<compile_context>
chip_gen: v6e
topology: v6e:2x2x1
jax: 0.10.0
libtpu: 0.0.40
codegen_flags: <defaults>
</compile_context>

<pallas_src>
import functools

import jax
import jax.numpy as jnp
from jax.experimental import pallas as pl
from jax.experimental.pallas import tpu as pltpu

LANE = 128                                  # lane width: pad channels to this
_VMEM_LIMIT = 64 * 1024 * 1024              # explicit scoped-VMEM limit


def _rup(x, m=LANE):
    """Round up to a multiple of m."""
    return -(-x // m) * m


# ----------------------------------------------------------------------------
# In-kernel helpers (operate on VMEM values)
# ----------------------------------------------------------------------------
def _pad_hw1(x):
    """Zero-pad (H, W, C) -> (H+2, W+2, C) entirely in VMEM (no HBM traffic)."""
    h, w, c = x.shape
    zrow = jnp.zeros((1, w, c), x.dtype)
    x = jnp.concatenate([zrow, x, zrow], axis=0)
    zcol = jnp.zeros((h + 2, 1, c), x.dtype)
    return jnp.concatenate([zcol, x, zcol], axis=1)


def _im2col3x3(xp, h, w, c):
    """Stack the 9 shifted taps of a padded (H+2, W+2, C) image into one
    (H*W, 9*C) patch matrix so the conv becomes a single K=9*C MXU matmul."""
    cols = []
    for dy in range(3):
        for dx in range(3):
            cols.append(xp[dy:dy + h, dx:dx + w, :].reshape(h * w, c))
    return jnp.concatenate(cols, axis=-1)


# ----------------------------------------------------------------------------
# Pallas kernels
# ----------------------------------------------------------------------------
def _conv3x3_kernel(x_ref, w_ref, b_ref, o_ref, *, relu: bool):
    # x_ref: (1, H, W, Cin)  w_ref: (9*Cin, Cout) bf16  b_ref: (1, Cout) f32
    # o_ref: (1, H, W, Cout)
    _, h, w, cin = x_ref.shape
    cout = o_ref.shape[-1]
    patch = _im2col3x3(_pad_hw1(x_ref[0].astype(jnp.bfloat16)), h, w, cin)
    acc = jnp.dot(patch, w_ref[...], preferred_element_type=jnp.float32)
    acc = acc + b_ref[...]
    if relu:
        acc = jnp.maximum(acc, 0.0)
    o_ref[...] = acc.reshape(1, h, w, cout).astype(o_ref.dtype)


def conv3x3(x, w, b, relu: bool = False):
    """3x3 same conv, NHWC, lane-padded channels.  x: (N,H,W,Cin_p),
    w: (9*Cin_p, Cout_p) bf16, b: (1, Cout_p) f32."""
    n, h, wd, cin = x.shape
    cout = w.shape[-1]
    kern = functools.partial(_conv3x3_kernel, relu=relu)
    return pl.pallas_call(
        kern,
        out_shape=jax.ShapeDtypeStruct((n, h, wd, cout), x.dtype),
        grid_spec=pltpu.PrefetchScalarGridSpec(
            num_scalar_prefetch=0,
            grid=(n,),
            in_specs=[
                pl.BlockSpec((1, h, wd, cin), lambda i: (i, 0, 0, 0)),
                pl.BlockSpec((9 * cin, cout), lambda i: (0, 0)),
                pl.BlockSpec((1, cout), lambda i: (0, 0)),
            ],
            out_specs=pl.BlockSpec((1, h, wd, cout), lambda i: (i, 0, 0, 0)),
        ),
        compiler_params=pltpu.CompilerParams(
            dimension_semantics=("parallel",),
            vmem_limit_bytes=_VMEM_LIMIT),
    )(x, w, b)


def _rcab_kernel(x_ref, w1_ref, b1_ref, w2_ref, b2_ref,
                 wd1_ref, bd1_ref, wd2_ref, bd2_ref, o_ref):
    # Fused RCAB:  out = CALayer(conv2(relu(conv1(x)))) + x
    # x_ref/o_ref: (1,H,W,C)   w1/w2: (9C, C) bf16   b1/b2: (1, C) f32
    # wd1: (C, Cr) bf16  bd1: (1, Cr)   wd2: (Cr, C) bf16  bd2: (1, C)
    _, h, w, c = x_ref.shape
    x32 = x_ref[0].astype(jnp.float32)                              # (H,W,C)

    # conv1 (3x3) + ReLU — single stacked K=9*C bf16 MXU matmul
    p1 = _im2col3x3(_pad_hw1(x32.astype(jnp.bfloat16)), h, w, c)
    y = jnp.dot(p1, w1_ref[...], preferred_element_type=jnp.float32) + b1_ref[...]
    y = jnp.maximum(y, 0.0)                                         # (H*W, C)

    # conv2 (3x3) — intermediate never leaves VMEM
    p2 = _im2col3x3(_pad_hw1(y.astype(jnp.bfloat16).reshape(h, w, c)), h, w, c)
    z = jnp.dot(p2, w2_ref[...], preferred_element_type=jnp.float32) + b2_ref[...]

    # CALayer: global avg pool -> 1x1 -> ReLU -> 1x1 -> sigmoid -> scale
    pooled = jnp.sum(z, axis=0, keepdims=True) * (1.0 / (h * w))    # (1, C)
    hid = jnp.dot(pooled, wd1_ref[...].astype(jnp.float32),
                  preferred_element_type=jnp.float32) + bd1_ref[...]
    hid = jnp.maximum(hid, 0.0)                                     # (1, Cr)
    s = jnp.dot(hid, wd2_ref[...].astype(jnp.float32),
                preferred_element_type=jnp.float32) + bd2_ref[...]
    s = jax.nn.sigmoid(s)                                           # (1, C)

    out = z * s + x32.reshape(h * w, c)                             # RCAB skip
    o_ref[...] = out.reshape(1, h, w, c).astype(o_ref.dtype)


def rcab_forward(x, p):
    """One fused RCAB: conv+ReLU+conv+CALayer+residual in a single kernel."""
    n, h, w, c = x.shape
    cr = p["ca_w1"].shape[-1]
    return pl.pallas_call(
        _rcab_kernel,
        out_shape=jax.ShapeDtypeStruct((n, h, w, c), x.dtype),
        grid_spec=pltpu.PrefetchScalarGridSpec(
            num_scalar_prefetch=0,
            grid=(n,),
            in_specs=[
                pl.BlockSpec((1, h, w, c), lambda i: (i, 0, 0, 0)),
                pl.BlockSpec((9 * c, c), lambda i: (0, 0)),
                pl.BlockSpec((1, c), lambda i: (0, 0)),
                pl.BlockSpec((9 * c, c), lambda i: (0, 0)),
                pl.BlockSpec((1, c), lambda i: (0, 0)),
                pl.BlockSpec((c, cr), lambda i: (0, 0)),
                pl.BlockSpec((1, cr), lambda i: (0, 0)),
                pl.BlockSpec((cr, c), lambda i: (0, 0)),
                pl.BlockSpec((1, c), lambda i: (0, 0)),
            ],
            out_specs=pl.BlockSpec((1, h, w, c), lambda i: (i, 0, 0, 0)),
        ),
        compiler_params=pltpu.CompilerParams(
            dimension_semantics=("parallel",),
            vmem_limit_bytes=_VMEM_LIMIT),
    )(x, p["c1_w"], p["c1_b"], p["c2_w"], p["c2_b"],
      p["ca_w1"], p["ca_b1"], p["ca_w2"], p["ca_b2"])


# ----------------------------------------------------------------------------
# Plain-JAX glue
# ----------------------------------------------------------------------------
def pixel_shuffle_nhwc(x, r):
    # Matches torch.nn.PixelShuffle: channel index = c*r*r + i*r + j.
    n, h, w, c = x.shape
    co = c // (r * r)
    x = x.reshape(n, h, w, co, r, r)
    x = jnp.transpose(x, (0, 1, 4, 2, 5, 3))
    return x.reshape(n, h * r, w * r, co)


def _pad_channels(x, c_target):
    c = x.shape[-1]
    if c == c_target:
        return x
    return jnp.pad(x, ((0, 0), (0, 0), (0, 0), (0, c_target - c)))


# ----------------------------------------------------------------------------
# Parameter construction (deterministic, synthetic; channels lane-padded)
# ----------------------------------------------------------------------------
def _conv_params(key, cin, cout, cin_p, cout_p):
    # To load real torch weights: permute (Cout, Cin, kh, kw) -> (kh*3+kw, Cin, Cout)
    # before the zero-pad / reshape below.
    kw, kb = jax.random.split(key)
    w = jax.random.normal(kw, (9, cin, cout), jnp.float32) * 0.05
    b = jax.random.normal(kb, (cout,), jnp.float32) * 0.01
    wp = jnp.zeros((9, cin_p, cout_p), jnp.float32).at[:, :cin, :cout].set(w)
    wp = wp.reshape(9 * cin_p, cout_p).astype(jnp.bfloat16)   # bf16 MXU operand
    bp = jnp.zeros((1, cout_p), jnp.float32).at[0, :cout].set(b)
    return wp, bp


def init_rcan_params(key, n_colors, n_feats, n_resgroups, depth, reduction, scale):
    c_in = _rup(n_colors)
    c = _rup(n_feats)
    red = max(n_feats // reduction, 1)
    cr = _rup(red)
    c_up = _rup(4 * n_feats)

    params = {}
    key, k = jax.random.split(key)
    params["head"] = _conv_params(k, n_colors, n_feats, c_in, c)

    groups = []
    for _ in range(n_resgroups):
        rcabs = []
        for _ in range(depth):
            key, k1, k2, k3, k4 = jax.random.split(key, 5)
            c1w, c1b = _conv_params(k1, n_feats, n_feats, c, c)
            c2w, c2b = _conv_params(k2, n_feats, n_feats, c, c)
            w1 = jax.random.normal(k3, (n_feats, red), jnp.float32) * 0.05
            w2 = jax.random.normal(k4, (red, n_feats), jnp.float32) * 0.05
            ca_w1 = jnp.zeros((c, cr), jnp.float32).at[:n_feats, :red].set(w1)
            ca_w2 = jnp.zeros((cr, c), jnp.float32).at[:red, :n_feats].set(w2)
            rcabs.append(dict(
                c1_w=c1w, c1_b=c1b, c2_w=c2w, c2_b=c2b,
                ca_w1=ca_w1.astype(jnp.bfloat16),
                ca_b1=jnp.zeros((1, cr), jnp.float32),
                ca_w2=ca_w2.astype(jnp.bfloat16),
                ca_b2=jnp.zeros((1, c), jnp.float32)))
        key, k = jax.random.split(key)
        groups.append(dict(rcabs=rcabs, tail=_conv_params(k, n_feats, n_feats, c, c)))
    params["groups"] = groups

    key, k = jax.random.split(key)
    params["body_tail"] = _conv_params(k, n_feats, n_feats, c, c)

    # Upsampler: for scale 2^m, m stages of (conv n_feats -> 4*n_feats, PixelShuffle(2))
    up = []
    s = scale
    while s > 1:
        assert s % 2 == 0, "only power-of-two scales supported here"
        key, k = jax.random.split(key)
        up.append(_conv_params(k, n_feats, 4 * n_feats, c, c_up))
        s //= 2
    params["up"] = up

    key, k = jax.random.split(key)
    params["recon_tail"] = _conv_params(k, n_feats, n_colors, c, _rup(n_colors))
    return params


# ----------------------------------------------------------------------------
# RCAN forward
# ----------------------------------------------------------------------------
def rcan_forward(x_nchw, params, *, n_colors, n_feats):
    c = _rup(n_feats)

    x = jnp.transpose(x_nchw, (0, 2, 3, 1))          # NCHW -> NHWC
    x = _pad_channels(x, _rup(n_colors))             # lane-dense channels
    x = conv3x3(x, *params["head"])                  # head conv

    y = x
    for g in params["groups"]:
        z = y
        for rp in g["rcabs"]:
            z = rcab_forward(z, rp)                  # fused RCAB kernel
        z = conv3x3(z, *g["tail"])
        y = y + z                                    # ResidualGroup skip
    y = conv3x3(y, *params["body_tail"])
    x = x + y                                        # RCAN trunk skip

    for (w, b) in params["up"]:                      # Upsampler
        x = conv3x3(x, w, b)
        x = x[..., :4 * n_feats]                     # drop lane padding
        x = pixel_shuffle_nhwc(x, 2)
        x = _pad_channels(x, c)                      # re-pad for next conv
    x = conv3x3(x, *params["recon_tail"])            # final conv (lane-dense out)
    x = x[..., :n_colors]

    return jnp.transpose(x, (0, 3, 1, 2))            # NHWC -> NCHW


# ----------------------------------------------------------------------------
if __name__ == "__main__":
    # Small configuration consistent with RCAN(scale, depth, n_colors, n_feats,
    # n_resgroups, reduction, upsample=True).
    N, H, W = 2, 8, 8
    n_colors, n_feats = 3, 16
    n_resgroups, depth, reduction, scale = 2, 2, 4, 2

    key = jax.random.PRNGKey(0)
    kx, kp = jax.random.split(key)
    x = jax.random.normal(kx, (N, n_colors, H, W), jnp.float32)   # NCHW like PyTorch

    params = init_rcan_params(kp, n_colors, n_feats, n_resgroups,
                              depth, reduction, scale)

    fwd = jax.jit(functools.partial(rcan_forward,
                                    n_colors=n_colors, n_feats=n_feats))
    out = fwd(x, params)
    out = jax.block_until_ready(out)
    assert out.shape == (N, n_colors, H * scale, W * scale), out.shape
    assert bool(jnp.all(jnp.isfinite(out)))
    print("KERNEL_OK")
</pallas_src>

<mosaic_0001>
module attributes {stable_mosaic.version = 11 : i64} {
  func.func @_conv3x3_kernel(%arg0: i32, %arg1: memref<1x8x8x128xf32, #tpu.memory_space<vmem>>, %arg2: memref<1152x128xbf16, #tpu.memory_space<vmem>>, %arg3: memref<1x128xf32, #tpu.memory_space<vmem>>, %arg4: memref<1x8x8x128xf32, #tpu.memory_space<vmem>>) attributes {dimension_semantics = [#tpu.dimension_semantics<parallel>], iteration_bounds = array<i64: 2>, scalar_prefetch = 0 : i64, scratch_operands = 0 : i64, tpu.core_type = #tpu.core_type<tc>, window_params = [{transform_indices = @transform_0, window_bounds = array<i64: 1, 8, 8, 128>}, {pipeline_mode = #tpu.pipeline_mode<synchronous>, transform_indices = @transform_1, window_bounds = array<i64: 1152, 128>}, {pipeline_mode = #tpu.pipeline_mode<synchronous>, transform_indices = @transform_2, window_bounds = array<i64: 1, 128>}, {transform_indices = @transform_3, window_bounds = array<i64: 1, 8, 8, 128>}]} {
    %c0 = arith.constant 0 : index
    %c0_0 = arith.constant 0 : index
    %c0_1 = arith.constant 0 : index
    %c0_2 = arith.constant 0 : index
    %0 = vector.load %arg1[%c0, %c0_0, %c0_1, %c0_2] : memref<1x8x8x128xf32, #tpu.memory_space<vmem>>, vector<1x8x8x128xf32>
    %1 = vector.shape_cast %0 : vector<1x8x8x128xf32> to vector<8x8x128xf32>
    %2 = arith.truncf %1 : vector<8x8x128xf32> to vector<8x8x128xbf16>
    %cst = arith.constant 0.000000e+00 : bf16
    %3 = vector.broadcast %cst : bf16 to vector<1x8x128xbf16>
    %4 = tpu.concatenate %3, %2, %3 in 0 : vector<1x8x128xbf16>, vector<8x8x128xbf16>, vector<1x8x128xbf16> -> vector<10x8x128xbf16>
    %cst_3 = arith.constant 0.000000e+00 : bf16
    %5 = vector.broadcast %cst_3 : bf16 to vector<10x1x128xbf16>
    %6 = tpu.concatenate %5, %4, %5 in 1 : vector<10x1x128xbf16>, vector<10x8x128xbf16>, vector<10x1x128xbf16> -> vector<10x10x128xbf16>
    %7 = vector.extract_strided_slice %6 {offsets = [0, 0, 0], sizes = [8, 8, 128], strides = [1, 1, 1]} : vector<10x10x128xbf16> to vector<8x8x128xbf16>
    %8 = vector.shape_cast %7 : vector<8x8x128xbf16> to vector<64x128xbf16>
    %9 = vector.extract_strided_slice %6 {offsets = [0, 1, 0], sizes = [8, 8, 128], strides = [1, 1, 1]} : vector<10x10x128xbf16> to vector<8x8x128xbf16>
    %10 = vector.shape_cast %9 : vector<8x8x128xbf16> to vector<64x128xbf16>
    %11 = vector.extract_strided_slice %6 {offsets = [0, 2, 0], sizes = [8, 8, 128], strides = [1, 1, 1]} : vector<10x10x128xbf16> to vector<8x8x128xbf16>
    %12 = vector.shape_cast %11 : vector<8x8x128xbf16> to vector<64x128xbf16>
    %13 = vector.extract_strided_slice %6 {offsets = [1, 0, 0], sizes = [8, 8, 128], strides = [1, 1, 1]} : vector<10x10x128xbf16> to vector<8x8x128xbf16>
    %14 = vector.shape_cast %13 : vector<8x8x128xbf16> to vector<64x128xbf16>
    %15 = vector.extract_strided_slice %6 {offsets = [1, 1, 0], sizes = [8, 8, 128], strides = [1, 1, 1]} : vector<10x10x128xbf16> to vector<8x8x128xbf16>
    %16 = vector.shape_cast %15 : vector<8x8x128xbf16> to vector<64x128xbf16>
    %17 = vector.extract_strided_slice %6 {offsets = [1, 2, 0], sizes = [8, 8, 128], strides = [1, 1, 1]} : vector<10x10x128xbf16> to vector<8x8x128xbf16>
    %18 = vector.shape_cast %17 : vector<8x8x128xbf16> to vector<64x128xbf16>
    %19 = vector.extract_strided_slice %6 {offsets = [2, 0, 0], sizes = [8, 8, 128], strides = [1, 1, 1]} : vector<10x10x128xbf16> to vector<8x8x128xbf16>
    %20 = vector.shape_cast %19 : vector<8x8x128xbf16> to vector<64x128xbf16>
    %21 = vector.extract_strided_slice %6 {offsets = [2, 1, 0], sizes = [8, 8, 128], strides = [1, 1, 1]} : vector<10x10x128xbf16> to vector<8x8x128xbf16>
    %22 = vector.shape_cast %21 : vector<8x8x128xbf16> to vector<64x128xbf16>
    %23 = vector.extract_strided_slice %6 {offsets = [2, 2, 0], sizes = [8, 8, 128], strides = [1, 1, 1]} : vector<10x10x128xbf16> to vector<8x8x128xbf16>
    %24 = vector.shape_cast %23 : vector<8x8x128xbf16> to vector<64x128xbf16>
    %25 = tpu.concatenate %8, %10, %12, %14, %16, %18, %20, %22, %24 in 1 : vector<64x128xbf16>, vector<64x128xbf16>, vector<64x128xbf16>, vector<64x128xbf16>, vector<64x128xbf16>, vector<64x128xbf16>, vector<64x128xbf16>, vector<64x128xbf16>, vector<64x128xbf16> -> vector<64x1152xbf16>
    %c0_4 = arith.constant 0 : index
    %c0_5 = arith.constant 0 : index
    %26 = vector.load %arg2[%c0_4, %c0_5] : memref<1152x128xbf16, #tpu.memory_space<vmem>>, vector<1152x128xbf16>
    %cst_6 = arith.constant dense<0.000000e+00> : vector<64x128xf32>
    %27 = tpu.matmul %25, %26, %cst_6 {dimension_numbers = #tpu.dot_dimension_numbers<[1], [0], [0], [1], [0, 0, 1, 1], [], []>} : vector<64x1152xbf16>, vector<1152x128xbf16>, vector<64x128xf32> -> vector<64x128xf32>
    %c0_7 = arith.constant 0 : index
    %c0_8 = arith.constant 0 : index
    %28 = vector.load %arg3[%c0_7, %c0_8] : memref<1x128xf32, #tpu.memory_space<vmem>>, vector<1x128xf32>
    %29 = vector.broadcast %28 : vector<1x128xf32> to vector<64x128xf32>
    %30 = arith.addf %27, %29 : vector<64x128xf32>
    %31 = vector.shape_cast %30 : vector<64x128xf32> to vector<1x8x8x128xf32>
    %c0_9 = arith.constant 0 : index
    %c0_10 = arith.constant 0 : index
    %c0_11 = arith.constant 0 : index
    %c0_12 = arith.constant 0 : index
    %32 = vector.load %arg4[%c0_9, %c0_10, %c0_11, %c0_12] : memref<1x8x8x128xf32, #tpu.memory_space<vmem>>, vector<1x8x8x128xf32>
    tpu.vector_store %arg4[%c0_9, %c0_10, %c0_11, %c0_12], %31 {strides = array<i32>} : memref<1x8x8x128xf32, #tpu.memory_space<vmem>>, vector<1x8x8x128xf32>,
    return
  }
  func.func @transform_0(%arg0: i32) -> (i32, i32, i32, i32) {
    %c0_i32 = arith.constant 0 : i32
    %c0_i32_0 = arith.constant 0 : i32
    %c0_i32_1 = arith.constant 0 : i32
    %c0_i32_2 = arith.constant 0 : i32
    return %arg0, %c0_i32, %c0_i32_0, %c0_i32_1 : i32, i32, i32, i32
  }
  func.func @transform_1(%arg0: i32) -> (i32, i32) {
    %c0_i32 = arith.constant 0 : i32
    %c0_i32_0 = arith.constant 0 : i32
    %c0_i32_1 = arith.constant 0 : i32
    return %c0_i32, %c0_i32_0 : i32, i32
  }
  func.func @transform_2(%arg0: i32) -> (i32, i32) {
    %c0_i32 = arith.constant 0 : i32
    %c0_i32_0 = arith.constant 0 : i32
    %c0_i32_1 = arith.constant 0 : i32
    return %c0_i32, %c0_i32_0 : i32, i32
  }
  func.func @transform_3(%arg0: i32) -> (i32, i32, i32, i32) {
    %c0_i32 = arith.constant 0 : i32
    %c0_i32_0 = arith.constant 0 : i32
    %c0_i32_1 = arith.constant 0 : i32
    %c0_i32_2 = arith.constant 0 : i32
    return %arg0, %c0_i32, %c0_i32_0, %c0_i32_1 : i32, i32, i32, i32
  }
}

module attributes {stable_mosaic.version = 11 : i64} {
  func.func @_rcab_kernel(%arg0: i32, %arg1: memref<1x8x8x128xf32, #tpu.memory_space<vmem>>, %arg2: memref<1152x128xbf16, #tpu.memory_space<vmem>>, %arg3: memref<1x128xf32, #tpu.memory_space<vmem>>, %arg4: memref<1152x128xbf16, #tpu.memory_space<vmem>>, %arg5: memref<1x128xf32, #tpu.memory_space<vmem>>, %arg6: memref<128x128xbf16, #tpu.memory_space<vmem>>, %arg7: memref<1x128xf32, #tpu.memory_space<vmem>>, %arg8: memref<128x128xbf16, #tpu.memory_space<vmem>>, %arg9: memref<1x128xf32, #tpu.memory_space<vmem>>, %arg10: memref<1x8x8x128xf32, #tpu.memory_space<vmem>>) attributes {dimension_semantics = [#tpu.dimension_semantics<parallel>], iteration_bounds = array<i64: 2>, scalar_prefetch = 0 : i64, scratch_operands = 0 : i64, tpu.core_type = #tpu.core_type<tc>, window_params = [{transform_indices = @transform_0, window_bounds = array<i64: 1, 8, 8, 128>}, {pipeline_mode = #tpu.pipeline_mode<synchronous>, transform_indices = @transform_1, window_bounds = array<i64: 1152, 128>}, {pipeline_mode = #tpu.pipeline_mode<synchronous>, transform_indices = @transform_2, window_bounds = array<i64: 1, 128>}, {pipeline_mode = #tpu.pipeline_mode<synchronous>, transform_indices = @transform_3, window_bounds = array<i64: 1152, 128>}, {pipeline_mode = #tpu.pipeline_mode<synchronous>, transform_indices = @transform_4, window_bounds = array<i64: 1, 128>}, {pipeline_mode = #tpu.pipeline_mode<synchronous>, transform_indices = @transform_5, window_bounds = array<i64: 128, 128>}, {pipeline_mode = #tpu.pipeline_mode<synchronous>, transform_indices = @transform_6, window_bounds = array<i64: 1, 128>}, {pipeline_mode = #tpu.pipeline_mode<synchronous>, transform_indices = @transform_7, window_bounds = array<i64: 128, 128>}, {pipeline_mode = #tpu.pipeline_mode<synchronous>, transform_indices = @transform_8, window_bounds = array<i64: 1, 128>}, {transform_indices = @transform_9, window_bounds = array<i64: 1, 8, 8, 128>}]} {
    %c0 = arith.constant 0 : index
    %c0_0 = arith.constant 0 : index
    %c0_1 = arith.constant 0 : index
    %c0_2 = arith.constant 0 : index
    %0 = vector.load %arg1[%c0, %c0_0, %c0_1, %c0_2] : memref<1x8x8x128xf32, #tpu.memory_space<vmem>>, vector<1x8x8x128xf32>
    %1 = vector.shape_cast %0 : vector<1x8x8x128xf32> to vector<8x8x128xf32>
    %2 = arith.truncf %1 : vector<8x8x128xf32> to vector<8x8x128xbf16>
    %cst = arith.constant 0.000000e+00 : bf16
    %3 = vector.broadcast %cst : bf16 to vector<1x8x128xbf16>
    %4 = tpu.concatenate %3, %2, %3 in 0 : vector<1x8x128xbf16>, vector<8x8x128xbf16>, vector<1x8x128xbf16> -> vector<10x8x128xbf16>
    %cst_3 = arith.constant 0.000000e+00 : bf16
    %5 = vector.broadcast %cst_3 : bf16 to vector<10x1x128xbf16>
    %6 = tpu.concatenate %5, %4, %5 in 1 : vector<10x1x128xbf16>, vector<10x8x128xbf16>, vector<10x1x128xbf16> -> vector<10x10x128xbf16>
    %7 = vector.extract_strided_slice %6 {offsets = [0, 0, 0], sizes = [8, 8, 128], strides = [1, 1, 1]} : vector<10x10x128xbf16> to vector<8x8x128xbf16>
    %8 = vector.shape_cast %7 : vector<8x8x128xbf16> to vector<64x128xbf16>
    %9 = vector.extract_strided_slice %6 {offsets = [0, 1, 0], sizes = [8, 8, 128], strides = [1, 1, 1]} : vector<10x10x128xbf16> to vector<8x8x128xbf16>
    %10 = vector.shape_cast %9 : vector<8x8x128xbf16> to vector<64x128xbf16>
    %11 = vector.extract_strided_slice %6 {offsets = [0, 2, 0], sizes = [8, 8, 128], strides = [1, 1, 1]} : vector<10x10x128xbf16> to vector<8x8x128xbf16>
    %12 = vector.shape_cast %11 : vector<8x8x128xbf16> to vector<64x128xbf16>
    %13 = vector.extract_strided_slice %6 {offsets = [1, 0, 0], sizes = [8, 8, 128], strides = [1, 1, 1]} : vector<10x10x128xbf16> to vector<8x8x128xbf16>
    %14 = vector.shape_cast %13 : vector<8x8x128xbf16> to vector<64x128xbf16>
    %15 = vector.extract_strided_slice %6 {offsets = [1, 1, 0], sizes = [8, 8, 128], strides = [1, 1, 1]} : vector<10x10x128xbf16> to vector<8x8x128xbf16>
    %16 = vector.shape_cast %15 : vector<8x8x128xbf16> to vector<64x128xbf16>
    %17 = vector.extract_strided_slice %6 {offsets = [1, 2, 0], sizes = [8, 8, 128], strides = [1, 1, 1]} : vector<10x10x128xbf16> to vector<8x8x128xbf16>
    %18 = vector.shape_cast %17 : vector<8x8x128xbf16> to vector<64x128xbf16>
    %19 = vector.extract_strided_slice %6 {offsets = [2, 0, 0], sizes = [8, 8, 128], strides = [1, 1, 1]} : vector<10x10x128xbf16> to vector<8x8x128xbf16>
    %20 = vector.shape_cast %19 : vector<8x8x128xbf16> to vector<64x128xbf16>
    %21 = vector.extract_strided_slice %6 {offsets = [2, 1, 0], sizes = [8, 8, 128], strides = [1, 1, 1]} : vector<10x10x128xbf16> to vector<8x8x128xbf16>
    %22 = vector.shape_cast %21 : vector<8x8x128xbf16> to vector<64x128xbf16>
    %23 = vector.extract_strided_slice %6 {offsets = [2, 2, 0], sizes = [8, 8, 128], strides = [1, 1, 1]} : vector<10x10x128xbf16> to vector<8x8x128xbf16>
    %24 = vector.shape_cast %23 : vector<8x8x128xbf16> to vector<64x128xbf16>
    %25 = tpu.concatenate %8, %10, %12, %14, %16, %18, %20, %22, %24 in 1 : vector<64x128xbf16>, vector<64x128xbf16>, vector<64x128xbf16>, vector<64x128xbf16>, vector<64x128xbf16>, vector<64x128xbf16>, vector<64x128xbf16>, vector<64x128xbf16>, vector<64x128xbf16> -> vector<64x1152xbf16>
    %c0_4 = arith.constant 0 : index
    %c0_5 = arith.constant 0 : index
    %26 = vector.load %arg2[%c0_4, %c0_5] : memref<1152x128xbf16, #tpu.memory_space<vmem>>, vector<1152x128xbf16>
    %cst_6 = arith.constant dense<0.000000e+00> : vector<64x128xf32>
    %27 = tpu.matmul %25, %26, %cst_6 {dimension_numbers = #tpu.dot_dimension_numbers<[1], [0], [0], [1], [0, 0, 1, 1], [], []>} : vector<64x1152xbf16>, vector<1152x128xbf16>, vector<64x128xf32> -> vector<64x128xf32>
    %c0_7 = arith.constant 0 : index
    %c0_8 = arith.constant 0 : index
    %28 = vector.load %arg3[%c0_7, %c0_8] : memref<1x128xf32, #tpu.memory_space<vmem>>, vector<1x128xf32>
    %29 = vector.broadcast %28 : vector<1x128xf32> to vector<64x128xf32>
    %30 = arith.addf %27, %29 : vector<64x128xf32>
    %cst_9 = arith.constant 0.000000e+00 : f32
    %31 = vector.broadcast %cst_9 : f32 to vector<64x128xf32>
    %32 = arith.maximumf %30, %31 : vector<64x128xf32>
    %33 = arith.truncf %32 : vector<64x128xf32> to vector<64x128xbf16>
    %34 = vector.shape_cast %33 : vector<64x128xbf16> to vector<8x8x128xbf16>
    %cst_10 = arith.constant 0.000000e+00 : bf16
    %35 = vector.broadcast %cst_10 : bf16 to vector<1x8x128xbf16>
    %36 = tpu.concatenate %35, %34, %35 in 0 : vector<1x8x128xbf16>, vector<8x8x128xbf16>, vector<1x8x128xbf16> -> vector<10x8x128xbf16>
    %cst_11 = arith.constant 0.000000e+00 : bf16
    %37 = vector.broadcast %cst_11 : bf16 to vector<10x1x128xbf16>
    %38 = tpu.concatenate %37, %36, %37 in 1 : vector<10x1x128xbf16>, vector<10x8x128xbf16>, vector<10x1x128xbf16> -> vector<10x10x128xbf16>
    %39 = vector.extract_strided_slice %38 {offsets = [0, 0, 0], sizes = [8, 8, 128], strides = [1, 1, 1]} : vector<10x10x128xbf16> to vector<8x8x128xbf16>
    %40 = vector.shape_cast %39 : vector<8x8x128xbf16> to vector<64x128xbf16>
    %41 = vector.extract_strided_slice %38 {offsets = [0, 1, 0], sizes = [8, 8, 128], strides = [1, 1, 1]} : vector<10x10x128xbf16> to vector<8x8x128xbf16>
    %42 = vector.shape_cast %41 : vector<8x8x128xbf16> to vector<64x128xbf16>
    %43 = vector.extract_strided_slice %38 {offsets = [0, 2, 0], sizes = [8, 8, 128], strides = [1, 1, 1]} : vector<10x10x128xbf16> to vector<8x8x128xbf16>
    %44 = vector.shape_cast %43 : vector<8x8x128xbf16> to vector<64x128xbf16>
    %45 = vector.extract_strided_slice %38 {offsets = [1, 0, 0], sizes = [8, 8, 128], strides = [1, 1, 1]} : vector<10x10x128xbf16> to vector<8x8x128xbf16>
    %46 = vector.shape_cast %45 : vector<8x8x128xbf16> to vector<64x128xbf16>
    %47 = vector.extract_strided_slice %38 {offsets = [1, 1, 0], sizes = [8, 8, 128], strides = [1, 1, 1]} : vector<10x10x128xbf16> to vector<8x8x128xbf16>
    %48 = vector.shape_cast %47 : vector<8x8x128xbf16> to vector<64x128xbf16>
    %49 = vector.extract_strided_slice %38 {offsets = [1, 2, 0], sizes = [8, 8, 128], strides = [1, 1, 1]} : vector<10x10x128xbf16> to vector<8x8x128xbf16>
    %50 = vector.shape_cast %49 : vector<8x8x128xbf16> to vector<64x128xbf16>
    %51 = vector.extract_strided_slice %38 {offsets = [2, 0, 0], sizes = [8, 8, 128], strides = [1, 1, 1]} : vector<10x10x128xbf16> to vector<8x8x128xbf16>
    %52 = vector.shape_cast %51 : vector<8x8x128xbf16> to vector<64x128xbf16>
    %53 = vector.extract_strided_slice %38 {offsets = [2, 1, 0], sizes = [8, 8, 128], strides = [1, 1, 1]} : vector<10x10x128xbf16> to vector<8x8x128xbf16>
    %54 = vector.shape_cast %53 : vector<8x8x128xbf16> to vector<64x128xbf16>
    %55 = vector.extract_strided_slice %38 {offsets = [2, 2, 0], sizes = [8, 8, 128], strides = [1, 1, 1]} : vector<10x10x128xbf16> to vector<8x8x128xbf16>
    %56 = vector.shape_cast %55 : vector<8x8x128xbf16> to vector<64x128xbf16>
    %57 = tpu.concatenate %40, %42, %44, %46, %48, %50, %52, %54, %56 in 1 : vector<64x128xbf16>, vector<64x128xbf16>, vector<64x128xbf16>, vector<64x128xbf16>, vector<64x128xbf16>, vector<64x128xbf16>, vector<64x128xbf16>, vector<64x128xbf16>, vector<64x128xbf16> -> vector<64x1152xbf16>
    %c0_12 = arith.constant 0 : index
    %c0_13 = arith.constant 0 : index
    %58 = vector.load %arg4[%c0_12, %c0_13] : memref<1152x128xbf16, #tpu.memory_space<vmem>>, vector<1152x128xbf16>
    %cst_14 = arith.constant dense<0.000000e+00> : vector<64x128xf32>
    %59 = tpu.matmul %57, %58, %cst_14 {dimension_numbers = #tpu.dot_dimension_numbers<[1], [0], [0], [1], [0, 0, 1, 1], [], []>} : vector<64x1152xbf16>, vector<1152x128xbf16>, vector<64x128xf32> -> vector<64x128xf32>
    %c0_15 = arith.constant 0 : index
    %c0_16 = arith.constant 0 : index
    %60 = vector.load %arg5[%c0_15, %c0_16] : memref<1x128xf32, #tpu.memory_space<vmem>>, vector<1x128xf32>
    %61 = vector.broadcast %60 : vector<1x128xf32> to vector<64x128xf32>
    %62 = arith.addf %59, %61 : vector<64x128xf32>
    %cst_17 = arith.constant dense<0.000000e+00> : vector<128xf32>
    %63 = vector.multi_reduction <add>, %62, %cst_17 [0] : vector<64x128xf32> to vector<128xf32>
    %64 = vector.shape_cast %63 : vector<128xf32> to vector<1x128xf32>
    %cst_18 = arith.constant 1.562500e-02 : f32
    %65 = vector.broadcast %cst_18 : f32 to vector<1x128xf32>
    %66 = arith.mulf %64, %65 : vector<1x128xf32>
    %c0_19 = arith.constant 0 : index
    %c0_20 = arith.constant 0 : index
    %67 = vector.load %arg6[%c0_19, %c0_20] : memref<128x128xbf16, #tpu.memory_space<vmem>>, vector<128x128xbf16>
    %68 = arith.extf %67 : vector<128x128xbf16> to vector<128x128xf32>
    %cst_21 = arith.constant dense<0.000000e+00> : vector<1x128xf32>
    %69 = tpu.matmul %66, %68, %cst_21 {dimension_numbers = #tpu.dot_dimension_numbers<[1], [0], [0], [1], [0, 0, 1, 1], [], []>} : vector<1x128xf32>, vector<128x128xf32>, vector<1x128xf32> -> vector<1x128xf32>
    %c0_22 = arith.constant 0 : index
    %c0_23 = arith.constant 0 : index
    %70 = vector.load %arg7[%c0_22, %c0_23] : memref<1x128xf32, #tpu.memory_space<vmem>>, vector<1x128xf32>
    %71 = arith.addf %69, %70 : vector<1x128xf32>
    %cst_24 = arith.constant 0.000000e+00 : f32
    %72 = vector.broadcast %cst_24 : f32 to vector<1x128xf32>
    %73 = arith.maximumf %71, %72 : vector<1x128xf32>
    %c0_25 = arith.constant 0 : index
    %c0_26 = arith.constant 0 : index
    %74 = vector.load %arg8[%c0_25, %c0_26] : memref<128x128xbf16, #tpu.memory_space<vmem>>, vector<128x128xbf16>
    %75 = arith.extf %74 : vector<128x128xbf16> to vector<128x128xf32>
    %cst_27 = arith.constant dense<0.000000e+00> : vector<1x128xf32>
    %76 = tpu.matmul %73, %75, %cst_27 {dimension_numbers = #tpu.dot_dimension_numbers<[1], [0], [0], [1], [0, 0, 1, 1], [], []>} : vector<1x128xf32>, vector<128x128xf32>, vector<1x128xf32> -> vector<1x128xf32>
    %c0_28 = arith.constant 0 : index
    %c0_29 = arith.constant 0 : index
    %77 = vector.load %arg9[%c0_28, %c0_29] : memref<1x128xf32, #tpu.memory_space<vmem>>, vector<1x128xf32>
    %78 = arith.addf %76, %77 : vector<1x128xf32>
    %79 = arith.negf %78 : vector<1x128xf32>
    %80 = math.exp %79 : vector<1x128xf32>
    %cst_30 = arith.constant 1.000000e+00 : f32
    %81 = vector.broadcast %cst_30 : f32 to vector<1x128xf32>
    %82 = arith.addf %81, %80 : vector<1x128xf32>
    %83 = arith.divf %81, %82 : vector<1x128xf32>
    %84 = vector.broadcast %83 : vector<1x128xf32> to vector<64x128xf32>
    %85 = arith.mulf %62, %84 : vector<64x128xf32>
    %86 = vector.shape_cast %1 : vector<8x8x128xf32> to vector<64x128xf32>
    %87 = arith.addf %85, %86 : vector<64x128xf32>
    %88 = vector.shape_cast %87 : vector<64x128xf32> to vector<1x8x8x128xf32>
    %c0_31 = arith.constant 0 : index
    %c0_32 = arith.constant 0 : index
    %c0_33 = arith.constant 0 : index
    %c0_34 = arith.constant 0 : index
    %89 = vector.load %arg10[%c0_31, %c0_32, %c0_33, %c0_34] : memref<1x8x8x128xf32, #tpu.memory_space<vmem>>, vector<1x8x8x128xf32>
    tpu.vector_store %arg10[%c0_31, %c0_32, %c0_33, %c0_34], %88 {strides = array<i32>} : memref<1x8x8x128xf32, #tpu.memory_space<vmem>>, vector<1x8x8x128xf32>,
    return
  }
  func.func @transform_0(%arg0: i32) -> (i32, i32, i32, i32) {
    %c0_i32 = arith.constant 0 : i32
    %c0_i32_0 = arith.constant 0 : i32
    %c0_i32_1 = arith.constant 0 : i32
    %c0_i32_2 = arith.constant 0 : i32
    return %arg0, %c0_i32, %c0_i32_0, %c0_i32_1 : i32, i32, i32, i32
  }
  func.func @transform_1(%arg0: i32) -> (i32, i32) {
    %c0_i32 = arith.constant 0 : i32
    %c0_i32_0 = arith.constant 0 : i32
    %c0_i32_1 = arith.constant 0 : i32
    return %c0_i32, %c0_i32_0 : i32, i32
  }
  func.func @transform_2(%arg0: i32) -> (i32, i32) {
    %c0_i32 = arith.constant 0 : i32
    %c0_i32_0 = arith.constant 0 : i32
    %c0_i32_1 = arith.constant 0 : i32
    return %c0_i32, %c0_i32_0 : i32, i32
  }
  func.func @transform_3(%arg0: i32) -> (i32, i32) {
    %c0_i32 = arith.constant 0 : i32
    %c0_i32_0 = arith.constant 0 : i32
    %c0_i32_1 = arith.constant 0 : i32
    return %c0_i32, %c0_i32_0 : i32, i32
  }
  func.func @transform_4(%arg0: i32) -> (i32, i32) {
    %c0_i32 = arith.constant 0 : i32
    %c0_i32_0 = arith.constant 0 : i32
    %c0_i32_1 = arith.constant 0 : i32
    return %c0_i32, %c0_i32_0 : i32, i32
  }
  func.func @transform_5(%arg0: i32) -> (i32, i32) {
    %c0_i32 = arith.constant 0 : i32
    %c0_i32_0 = arith.constant 0 : i32
    %c0_i32_1 = arith.constant 0 : i32
    return %c0_i32, %c0_i32_0 : i32, i32
  }
  func.func @transform_6(%arg0: i32) -> (i32, i32) {
    %c0_i32 = arith.constant 0 : i32
    %c0_i32_0 = arith.constant 0 : i32
    %c0_i32_1 = arith.constant 0 : i32
    return %c0_i32, %c0_i32_0 : i32, i32
  }
  func.func @transform_7(%arg0: i32) -> (i32, i32) {
    %c0_i32 = arith.constant 0 : i32
    %c0_i32_0 = arith.constant 0 : i32
    %c0_i32_1 = arith.constant 0 : i32
    return %c0_i32, %c0_i32_0 : i32, i32
  }
  func.func @transform_8(%arg0: i32) -> (i32, i32) {
    %c0_i32 = arith.constant 0 : i32
    %c0_i32_0 = arith.constant 0 : i32
    %c0_i32_1 = arith.constant 0 : i32
    return %c0_i32, %c0_i32_0 : i32, i32
  }
  func.func @transform_9(%arg0: i32) -> (i32, i32, i32, i32) {
    %c0_i32 = arith.constant 0 : i32
    %c0_i32_0 = arith.constant 0 : i32
    %c0_i32_1 = arith.constant 0 : i32
    %c0_i32_2 = arith.constant 0 : i32
    return %arg0, %c0_i32, %c0_i32_0, %c0_i32_1 : i32, i32, i32, i32
  }
}

module attributes {stable_mosaic.version = 11 : i64} {
  func.func @_rcab_kernel(%arg0: i32, %arg1: memref<1x8x8x128xf32, #tpu.memory_space<vmem>>, %arg2: memref<1152x128xbf16, #tpu.memory_space<vmem>>, %arg3: memref<1x128xf32, #tpu.memory_space<vmem>>, %arg4: memref<1152x128xbf16, #tpu.memory_space<vmem>>, %arg5: memref<1x128xf32, #tpu.memory_space<vmem>>, %arg6: memref<128x128xbf16, #tpu.memory_space<vmem>>, %arg7: memref<1x128xf32, #tpu.memory_space<vmem>>, %arg8: memref<128x128xbf16, #tpu.memory_space<vmem>>, %arg9: memref<1x128xf32, #tpu.memory_space<vmem>>, %arg10: memref<1x8x8x128xf32, #tpu.memory_space<vmem>>) attributes {dimension_semantics = [#tpu.dimension_semantics<parallel>], iteration_bounds = array<i64: 2>, scalar_prefetch = 0 : i64, scratch_operands = 0 : i64, tpu.core_type = #tpu.core_type<tc>, window_params = [{transform_indices = @transform_0, window_bounds = array<i64: 1, 8, 8, 128>}, {pipeline_mode = #tpu.pipeline_mode<synchronous>, transform_indices = @transform_1, window_bounds = array<i64: 1152, 128>}, {pipeline_mode = #tpu.pipeline_mode<synchronous>, transform_indices = @transform_2, window_bounds = array<i64: 1, 128>}, {pipeline_mode = #tpu.pipeline_mode<synchronous>, transform_indices = @transform_3, window_bounds = array<i64: 1152, 128>}, {pipeline_mode = #tpu.pipeline_mode<synchronous>, transform_indices = @transform_4, window_bounds = array<i64: 1, 128>}, {pipeline_mode = #tpu.pipeline_mode<synchronous>, transform_indices = @transform_5, window_bounds = array<i64: 128, 128>}, {pipeline_mode = #tpu.pipeline_mode<synchronous>, transform_indices = @transform_6, window_bounds = array<i64: 1, 128>}, {pipeline_mode = #tpu.pipeline_mode<synchronous>, transform_indices = @transform_7, window_bounds = array<i64: 128, 128>}, {pipeline_mode = #tpu.pipeline_mode<synchronous>, transform_indices = @transform_8, window_bounds = array<i64: 1, 128>}, {transform_indices = @transform_9, window_bounds = array<i64: 1, 8, 8, 128>}]} {
    %c0 = arith.constant 0 : index
    %c0_0 = arith.constant 0 : index
    %c0_1 = arith.constant 0 : index
    %c0_2 = arith.constant 0 : index
    %0 = vector.load %arg1[%c0, %c0_0, %c0_1, %c0_2] : memref<1x8x8x128xf32, #tpu.memory_space<vmem>>, vector<1x8x8x128xf32>
    %1 = vector.shape_cast %0 : vector<1x8x8x128xf32> to vector<8x8x128xf32>
    %2 = arith.truncf %1 : vector<8x8x128xf32> to vector<8x8x128xbf16>
    %cst = arith.constant 0.000000e+00 : bf16
    %3 = vector.broadcast %cst : bf16 to vector<1x8x128xbf16>
    %4 = tpu.concatenate %3, %2, %3 in 0 : vector<1x8x128xbf16>, vector<8x8x128xbf16>, vector<1x8x128xbf16> -> vector<10x8x128xbf16>
    %cst_3 = arith.constant 0.000000e+00 : bf16
    %5 = vector.broadcast %cst_3 : bf16 to vector<10x1x128xbf16>
    %6 = tpu.concatenate %5, %4, %5 in 1 : vector<10x1x128xbf16>, vector<10x8x128xbf16>, vector<10x1x128xbf16> -> vector<10x10x128xbf16>
    %7 = vector.extract_strided_slice %6 {offsets = [0, 0, 0], sizes = [8, 8, 128], strides = [1, 1, 1]} : vector<10x10x128xbf16> to vector<8x8x128xbf16>
    %8 = vector.shape_cast %7 : vector<8x8x128xbf16> to vector<64x128xbf16>
    %9 = vector.extract_strided_slice %6 {offsets = [0, 1, 0], sizes = [8, 8, 128], strides = [1, 1, 1]} : vector<10x10x128xbf16> to vector<8x8x128xbf16>
    %10 = vector.shape_cast %9 : vector<8x8x128xbf16> to vector<64x128xbf16>
    %11 = vector.extract_strided_slice %6 {offsets = [0, 2, 0], sizes = [8, 8, 128], strides = [1, 1, 1]} : vector<10x10x128xbf16> to vector<8x8x128xbf16>
    %12 = vector.shape_cast %11 : vector<8x8x128xbf16> to vector<64x128xbf16>
    %13 = vector.extract_strided_slice %6 {offsets = [1, 0, 0], sizes = [8, 8, 128], strides = [1, 1, 1]} : vector<10x10x128xbf16> to vector<8x8x128xbf16>
    %14 = vector.shape_cast %13 : vector<8x8x128xbf16> to vector<64x128xbf16>
    %15 = vector.extract_strided_slice %6 {offsets = [1, 1, 0], sizes = [8, 8, 128], strides = [1, 1, 1]} : vector<10x10x128xbf16> to vector<8x8x128xbf16>
    %16 = vector.shape_cast %15 : vector<8x8x128xbf16> to vector<64x128xbf16>
    %17 = vector.extract_strided_slice %6 {offsets = [1, 2, 0], sizes = [8, 8, 128], strides = [1, 1, 1]} : vector<10x10x128xbf16> to vector<8x8x128xbf16>
    %18 = vector.shape_cast %17 : vector<8x8x128xbf16> to vector<64x128xbf16>
    %19 = vector.extract_strided_slice %6 {offsets = [2, 0, 0], sizes = [8, 8, 128], strides = [1, 1, 1]} : vector<10x10x128xbf16> to vector<8x8x128xbf16>
    %20 = vector.shape_cast %19 : vector<8x8x128xbf16> to vector<64x128xbf16>
    %21 = vector.extract_strided_slice %6 {offsets = [2, 1, 0], sizes = [8, 8, 128], strides = [1, 1, 1]} : vector<10x10x128xbf16> to vector<8x8x128xbf16>
    %22 = vector.shape_cast %21 : vector<8x8x128xbf16> to vector<64x128xbf16>
    %23 = vector.extract_strided_slice %6 {offsets = [2, 2, 0], sizes = [8, 8, 128], strides = [1, 1, 1]} : vector<10x10x128xbf16> to vector<8x8x128xbf16>
    %24 = vector.shape_cast %23 : vector<8x8x128xbf16> to vector<64x128xbf16>
    %25 = tpu.concatenate %8, %10, %12, %14, %16, %18, %20, %22, %24 in 1 : vector<64x128xbf16>, vector<64x128xbf16>, vector<64x128xbf16>, vector<64x128xbf16>, vector<64x128xbf16>, vector<64x128xbf16>, vector<64x128xbf16>, vector<64x128xbf16>, vector<64x128xbf16> -> vector<64x1152xbf16>
    %c0_4 = arith.constant 0 : index
    %c0_5 = arith.constant 0 : index
    %26 = vector.load %arg2[%c0_4, %c0_5] : memref<1152x128xbf16, #tpu.memory_space<vmem>>, vector<1152x128xbf16>
    %cst_6 = arith.constant dense<0.000000e+00> : vector<64x128xf32>
    %27 = tpu.matmul %25, %26, %cst_6 {dimension_numbers = #tpu.dot_dimension_numbers<[1], [0], [0], [1], [0, 0, 1, 1], [], []>} : vector<64x1152xbf16>, vector<1152x128xbf16>, vector<64x128xf32> -> vector<64x128xf32>
    %c0_7 = arith.constant 0 : index
    %c0_8 = arith.constant 0 : index
    %28 = vector.load %arg3[%c0_7, %c0_8] : memref<1x128xf32, #tpu.memory_space<vmem>>, vector<1x128xf32>
    %29 = vector.broadcast %28 : vector<1x128xf32> to vector<64x128xf32>
    %30 = arith.addf %27, %29 : vector<64x128xf32>
    %cst_9 = arith.constant 0.000000e+00 : f32
    %31 = vector.broadcast %cst_9 : f32 to vector<64x128xf32>
    %32 = arith.maximumf %30, %31 : vector<64x128xf32>
    %33 = arith.truncf %32 : vector<64x128xf32> to vector<64x128xbf16>
    %34 = vector.shape_cast %33 : vector<64x128xbf16> to vector<8x8x128xbf16>
    %cst_10 = arith.constant 0.000000e+00 : bf16
    %35 = vector.broadcast %cst_10 : bf16 to vector<1x8x128xbf16>
    %36 = tpu.concatenate %35, %34, %35 in 0 : vector<1x8x128xbf16>, vector<8x8x128xbf16>, vector<1x8x128xbf16> -> vector<10x8x128xbf16>
    %cst_11 = arith.constant 0.000000e+00 : bf16
    %37 = vector.broadcast %cst_11 : bf16 to vector<10x1x128xbf16>
    %38 = tpu.concatenate %37, %36, %37 in 1 : vector<10x1x128xbf16>, vector<10x8x128xbf16>, vector<10x1x128xbf16> -> vector<10x10x128xbf16>
    %39 = vector.extract_strided_slice %38 {offsets = [0, 0, 0], sizes = [8, 8, 128], strides = [1, 1, 1]} : vector<10x10x128xbf16> to vector<8x8x128xbf16>
    %40 = vector.shape_cast %39 : vector<8x8x128xbf16> to vector<64x128xbf16>
    %41 = vector.extract_strided_slice %38 {offsets = [0, 1, 0], sizes = [8, 8, 128], strides = [1, 1, 1]} : vector<10x10x128xbf16> to vector<8x8x128xbf16>
    %42 = vector.shape_cast %41 : vector<8x8x128xbf16> to vector<64x128xbf16>
    %43 = vector.extract_strided_slice %38 {offsets = [0, 2, 0], sizes = [8, 8, 128], strides = [1, 1, 1]} : vector<10x10x128xbf16> to vector<8x8x128xbf16>
    %44 = vector.shape_cast %43 : vector<8x8x128xbf16> to vector<64x128xbf16>
    %45 = vector.extract_strided_slice %38 {offsets = [1, 0, 0], sizes = [8, 8, 128], strides = [1, 1, 1]} : vector<10x10x128xbf16> to vector<8x8x128xbf16>
    %46 = vector.shape_cast %45 : vector<8x8x128xbf16> to vector<64x128xbf16>
    %47 = vector.extract_strided_slice %38 {offsets = [1, 1, 0], sizes = [8, 8, 128], strides = [1, 1, 1]} : vector<10x10x128xbf16> to vector<8x8x128xbf16>
    %48 = vector.shape_cast %47 : vector<8x8x128xbf16> to vector<64x128xbf16>
    %49 = vector.extract_strided_slice %38 {offsets = [1, 2, 0], sizes = [8, 8, 128], strides = [1, 1, 1]} : vector<10x10x128xbf16> to vector<8x8x128xbf16>
    %50 = vector.shape_cast %49 : vector<8x8x128xbf16> to vector<64x128xbf16>
    %51 = vector.extract_strided_slice %38 {offsets = [2, 0, 0], sizes = [8, 8, 128], strides = [1, 1, 1]} : vector<10x10x128xbf16> to vector<8x8x128xbf16>
    %52 = vector.shape_cast %51 : vector<8x8x128xbf16> to vector<64x128xbf16>
    %53 = vector.extract_strided_slice %38 {offsets = [2, 1, 0], sizes = [8, 8, 128], strides = [1, 1, 1]} : vector<10x10x128xbf16> to vector<8x8x128xbf16>
    %54 = vector.shape_cast %53 : vector<8x8x128xbf16> to vector<64x128xbf16>
    %55 = vector.extract_strided_slice %38 {offsets = [2, 2, 0], sizes = [8, 8, 128], strides = [1, 1, 1]} : vector<10x10x128xbf16> to vector<8x8x128xbf16>
    %56 = vector.shape_cast %55 : vector<8x8x128xbf16> to vector<64x128xbf16>
    %57 = tpu.concatenate %40, %42, %44, %46, %48, %50, %52, %54, %56 in 1 : vector<64x128xbf16>, vector<64x128xbf16>, vector<64x128xbf16>, vector<64x128xbf16>, vector<64x128xbf16>, vector<64x128xbf16>, vector<64x128xbf16>, vector<64x128xbf16>, vector<64x128xbf16> -> vector<64x1152xbf16>
    %c0_12 = arith.constant 0 : index
    %c0_13 = arith.constant 0 : index
    %58 = vector.load %arg4[%c0_12, %c0_13] : memref<1152x128xbf16, #tpu.memory_space<vmem>>, vector<1152x128xbf16>
    %cst_14 = arith.constant dense<0.000000e+00> : vector<64x128xf32>
    %59 = tpu.matmul %57, %58, %cst_14 {dimension_numbers = #tpu.dot_dimension_numbers<[1], [0], [0], [1], [0, 0, 1, 1], [], []>} : vector<64x1152xbf16>, vector<1152x128xbf16>, vector<64x128xf32> -> vector<64x128xf32>
    %c0_15 = arith.constant 0 : index
    %c0_16 = arith.constant 0 : index
    %60 = vector.load %arg5[%c0_15, %c0_16] : memref<1x128xf32, #tpu.memory_space<vmem>>, vector<1x128xf32>
    %61 = vector.broadcast %60 : vector<1x128xf32> to vector<64x128xf32>
    %62 = arith.addf %59, %61 : vector<64x128xf32>
    %cst_17 = arith.constant dense<0.000000e+00> : vector<128xf32>
    %63 = vector.multi_reduction <add>, %62, %cst_17 [0] : vector<64x128xf32> to vector<128xf32>
    %64 = vector.shape_cast %63 : vector<128xf32> to vector<1x128xf32>
    %cst_18 = arith.constant 1.562500e-02 : f32
    %65 = vector.broadcast %cst_18 : f32 to vector<1x128xf32>
    %66 = arith.mulf %64, %65 : vector<1x128xf32>
    %c0_19 = arith.constant 0 : index
    %c0_20 = arith.constant 0 : index
    %67 = vector.load %arg6[%c0_19, %c0_20] : memref<128x128xbf16, #tpu.memory_space<vmem>>, vector<128x128xbf16>
    %68 = arith.extf %67 : vector<128x128xbf16> to vector<128x128xf32>
    %cst_21 = arith.constant dense<0.000000e+00> : vector<1x128xf32>
    %69 = tpu.matmul %66, %68, %cst_21 {dimension_numbers = #tpu.dot_dimension_numbers<[1], [0], [0], [1], [0, 0, 1, 1], [], []>} : vector<1x128xf32>, vector<128x128xf32>, vector<1x128xf32> -> vector<1x128xf32>
    %c0_22 = arith.constant 0 : index
    %c0_23 = arith.constant 0 : index
    %70 = vector.load %arg7[%c0_22, %c0_23] : memref<1x128xf32, #tpu.memory_space<vmem>>, vector<1x128xf32>
    %71 = arith.addf %69, %70 : vector<1x128xf32>
    %cst_24 = arith.constant 0.000000e+00 : f32
    %72 = vector.broadcast %cst_24 : f32 to vector<1x128xf32>
    %73 = arith.maximumf %71, %72 : vector<1x128xf32>
    %c0_25 = arith.constant 0 : index
    %c0_26 = arith.constant 0 : index
    %74 = vector.load %arg8[%c0_25, %c0_26] : memref<128x128xbf16, #tpu.memory_space<vmem>>, vector<128x128xbf16>
    %75 = arith.extf %74 : vector<128x128xbf16> to vector<128x128xf32>
    %cst_27 = arith.constant dense<0.000000e+00> : vector<1x128xf32>
    %76 = tpu.matmul %73, %75, %cst_27 {dimension_numbers = #tpu.dot_dimension_numbers<[1], [0], [0], [1], [0, 0, 1, 1], [], []>} : vector<1x128xf32>, vector<128x128xf32>, vector<1x128xf32> -> vector<1x128xf32>
    %c0_28 = arith.constant 0 : index
    %c0_29 = arith.constant 0 : index
    %77 = vector.load %arg9[%c0_28, %c0_29] : memref<1x128xf32, #tpu.memory_space<vmem>>, vector<1x128xf32>
    %78 = arith.addf %76, %77 : vector<1x128xf32>
    %79 = arith.negf %78 : vector<1x128xf32>
    %80 = math.exp %79 : vector<1x128xf32>
    %cst_30 = arith.constant 1.000000e+00 : f32
    %81 = vector.broadcast %cst_30 : f32 to vector<1x128xf32>
    %82 = arith.addf %81, %80 : vector<1x128xf32>
    %83 = arith.divf %81, %82 : vector<1x128xf32>
    %84 = vector.broadcast %83 : vector<1x128xf32> to vector<64x128xf32>
    %85 = arith.mulf %62, %84 : vector<64x128xf32>
    %86 = vector.shape_cast %1 : vector<8x8x128xf32> to vector<64x128xf32>
    %87 = arith.addf %85, %86 : vector<64x128xf32>
    %88 = vector.shape_cast %87 : vector<64x128xf32> to vector<1x8x8x128xf32>
    %c0_31 = arith.constant 0 : index
    %c0_32 = arith.constant 0 : index
    %c0_33 = arith.constant 0 : index
    %c0_34 = arith.constant 0 : index
    %89 = vector.load %arg10[%c0_31, %c0_32, %c0_33, %c0_34] : memref<1x8x8x128xf32, #tpu.memory_space<vmem>>, vector<1x8x8x128xf32>
    tpu.vector_store %arg10[%c0_31, %c0_32, %c0_33, %c0_34], %88 {strides = array<i32>} : memref<1x8x8x128xf32, #tpu.memory_space<vmem>>, vector<1x8x8x128xf32>,
    return
  }
  func.func @transform_0(%arg0: i32) -> (i32, i32, i32, i32) {
    %c0_i32 = arith.constant 0 : i32
    %c0_i32_0 = arith.constant 0 : i32
    %c0_i32_1 = arith.constant 0 : i32
    %c0_i32_2 = arith.constant 0 : i32
    return %arg0, %c0_i32, %c0_i32_0, %c0_i32_1 : i32, i32, i32, i32
  }
  func.func @transform_1(%arg0: i32) -> (i32, i32) {
    %c0_i32 = arith.constant 0 : i32
    %c0_i32_0 = arith.constant 0 : i32
    %c0_i32_1 = arith.constant 0 : i32
    return %c0_i32, %c0_i32_0 : i32, i32
  }
  func.func @transform_2(%arg0: i32) -> (i32, i32) {
    %c0_i32 = arith.constant 0 : i32
    %c0_i32_0 = arith.constant 0 : i32
    %c0_i32_1 = arith.constant 0 : i32
    return %c0_i32, %c0_i32_0 : i32, i32
  }
  func.func @transform_3(%arg0: i32) -> (i32, i32) {
    %c0_i32 = arith.constant 0 : i32
    %c0_i32_0 = arith.constant 0 : i32
    %c0_i32_1 = arith.constant 0 : i32
    return %c0_i32, %c0_i32_0 : i32, i32
  }
  func.func @transform_4(%arg0: i32) -> (i32, i32) {
    %c0_i32 = arith.constant 0 : i32
    %c0_i32_0 = arith.constant 0 : i32
    %c0_i32_1 = arith.constant 0 : i32
    return %c0_i32, %c0_i32_0 : i32, i32
  }
  func.func @transform_5(%arg0: i32) -> (i32, i32) {
    %c0_i32 = arith.constant 0 : i32
    %c0_i32_0 = arith.constant 0 : i32
    %c0_i32_1 = arith.constant 0 : i32
    return %c0_i32, %c0_i32_0 : i32, i32
  }
  func.func @transform_6(%arg0: i32) -> (i32, i32) {
    %c0_i32 = arith.constant 0 : i32
    %c0_i32_0 = arith.constant 0 : i32
    %c0_i32_1 = arith.constant 0 : i32
    return %c0_i32, %c0_i32_0 : i32, i32
  }
  func.func @transform_7(%arg0: i32) -> (i32, i32) {
    %c0_i32 = arith.constant 0 : i32
    %c0_i32_0 = arith.constant 0 : i32
    %c0_i32_1 = arith.constant 0 : i32
    return %c0_i32, %c0_i32_0 : i32, i32
  }
  func.func @transform_8(%arg0: i32) -> (i32, i32) {
    %c0_i32 = arith.constant 0 : i32
    %c0_i32_0 = arith.constant 0 : i32
    %c0_i32_1 = arith.constant 0 : i32
    return %c0_i32, %c0_i32_0 : i32, i32
  }
  func.func @transform_9(%arg0: i32) -> (i32, i32, i32, i32) {
    %c0_i32 = arith.constant 0 : i32
    %c0_i32_0 = arith.constant 0 : i32
    %c0_i32_1 = arith.constant 0 : i32
    %c0_i32_2 = arith.constant 0 : i32
    return %arg0, %c0_i32, %c0_i32_0, %c0_i32_1 : i32, i32, i32, i32
  }
}

module attributes {stable_mosaic.version = 11 : i64} {
  func.func @_conv3x3_kernel(%arg0: i32, %arg1: memref<1x8x8x128xf32, #tpu.memory_space<vmem>>, %arg2: memref<1152x128xbf16, #tpu.memory_space<vmem>>, %arg3: memref<1x128xf32, #tpu.memory_space<vmem>>, %arg4: memref<1x8x8x128xf32, #tpu.memory_space<vmem>>) attributes {dimension_semantics = [#tpu.dimension_semantics<parallel>], iteration_bounds = array<i64: 2>, scalar_prefetch = 0 : i64, scratch_operands = 0 : i64, tpu.core_type = #tpu.core_type<tc>, window_params = [{transform_indices = @transform_0, window_bounds = array<i64: 1, 8, 8, 128>}, {pipeline_mode = #tpu.pipeline_mode<synchronous>, transform_indices = @transform_1, window_bounds = array<i64: 1152, 128>}, {pipeline_mode = #tpu.pipeline_mode<synchronous>, transform_indices = @transform_2, window_bounds = array<i64: 1, 128>}, {transform_indices = @transform_3, window_bounds = array<i64: 1, 8, 8, 128>}]} {
    %c0 = arith.constant 0 : index
    %c0_0 = arith.constant 0 : index
    %c0_1 = arith.constant 0 : index
    %c0_2 = arith.constant 0 : index
    %0 = vector.load %arg1[%c0, %c0_0, %c0_1, %c0_2] : memref<1x8x8x128xf32, #tpu.memory_space<vmem>>, vector<1x8x8x128xf32>
    %1 = vector.shape_cast %0 : vector<1x8x8x128xf32> to vector<8x8x128xf32>
    %2 = arith.truncf %1 : vector<8x8x128xf32> to vector<8x8x128xbf16>
    %cst = arith.constant 0.000000e+00 : bf16
    %3 = vector.broadcast %cst : bf16 to vector<1x8x128xbf16>
    %4 = tpu.concatenate %3, %2, %3 in 0 : vector<1x8x128xbf16>, vector<8x8x128xbf16>, vector<1x8x128xbf16> -> vector<10x8x128xbf16>
    %cst_3 = arith.constant 0.000000e+00 : bf16
    %5 = vector.broadcast %cst_3 : bf16 to vector<10x1x128xbf16>
    %6 = tpu.concatenate %5, %4, %5 in 1 : vector<10x1x128xbf16>, vector<10x8x128xbf16>, vector<10x1x128xbf16> -> vector<10x10x128xbf16>
    %7 = vector.extract_strided_slice %6 {offsets = [0, 0, 0], sizes = [8, 8, 128], strides = [1, 1, 1]} : vector<10x10x128xbf16> to vector<8x8x128xbf16>
    %8 = vector.shape_cast %7 : vector<8x8x128xbf16> to vector<64x128xbf16>
    %9 = vector.extract_strided_slice %6 {offsets = [0, 1, 0], sizes = [8, 8, 128], strides = [1, 1, 1]} : vector<10x10x128xbf16> to vector<8x8x128xbf16>
    %10 = vector.shape_cast %9 : vector<8x8x128xbf16> to vector<64x128xbf16>
    %11 = vector.extract_strided_slice %6 {offsets = [0, 2, 0], sizes = [8, 8, 128], strides = [1, 1, 1]} : vector<10x10x128xbf16> to vector<8x8x128xbf16>
    %12 = vector.shape_cast %11 : vector<8x8x128xbf16> to vector<64x128xbf16>
    %13 = vector.extract_strided_slice %6 {offsets = [1, 0, 0], sizes = [8, 8, 128], strides = [1, 1, 1]} : vector<10x10x128xbf16> to vector<8x8x128xbf16>
    %14 = vector.shape_cast %13 : vector<8x8x128xbf16> to vector<64x128xbf16>
    %15 = vector.extract_strided_slice %6 {offsets = [1, 1, 0], sizes = [8, 8, 128], strides = [1, 1, 1]} : vector<10x10x128xbf16> to vector<8x8x128xbf16>
    %16 = vector.shape_cast %15 : vector<8x8x128xbf16> to vector<64x128xbf16>
    %17 = vector.extract_strided_slice %6 {offsets = [1, 2, 0], sizes = [8, 8, 128], strides = [1, 1, 1]} : vector<10x10x128xbf16> to vector<8x8x128xbf16>
    %18 = vector.shape_cast %17 : vector<8x8x128xbf16> to vector<64x128xbf16>
    %19 = vector.extract_strided_slice %6 {offsets = [2, 0, 0], sizes = [8, 8, 128], strides = [1, 1, 1]} : vector<10x10x128xbf16> to vector<8x8x128xbf16>
    %20 = vector.shape_cast %19 : vector<8x8x128xbf16> to vector<64x128xbf16>
    %21 = vector.extract_strided_slice %6 {offsets = [2, 1, 0], sizes = [8, 8, 128], strides = [1, 1, 1]} : vector<10x10x128xbf16> to vector<8x8x128xbf16>
    %22 = vector.shape_cast %21 : vector<8x8x128xbf16> to vector<64x128xbf16>
    %23 = vector.extract_strided_slice %6 {offsets = [2, 2, 0], sizes = [8, 8, 128], strides = [1, 1, 1]} : vector<10x10x128xbf16> to vector<8x8x128xbf16>
    %24 = vector.shape_cast %23 : vector<8x8x128xbf16> to vector<64x128xbf16>
    %25 = tpu.concatenate %8, %10, %12, %14, %16, %18, %20, %22, %24 in 1 : vector<64x128xbf16>, vector<64x128xbf16>, vector<64x128xbf16>, vector<64x128xbf16>, vector<64x128xbf16>, vector<64x128xbf16>, vector<64x128xbf16>, vector<64x128xbf16>, vector<64x128xbf16> -> vector<64x1152xbf16>
    %c0_4 = arith.constant 0 : index
    %c0_5 = arith.constant 0 : index
    %26 = vector.load %arg2[%c0_4, %c0_5] : memref<1152x128xbf16, #tpu.memory_space<vmem>>, vector<1152x128xbf16>
    %cst_6 = arith.constant dense<0.000000e+00> : vector<64x128xf32>
    %27 = tpu.matmul %25, %26, %cst_6 {dimension_numbers = #tpu.dot_dimension_numbers<[1], [0], [0], [1], [0, 0, 1, 1], [], []>} : vector<64x1152xbf16>, vector<1152x128xbf16>, vector<64x128xf32> -> vector<64x128xf32>
    %c0_7 = arith.constant 0 : index
    %c0_8 = arith.constant 0 : index
    %28 = vector.load %arg3[%c0_7, %c0_8] : memref<1x128xf32, #tpu.memory_space<vmem>>, vector<1x128xf32>
    %29 = vector.broadcast %28 : vector<1x128xf32> to vector<64x128xf32>
    %30 = arith.addf %27, %29 : vector<64x128xf32>
    %31 = vector.shape_cast %30 : vector<64x128xf32> to vector<1x8x8x128xf32>
    %c0_9 = arith.constant 0 : index
    %c0_10 = arith.constant 0 : index
    %c0_11 = arith.constant 0 : index
    %c0_12 = arith.constant 0 : index
    %32 = vector.load %arg4[%c0_9, %c0_10, %c0_11, %c0_12] : memref<1x8x8x128xf32, #tpu.memory_space<vmem>>, vector<1x8x8x128xf32>
    tpu.vector_store %arg4[%c0_9, %c0_10, %c0_11, %c0_12], %31 {strides = array<i32>} : memref<1x8x8x128xf32, #tpu.memory_space<vmem>>, vector<1x8x8x128xf32>,
    return
  }
  func.func @transform_0(%arg0: i32) -> (i32, i32, i32, i32) {
    %c0_i32 = arith.constant 0 : i32
    %c0_i32_0 = arith.constant 0 : i32
    %c0_i32_1 = arith.constant 0 : i32
    %c0_i32_2 = arith.constant 0 : i32
    return %arg0, %c0_i32, %c0_i32_0, %c0_i32_1 : i32, i32, i32, i32
  }
  func.func @transform_1(%arg0: i32) -> (i32, i32) {
    %c0_i32 = arith.constant 0 : i32
    %c0_i32_0 = arith.constant 0 : i32
    %c0_i32_1 = arith.constant 0 : i32
    return %c0_i32, %c0_i32_0 : i32, i32
  }
  func.func @transform_2(%arg0: i32) -> (i32, i32) {
    %c0_i32 = arith.constant 0 : i32
    %c0_i32_0 = arith.constant 0 : i32
    %c0_i32_1 = arith.constant 0 : i32
    return %c0_i32, %c0_i32_0 : i32, i32
  }
  func.func @transform_3(%arg0: i32) -> (i32, i32, i32, i32) {
    %c0_i32 = arith.constant 0 : i32
    %c0_i32_0 = arith.constant 0 : i32
    %c0_i32_1 = arith.constant 0 : i32
    %c0_i32_2 = arith.constant 0 : i32
    return %arg0, %c0_i32, %c0_i32_0, %c0_i32_1 : i32, i32, i32, i32
  }
}

module attributes {stable_mosaic.version = 11 : i64} {
  func.func @_conv3x3_kernel(%arg0: i32, %arg1: memref<1x16x16x128xf32, #tpu.memory_space<vmem>>, %arg2: memref<1152x128xbf16, #tpu.memory_space<vmem>>, %arg3: memref<1x128xf32, #tpu.memory_space<vmem>>, %arg4: memref<1x16x16x128xf32, #tpu.memory_space<vmem>>) attributes {dimension_semantics = [#tpu.dimension_semantics<parallel>], iteration_bounds = array<i64: 2>, scalar_prefetch = 0 : i64, scratch_operands = 0 : i64, tpu.core_type = #tpu.core_type<tc>, window_params = [{transform_indices = @transform_0, window_bounds = array<i64: 1, 16, 16, 128>}, {pipeline_mode = #tpu.pipeline_mode<synchronous>, transform_indices = @transform_1, window_bounds = array<i64: 1152, 128>}, {pipeline_mode = #tpu.pipeline_mode<synchronous>, transform_indices = @transform_2, window_bounds = array<i64: 1, 128>}, {transform_indices = @transform_3, window_bounds = array<i64: 1, 16, 16, 128>}]} {
    %c0 = arith.constant 0 : index
    %c0_0 = arith.constant 0 : index
    %c0_1 = arith.constant 0 : index
    %c0_2 = arith.constant 0 : index
    %0 = vector.load %arg1[%c0, %c0_0, %c0_1, %c0_2] : memref<1x16x16x128xf32, #tpu.memory_space<vmem>>, vector<1x16x16x128xf32>
    %1 = vector.shape_cast %0 : vector<1x16x16x128xf32> to vector<16x16x128xf32>
    %2 = arith.truncf %1 : vector<16x16x128xf32> to vector<16x16x128xbf16>
    %cst = arith.constant 0.000000e+00 : bf16
    %3 = vector.broadcast %cst : bf16 to vector<1x16x128xbf16>
    %4 = tpu.concatenate %3, %2, %3 in 0 : vector<1x16x128xbf16>, vector<16x16x128xbf16>, vector<1x16x128xbf16> -> vector<18x16x128xbf16>
    %cst_3 = arith.constant 0.000000e+00 : bf16
    %5 = vector.broadcast %cst_3 : bf16 to vector<18x1x128xbf16>
    %6 = tpu.concatenate %5, %4, %5 in 1 : vector<18x1x128xbf16>, vector<18x16x128xbf16>, vector<18x1x128xbf16> -> vector<18x18x128xbf16>
    %7 = vector.extract_strided_slice %6 {offsets = [0, 0, 0], sizes = [16, 16, 128], strides = [1, 1, 1]} : vector<18x18x128xbf16> to vector<16x16x128xbf16>
    %8 = vector.shape_cast %7 : vector<16x16x128xbf16> to vector<256x128xbf16>
    %9 = vector.extract_strided_slice %6 {offsets = [0, 1, 0], sizes = [16, 16, 128], strides = [1, 1, 1]} : vector<18x18x128xbf16> to vector<16x16x128xbf16>
    %10 = vector.shape_cast %9 : vector<16x16x128xbf16> to vector<256x128xbf16>
    %11 = vector.extract_strided_slice %6 {offsets = [0, 2, 0], sizes = [16, 16, 128], strides = [1, 1, 1]} : vector<18x18x128xbf16> to vector<16x16x128xbf16>
    %12 = vector.shape_cast %11 : vector<16x16x128xbf16> to vector<256x128xbf16>
    %13 = vector.extract_strided_slice %6 {offsets = [1, 0, 0], sizes = [16, 16, 128], strides = [1, 1, 1]} : vector<18x18x128xbf16> to vector<16x16x128xbf16>
    %14 = vector.shape_cast %13 : vector<16x16x128xbf16> to vector<256x128xbf16>
    %15 = vector.extract_strided_slice %6 {offsets = [1, 1, 0], sizes = [16, 16, 128], strides = [1, 1, 1]} : vector<18x18x128xbf16> to vector<16x16x128xbf16>
    %16 = vector.shape_cast %15 : vector<16x16x128xbf16> to vector<256x128xbf16>
    %17 = vector.extract_strided_slice %6 {offsets = [1, 2, 0], sizes = [16, 16, 128], strides = [1, 1, 1]} : vector<18x18x128xbf16> to vector<16x16x128xbf16>
    %18 = vector.shape_cast %17 : vector<16x16x128xbf16> to vector<256x128xbf16>
    %19 = vector.extract_strided_slice %6 {offsets = [2, 0, 0], sizes = [16, 16, 128], strides = [1, 1, 1]} : vector<18x18x128xbf16> to vector<16x16x128xbf16>
    %20 = vector.shape_cast %19 : vector<16x16x128xbf16> to vector<256x128xbf16>
    %21 = vector.extract_strided_slice %6 {offsets = [2, 1, 0], sizes = [16, 16, 128], strides = [1, 1, 1]} : vector<18x18x128xbf16> to vector<16x16x128xbf16>
    %22 = vector.shape_cast %21 : vector<16x16x128xbf16> to vector<256x128xbf16>
    %23 = vector.extract_strided_slice %6 {offsets = [2, 2, 0], sizes = [16, 16, 128], strides = [1, 1, 1]} : vector<18x18x128xbf16> to vector<16x16x128xbf16>
    %24 = vector.shape_cast %23 : vector<16x16x128xbf16> to vector<256x128xbf16>
    %25 = tpu.concatenate %8, %10, %12, %14, %16, %18, %20, %22, %24 in 1 : vector<256x128xbf16>, vector<256x128xbf16>, vector<256x128xbf16>, vector<256x128xbf16>, vector<256x128xbf16>, vector<256x128xbf16>, vector<256x128xbf16>, vector<256x128xbf16>, vector<256x128xbf16> -> vector<256x1152xbf16>
    %c0_4 = arith.constant 0 : index
    %c0_5 = arith.constant 0 : index
    %26 = vector.load %arg2[%c0_4, %c0_5] : memref<1152x128xbf16, #tpu.memory_space<vmem>>, vector<1152x128xbf16>
    %cst_6 = arith.constant dense<0.000000e+00> : vector<256x128xf32>
    %27 = tpu.matmul %25, %26, %cst_6 {dimension_numbers = #tpu.dot_dimension_numbers<[1], [0], [0], [1], [0, 0, 1, 1], [], []>} : vector<256x1152xbf16>, vector<1152x128xbf16>, vector<256x128xf32> -> vector<256x128xf32>
    %c0_7 = arith.constant 0 : index
    %c0_8 = arith.constant 0 : index
    %28 = vector.load %arg3[%c0_7, %c0_8] : memref<1x128xf32, #tpu.memory_space<vmem>>, vector<1x128xf32>
    %29 = vector.broadcast %28 : vector<1x128xf32> to vector<256x128xf32>
    %30 = arith.addf %27, %29 : vector<256x128xf32>
    %31 = vector.shape_cast %30 : vector<256x128xf32> to vector<1x16x16x128xf32>
    %c0_9 = arith.constant 0 : index
    %c0_10 = arith.constant 0 : index
    %c0_11 = arith.constant 0 : index
    %c0_12 = arith.constant 0 : index
    %32 = vector.load %arg4[%c0_9, %c0_10, %c0_11, %c0_12] : memref<1x16x16x128xf32, #tpu.memory_space<vmem>>, vector<1x16x16x128xf32>
    tpu.vector_store %arg4[%c0_9, %c0_10, %c0_11, %c0_12], %31 {strides = array<i32>} : memref<1x16x16x128xf32, #tpu.memory_space<vmem>>, vector<1x16x16x128xf32>,
    return
  }
  func.func @transform_0(%arg0: i32) -> (i32, i32, i32, i32) {
    %c0_i32 = arith.constant 0 : i32
    %c0_i32_0 = arith.constant 0 : i32
    %c0_i32_1 = arith.constant 0 : i32
    %c0_i32_2 = arith.constant 0 : i32
    return %arg0, %c0_i32, %c0_i32_0, %c0_i32_1 : i32, i32, i32, i32
  }
  func.func @transform_1(%arg0: i32) -> (i32, i32) {
    %c0_i32 = arith.constant 0 : i32
    %c0_i32_0 = arith.constant 0 : i32
    %c0_i32_1 = arith.constant 0 : i32
    return %c0_i32, %c0_i32_0 : i32, i32
  }
  func.func @transform_2(%arg0: i32) -> (i32, i32) {
    %c0_i32 = arith.constant 0 : i32
    %c0_i32_0 = arith.constant 0 : i32
    %c0_i32_1 = arith.constant 0 : i32
    return %c0_i32, %c0_i32_0 : i32, i32
  }
  func.func @transform_3(%arg0: i32) -> (i32, i32, i32, i32) {
    %c0_i32 = arith.constant 0 : i32
    %c0_i32_0 = arith.constant 0 : i32
    %c0_i32_1 = arith.constant 0 : i32
    %c0_i32_2 = arith.constant 0 : i32
    return %arg0, %c0_i32, %c0_i32_0, %c0_i32_1 : i32, i32, i32, i32
  }
}

</mosaic_0001>

<llo_original>
// kernel: rcan_forward.10
$region0: #{rcan_forward.10}
  #allocation0 [shape = 'u32[]', space=smem, size = 0x4, offset = 0x4, fixed_abs, tag = 'smem constant byte address 0x4 - core index']
  #allocation1 [shape = 'u32[144,128]{1,0:T(1,128)}', space=vmem, size = 0x12000, scoped, tag = 'internal scratch']
  %s0 = inlined_call_operand.vmem [shape: f32[2,8,8,128], index: 0, kind: input, shape index: {}]
  %s1 = inlined_call_operand.hbm [shape: bf16[1152,128], index: 1, kind: input, shape index: {}]
  %s2 = inlined_call_operand.vmem [shape: f32[1,128], index: 2, kind: input, shape index: {}]
  %s3 = inlined_call_operand.vmem [shape: f32[2,8,8,128], index: 3, kind: output, shape index: {}]
  %s4 = sld [smem:[#allocation0]]
  $region49: #{rcan_forward.10} parent=0
    _
  %s6 = ssub.s32 1, %s4
  %s7 = scalar_select 0, %s6, %s4
  $region1: #{rcan_forward.10} parent=0
    #allocation2 [shape = 'u8[294912]{0}', space=vmem, size = 0x48000, scoped, tag = 'input window, operand 1, single buffered']
    #allocation3 [shape = 's32[2]{0}', space=sflag, size = 0x8, scoped, tag = 'scoped memory for rcan_forward.10']
    %8 = vsyncpa [#allocation3], 0
    loop: start=0, step=1, limit=4
    $region2: #{rcan_forward.10} parent=1 // loop_pre_header
      _
    $region3: #{rcan_forward.10} parent=1 // loop_header
      %s10 = sphi 0, %s14
      %p11 = scmp.ge.s32.totalorder %s10, 4
      %s20 = sphi 0, %s22
      %s23 = sphi 0, %s20
      %s24 = sphi 0, %s23
      %s40 = sphi 0, %s24
      %s44 = sphi 0, %s44
      %s46 = sphi 0, %s44
      %s47 = sphi 0, %s46
      %s61 = sphi 0, %s47
      %s65 = sphi 0, %s65
      %s67 = sphi 0, %s65
      %s68 = sphi 0, %s67
      %s82 = sphi 0, %s68
      %s88 = sphi 0, %s90
      %s91 = sphi 0, %s88
      %s92 = sphi 0, %s91
      %s108 = sphi 0, %s92
    $region4: #{rcan_forward.10} parent=1 // loop_header_branch
      %13 = sbr.rel (%p11) target = $region8
    $region5: #{rcan_forward.10} parent=1 // loop_body
      %s15 = ssub.s32 %s10, 1
      %s16 = ssub.s32 %s10, 2
      %s17 = sadd.s32 %s10, 1
      %s18 = ssub.s32 %s10, %s17
      %p19 = scmp.eq.s32.totalorder %s18, 0
      %s21 = sadd.s32 %s20, 1
      %s22 = scalar_select %p19, %s20, %s21
      %p25 = pneg %p19
      %p26 = scmp.eq.s32.totalorder %s10, 1
      %p27 = por %p25, %p26
      %p28 = scmp.ne.s32.totalorder %s20, %s23
      %p29 = scmp.eq.s32.totalorder %s10, 0
      %p30 = por %p28, %p29
      %p31 = scmp.ne.s32.totalorder %s20, %s23
      %p32 = scmp.eq.s32.totalorder %s15, 1
      %p33 = por %p31, %p32
      %p34 = scmp.ne.s32.totalorder %s23, %s24
      %p35 = scmp.eq.s32.totalorder %s15, 0
      %p36 = por %p34, %p35
      %p37 = scmp.ne.s32.totalorder %s23, %s24
      %p38 = scmp.eq.s32.totalorder %s16, 1
      %p39 = por %p37, %p38
      %p41 = scmp.ne.s32.totalorder %s24, %s40
      %p42 = scmp.eq.s32.totalorder %s16, 0
      %p43 = por %p41, %p42
      %s45 = sadd.s32 %s44, 1
      %p48 = scmp.eq.s32.totalorder %s10, 1
      %p49 = scmp.ne.s32.totalorder %s44, %s46
      %p50 = scmp.eq.s32.totalorder %s10, 0
      %p51 = por %p49, %p50
      %p52 = scmp.ne.s32.totalorder %s44, %s46
      %p53 = scmp.eq.s32.totalorder %s15, 1
      %p54 = por %p52, %p53
      %p55 = scmp.ne.s32.totalorder %s46, %s47
      %p56 = scmp.eq.s32.totalorder %s15, 0
      %p57 = por %p55, %p56
      %p58 = scmp.ne.s32.totalorder %s46, %s47
      %p59 = scmp.eq.s32.totalorder %s16, 1
      %p60 = por %p58, %p59
      %p62 = scmp.ne.s32.totalorder %s47, %s61
      %p63 = scmp.eq.s32.totalorder %s16, 0
      %p64 = por %p62, %p63
      %s66 = sadd.s32 %s65, 1
      %p69 = scmp.eq.s32.totalorder %s10, 1
      %p70 = scmp.ne.s32.totalorder %s65, %s67
      %p71 = scmp.eq.s32.totalorder %s10, 0
      %p72 = por %p70, %p71
      %p73 = scmp.ne.s32.totalorder %s65, %s67
      %p74 = scmp.eq.s32.totalorder %s15, 1
      %p75 = por %p73, %p74
      %p76 = scmp.ne.s32.totalorder %s67, %s68
      %p77 = scmp.eq.s32.totalorder %s15, 0
      %p78 = por %p76, %p77
      %p79 = scmp.ne.s32.totalorder %s67, %s68
      %p80 = scmp.eq.s32.totalorder %s16, 1
      %p81 = por %p79, %p80
      %p83 = scmp.ne.s32.totalorder %s68, %s82
      %p84 = scmp.eq.s32.totalorder %s16, 0
      %p85 = por %p83, %p84
      %s86 = ssub.s32 %s10, %s17
      %p87 = scmp.eq.s32.totalorder %s86, 0
      %s89 = sadd.s32 %s88, 1
      %s90 = scalar_select %p87, %s88, %s89
      %p93 = pneg %p87
      %p94 = scmp.eq.s32.totalorder %s10, 1
      %p95 = por %p93, %p94
      %p96 = scmp.ne.s32.totalorder %s88, %s91
      %p97 = scmp.eq.s32.totalorder %s10, 0
      %p98 = por %p96, %p97
      %p99 = scmp.ne.s32.totalorder %s88, %s91
      %p100 = scmp.eq.s32.totalorder %s15, 1
      %p101 = por %p99, %p100
      %p102 = scmp.ne.s32.totalorder %s91, %s92
      %p103 = scmp.eq.s32.totalorder %s15, 0
      %p104 = por %p102, %p103
      %p105 = scmp.ne.s32.totalorder %s91, %s92
      %p106 = scmp.eq.s32.totalorder %s16, 1
      %p107 = por %p105, %p106
      %p109 = scmp.ne.s32.totalorder %s92, %s108
      %p110 = scmp.eq.s32.totalorder %s16, 0
      %p111 = por %p109, %p110
      %p112 = scmp.le.s32.totalorder 1, %s10
      %p113 = scmp.lt.s32.totalorder %s10, 3
      %p114 = pnand %p112, %p113
      %p115 = pneg %p114
      // Predicated region
      $region9: #{rcan_forward.10} parent=5 // pred_check
        _
      $region10: #{rcan_forward.10} parent=5 // pred_check_branch
        %117 = sbr.rel (%p114) target = $region12
      $region11: #{rcan_forward.10} parent=5 // pred_region
        %s118 = ssub.s32 %s10, 1
        // Predicated region
        $region13: #{rcan_forward.10} parent=11 // pred_check
          %p119 = pneg %p57
        $region14: #{rcan_forward.10} parent=11 // pred_check_branch
          %121 = sbr.rel (%p119) target = $region16
        $region15: #{rcan_forward.10} parent=11 // pred_region
          %s123 = ssub.s32 9216, 9216
          %124 = vsyncadd [#allocation3], %s123
          %s125 = sshll.u32 [#allocation2], 4
          %s126 = int_to_ptr.vmem [resolvable:$true] %s125
          %131 = dma.hbm_to_vmem [thread:$0]  %s1, 9216, %s126, [#allocation3], 64, 64, 4
        $region16: #{rcan_forward.10} parent=11 // pred_fallthru
          _
        // Predicated region
        $region17: #{rcan_forward.10} parent=11 // pred_check
          %p132 = pneg %p78
        $region18: #{rcan_forward.10} parent=11 // pred_check_branch
          %134 = sbr.rel (%p132) target = $region20
        $region19: #{rcan_forward.10} parent=11 // pred_region
          _
        $region20: #{rcan_forward.10} parent=11 // pred_fallthru
          _
      $region12: #{rcan_forward.10} parent=5 // pred_fallthru
        _
      %p135 = scmp.lt.s32.totalorder %s10, 2
      // Predicated region
      $region21: #{rcan_forward.10} parent=5 // pred_check
        %p136 = pneg %p135
      $region22: #{rcan_forward.10} parent=5 // pred_check_branch
        %138 = sbr.rel (%p136) target = $region24
      $region23: #{rcan_forward.10} parent=5 // pred_region
        // Predicated region
        $region25: #{rcan_forward.10} parent=23 // pred_check
          %p139 = pneg %p30
        $region26: #{rcan_forward.10} parent=23 // pred_check_branch
          %141 = sbr.rel (%p139) target = $region28
        $region27: #{rcan_forward.10} parent=23 // pred_region
          %p142 = scmp.lt.s32.totalorder %s10, 1
          %s143 = scalar_select %p142, %s10, 1
          %s144 = smul.addr %s143, 8
          %s145 = smul.addr %s144, 8
          %s146 = scalar_lea.vmem %s0, %s145
        $region28: #{rcan_forward.10} parent=23 // pred_fallthru
          _
      $region24: #{rcan_forward.10} parent=5 // pred_fallthru
        _
      %p147 = scmp.le.s32.totalorder 1, %s10
      %p148 = scmp.lt.s32.totalorder %s10, 3
      %p149 = pnand %p147, %p148
      %p150 = pneg %p149
      // Predicated region
      $region29: #{rcan_forward.10} parent=5 // pred_check
        _
      $region30: #{rcan_forward.10} parent=5 // pred_check_branch
        %152 = sbr.rel (%p149) target = $region32
      $region31: #{rcan_forward.10} parent=5 // pred_region
        %s153 = ssub.s32 %s10, 1
        // Predicated region
        $region33: #{rcan_forward.10} parent=31 // pred_check
          %p154 = pneg %p57
        $region34: #{rcan_forward.10} parent=31 // pred_check_branch
          %156 = sbr.rel (%p154) target = $region36
        $region35: #{rcan_forward.10} parent=31 // pred_region
          %157 = dma.done [#allocation3], 9216
        $region36: #{rcan_forward.10} parent=31 // pred_fallthru
          _
        %p158 = scmp.lt.s32.totalorder %s15, 1
        %s159 = scalar_select %p158, %s15, 1
        %s160 = smul.addr %s159, 8
        %s161 = smul.addr %s160, 8
        %s162 = scalar_lea.vmem %s0, %s161
        %p163 = pneg %p36
        %p164 = pneg %p33
        %p165 = pneg %p57
        %p166 = pneg %p54
        %p167 = pneg %p78
        %p168 = pneg %p75
        %p169 = pneg %p104
        %p170 = pneg %p101
        %p171 = scmp.lt.s32.totalorder %s15, 1
        %s172 = scalar_select %p171, %s15, 1
        %s173 = smul.addr %s172, 8
        %s174 = smul.addr %s173, 8
        %s175 = scalar_lea.vmem %s3, %s174
        %p176 = scmp.lt.s32.totalorder %s15, 1
        %s177 = scalar_select %p176, %s15, 1
        %s178 = smul.addr %s177, 8
        %s179 = smul.addr %s178, 8
        %s180 = scalar_lea.vmem %s0, %s179
        %p181 = scmp.lt.s32.totalorder %s15, 1
        %s182 = scalar_select %p181, %s15, 1
        %s183 = smul.addr %s182, 8
        %s184 = smul.addr %s183, 8
        %s185 = scalar_lea.vmem %s3, %s184
        %v187 = vld [vmem:[%s180] sm:$0xff]
        %v188 = vld [vmem:[%s180 + $0x8] sm:$0xff]
        %v189 = vld [vmem:[%s180 + $0x10] sm:$0xff]
        %v190 = vld [vmem:[%s180 + $0x18] sm:$0xff]
        %v191 = vld [vmem:[%s180 + $0x20] sm:$0xff]
        %v192 = vld [vmem:[%s180 + $0x28] sm:$0xff]
        %v193 = vld [vmem:[%s180 + $0x30] sm:$0xff]
        %v194 = vld [vmem:[%s180 + $0x38] sm:$0xff]
        %v195 = vpack.c.bf16 %v187, %v187
        %v196 = vpack.c.bf16 %v188, %v188
        %v197 = vpack.c.bf16 %v189, %v189
        %v198 = vpack.c.bf16 %v190, %v190
        %v199 = vpack.c.bf16 %v191, %v191
        %v200 = vpack.c.bf16 %v192, %v192
        %v201 = vpack.c.bf16 %v193, %v193
        %v202 = vpack.c.bf16 %v194, %v194
        %v204 = vshrl.u32 0, 16
        %v206 = vrot.slane %v204, 7
        %v207 = vshll.u32 0, 16
        %v209 = vor.u32 %v206, %v207
        %v211 = vshrl.u32 %v195, 16
        %v213 = vrot.slane %v211, 7
        %v214 = vshll.u32 %v195, 16
        %v216 = vor.u32 %v213, %v214
        %v218 = vshrl.u32 %v196, 16
        %v220 = vrot.slane %v218, 7
        %v221 = vshll.u32 %v196, 16
        %v223 = vor.u32 %v220, %v221
        %v225 = vshrl.u32 %v197, 16
        %v227 = vrot.slane %v225, 7
        %v228 = vshll.u32 %v197, 16
        %v230 = vor.u32 %v227, %v228
        %v232 = vshrl.u32 %v198, 16
        %v234 = vrot.slane %v232, 7
        %v235 = vshll.u32 %v198, 16
        %v237 = vor.u32 %v234, %v235
        %v239 = vshrl.u32 %v199, 16
        %v241 = vrot.slane %v239, 7
        %v242 = vshll.u32 %v199, 16
        %v244 = vor.u32 %v241, %v242
        %v246 = vshrl.u32 %v200, 16
        %v248 = vrot.slane %v246, 7
        %v249 = vshll.u32 %v200, 16
        %v251 = vor.u32 %v248, %v249
        %v253 = vshrl.u32 %v201, 16
        %v255 = vrot.slane %v253, 7
        %v256 = vshll.u32 %v201, 16
        %v258 = vor.u32 %v255, %v256
        %v260 = vshrl.u32 %v202, 16
        %v262 = vrot.slane %v260, 7
        %v263 = vshll.u32 %v202, 16
        %v265 = vor.u32 %v262, %v263
        %vm275 = vcmask 1040384
        %vm276 = vsmask.f32 256
        %vm277 = vmand %vm275, %vm276
        %v278 = vsel %vm277, 0, %v209
        %v279 = vsel %vm277, 0, %v216
        %v280 = vsel %vm277, 0, %v223
        %v281 = vsel %vm277, 0, %v230
        %v282 = vsel %vm277, 0, %v237
        %v283 = vsel %vm277, 0, %v244
        %v284 = vsel %vm277, 0, %v251
        %v285 = vsel %vm277, 0, %v258
        %v286 = vsel %vm277, 0, %v265
        %vm287 = vcmask 1044480
        %vm288 = vsmask.f32 4352
        %vm289 = vmand %vm287, %vm288
        %v290 = vsel %vm289, %v278, 0
        %v291 = vsel %vm289, %v279, 0
        %v292 = vsel %vm289, %v280, 0
        %v293 = vsel %vm289, %v281, 0
        %v294 = vsel %vm289, %v282, 0
        %v295 = vsel %vm289, %v283, 0
        %v296 = vsel %vm289, %v284, 0
        %v297 = vsel %vm289, %v285, 0
        %v298 = vsel %vm289, %v286, 0
        %v307 = vunpack.c.l.b16 %v290
        %v308 = vunpack.c.h.b16 %v290
        %v309 = vunpack.c.l.b16 %v291
        %v310 = vunpack.c.h.b16 %v291
        %v311 = vunpack.c.l.b16 %v292
        %v312 = vunpack.c.h.b16 %v292
        %v313 = vunpack.c.l.b16 %v293
        %v314 = vunpack.c.h.b16 %v293
        %v315 = vunpack.c.l.b16 %v294
        %v316 = vunpack.c.h.b16 %v294
        %v317 = vunpack.c.l.b16 %v295
        %v318 = vunpack.c.h.b16 %v295
        %v319 = vunpack.c.l.b16 %v296
        %v320 = vunpack.c.h.b16 %v296
        %v321 = vunpack.c.l.b16 %v297
        %v322 = vunpack.c.h.b16 %v297
        %v323 = vpack.c.b16 %v307, %v307
        %v324 = vpack.c.b16 %v308, %v308
        %v325 = vpack.c.b16 %v309, %v309
        %v326 = vpack.c.b16 %v310, %v310
        %v327 = vpack.c.b16 %v311, %v311
        %v328 = vpack.c.b16 %v312, %v312
        %v329 = vpack.c.b16 %v313, %v313
        %v330 = vpack.c.b16 %v314, %v314
        %v331 = vpack.c.b16 %v315, %v315
        %v332 = vpack.c.b16 %v316, %v316
        %v333 = vpack.c.b16 %v317, %v317
        %v334 = vpack.c.b16 %v318, %v318
        %v335 = vpack.c.b16 %v319, %v319
        %v336 = vpack.c.b16 %v320, %v320
        %v337 = vpack.c.b16 %v321, %v321
        %v338 = vpack.c.b16 %v322, %v322
        %vm339 = vsmask.f32 3328
        %vm340 = vsmask.f32 7440
        %vm341 = vmor %vm339, %vm340
        %v343 = vshrl.u32 %v323, 16
        %v345 = vrot.slane %v343, 4
        %v346 = vshll.u32 %v323, 16
        %v348 = vrot.slane %v346, 5
        %v349 = vor.u32 %v345, %v348
        %v350 = vrot.slane %v349, 4
        %v352 = vshll.u32 %v324, 16
        %v354 = vrot.slane %v352, 5
        %v355 = vsel %vm341, %v350, %v354
        %v357 = vshrl.u32 %v325, 16
        %v359 = vrot.slane %v357, 4
        %v360 = vshll.u32 %v325, 16
        %v362 = vrot.slane %v360, 5
        %v363 = vor.u32 %v359, %v362
        %v364 = vrot.slane %v363, 4
        %v366 = vshll.u32 %v326, 16
        %v368 = vrot.slane %v366, 5
        %v369 = vsel %vm341, %v364, %v368
        %v371 = vshrl.u32 %v327, 16
        %v373 = vrot.slane %v371, 4
        %v374 = vshll.u32 %v327, 16
        %v376 = vrot.slane %v374, 5
        %v377 = vor.u32 %v373, %v376
        %v378 = vrot.slane %v377, 4
        %v380 = vshll.u32 %v328, 16
        %v382 = vrot.slane %v380, 5
        %v383 = vsel %vm341, %v378, %v382
        %v385 = vshrl.u32 %v329, 16
        %v387 = vrot.slane %v385, 4
        %v388 = vshll.u32 %v329, 16
        %v390 = vrot.slane %v388, 5
        %v391 = vor.u32 %v387, %v390
        %v392 = vrot.slane %v391, 4
        %v394 = vshll.u32 %v330, 16
        %v396 = vrot.slane %v394, 5
        %v397 = vsel %vm341, %v392, %v396
        %v399 = vshrl.u32 %v331, 16
        %v401 = vrot.slane %v399, 4
        %v402 = vshll.u32 %v331, 16
        %v404 = vrot.slane %v402, 5
        %v405 = vor.u32 %v401, %v404
        %v406 = vrot.slane %v405, 4
        %v408 = vshll.u32 %v332, 16
        %v410 = vrot.slane %v408, 5
        %v411 = vsel %vm341, %v406, %v410
        %v413 = vshrl.u32 %v333, 16
        %v415 = vrot.slane %v413, 4
        %v416 = vshll.u32 %v333, 16
        %v418 = vrot.slane %v416, 5
        %v419 = vor.u32 %v415, %v418
        %v420 = vrot.slane %v419, 4
        %v422 = vshll.u32 %v334, 16
        %v424 = vrot.slane %v422, 5
        %v425 = vsel %vm341, %v420, %v424
        %v427 = vshrl.u32 %v335, 16
        %v429 = vrot.slane %v427, 4
        %v430 = vshll.u32 %v335, 16
        %v432 = vrot.slane %v430, 5
        %v433 = vor.u32 %v429, %v432
        %v434 = vrot.slane %v433, 4
        %v436 = vshll.u32 %v336, 16
        %v438 = vrot.slane %v436, 5
        %v439 = vsel %vm341, %v434, %v438
        %v441 = vshrl.u32 %v337, 16
        %v443 = vrot.slane %v441, 4
        %v444 = vshll.u32 %v337, 16
        %v446 = vrot.slane %v444, 5
        %v447 = vor.u32 %v443, %v446
        %v448 = vrot.slane %v447, 4
        %v450 = vshll.u32 %v338, 16
        %v452 = vrot.slane %v450, 5
        %v453 = vsel %vm341, %v448, %v452
        %vm454 = vcmask 1042432
        %vm455 = vcmask 1046532
        %vm456 = vmor %vm454, %vm455
        %v457 = vrot.slane %v323, 5
        %v458 = vrot.slane %v457, 4
        %v459 = vrot.slane %v324, 5
        %v460 = vsel %vm456, %v458, %v459
        %v461 = vrot.slane %v325, 5
        %v462 = vrot.slane %v461, 4
        %v463 = vrot.slane %v326, 5
        %v464 = vsel %vm456, %v462, %v463
        %v465 = vrot.slane %v327, 5
        %v466 = vrot.slane %v465, 4
        %v467 = vrot.slane %v328, 5
        %v468 = vsel %vm456, %v466, %v467
        %v469 = vrot.slane %v329, 5
        %v470 = vrot.slane %v469, 4
        %v471 = vrot.slane %v330, 5
        %v472 = vsel %vm456, %v470, %v471
        %v473 = vrot.slane %v331, 5
        %v474 = vrot.slane %v473, 4
        %v475 = vrot.slane %v332, 5
        %v476 = vsel %vm456, %v474, %v475
        %v477 = vrot.slane %v333, 5
        %v478 = vrot.slane %v477, 4
        %v479 = vrot.slane %v334, 5
        %v480 = vsel %vm456, %v478, %v479
        %v481 = vrot.slane %v335, 5
        %v482 = vrot.slane %v481, 4
        %v483 = vrot.slane %v336, 5
        %v484 = vsel %vm456, %v482, %v483
        %v485 = vrot.slane %v337, 5
        %v486 = vrot.slane %v485, 4
        %v487 = vrot.slane %v338, 5
        %v488 = vsel %vm456, %v486, %v487
        %v490 = vunpack.c.l.b16 %v298
        %v491 = vunpack.c.h.b16 %v298
        %v492 = vpack.c.b16 %v490, %v490
        %v493 = vpack.c.b16 %v491, %v491
        %v495 = vshrl.u32 %v492, 16
        %v497 = vrot.slane %v495, 4
        %v498 = vshll.u32 %v492, 16
        %v500 = vrot.slane %v498, 5
        %v501 = vor.u32 %v497, %v500
        %v502 = vrot.slane %v501, 4
        %v504 = vshll.u32 %v493, 16
        %v506 = vrot.slane %v504, 5
        %v507 = vsel %vm341, %v502, %v506
        %v508 = vrot.slane %v492, 5
        %v509 = vrot.slane %v508, 4
        %v510 = vrot.slane %v493, 5
        %v511 = vsel %vm456, %v509, %v510
        %v512 = vpack.c.b16 %v309, %v307
        %v513 = vpack.c.b16 %v313, %v311
        %v514 = vpack.c.b16 %v317, %v315
        %v515 = vpack.c.b16 %v321, %v319
        %v520 = vunpack.c.l.b16 %v355
        %v521 = vunpack.c.l.b16 %v369
        %v522 = vunpack.c.l.b16 %v383
        %v523 = vunpack.c.l.b16 %v397
        %v524 = vunpack.c.l.b16 %v411
        %v525 = vunpack.c.l.b16 %v425
        %v526 = vunpack.c.l.b16 %v439
        %v527 = vunpack.c.l.b16 %v453
        %v528 = vpack.c.b16 %v521, %v520
        %v529 = vpack.c.b16 %v523, %v522
        %v530 = vpack.c.b16 %v525, %v524
        %v531 = vpack.c.b16 %v527, %v526
        %v536 = vunpack.c.l.b16 %v460
        %v537 = vunpack.c.l.b16 %v464
        %v538 = vunpack.c.l.b16 %v468
        %v539 = vunpack.c.l.b16 %v472
        %v540 = vunpack.c.l.b16 %v476
        %v541 = vunpack.c.l.b16 %v480
        %v542 = vunpack.c.l.b16 %v484
        %v543 = vunpack.c.l.b16 %v488
        %v544 = vpack.c.b16 %v537, %v536
        %v545 = vpack.c.b16 %v539, %v538
        %v546 = vpack.c.b16 %v541, %v540
        %v547 = vpack.c.b16 %v543, %v542
        %v552 = vpack.c.b16 %v311, %v309
        %v553 = vpack.c.b16 %v315, %v313
        %v554 = vpack.c.b16 %v319, %v317
        %v555 = vpack.c.b16 %v490, %v321
        %v560 = vunpack.c.l.b16 %v507
        %v561 = vpack.c.b16 %v522, %v521
        %v562 = vpack.c.b16 %v524, %v523
        %v563 = vpack.c.b16 %v526, %v525
        %v564 = vpack.c.b16 %v560, %v527
        %v569 = vunpack.c.l.b16 %v511
        %v570 = vpack.c.b16 %v538, %v537
        %v571 = vpack.c.b16 %v540, %v539
        %v572 = vpack.c.b16 %v542, %v541
        %v573 = vpack.c.b16 %v569, %v543
        %v578 = vpack.c.b16 %v307, %v490
        %v580 = vpack.c.b16 %v520, %v560
        %v582 = vpack.c.b16 %v536, %v569
        %v584 = vld [vmem:[#allocation2] sm:$0xf]
        %v585 = vld [vmem:[#allocation2 + $0x4] sm:$0xf]
        %v586 = vld [vmem:[#allocation2 + $0x8] sm:$0xf]
        %v587 = vld [vmem:[#allocation2 + $0xc] sm:$0xf]
        %v588 = vld [vmem:[#allocation2 + $0x10] sm:$0xf]
        %v589 = vld [vmem:[#allocation2 + $0x14] sm:$0xf]
        %v590 = vld [vmem:[#allocation2 + $0x18] sm:$0xf]
        %v591 = vld [vmem:[#allocation2 + $0x1c] sm:$0xf]
        %v592 = vld [vmem:[#allocation2 + $0x20] sm:$0xf]
        %v593 = vld [vmem:[#allocation2 + $0x24] sm:$0xf]
        %v594 = vld [vmem:[#allocation2 + $0x28] sm:$0xf]
        %v595 = vld [vmem:[#allocation2 + $0x2c] sm:$0xf]
        %v596 = vld [vmem:[#allocation2 + $0x30] sm:$0xf]
        %v597 = vld [vmem:[#allocation2 + $0x34] sm:$0xf]
        %v598 = vld [vmem:[#allocation2 + $0x38] sm:$0xf]
        %v599 = vld [vmem:[#allocation2 + $0x3c] sm:$0xf]
        %v600 = vld [vmem:[#allocation2 + $0x40] sm:$0xf]
        %v601 = vld [vmem:[#allocation2 + $0x44] sm:$0xf]
        %v602 = vld [vmem:[#allocation2 + $0x48] sm:$0xf]
        %v603 = vld [vmem:[#allocation2 + $0x4c] sm:$0xf]
        %v604 = vld [vmem:[#allocation2 + $0x50] sm:$0xf]
        %v605 = vld [vmem:[#allocation2 + $0x54] sm:$0xf]
        %v606 = vld [vmem:[#allocation2 + $0x58] sm:$0xf]
        %v607 = vld [vmem:[#allocation2 + $0x5c] sm:$0xf]
        %v608 = vld [vmem:[#allocation2 + $0x60] sm:$0xf]
        %v609 = vld [vmem:[#allocation2 + $0x64] sm:$0xf]
        %v610 = vld [vmem:[#allocation2 + $0x68] sm:$0xf]
        %v611 = vld [vmem:[#allocation2 + $0x6c] sm:$0xf]
        %v612 = vld [vmem:[#allocation2 + $0x70] sm:$0xf]
        %v613 = vld [vmem:[#allocation2 + $0x74] sm:$0xf]
        %v614 = vld [vmem:[#allocation2 + $0x78] sm:$0xf]
        %v615 = vld [vmem:[#allocation2 + $0x7c] sm:$0xf]
        %v616 = vld [vmem:[#allocation2 + $0x80] sm:$0xf]
        %v617 = vld [vmem:[#allocation2 + $0x84] sm:$0xf]
        %v618 = vld [vmem:[#allocation2 + $0x88] sm:$0xf]
        %v619 = vld [vmem:[#allocation2 + $0x8c] sm:$0xf]
        %v620 = vld [vmem:[#allocation2 + $0x90] sm:$0xf]
        %v621 = vld [vmem:[#allocation2 + $0x94] sm:$0xf]
        %v622 = vld [vmem:[#allocation2 + $0x98] sm:$0xf]
        %v623 = vld [vmem:[#allocation2 + $0x9c] sm:$0xf]
        %v624 = vld [vmem:[#allocation2 + $0xa0] sm:$0xf]
        %v625 = vld [vmem:[#allocation2 + $0xa4] sm:$0xf]
        %v626 = vld [vmem:[#allocation2 + $0xa8] sm:$0xf]
        %v627 = vld [vmem:[#allocation2 + $0xac] sm:$0xf]
        %v628 = vld [vmem:[#allocation2 + $0xb0] sm:$0xf]
        %v629 = vld [vmem:[#allocation2 + $0xb4] sm:$0xf]
        %v630 = vld [vmem:[#allocation2 + $0xb8] sm:$0xf]
        %v631 = vld [vmem:[#allocation2 + $0xbc] sm:$0xf]
        %v632 = vld [vmem:[#allocation2 + $0xc0] sm:$0xf]
        %v633 = vld [vmem:[#allocation2 + $0xc4] sm:$0xf]
        %v634 = vld [vmem:[#allocation2 + $0xc8] sm:$0xf]
        %v635 = vld [vmem:[#allocation2 + $0xcc] sm:$0xf]
        %v636 = vld [vmem:[#allocation2 + $0xd0] sm:$0xf]
        %v637 = vld [vmem:[#allocation2 + $0xd4] sm:$0xf]
        %v638 = vld [vmem:[#allocation2 + $0xd8] sm:$0xf]
        %v639 = vld [vmem:[#allocation2 + $0xdc] sm:$0xf]
        %v640 = vld [vmem:[#allocation2 + $0xe0] sm:$0xf]
        %v641 = vld [vmem:[#allocation2 + $0xe4] sm:$0xf]
        %v642 = vld [vmem:[#allocation2 + $0xe8] sm:$0xf]
        %v643 = vld [vmem:[#allocation2 + $0xec] sm:$0xf]
        %v644 = vld [vmem:[#allocation2 + $0xf0] sm:$0xf]
        %v645 = vld [vmem:[#allocation2 + $0xf4] sm:$0xf]
        %v646 = vld [vmem:[#allocation2 + $0xf8] sm:$0xf]
        %v647 = vld [vmem:[#allocation2 + $0xfc] sm:$0xf]
        %v648 = vld [vmem:[#allocation2 + $0x100] sm:$0xf]
        %v649 = vld [vmem:[#allocation2 + $0x104] sm:$0xf]
        %v650 = vld [vmem:[#allocation2 + $0x108] sm:$0xf]
        %v651 = vld [vmem:[#allocation2 + $0x10c] sm:$0xf]
        %v652 = vld [vmem:[#allocation2 + $0x110] sm:$0xf]
        %v653 = vld [vmem:[#allocation2 + $0x114] sm:$0xf]
        %v654 = vld [vmem:[#allocation2 + $0x118] sm:$0xf]
        %v655 = vld [vmem:[#allocation2 + $0x11c] sm:$0xf]
        %v656 = vld [vmem:[#allocation2 + $0x120] sm:$0xf]
        %v657 = vld [vmem:[#allocation2 + $0x124] sm:$0xf]
        %v658 = vld [vmem:[#allocation2 + $0x128] sm:$0xf]
        %v659 = vld [vmem:[#allocation2 + $0x12c] sm:$0xf]
        %v660 = vld [vmem:[#allocation2 + $0x130] sm:$0xf]
        %v661 = vld [vmem:[#allocation2 + $0x134] sm:$0xf]
        %v662 = vld [vmem:[#allocation2 + $0x138] sm:$0xf]
        %v663 = vld [vmem:[#allocation2 + $0x13c] sm:$0xf]
        %v664 = vld [vmem:[#allocation2 + $0x140] sm:$0xf]
        %v665 = vld [vmem:[#allocation2 + $0x144] sm:$0xf]
        %v666 = vld [vmem:[#allocation2 + $0x148] sm:$0xf]
        %v667 = vld [vmem:[#allocation2 + $0x14c] sm:$0xf]
        %v668 = vld [vmem:[#allocation2 + $0x150] sm:$0xf]
        %v669 = vld [vmem:[#allocation2 + $0x154] sm:$0xf]
        %v670 = vld [vmem:[#allocation2 + $0x158] sm:$0xf]
        %v671 = vld [vmem:[#allocation2 + $0x15c] sm:$0xf]
        %v672 = vld [vmem:[#allocation2 + $0x160] sm:$0xf]
        %v673 = vld [vmem:[#allocation2 + $0x164] sm:$0xf]
        %v674 = vld [vmem:[#allocation2 + $0x168] sm:$0xf]
        %v675 = vld [vmem:[#allocation2 + $0x16c] sm:$0xf]
        %v676 = vld [vmem:[#allocation2 + $0x170] sm:$0xf]
        %v677 = vld [vmem:[#allocation2 + $0x174] sm:$0xf]
        %v678 = vld [vmem:[#allocation2 + $0x178] sm:$0xf]
        %v679 = vld [vmem:[#allocation2 + $0x17c] sm:$0xf]
        %v680 = vld [vmem:[#allocation2 + $0x180] sm:$0xf]
        %v681 = vld [vmem:[#allocation2 + $0x184] sm:$0xf]
        %v682 = vld [vmem:[#allocation2 + $0x188] sm:$0xf]
        %v683 = vld [vmem:[#allocation2 + $0x18c] sm:$0xf]
        %v684 = vld [vmem:[#allocation2 + $0x190] sm:$0xf]
        %v685 = vld [vmem:[#allocation2 + $0x194] sm:$0xf]
        %v686 = vld [vmem:[#allocation2 + $0x198] sm:$0xf]
        %v687 = vld [vmem:[#allocation2 + $0x19c] sm:$0xf]
        %v688 = vld [vmem:[#allocation2 + $0x1a0] sm:$0xf]
        %v689 = vld [vmem:[#allocation2 + $0x1a4] sm:$0xf]
        %v690 = vld [vmem:[#allocation2 + $0x1a8] sm:$0xf]
        %v691 = vld [vmem:[#allocation2 + $0x1ac] sm:$0xf]
        %v692 = vld [vmem:[#allocation2 + $0x1b0] sm:$0xf]
        %v693 = vld [vmem:[#allocation2 + $0x1b4] sm:$0xf]
        %v694 = vld [vmem:[#allocation2 + $0x1b8] sm:$0xf]
        %v695 = vld [vmem:[#allocation2 + $0x1bc] sm:$0xf]
        %v696 = vld [vmem:[#allocation2 + $0x1c0] sm:$0xf]
        %v697 = vld [vmem:[#allocation2 + $0x1c4] sm:$0xf]
        %v698 = vld [vmem:[#allocation2 + $0x1c8] sm:$0xf]
        %v699 = vld [vmem:[#allocation2 + $0x1cc] sm:$0xf]
        %v700 = vld [vmem:[#allocation2 + $0x1d0] sm:$0xf]
        %v701 = vld [vmem:[#allocation2 + $0x1d4] sm:$0xf]
        %v702 = vld [vmem:[#allocation2 + $0x1d8] sm:$0xf]
        %v703 = vld [vmem:[#allocation2 + $0x1dc] sm:$0xf]
        %v704 = vld [vmem:[#allocation2 + $0x1e0] sm:$0xf]
        %v705 = vld [vmem:[#allocation2 + $0x1e4] sm:$0xf]
        %v706 = vld [vmem:[#allocation2 + $0x1e8] sm:$0xf]
        %v707 = vld [vmem:[#allocation2 + $0x1ec] sm:$0xf]
        %v708 = vld [vmem:[#allocation2 + $0x1f0] sm:$0xf]
        %v709 = vld [vmem:[#allocation2 + $0x1f4] sm:$0xf]
        %v710 = vld [vmem:[#allocation2 + $0x1f8] sm:$0xf]
        %v711 = vld [vmem:[#allocation2 + $0x1fc] sm:$0xf]
        %v712 = vld [vmem:[#allocation2 + $0x200] sm:$0xf]
        %v713 = vld [vmem:[#allocation2 + $0x204] sm:$0xf]
        %v714 = vld [vmem:[#allocation2 + $0x208] sm:$0xf]
        %v715 = vld [vmem:[#allocation2 + $0x20c] sm:$0xf]
        %v716 = vld [vmem:[#allocation2 + $0x210] sm:$0xf]
        %v717 = vld [vmem:[#allocation2 + $0x214] sm:$0xf]
        %v718 = vld [vmem:[#allocation2 + $0x218] sm:$0xf]
        %v719 = vld [vmem:[#allocation2 + $0x21c] sm:$0xf]
        %v720 = vld [vmem:[#allocation2 + $0x220] sm:$0xf]
        %v721 = vld [vmem:[#allocation2 + $0x224] sm:$0xf]
        %v722 = vld [vmem:[#allocation2 + $0x228] sm:$0xf]
        %v723 = vld [vmem:[#allocation2 + $0x22c] sm:$0xf]
        %v724 = vld [vmem:[#allocation2 + $0x230] sm:$0xf]
        %v725 = vld [vmem:[#allocation2 + $0x234] sm:$0xf]
        %v726 = vld [vmem:[#allocation2 + $0x238] sm:$0xf]
        %v727 = vld [vmem:[#allocation2 + $0x23c] sm:$0xf]
        %v728 = vld [vmem:[%s2] sm:$0x1]
        %v730 = vlaneseq
        %v731 = vshrl.u32 %v730, 7
        %v732 = vsub.s32 0, %v731
        %v733 = vrot.slane %v728, %v732
        %v879 = vunpack.c.l.b16 %v584
        %v880 = vunpack.c.l.b16 %v585
        %v881 = vunpack.c.l.b16 %v586
        %v882 = vunpack.c.l.b16 %v587
        %v883 = vunpack.c.l.b16 %v588
        %v884 = vunpack.c.l.b16 %v589
        %v885 = vunpack.c.l.b16 %v590
        %v886 = vunpack.c.l.b16 %v591
        %v887 = vunpack.c.l.b16 %v592
        %v888 = vunpack.c.l.b16 %v593
        %v889 = vunpack.c.l.b16 %v594
        %v890 = vunpack.c.l.b16 %v595
        %v891 = vunpack.c.l.b16 %v596
        %v892 = vunpack.c.l.b16 %v597
        %v893 = vunpack.c.l.b16 %v598
        %v894 = vunpack.c.l.b16 %v599
        %v895 = vunpack.c.l.b16 %v600
        %v896 = vunpack.c.l.b16 %v601
        %v897 = vunpack.c.l.b16 %v602
        %v898 = vunpack.c.l.b16 %v603
        %v899 = vunpack.c.l.b16 %v604
        %v900 = vunpack.c.l.b16 %v605
        %v901 = vunpack.c.l.b16 %v606
        %v902 = vunpack.c.l.b16 %v607
        %v903 = vunpack.c.l.b16 %v608
        %v904 = vunpack.c.l.b16 %v609
        %v905 = vunpack.c.l.b16 %v610
        %v906 = vunpack.c.l.b16 %v611
        %v907 = vunpack.c.l.b16 %v612
        %v908 = vunpack.c.l.b16 %v613
        %v909 = vunpack.c.l.b16 %v614
        %v910 = vunpack.c.l.b16 %v615
        %v911 = vunpack.c.l.b16 %v616
        %v912 = vunpack.c.l.b16 %v617
        %v913 = vunpack.c.l.b16 %v618
        %v914 = vunpack.c.l.b16 %v619
        %v915 = vunpack.c.l.b16 %v620
        %v916 = vunpack.c.l.b16 %v621
        %v917 = vunpack.c.l.b16 %v622
        %v918 = vunpack.c.l.b16 %v623
        %v919 = vunpack.c.l.b16 %v624
        %v920 = vunpack.c.l.b16 %v625
        %v921 = vunpack.c.l.b16 %v626
        %v922 = vunpack.c.l.b16 %v627
        %v923 = vunpack.c.l.b16 %v628
        %v924 = vunpack.c.l.b16 %v629
        %v925 = vunpack.c.l.b16 %v630
        %v926 = vunpack.c.l.b16 %v631
        %v927 = vunpack.c.l.b16 %v632
        %v928 = vunpack.c.l.b16 %v633
        %v929 = vunpack.c.l.b16 %v634
        %v930 = vunpack.c.l.b16 %v635
        %v931 = vunpack.c.l.b16 %v636
        %v932 = vunpack.c.l.b16 %v637
        %v933 = vunpack.c.l.b16 %v638
        %v934 = vunpack.c.l.b16 %v639
        %v935 = vunpack.c.l.b16 %v640
        %v936 = vunpack.c.l.b16 %v641
        %v937 = vunpack.c.l.b16 %v642
        %v938 = vunpack.c.l.b16 %v643
        %v939 = vunpack.c.l.b16 %v644
        %v940 = vunpack.c.l.b16 %v645
        %v941 = vunpack.c.l.b16 %v646
        %v942 = vunpack.c.l.b16 %v647
        %v943 = vunpack.c.l.b16 %v648
        %v944 = vunpack.c.l.b16 %v649
        %v945 = vunpack.c.l.b16 %v650
        %v946 = vunpack.c.l.b16 %v651
        %v947 = vunpack.c.l.b16 %v652
        %v948 = vunpack.c.l.b16 %v653
        %v949 = vunpack.c.l.b16 %v654
        %v950 = vunpack.c.l.b16 %v655
        %v951 = vunpack.c.l.b16 %v656
        %v952 = vunpack.c.l.b16 %v657
        %v953 = vunpack.c.l.b16 %v658
        %v954 = vunpack.c.l.b16 %v659
        %v955 = vunpack.c.l.b16 %v660
        %v956 = vunpack.c.l.b16 %v661
        %v957 = vunpack.c.l.b16 %v662
        %v958 = vunpack.c.l.b16 %v663
        %v959 = vunpack.c.l.b16 %v664
        %v960 = vunpack.c.l.b16 %v665
        %v961 = vunpack.c.l.b16 %v666
        %v962 = vunpack.c.l.b16 %v667
        %v963 = vunpack.c.l.b16 %v668
        %v964 = vunpack.c.l.b16 %v669
        %v965 = vunpack.c.l.b16 %v670
        %v966 = vunpack.c.l.b16 %v671
        %v967 = vunpack.c.l.b16 %v672
        %v968 = vunpack.c.l.b16 %v673
        %v969 = vunpack.c.l.b16 %v674
        %v970 = vunpack.c.l.b16 %v675
        %v971 = vunpack.c.l.b16 %v676
        %v972 = vunpack.c.l.b16 %v677
        %v973 = vunpack.c.l.b16 %v678
        %v974 = vunpack.c.l.b16 %v679
        %v975 = vunpack.c.l.b16 %v680
        %v976 = vunpack.c.l.b16 %v681
        %v977 = vunpack.c.l.b16 %v682
        %v978 = vunpack.c.l.b16 %v683
        %v979 = vunpack.c.l.b16 %v684
        %v980 = vunpack.c.l.b16 %v685
        %v981 = vunpack.c.l.b16 %v686
        %v982 = vunpack.c.l.b16 %v687
        %v983 = vunpack.c.l.b16 %v688
        %v984 = vunpack.c.l.b16 %v689
        %v985 = vunpack.c.l.b16 %v690
        %v986 = vunpack.c.l.b16 %v691
        %v987 = vunpack.c.l.b16 %v692
        %v988 = vunpack.c.l.b16 %v693
        %v989 = vunpack.c.l.b16 %v694
        %v990 = vunpack.c.l.b16 %v695
        %v991 = vunpack.c.l.b16 %v696
        %v992 = vunpack.c.l.b16 %v697
        %v993 = vunpack.c.l.b16 %v698
        %v994 = vunpack.c.l.b16 %v699
        %v995 = vunpack.c.l.b16 %v700
        %v996 = vunpack.c.l.b16 %v701
        %v997 = vunpack.c.l.b16 %v702
        %v998 = vunpack.c.l.b16 %v703
        %v999 = vunpack.c.l.b16 %v704
        %v1000 = vunpack.c.l.b16 %v705
        %v1001 = vunpack.c.l.b16 %v706
        %v1002 = vunpack.c.l.b16 %v707
        %v1003 = vunpack.c.l.b16 %v708
        %v1004 = vunpack.c.l.b16 %v709
        %v1005 = vunpack.c.l.b16 %v710
        %v1006 = vunpack.c.l.b16 %v711
        %v1007 = vunpack.c.l.b16 %v712
        %v1008 = vunpack.c.l.b16 %v713
        %v1009 = vunpack.c.l.b16 %v714
        %v1010 = vunpack.c.l.b16 %v715
        %v1011 = vunpack.c.l.b16 %v716
        %v1012 = vunpack.c.l.b16 %v717
        %v1013 = vunpack.c.l.b16 %v718
        %v1014 = vunpack.c.l.b16 %v719
        %v1015 = vunpack.c.l.b16 %v720
        %v1016 = vunpack.c.l.b16 %v721
        %v1017 = vunpack.c.l.b16 %v722
        %v1018 = vunpack.c.l.b16 %v723
        %v1019 = vunpack.c.l.b16 %v724
        %v1020 = vunpack.c.l.b16 %v725
        %v1021 = vunpack.c.l.b16 %v726
        %v1022 = vunpack.c.l.b16 %v727
        %v1023 = vpack.c.b16 %v880, %v879
        %v1024 = vpack.c.b16 %v882, %v881
        %v1025 = vpack.c.b16 %v884, %v883
        %v1026 = vpack.c.b16 %v886, %v885
        %v1027 = vpack.c.b16 %v888, %v887
        %v1028 = vpack.c.b16 %v890, %v889
        %v1029 = vpack.c.b16 %v892, %v891
        %v1030 = vpack.c.b16 %v894, %v893
        %v1031 = vpack.c.b16 %v896, %v895
        %v1032 = vpack.c.b16 %v898, %v897
        %v1033 = vpack.c.b16 %v900, %v899
        %v1034 = vpack.c.b16 %v902, %v901
        %v1035 = vpack.c.b16 %v904, %v903
        %v1036 = vpack.c.b16 %v906, %v905
        %v1037 = vpack.c.b16 %v908, %v907
        %v1038 = vpack.c.b16 %v910, %v909
        %v1039 = vpack.c.b16 %v912, %v911
        %v1040 = vpack.c.b16 %v914, %v913
        %v1041 = vpack.c.b16 %v916, %v915
        %v1042 = vpack.c.b16 %v918, %v917
        %v1043 = vpack.c.b16 %v920, %v919
        %v1044 = vpack.c.b16 %v922, %v921
        %v1045 = vpack.c.b16 %v924, %v923
        %v1046 = vpack.c.b16 %v926, %v925
        %v1047 = vpack.c.b16 %v928, %v927
        %v1048 = vpack.c.b16 %v930, %v929
        %v1049 = vpack.c.b16 %v932, %v931
        %v1050 = vpack.c.b16 %v934, %v933
        %v1051 = vpack.c.b16 %v936, %v935
        %v1052 = vpack.c.b16 %v938, %v937
        %v1053 = vpack.c.b16 %v940, %v939
        %v1054 = vpack.c.b16 %v942, %v941
        %v1055 = vpack.c.b16 %v944, %v943
        %v1056 = vpack.c.b16 %v946, %v945
        %v1057 = vpack.c.b16 %v948, %v947
        %v1058 = vpack.c.b16 %v950, %v949
        %v1059 = vpack.c.b16 %v952, %v951
        %v1060 = vpack.c.b16 %v954, %v953
        %v1061 = vpack.c.b16 %v956, %v955
        %v1062 = vpack.c.b16 %v958, %v957
        %v1063 = vpack.c.b16 %v960, %v959
        %v1064 = vpack.c.b16 %v962, %v961
        %v1065 = vpack.c.b16 %v964, %v963
        %v1066 = vpack.c.b16 %v966, %v965
        %v1067 = vpack.c.b16 %v968, %v967
        %v1068 = vpack.c.b16 %v970, %v969
        %v1069 = vpack.c.b16 %v972, %v971
        %v1070 = vpack.c.b16 %v974, %v973
        %v1071 = vpack.c.b16 %v976, %v975
        %v1072 = vpack.c.b16 %v978, %v977
        %v1073 = vpack.c.b16 %v980, %v979
        %v1074 = vpack.c.b16 %v982, %v981
        %v1075 = vpack.c.b16 %v984, %v983
        %v1076 = vpack.c.b16 %v986, %v985
        %v1077 = vpack.c.b16 %v988, %v987
        %v1078 = vpack.c.b16 %v990, %v989
        %v1079 = vpack.c.b16 %v992, %v991
        %v1080 = vpack.c.b16 %v994, %v993
        %v1081 = vpack.c.b16 %v996, %v995
        %v1082 = vpack.c.b16 %v998, %v997
        %v1083 = vpack.c.b16 %v1000, %v999
        %v1084 = vpack.c.b16 %v1002, %v1001
        %v1085 = vpack.c.b16 %v1004, %v1003
        %v1086 = vpack.c.b16 %v1006, %v1005
        %v1087 = vpack.c.b16 %v1008, %v1007
        %v1088 = vpack.c.b16 %v1010, %v1009
        %v1089 = vpack.c.b16 %v1012, %v1011
        %v1090 = vpack.c.b16 %v1014, %v1013
        %v1091 = vpack.c.b16 %v1016, %v1015
        %v1092 = vpack.c.b16 %v1018, %v1017
        %v1093 = vpack.c.b16 %v1020, %v1019
        %v1094 = vpack.c.b16 %v1022, %v1021
        %1167 = vmatprep.subr.bf16.mxu0 0
        %1168 = vmatpush1.bf16.msra.mxu0 %v1030
        %1169 = vmatprep.subr.bf16.mxu0 0
        %1170 = vmatpush1.bf16.msra.mxu0 %v1029
        %1171 = vmatprep.subr.bf16.mxu0 0
        %1172 = vmatpush1.bf16.msra.mxu0 %v1028
        %1173 = vmatprep.subr.bf16.mxu0 0
        %1174 = vmatpush1.bf16.msra.mxu0 %v1027
        %1175 = vmatprep.subr.bf16.mxu0 0
        %1176 = vmatpush1.bf16.msra.mxu0 %v1026
        %1177 = vmatprep.subr.bf16.mxu0 0
        %1178 = vmatpush1.bf16.msra.mxu0 %v1025
        %1179 = vmatprep.subr.bf16.mxu0 0
        %1180 = vmatpush1.bf16.msra.mxu0 %v1024
        %1181 = vmatprep.subr.bf16.mxu0 0
        %1182 = vmatpush1.bf16.msra.mxu0 %v1023
        %1183 = vmatprep.subr.bf16.mxu0 0
        %1184 = vmatpush2.bf16.msra.mxu0 %v1038
        %1185 = vmatprep.subr.bf16.mxu0 0
        %1186 = vmatpush2.bf16.msra.mxu0 %v1037
        %1187 = vmatprep.subr.bf16.mxu0 0
        %1188 = vmatpush2.bf16.msra.mxu0 %v1036
        %1189 = vmatprep.subr.bf16.mxu0 0
        %1190 = vmatpush2.bf16.msra.mxu0 %v1035
        %1191 = vmatprep.subr.bf16.mxu0 0
        %1192 = vmatpush2.bf16.msra.mxu0 %v1034
        %1193 = vmatprep.subr.bf16.mxu0 0
        %1194 = vmatpush2.bf16.msra.mxu0 %v1033
        %1195 = vmatprep.subr.bf16.mxu0 0
        %1196 = vmatpush2.bf16.msra.mxu0 %v1032
        %1197 = vmatprep.subr.bf16.mxu0 0
        %1198 = vmatpush2.bf16.msra.mxu0 %v1031
        %1199 = vmatprep.mubr.bf16.mxu0 %v528
        %1200 = vmatmul.mubr.bf16.gmra.mxu0 %v512
        %v1201 = vpop.f32.mrf.mxu0
        %v1202 = vadd.f32 %v733, %v1201
        %v1203 = vpop.f32.mrf.mxu0
        %v1204 = vpop.f32.mrf.mxu0
        %v1205 = vadd.f32 %v733, %v1204
        %v1206 = vpop.f32.mrf.mxu0
        %1207 = vmatprep.mubr.bf16.mxu0 %v529
        %1208 = vmatmul.mubr.bf16.gmra.mxu0 %v513
        %v1209 = vpop.f32.mrf.mxu0
        %v1210 = vadd.f32 %v733, %v1209
        %v1211 = vpop.f32.mrf.mxu0
        %v1212 = vpop.f32.mrf.mxu0
        %v1213 = vadd.f32 %v733, %v1212
        %v1214 = vpop.f32.mrf.mxu0
        %1215 = vmatprep.mubr.bf16.mxu0 %v530
        %1216 = vmatmul.mubr.bf16.gmra.mxu0 %v514
        %v1217 = vpop.f32.mrf.mxu0
        %v1218 = vadd.f32 %v733, %v1217
        %v1219 = vpop.f32.mrf.mxu0
        %v1220 = vpop.f32.mrf.mxu0
        %v1221 = vadd.f32 %v733, %v1220
        %v1222 = vpop.f32.mrf.mxu0
        %1223 = vmatprep.mubr.bf16.mxu0 %v531
        %1224 = vmatmul.mubr.bf16.gmra.mxu0 %v515
        %v1225 = vpop.f32.mrf.mxu0
        %v1226 = vadd.f32 %v733, %v1225
        %v1227 = vpop.f32.mrf.mxu0
        %v1228 = vpop.f32.mrf.mxu0
        %v1229 = vadd.f32 %v733, %v1228
        %v1230 = vpop.f32.mrf.mxu0
        %1231 = vdwg.mxu0
        %1232 = vmatprep.subr.bf16.mxu0 0
        %1233 = vmatpush1.bf16.msra.mxu0 %v1046
        %1234 = vmatprep.subr.bf16.mxu0 0
        %1235 = vmatpush1.bf16.msra.mxu0 %v1045
        %1236 = vmatprep.subr.bf16.mxu0 0
        %1237 = vmatpush1.bf16.msra.mxu0 %v1044
        %1238 = vmatprep.subr.bf16.mxu0 0
        %1239 = vmatpush1.bf16.msra.mxu0 %v1043
        %1240 = vmatprep.subr.bf16.mxu0 0
        %1241 = vmatpush1.bf16.msra.mxu0 %v1042
        %1242 = vmatprep.subr.bf16.mxu0 0
        %1243 = vmatpush1.bf16.msra.mxu0 %v1041
        %1244 = vmatprep.subr.bf16.mxu0 0
        %1245 = vmatpush1.bf16.msra.mxu0 %v1040
        %1246 = vmatprep.subr.bf16.mxu0 0
        %1247 = vmatpush1.bf16.msra.mxu0 %v1039
        %1248 = vmatprep.subr.bf16.mxu0 0
        %1249 = vmatpush2.bf16.msra.mxu0 %v1054
        %1250 = vmatprep.subr.bf16.mxu0 0
        %1251 = vmatpush2.bf16.msra.mxu0 %v1053
        %1252 = vmatprep.subr.bf16.mxu0 0
        %1253 = vmatpush2.bf16.msra.mxu0 %v1052
        %1254 = vmatprep.subr.bf16.mxu0 0
        %1255 = vmatpush2.bf16.msra.mxu0 %v1051
        %1256 = vmatprep.subr.bf16.mxu0 0
        %1257 = vmatpush2.bf16.msra.mxu0 %v1050
        %1258 = vmatprep.subr.bf16.mxu0 0
        %1259 = vmatpush2.bf16.msra.mxu0 %v1049
        %1260 = vmatprep.subr.bf16.mxu0 0
        %1261 = vmatpush2.bf16.msra.mxu0 %v1048
        %1262 = vmatprep.subr.bf16.mxu0 0
        %1263 = vmatpush2.bf16.msra.mxu0 %v1047
        %1264 = vmatprep.mubr.bf16.mxu0 %v552
        %1265 = vmatmul.mubr.bf16.gmra.mxu0 %v544
        %v1266 = vpop.f32.mrf.mxu0
        %v1267 = vadd.f32 %v1202, %v1266
        %v1268 = vpop.f32.mrf.mxu0
        %v1269 = vpop.f32.mrf.mxu0
        %v1270 = vadd.f32 %v1205, %v1269
        %v1271 = vpop.f32.mrf.mxu0
        %1272 = vmatprep.mubr.bf16.mxu0 %v553
        %1273 = vmatmul.mubr.bf16.gmra.mxu0 %v545
        %v1274 = vpop.f32.mrf.mxu0
        %v1275 = vadd.f32 %v1210, %v1274
        %v1276 = vpop.f32.mrf.mxu0
        %v1277 = vpop.f32.mrf.mxu0
        %v1278 = vadd.f32 %v1213, %v1277
        %v1279 = vpop.f32.mrf.mxu0
        %1280 = vmatprep.mubr.bf16.mxu0 %v554
        %1281 = vmatmul.mubr.bf16.gmra.mxu0 %v546
        %v1282 = vpop.f32.mrf.mxu0
        %v1283 = vadd.f32 %v1218, %v1282
        %v1284 = vpop.f32.mrf.mxu0
        %v1285 = vpop.f32.mrf.mxu0
        %v1286 = vadd.f32 %v1221, %v1285
        %v1287 = vpop.f32.mrf.mxu0
        %1288 = vmatprep.mubr.bf16.mxu0 %v555
        %1289 = vmatmul.mubr.bf16.gmra.mxu0 %v547
        %v1290 = vpop.f32.mrf.mxu0
        %v1291 = vadd.f32 %v1226, %v1290
        %v1292 = vpop.f32.mrf.mxu0
        %v1293 = vpop.f32.mrf.mxu0
        %v1294 = vadd.f32 %v1229, %v1293
        %v1295 = vpop.f32.mrf.mxu0
        %1296 = vdwg.mxu0
        %1297 = vmatprep.subr.bf16.mxu0 0
        %1298 = vmatpush1.bf16.msra.mxu0 %v1062
        %1299 = vmatprep.subr.bf16.mxu0 0
        %1300 = vmatpush1.bf16.msra.mxu0 %v1061
        %1301 = vmatprep.subr.bf16.mxu0 0
        %1302 = vmatpush1.bf16.msra.mxu0 %v1060
        %1303 = vmatprep.subr.bf16.mxu0 0
        %1304 = vmatpush1.bf16.msra.mxu0 %v1059
        %1305 = vmatprep.subr.bf16.mxu0 0
        %1306 = vmatpush1.bf16.msra.mxu0 %v1058
        %1307 = vmatprep.subr.bf16.mxu0 0
        %1308 = vmatpush1.bf16.msra.mxu0 %v1057
        %1309 = vmatprep.subr.bf16.mxu0 0
        %1310 = vmatpush1.bf16.msra.mxu0 %v1056
        %1311 = vmatprep.subr.bf16.mxu0 0
        %1312 = vmatpush1.bf16.msra.mxu0 %v1055
        %1313 = vmatprep.subr.bf16.mxu0 0
        %1314 = vmatpush2.bf16.msra.mxu0 %v1070
        %1315 = vmatprep.subr.bf16.mxu0 0
        %1316 = vmatpush2.bf16.msra.mxu0 %v1069
        %1317 = vmatprep.subr.bf16.mxu0 0
        %1318 = vmatpush2.bf16.msra.mxu0 %v1068
        %1319 = vmatprep.subr.bf16.mxu0 0
        %1320 = vmatpush2.bf16.msra.mxu0 %v1067
        %1321 = vmatprep.subr.bf16.mxu0 0
        %1322 = vmatpush2.bf16.msra.mxu0 %v1066
        %1323 = vmatprep.subr.bf16.mxu0 0
        %1324 = vmatpush2.bf16.msra.mxu0 %v1065
        %1325 = vmatprep.subr.bf16.mxu0 0
        %1326 = vmatpush2.bf16.msra.mxu0 %v1064
        %1327 = vmatprep.subr.bf16.mxu0 0
        %1328 = vmatpush2.bf16.msra.mxu0 %v1063
        %1329 = vmatprep.mubr.bf16.mxu0 %v570
        %1330 = vmatmul.mubr.bf16.gmra.mxu0 %v561
        %v1331 = vpop.f32.mrf.mxu0
        %v1332 = vadd.f32 %v1267, %v1331
        %v1333 = vpop.f32.mrf.mxu0
        %v1334 = vpop.f32.mrf.mxu0
        %v1335 = vadd.f32 %v1270, %v1334
        %v1336 = vpop.f32.mrf.mxu0
        %1337 = vmatprep.mubr.bf16.mxu0 %v571
        %1338 = vmatmul.mubr.bf16.gmra.mxu0 %v562
        %v1339 = vpop.f32.mrf.mxu0
        %v1340 = vadd.f32 %v1275, %v1339
        %v1341 = vpop.f32.mrf.mxu0
        %v1342 = vpop.f32.mrf.mxu0
        %v1343 = vadd.f32 %v1278, %v1342
        %v1344 = vpop.f32.mrf.mxu0
        %1345 = vmatprep.mubr.bf16.mxu0 %v572
        %1346 = vmatmul.mubr.bf16.gmra.mxu0 %v563
        %v1347 = vpop.f32.mrf.mxu0
        %v1348 = vadd.f32 %v1283, %v1347
        %v1349 = vpop.f32.mrf.mxu0
        %v1350 = vpop.f32.mrf.mxu0
        %v1351 = vadd.f32 %v1286, %v1350
        %v1352 = vpop.f32.mrf.mxu0
        %1353 = vmatprep.mubr.bf16.mxu0 %v573
        %1354 = vmatmul.mubr.bf16.gmra.mxu0 %v564
        %v1355 = vpop.f32.mrf.mxu0
        %v1356 = vadd.f32 %v1291, %v1355
        %v1357 = vpop.f32.mrf.mxu0
        %v1358 = vpop.f32.mrf.mxu0
        %v1359 = vadd.f32 %v1294, %v1358
        %v1360 = vpop.f32.mrf.mxu0
        %1361 = vdwg.mxu0
        %1362 = vmatprep.subr.bf16.mxu0 0
        %1363 = vmatpush1.bf16.msra.mxu0 %v1078
        %1364 = vmatprep.subr.bf16.mxu0 0
        %1365 = vmatpush1.bf16.msra.mxu0 %v1077
        %1366 = vmatprep.subr.bf16.mxu0 0
        %1367 = vmatpush1.bf16.msra.mxu0 %v1076
        %1368 = vmatprep.subr.bf16.mxu0 0
        %1369 = vmatpush1.bf16.msra.mxu0 %v1075
        %1370 = vmatprep.subr.bf16.mxu0 0
        %1371 = vmatpush1.bf16.msra.mxu0 %v1074
        %1372 = vmatprep.subr.bf16.mxu0 0
        %1373 = vmatpush1.bf16.msra.mxu0 %v1073
        %1374 = vmatprep.subr.bf16.mxu0 0
        %1375 = vmatpush1.bf16.msra.mxu0 %v1072
        %1376 = vmatprep.subr.bf16.mxu0 0
        %1377 = vmatpush1.bf16.msra.mxu0 %v1071
        %1378 = vmatprep.subr.bf16.mxu0 0
        %1379 = vmatpush2.bf16.msra.mxu0 %v1086
        %1380 = vmatprep.subr.bf16.mxu0 0
        %1381 = vmatpush2.bf16.msra.mxu0 %v1085
        %1382 = vmatprep.subr.bf16.mxu0 0
        %1383 = vmatpush2.bf16.msra.mxu0 %v1084
        %1384 = vmatprep.subr.bf16.mxu0 0
        %1385 = vmatpush2.bf16.msra.mxu0 %v1083
        %1386 = vmatprep.subr.bf16.mxu0 0
        %1387 = vmatpush2.bf16.msra.mxu0 %v1082
        %1388 = vmatprep.subr.bf16.mxu0 0
        %1389 = vmatpush2.bf16.msra.mxu0 %v1081
        %1390 = vmatprep.subr.bf16.mxu0 0
        %1391 = vmatpush2.bf16.msra.mxu0 %v1080
        %1392 = vmatprep.subr.bf16.mxu0 0
        %1393 = vmatpush2.bf16.msra.mxu0 %v1079
        %1394 = vmatprep.mubr.bf16.mxu0 %v529
        %1395 = vmatmul.mubr.bf16.gmra.mxu0 %v513
        %v1396 = vpop.f32.mrf.mxu0
        %v1397 = vadd.f32 %v1332, %v1396
        %v1398 = vpop.f32.mrf.mxu0
        %v1399 = vpop.f32.mrf.mxu0
        %v1400 = vadd.f32 %v1335, %v1399
        %v1401 = vpop.f32.mrf.mxu0
        %1402 = vmatprep.mubr.bf16.mxu0 %v530
        %1403 = vmatmul.mubr.bf16.gmra.mxu0 %v514
        %v1404 = vpop.f32.mrf.mxu0
        %v1405 = vadd.f32 %v1340, %v1404
        %v1406 = vpop.f32.mrf.mxu0
        %v1407 = vpop.f32.mrf.mxu0
        %v1408 = vadd.f32 %v1343, %v1407
        %v1409 = vpop.f32.mrf.mxu0
        %1410 = vmatprep.mubr.bf16.mxu0 %v531
        %1411 = vmatmul.mubr.bf16.gmra.mxu0 %v515
        %v1412 = vpop.f32.mrf.mxu0
        %v1413 = vadd.f32 %v1348, %v1412
        %v1414 = vpop.f32.mrf.mxu0
        %v1415 = vpop.f32.mrf.mxu0
        %v1416 = vadd.f32 %v1351, %v1415
        %v1417 = vpop.f32.mrf.mxu0
        %1418 = vmatprep.mubr.bf16.mxu0 %v580
        %1419 = vmatmul.mubr.bf16.gmra.mxu0 %v578
        %v1420 = vpop.f32.mrf.mxu0
        %v1421 = vadd.f32 %v1356, %v1420
        %v1422 = vpop.f32.mrf.mxu0
        %v1423 = vpop.f32.mrf.mxu0
        %v1424 = vadd.f32 %v1359, %v1423
        %v1425 = vpop.f32.mrf.mxu0
        %1426 = vdwg.mxu0
        %1427 = vmatprep.subr.bf16.mxu0 0
        %1428 = vmatpush1.bf16.msra.mxu0 %v1094
        %1429 = vmatprep.subr.bf16.mxu0 0
        %1430 = vmatpush1.bf16.msra.mxu0 %v1093
        %1431 = vmatprep.subr.bf16.mxu0 0
        %1432 = vmatpush1.bf16.msra.mxu0 %v1092
        %1433 = vmatprep.subr.bf16.mxu0 0
        %1434 = vmatpush1.bf16.msra.mxu0 %v1091
        %1435 = vmatprep.subr.bf16.mxu0 0
        %1436 = vmatpush1.bf16.msra.mxu0 %v1090
        %1437 = vmatprep.subr.bf16.mxu0 0
        %1438 = vmatpush1.bf16.msra.mxu0 %v1089
        %1439 = vmatprep.subr.bf16.mxu0 0
        %1440 = vmatpush1.bf16.msra.mxu0 %v1088
        %1441 = vmatprep.subr.bf16.mxu0 0
        %1442 = vmatpush1.bf16.msra.mxu0 %v1087
        %1443 = vmatprep.subr.bf16.mxu0 0
        %1444 = vmatpush2.bf16.msra.mxu0 0
        %1445 = vmatprep.subr.bf16.mxu0 0
        %1446 = vmatpush2.bf16.msra.mxu0 0
        %1447 = vmatprep.subr.bf16.mxu0 0
        %1448 = vmatpush2.bf16.msra.mxu0 0
        %1449 = vmatprep.subr.bf16.mxu0 0
        %1450 = vmatpush2.bf16.msra.mxu0 0
        %1451 = vmatprep.subr.bf16.mxu0 0
        %1452 = vmatpush2.bf16.msra.mxu0 0
        %1453 = vmatprep.subr.bf16.mxu0 0
        %1454 = vmatpush2.bf16.msra.mxu0 0
        %1455 = vmatprep.subr.bf16.mxu0 0
        %1456 = vmatpush2.bf16.msra.mxu0 0
        %1457 = vmatprep.subr.bf16.mxu0 0
        %1458 = vmatpush2.bf16.msra.mxu0 0
        %1459 = vmatprep.mubr.bf16.mxu0 0
        %1460 = vmatmul.mubr.bf16.gmra.mxu0 %v545
        %v1461 = vpop.f32.mrf.mxu0
        %v1462 = vadd.f32 %v1397, %v1461
        %v1463 = vpop.f32.mrf.mxu0
        %v1464 = vpop.f32.mrf.mxu0
        %v1465 = vadd.f32 %v1400, %v1464
        %v1466 = vpop.f32.mrf.mxu0
        %1467 = vmatprep.mubr.bf16.mxu0 0
        %1468 = vmatmul.mubr.bf16.gmra.mxu0 %v546
        %v1469 = vpop.f32.mrf.mxu0
        %v1470 = vadd.f32 %v1405, %v1469
        %v1471 = vpop.f32.mrf.mxu0
        %v1472 = vpop.f32.mrf.mxu0
        %v1473 = vadd.f32 %v1408, %v1472
        %v1474 = vpop.f32.mrf.mxu0
        %1475 = vmatprep.mubr.bf16.mxu0 0
        %1476 = vmatmul.mubr.bf16.gmra.mxu0 %v547
        %v1477 = vpop.f32.mrf.mxu0
        %v1478 = vadd.f32 %v1413, %v1477
        %v1479 = vpop.f32.mrf.mxu0
        %v1480 = vpop.f32.mrf.mxu0
        %v1481 = vadd.f32 %v1416, %v1480
        %v1482 = vpop.f32.mrf.mxu0
        %1483 = vmatprep.mubr.bf16.mxu0 0
        %1484 = vmatmul.mubr.bf16.gmra.mxu0 %v582
        %v1485 = vpop.f32.mrf.mxu0
        %v1486 = vadd.f32 %v1421, %v1485
        %v1487 = vpop.f32.mrf.mxu0
        %v1488 = vpop.f32.mrf.mxu0
        %v1489 = vadd.f32 %v1424, %v1488
        %v1490 = vpop.f32.mrf.mxu0
        %1491 = vdwg.mxu0
        %1492 = vst [vmem:[%s185] sm:$0xff] %v1462
        %1493 = vst [vmem:[%s185 + $0x8] sm:$0xff] %v1465
        %1494 = vst [vmem:[%s185 + $0x10] sm:$0xff] %v1470
        %1495 = vst [vmem:[%s185 + $0x18] sm:$0xff] %v1473
        %1496 = vst [vmem:[%s185 + $0x20] sm:$0xff] %v1478
        %1497 = vst [vmem:[%s185 + $0x28] sm:$0xff] %v1481
        %1498 = vst [vmem:[%s185 + $0x30] sm:$0xff] %v1486
        %1499 = vst [vmem:[%s185 + $0x38] sm:$0xff] %v1489
        %p1500 = scmp.lt.s32.totalorder %s15, 1
        %s1501 = scalar_select %p1500, %s15, 1
        %s1502 = smul.addr %s1501, 8
        %s1503 = smul.addr %s1502, 8
        %s1504 = scalar_lea.vmem %s3, %s1503
        // Predicated region
        $region37: #{rcan_forward.10} parent=31 // pred_check
          %p1505 = pneg %p101
        $region38: #{rcan_forward.10} parent=31 // pred_check_branch
          %1507 = sbr.rel (%p1505) target = $region40
        $region39: #{rcan_forward.10} parent=31 // pred_region
          _
        $region40: #{rcan_forward.10} parent=31 // pred_fallthru
          _
      $region32: #{rcan_forward.10} parent=5 // pred_fallthru
        _
      %p1508 = scmp.le.s32.totalorder 2, %s10
      // Predicated region
      $region41: #{rcan_forward.10} parent=5 // pred_check
        %p1509 = pneg %p1508
      $region42: #{rcan_forward.10} parent=5 // pred_check_branch
        %1511 = sbr.rel (%p1509) target = $region44
      $region43: #{rcan_forward.10} parent=5 // pred_region
        %s1512 = ssub.s32 %s10, 2
        // Predicated region
        $region45: #{rcan_forward.10} parent=43 // pred_check
          %p1513 = pneg %p107
        $region46: #{rcan_forward.10} parent=43 // pred_check_branch
          %1515 = sbr.rel (%p1513) target = $region48
        $region47: #{rcan_forward.10} parent=43 // pred_region
          %p1516 = scmp.lt.s32.totalorder %s16, 1
          %s1517 = scalar_select %p1516, %s16, 1
          %s1518 = smul.addr %s1517, 8
          %s1519 = smul.addr %s1518, 8
          %s1520 = scalar_lea.vmem %s3, %s1519
        $region48: #{rcan_forward.10} parent=43 // pred_fallthru
          _
      $region44: #{rcan_forward.10} parent=5 // pred_fallthru
        _
    $region6: #{rcan_forward.10} parent=1 // loop_footer
      %s14 = sadd.s32 1, %s10
    $region7: #{rcan_forward.10} parent=1 // loop_footer_branch
      %9 = sbr.rel target = $region3
    $region8: #{rcan_forward.10} parent=1 // loop_exit
      _
    %1521 = vsyncpa [#allocation3], 1
    %s1522 = scalar_lea.sflag [#allocation3], 1
    %1523 = vsyncpa %s1522, 1

// kernel: rcan_forward.13
$region0: #{rcan_forward.13}
  #allocation0 [shape = 'u32[]', space=smem, size = 0x4, offset = 0x4, fixed_abs, tag = 'smem constant byte address 0x4 - core index']
  #allocation1 [shape = 'u32[144,128]{1,0:T(1,128)}', space=vmem, size = 0x12000, scoped, tag = 'internal scratch']
  %s0 = inlined_call_operand.vmem [shape: f32[2,8,8,128], index: 0, kind: input, shape index: {}]
  %s1 = inlined_call_operand.vmem [shape: bf16[1152,128], index: 1, kind: input, shape index: {}]
  %s2 = inlined_call_operand.vmem [shape: f32[1,128], index: 2, kind: input, shape index: {}]
  %s3 = inlined_call_operand.vmem [shape: f32[2,8,8,128], index: 3, kind: output, shape index: {}]
  %s4 = sld [smem:[#allocation0]]
  $region45: #{rcan_forward.13} parent=0
    _
  %s6 = ssub.s32 1, %s4
  %s7 = scalar_select 0, %s6, %s4
  loop: start=0, step=1, limit=4
  $region2: #{rcan_forward.13} parent=0 // loop_pre_header
    _
  $region3: #{rcan_forward.13} parent=0 // loop_header
    %s9 = sphi 0, %s13
    %p10 = scmp.ge.s32.totalorder %s9, 4
    %s19 = sphi 0, %s21
    %s22 = sphi 0, %s19
    %s23 = sphi 0, %s22
    %s39 = sphi 0, %s23
    %s43 = sphi 0, %s43
    %s45 = sphi 0, %s43
    %s46 = sphi 0, %s45
    %s60 = sphi 0, %s46
    %s64 = sphi 0, %s64
    %s66 = sphi 0, %s64
    %s67 = sphi 0, %s66
    %s81 = sphi 0, %s67
    %s87 = sphi 0, %s89
    %s90 = sphi 0, %s87
    %s91 = sphi 0, %s90
    %s107 = sphi 0, %s91
  $region4: #{rcan_forward.13} parent=0 // loop_header_branch
    %12 = sbr.rel (%p10) target = $region8
  $region5: #{rcan_forward.13} parent=0 // loop_body
    %s14 = ssub.s32 %s9, 1
    %s15 = ssub.s32 %s9, 2
    %s16 = sadd.s32 %s9, 1
    %s17 = ssub.s32 %s9, %s16
    %p18 = scmp.eq.s32.totalorder %s17, 0
    %s20 = sadd.s32 %s19, 1
    %s21 = scalar_select %p18, %s19, %s20
    %p24 = pneg %p18
    %p25 = scmp.eq.s32.totalorder %s9, 1
    %p26 = por %p24, %p25
    %p27 = scmp.ne.s32.totalorder %s19, %s22
    %p28 = scmp.eq.s32.totalorder %s9, 0
    %p29 = por %p27, %p28
    %p30 = scmp.ne.s32.totalorder %s19, %s22
    %p31 = scmp.eq.s32.totalorder %s14, 1
    %p32 = por %p30, %p31
    %p33 = scmp.ne.s32.totalorder %s22, %s23
    %p34 = scmp.eq.s32.totalorder %s14, 0
    %p35 = por %p33, %p34
    %p36 = scmp.ne.s32.totalorder %s22, %s23
    %p37 = scmp.eq.s32.totalorder %s15, 1
    %p38 = por %p36, %p37
    %p40 = scmp.ne.s32.totalorder %s23, %s39
    %p41 = scmp.eq.s32.totalorder %s15, 0
    %p42 = por %p40, %p41
    %s44 = sadd.s32 %s43, 1
    %p47 = scmp.eq.s32.totalorder %s9, 1
    %p48 = scmp.ne.s32.totalorder %s43, %s45
    %p49 = scmp.eq.s32.totalorder %s9, 0
    %p50 = por %p48, %p49
    %p51 = scmp.ne.s32.totalorder %s43, %s45
    %p52 = scmp.eq.s32.totalorder %s14, 1
    %p53 = por %p51, %p52
    %p54 = scmp.ne.s32.totalorder %s45, %s46
    %p55 = scmp.eq.s32.totalorder %s14, 0
    %p56 = por %p54, %p55
    %p57 = scmp.ne.s32.totalorder %s45, %s46
    %p58 = scmp.eq.s32.totalorder %s15, 1
    %p59 = por %p57, %p58
    %p61 = scmp.ne.s32.totalorder %s46, %s60
    %p62 = scmp.eq.s32.totalorder %s15, 0
    %p63 = por %p61, %p62
    %s65 = sadd.s32 %s64, 1
    %p68 = scmp.eq.s32.totalorder %s9, 1
    %p69 = scmp.ne.s32.totalorder %s64, %s66
    %p70 = scmp.eq.s32.totalorder %s9, 0
    %p71 = por %p69, %p70
    %p72 = scmp.ne.s32.totalorder %s64, %s66
    %p73 = scmp.eq.s32.totalorder %s14, 1
    %p74 = por %p72, %p73
    %p75 = scmp.ne.s32.totalorder %s66, %s67
    %p76 = scmp.eq.s32.totalorder %s14, 0
    %p77 = por %p75, %p76
    %p78 = scmp.ne.s32.totalorder %s66, %s67
    %p79 = scmp.eq.s32.totalorder %s15, 1
    %p80 = por %p78, %p79
    %p82 = scmp.ne.s32.totalorder %s67, %s81
    %p83 = scmp.eq.s32.totalorder %s15, 0
    %p84 = por %p82, %p83
    %s85 = ssub.s32 %s9, %s16
    %p86 = scmp.eq.s32.totalorder %s85, 0
    %s88 = sadd.s32 %s87, 1
    %s89 = scalar_select %p86, %s87, %s88
    %p92 = pneg %p86
    %p93 = scmp.eq.s32.totalorder %s9, 1
    %p94 = por %p92, %p93
    %p95 = scmp.ne.s32.totalorder %s87, %s90
    %p96 = scmp.eq.s32.totalorder %s9, 0
    %p97 = por %p95, %p96
    %p98 = scmp.ne.s32.totalorder %s87, %s90
    %p99 = scmp.eq.s32.totalorder %s14, 1
    %p100 = por %p98, %p99
    %p101 = scmp.ne.s32.totalorder %s90, %s91
    %p102 = scmp.eq.s32.totalorder %s14, 0
    %p103 = por %p101, %p102
    %p104 = scmp.ne.s32.totalorder %s90, %s91
    %p105 = scmp.eq.s32.totalorder %s15, 1
    %p106 = por %p104, %p105
    %p108 = scmp.ne.s32.totalorder %s91, %s107
    %p109 = scmp.eq.s32.totalorder %s15, 0
    %p110 = por %p108, %p109
    %p111 = scmp.le.s32.totalorder 1, %s9
    %p112 = scmp.lt.s32.totalorder %s9, 3
    %p113 = pnand %p111, %p112
    %p114 = pneg %p113
    // Predicated region
    $region9: #{rcan_forward.13} parent=5 // pred_check
      _
    $region10: #{rcan_forward.13} parent=5 // pred_check_branch
      %116 = sbr.rel (%p113) target = $region12
    $region11: #{rcan_forward.13} parent=5 // pred_region
      %s117 = ssub.s32 %s9, 1
      // Predicated region
      $region13: #{rcan_forward.13} parent=11 // pred_check
        %p118 = pneg %p56
      $region14: #{rcan_forward.13} parent=11 // pred_check_branch
        %120 = sbr.rel (%p118) target = $region16
      $region15: #{rcan_forward.13} parent=11 // pred_region
        _
      $region16: #{rcan_forward.13} parent=11 // pred_fallthru
        _
      // Predicated region
      $region17: #{rcan_forward.13} parent=11 // pred_check
        %p121 = pneg %p77
      $region18: #{rcan_forward.13} parent=11 // pred_check_branch
        %123 = sbr.rel (%p121) target = $region20
      $region19: #{rcan_forward.13} parent=11 // pred_region
        _
      $region20: #{rcan_forward.13} parent=11 // pred_fallthru
        _
    $region12: #{rcan_forward.13} parent=5 // pred_fallthru
      _
    %p124 = scmp.lt.s32.totalorder %s9, 2
    // Predicated region
    $region21: #{rcan_forward.13} parent=5 // pred_check
      %p125 = pneg %p124
    $region22: #{rcan_forward.13} parent=5 // pred_check_branch
      %127 = sbr.rel (%p125) target = $region24
    $region23: #{rcan_forward.13} parent=5 // pred_region
      // Predicated region
      $region25: #{rcan_forward.13} parent=23 // pred_check
        %p128 = pneg %p29
      $region26: #{rcan_forward.13} parent=23 // pred_check_branch
        %130 = sbr.rel (%p128) target = $region28
      $region27: #{rcan_forward.13} parent=23 // pred_region
        %p131 = scmp.lt.s32.totalorder %s9, 1
        %s132 = scalar_select %p131, %s9, 1
        %s133 = smul.addr %s132, 8
        %s134 = smul.addr %s133, 8
        %s135 = scalar_lea.vmem %s0, %s134
      $region28: #{rcan_forward.13} parent=23 // pred_fallthru
        _
    $region24: #{rcan_forward.13} parent=5 // pred_fallthru
      _
    %p136 = scmp.le.s32.totalorder 1, %s9
    %p137 = scmp.lt.s32.totalorder %s9, 3
    %p138 = pnand %p136, %p137
    %p139 = pneg %p138
    // Predicated region
    $region29: #{rcan_forward.13} parent=5 // pred_check
      _
    $region30: #{rcan_forward.13} parent=5 // pred_check_branch
      %141 = sbr.rel (%p138) target = $region32
    $region31: #{rcan_forward.13} parent=5 // pred_region
      %s142 = ssub.s32 %s9, 1
      %p143 = scmp.lt.s32.totalorder %s14, 1
      %s144 = scalar_select %p143, %s14, 1
      %s145 = smul.addr %s144, 8
      %s146 = smul.addr %s145, 8
      %s147 = scalar_lea.vmem %s0, %s146
      %p148 = pneg %p35
      %p149 = pneg %p32
      %p150 = pneg %p56
      %p151 = pneg %p53
      %p152 = pneg %p77
      %p153 = pneg %p74
      %p154 = pneg %p103
      %p155 = pneg %p100
      %p156 = scmp.lt.s32.totalorder %s14, 1
      %s157 = scalar_select %p156, %s14, 1
      %s158 = smul.addr %s157, 8
      %s159 = smul.addr %s158, 8
      %s160 = scalar_lea.vmem %s3, %s159
      %p161 = scmp.lt.s32.totalorder %s14, 1
      %s162 = scalar_select %p161, %s14, 1
      %s163 = smul.addr %s162, 8
      %s164 = smul.addr %s163, 8
      %s165 = scalar_lea.vmem %s0, %s164
      %p166 = scmp.lt.s32.totalorder %s14, 1
      %s167 = scalar_select %p166, %s14, 1
      %s168 = smul.addr %s167, 8
      %s169 = smul.addr %s168, 8
      %s170 = scalar_lea.vmem %s3, %s169
      %v172 = vld [vmem:[%s165] sm:$0xff]
      %v173 = vld [vmem:[%s165 + $0x8] sm:$0xff]
      %v174 = vld [vmem:[%s165 + $0x10] sm:$0xff]
      %v175 = vld [vmem:[%s165 + $0x18] sm:$0xff]
      %v176 = vld [vmem:[%s165 + $0x20] sm:$0xff]
      %v177 = vld [vmem:[%s165 + $0x28] sm:$0xff]
      %v178 = vld [vmem:[%s165 + $0x30] sm:$0xff]
      %v179 = vld [vmem:[%s165 + $0x38] sm:$0xff]
      %v180 = vpack.c.bf16 %v172, %v172
      %v181 = vpack.c.bf16 %v173, %v173
      %v182 = vpack.c.bf16 %v174, %v174
      %v183 = vpack.c.bf16 %v175, %v175
      %v184 = vpack.c.bf16 %v176, %v176
      %v185 = vpack.c.bf16 %v177, %v177
      %v186 = vpack.c.bf16 %v178, %v178
      %v187 = vpack.c.bf16 %v179, %v179
      %v189 = vshrl.u32 0, 16
      %v191 = vrot.slane %v189, 7
      %v192 = vshll.u32 0, 16
      %v194 = vor.u32 %v191, %v192
      %v196 = vshrl.u32 %v180, 16
      %v198 = vrot.slane %v196, 7
      %v199 = vshll.u32 %v180, 16
      %v201 = vor.u32 %v198, %v199
      %v203 = vshrl.u32 %v181, 16
      %v205 = vrot.slane %v203, 7
      %v206 = vshll.u32 %v181, 16
      %v208 = vor.u32 %v205, %v206
      %v210 = vshrl.u32 %v182, 16
      %v212 = vrot.slane %v210, 7
      %v213 = vshll.u32 %v182, 16
      %v215 = vor.u32 %v212, %v213
      %v217 = vshrl.u32 %v183, 16
      %v219 = vrot.slane %v217, 7
      %v220 = vshll.u32 %v183, 16
      %v222 = vor.u32 %v219, %v220
      %v224 = vshrl.u32 %v184, 16
      %v226 = vrot.slane %v224, 7
      %v227 = vshll.u32 %v184, 16
      %v229 = vor.u32 %v226, %v227
      %v231 = vshrl.u32 %v185, 16
      %v233 = vrot.slane %v231, 7
      %v234 = vshll.u32 %v185, 16
      %v236 = vor.u32 %v233, %v234
      %v238 = vshrl.u32 %v186, 16
      %v240 = vrot.slane %v238, 7
      %v241 = vshll.u32 %v186, 16
      %v243 = vor.u32 %v240, %v241
      %v245 = vshrl.u32 %v187, 16
      %v247 = vrot.slane %v245, 7
      %v248 = vshll.u32 %v187, 16
      %v250 = vor.u32 %v247, %v248
      %vm260 = vcmask 1040384
      %vm261 = vsmask.f32 256
      %vm262 = vmand %vm260, %vm261
      %v263 = vsel %vm262, 0, %v194
      %v264 = vsel %vm262, 0, %v201
      %v265 = vsel %vm262, 0, %v208
      %v266 = vsel %vm262, 0, %v215
      %v267 = vsel %vm262, 0, %v222
      %v268 = vsel %vm262, 0, %v229
      %v269 = vsel %vm262, 0, %v236
      %v270 = vsel %vm262, 0, %v243
      %v271 = vsel %vm262, 0, %v250
      %vm272 = vcmask 1044480
      %vm273 = vsmask.f32 4352
      %vm274 = vmand %vm272, %vm273
      %v275 = vsel %vm274, %v263, 0
      %v276 = vsel %vm274, %v264, 0
      %v277 = vsel %vm274, %v265, 0
      %v278 = vsel %vm274, %v266, 0
      %v279 = vsel %vm274, %v267, 0
      %v280 = vsel %vm274, %v268, 0
      %v281 = vsel %vm274, %v269, 0
      %v282 = vsel %vm274, %v270, 0
      %v283 = vsel %vm274, %v271, 0
      %v292 = vunpack.c.l.b16 %v275
      %v293 = vunpack.c.h.b16 %v275
      %v294 = vunpack.c.l.b16 %v276
      %v295 = vunpack.c.h.b16 %v276
      %v296 = vunpack.c.l.b16 %v277
      %v297 = vunpack.c.h.b16 %v277
      %v298 = vunpack.c.l.b16 %v278
      %v299 = vunpack.c.h.b16 %v278
      %v300 = vunpack.c.l.b16 %v279
      %v301 = vunpack.c.h.b16 %v279
      %v302 = vunpack.c.l.b16 %v280
      %v303 = vunpack.c.h.b16 %v280
      %v304 = vunpack.c.l.b16 %v281
      %v305 = vunpack.c.h.b16 %v281
      %v306 = vunpack.c.l.b16 %v282
      %v307 = vunpack.c.h.b16 %v282
      %v308 = vpack.c.b16 %v292, %v292
      %v309 = vpack.c.b16 %v293, %v293
      %v310 = vpack.c.b16 %v294, %v294
      %v311 = vpack.c.b16 %v295, %v295
      %v312 = vpack.c.b16 %v296, %v296
      %v313 = vpack.c.b16 %v297, %v297
      %v314 = vpack.c.b16 %v298, %v298
      %v315 = vpack.c.b16 %v299, %v299
      %v316 = vpack.c.b16 %v300, %v300
      %v317 = vpack.c.b16 %v301, %v301
      %v318 = vpack.c.b16 %v302, %v302
      %v319 = vpack.c.b16 %v303, %v303
      %v320 = vpack.c.b16 %v304, %v304
      %v321 = vpack.c.b16 %v305, %v305
      %v322 = vpack.c.b16 %v306, %v306
      %v323 = vpack.c.b16 %v307, %v307
      %vm324 = vsmask.f32 3328
      %vm325 = vsmask.f32 7440
      %vm326 = vmor %vm324, %vm325
      %v328 = vshrl.u32 %v308, 16
      %v330 = vrot.slane %v328, 4
      %v331 = vshll.u32 %v308, 16
      %v333 = vrot.slane %v331, 5
      %v334 = vor.u32 %v330, %v333
      %v335 = vrot.slane %v334, 4
      %v337 = vshll.u32 %v309, 16
      %v339 = vrot.slane %v337, 5
      %v340 = vsel %vm326, %v335, %v339
      %v342 = vshrl.u32 %v310, 16
      %v344 = vrot.slane %v342, 4
      %v345 = vshll.u32 %v310, 16
      %v347 = vrot.slane %v345, 5
      %v348 = vor.u32 %v344, %v347
      %v349 = vrot.slane %v348, 4
      %v351 = vshll.u32 %v311, 16
      %v353 = vrot.slane %v351, 5
      %v354 = vsel %vm326, %v349, %v353
      %v356 = vshrl.u32 %v312, 16
      %v358 = vrot.slane %v356, 4
      %v359 = vshll.u32 %v312, 16
      %v361 = vrot.slane %v359, 5
      %v362 = vor.u32 %v358, %v361
      %v363 = vrot.slane %v362, 4
      %v365 = vshll.u32 %v313, 16
      %v367 = vrot.slane %v365, 5
      %v368 = vsel %vm326, %v363, %v367
      %v370 = vshrl.u32 %v314, 16
      %v372 = vrot.slane %v370, 4
      %v373 = vshll.u32 %v314, 16
      %v375 = vrot.slane %v373, 5
      %v376 = vor.u32 %v372, %v375
      %v377 = vrot.slane %v376, 4
      %v379 = vshll.u32 %v315, 16
      %v381 = vrot.slane %v379, 5
      %v382 = vsel %vm326, %v377, %v381
      %v384 = vshrl.u32 %v316, 16
      %v386 = vrot.slane %v384, 4
      %v387 = vshll.u32 %v316, 16
      %v389 = vrot.slane %v387, 5
      %v390 = vor.u32 %v386, %v389
      %v391 = vrot.slane %v390, 4
      %v393 = vshll.u32 %v317, 16
      %v395 = vrot.slane %v393, 5
      %v396 = vsel %vm326, %v391, %v395
      %v398 = vshrl.u32 %v318, 16
      %v400 = vrot.slane %v398, 4
      %v401 = vshll.u32 %v318, 16
      %v403 = vrot.slane %v401, 5
      %v404 = vor.u32 %v400, %v403
      %v405 = vrot.slane %v404, 4
      %v407 = vshll.u32 %v319, 16
      %v409 = vrot.slane %v407, 5
      %v410 = vsel %vm326, %v405, %v409
      %v412 = vshrl.u32 %v320, 16
      %v414 = vrot.slane %v412, 4
      %v415 = vshll.u32 %v320, 16
      %v417 = vrot.slane %v415, 5
      %v418 = vor.u32 %v414, %v417
      %v419 = vrot.slane %v418, 4
      %v421 = vshll.u32 %v321, 16
      %v423 = vrot.slane %v421, 5
      %v424 = vsel %vm326, %v419, %v423
      %v426 = vshrl.u32 %v322, 16
      %v428 = vrot.slane %v426, 4
      %v429 = vshll.u32 %v322, 16
      %v431 = vrot.slane %v429, 5
      %v432 = vor.u32 %v428, %v431
      %v433 = vrot.slane %v432, 4
      %v435 = vshll.u32 %v323, 16
      %v437 = vrot.slane %v435, 5
      %v438 = vsel %vm326, %v433, %v437
      %vm439 = vcmask 1042432
      %vm440 = vcmask 1046532
      %vm441 = vmor %vm439, %vm440
      %v442 = vrot.slane %v308, 5
      %v443 = vrot.slane %v442, 4
      %v444 = vrot.slane %v309, 5
      %v445 = vsel %vm441, %v443, %v444
      %v446 = vrot.slane %v310, 5
      %v447 = vrot.slane %v446, 4
      %v448 = vrot.slane %v311, 5
      %v449 = vsel %vm441, %v447, %v448
      %v450 = vrot.slane %v312, 5
      %v451 = vrot.slane %v450, 4
      %v452 = vrot.slane %v313, 5
      %v453 = vsel %vm441, %v451, %v452
      %v454 = vrot.slane %v314, 5
      %v455 = vrot.slane %v454, 4
      %v456 = vrot.slane %v315, 5
      %v457 = vsel %vm441, %v455, %v456
      %v458 = vrot.slane %v316, 5
      %v459 = vrot.slane %v458, 4
      %v460 = vrot.slane %v317, 5
      %v461 = vsel %vm441, %v459, %v460
      %v462 = vrot.slane %v318, 5
      %v463 = vrot.slane %v462, 4
      %v464 = vrot.slane %v319, 5
      %v465 = vsel %vm441, %v463, %v464
      %v466 = vrot.slane %v320, 5
      %v467 = vrot.slane %v466, 4
      %v468 = vrot.slane %v321, 5
      %v469 = vsel %vm441, %v467, %v468
      %v470 = vrot.slane %v322, 5
      %v471 = vrot.slane %v470, 4
      %v472 = vrot.slane %v323, 5
      %v473 = vsel %vm441, %v471, %v472
      %v475 = vunpack.c.l.b16 %v283
      %v476 = vunpack.c.h.b16 %v283
      %v477 = vpack.c.b16 %v475, %v475
      %v478 = vpack.c.b16 %v476, %v476
      %v480 = vshrl.u32 %v477, 16
      %v482 = vrot.slane %v480, 4
      %v483 = vshll.u32 %v477, 16
      %v485 = vrot.slane %v483, 5
      %v486 = vor.u32 %v482, %v485
      %v487 = vrot.slane %v486, 4
      %v489 = vshll.u32 %v478, 16
      %v491 = vrot.slane %v489, 5
      %v492 = vsel %vm326, %v487, %v491
      %v493 = vrot.slane %v477, 5
      %v494 = vrot.slane %v493, 4
      %v495 = vrot.slane %v478, 5
      %v496 = vsel %vm441, %v494, %v495
      %v497 = vpack.c.b16 %v294, %v292
      %v498 = vpack.c.b16 %v298, %v296
      %v499 = vpack.c.b16 %v302, %v300
      %v500 = vpack.c.b16 %v306, %v304
      %v505 = vunpack.c.l.b16 %v340
      %v506 = vunpack.c.l.b16 %v354
      %v507 = vunpack.c.l.b16 %v368
      %v508 = vunpack.c.l.b16 %v382
      %v509 = vunpack.c.l.b16 %v396
      %v510 = vunpack.c.l.b16 %v410
      %v511 = vunpack.c.l.b16 %v424
      %v512 = vunpack.c.l.b16 %v438
      %v513 = vpack.c.b16 %v506, %v505
      %v514 = vpack.c.b16 %v508, %v507
      %v515 = vpack.c.b16 %v510, %v509
      %v516 = vpack.c.b16 %v512, %v511
      %v521 = vunpack.c.l.b16 %v445
      %v522 = vunpack.c.l.b16 %v449
      %v523 = vunpack.c.l.b16 %v453
      %v524 = vunpack.c.l.b16 %v457
      %v525 = vunpack.c.l.b16 %v461
      %v526 = vunpack.c.l.b16 %v465
      %v527 = vunpack.c.l.b16 %v469
      %v528 = vunpack.c.l.b16 %v473
      %v529 = vpack.c.b16 %v522, %v521
      %v530 = vpack.c.b16 %v524, %v523
      %v531 = vpack.c.b16 %v526, %v525
      %v532 = vpack.c.b16 %v528, %v527
      %v537 = vpack.c.b16 %v296, %v294
      %v538 = vpack.c.b16 %v300, %v298
      %v539 = vpack.c.b16 %v304, %v302
      %v540 = vpack.c.b16 %v475, %v306
      %v545 = vunpack.c.l.b16 %v492
      %v546 = vpack.c.b16 %v507, %v506
      %v547 = vpack.c.b16 %v509, %v508
      %v548 = vpack.c.b16 %v511, %v510
      %v549 = vpack.c.b16 %v545, %v512
      %v554 = vunpack.c.l.b16 %v496
      %v555 = vpack.c.b16 %v523, %v522
      %v556 = vpack.c.b16 %v525, %v524
      %v557 = vpack.c.b16 %v527, %v526
      %v558 = vpack.c.b16 %v554, %v528
      %v563 = vpack.c.b16 %v292, %v475
      %v565 = vpack.c.b16 %v505, %v545
      %v567 = vpack.c.b16 %v521, %v554
      %v569 = vld [vmem:[%s1] sm:$0xf]
      %v570 = vld [vmem:[%s1 + $0x4] sm:$0xf]
      %v571 = vld [vmem:[%s1 + $0x8] sm:$0xf]
      %v572 = vld [vmem:[%s1 + $0xc] sm:$0xf]
      %v573 = vld [vmem:[%s1 + $0x10] sm:$0xf]
      %v574 = vld [vmem:[%s1 + $0x14] sm:$0xf]
      %v575 = vld [vmem:[%s1 + $0x18] sm:$0xf]
      %v576 = vld [vmem:[%s1 + $0x1c] sm:$0xf]
      %v577 = vld [vmem:[%s1 + $0x20] sm:$0xf]
      %v578 = vld [vmem:[%s1 + $0x24] sm:$0xf]
      %v579 = vld [vmem:[%s1 + $0x28] sm:$0xf]
      %v580 = vld [vmem:[%s1 + $0x2c] sm:$0xf]
      %v581 = vld [vmem:[%s1 + $0x30] sm:$0xf]
      %v582 = vld [vmem:[%s1 + $0x34] sm:$0xf]
      %v583 = vld [vmem:[%s1 + $0x38] sm:$0xf]
      %v584 = vld [vmem:[%s1 + $0x3c] sm:$0xf]
      %v585 = vld [vmem:[%s1 + $0x40] sm:$0xf]
      %v586 = vld [vmem:[%s1 + $0x44] sm:$0xf]
      %v587 = vld [vmem:[%s1 + $0x48] sm:$0xf]
      %v588 = vld [vmem:[%s1 + $0x4c] sm:$0xf]
      %v589 = vld [vmem:[%s1 + $0x50] sm:$0xf]
      %v590 = vld [vmem:[%s1 + $0x54] sm:$0xf]
      %v591 = vld [vmem:[%s1 + $0x58] sm:$0xf]
      %v592 = vld [vmem:[%s1 + $0x5c] sm:$0xf]
      %v593 = vld [vmem:[%s1 + $0x60] sm:$0xf]
      %v594 = vld [vmem:[%s1 + $0x64] sm:$0xf]
      %v595 = vld [vmem:[%s1 + $0x68] sm:$0xf]
      %v596 = vld [vmem:[%s1 + $0x6c] sm:$0xf]
      %v597 = vld [vmem:[%s1 + $0x70] sm:$0xf]
      %v598 = vld [vmem:[%s1 + $0x74] sm:$0xf]
      %v599 = vld [vmem:[%s1 + $0x78] sm:$0xf]
      %v600 = vld [vmem:[%s1 + $0x7c] sm:$0xf]
      %v601 = vld [vmem:[%s1 + $0x80] sm:$0xf]
      %v602 = vld [vmem:[%s1 + $0x84] sm:$0xf]
      %v603 = vld [vmem:[%s1 + $0x88] sm:$0xf]
      %v604 = vld [vmem:[%s1 + $0x8c] sm:$0xf]
      %v605 = vld [vmem:[%s1 + $0x90] sm:$0xf]
      %v606 = vld [vmem:[%s1 + $0x94] sm:$0xf]
      %v607 = vld [vmem:[%s1 + $0x98] sm:$0xf]
      %v608 = vld [vmem:[%s1 + $0x9c] sm:$0xf]
      %v609 = vld [vmem:[%s1 + $0xa0] sm:$0xf]
      %v610 = vld [vmem:[%s1 + $0xa4] sm:$0xf]
      %v611 = vld [vmem:[%s1 + $0xa8] sm:$0xf]
      %v612 = vld [vmem:[%s1 + $0xac] sm:$0xf]
      %v613 = vld [vmem:[%s1 + $0xb0] sm:$0xf]
      %v614 = vld [vmem:[%s1 + $0xb4] sm:$0xf]
      %v615 = vld [vmem:[%s1 + $0xb8] sm:$0xf]
      %v616 = vld [vmem:[%s1 + $0xbc] sm:$0xf]
      %v617 = vld [vmem:[%s1 + $0xc0] sm:$0xf]
      %v618 = vld [vmem:[%s1 + $0xc4] sm:$0xf]
      %v619 = vld [vmem:[%s1 + $0xc8] sm:$0xf]
      %v620 = vld [vmem:[%s1 + $0xcc] sm:$0xf]
      %v621 = vld [vmem:[%s1 + $0xd0] sm:$0xf]
      %v622 = vld [vmem:[%s1 + $0xd4] sm:$0xf]
      %v623 = vld [vmem:[%s1 + $0xd8] sm:$0xf]
      %v624 = vld [vmem:[%s1 + $0xdc] sm:$0xf]
      %v625 = vld [vmem:[%s1 + $0xe0] sm:$0xf]
      %v626 = vld [vmem:[%s1 + $0xe4] sm:$0xf]
      %v627 = vld [vmem:[%s1 + $0xe8] sm:$0xf]
      %v628 = vld [vmem:[%s1 + $0xec] sm:$0xf]
      %v629 = vld [vmem:[%s1 + $0xf0] sm:$0xf]
      %v630 = vld [vmem:[%s1 + $0xf4] sm:$0xf]
      %v631 = vld [vmem:[%s1 + $0xf8] sm:$0xf]
      %v632 = vld [vmem:[%s1 + $0xfc] sm:$0xf]
      %v633 = vld [vmem:[%s1 + $0x100] sm:$0xf]
      %v634 = vld [vmem:[%s1 + $0x104] sm:$0xf]
      %v635 = vld [vmem:[%s1 + $0x108] sm:$0xf]
      %v636 = vld [vmem:[%s1 + $0x10c] sm:$0xf]
      %v637 = vld [vmem:[%s1 + $0x110] sm:$0xf]
      %v638 = vld [vmem:[%s1 + $0x114] sm:$0xf]
      %v639 = vld [vmem:[%s1 + $0x118] sm:$0xf]
      %v640 = vld [vmem:[%s1 + $0x11c] sm:$0xf]
      %v641 = vld [vmem:[%s1 + $0x120] sm:$0xf]
      %v642 = vld [vmem:[%s1 + $0x124] sm:$0xf]
      %v643 = vld [vmem:[%s1 + $0x128] sm:$0xf]
      %v644 = vld [vmem:[%s1 + $0x12c] sm:$0xf]
      %v645 = vld [vmem:[%s1 + $0x130] sm:$0xf]
      %v646 = vld [vmem:[%s1 + $0x134] sm:$0xf]
      %v647 = vld [vmem:[%s1 + $0x138] sm:$0xf]
      %v648 = vld [vmem:[%s1 + $0x13c] sm:$0xf]
      %v649 = vld [vmem:[%s1 + $0x140] sm:$0xf]
      %v650 = vld [vmem:[%s1 + $0x144] sm:$0xf]
      %v651 = vld [vmem:[%s1 + $0x148] sm:$0xf]
      %v652 = vld [vmem:[%s1 + $0x14c] sm:$0xf]
      %v653 = vld [vmem:[%s1 + $0x150] sm:$0xf]
      %v654 = vld [vmem:[%s1 + $0x154] sm:$0xf]
      %v655 = vld [vmem:[%s1 + $0x158] sm:$0xf]
      %v656 = vld [vmem:[%s1 + $0x15c] sm:$0xf]
      %v657 = vld [vmem:[%s1 + $0x160] sm:$0xf]
      %v658 = vld [vmem:[%s1 + $0x164] sm:$0xf]
      %v659 = vld [vmem:[%s1 + $0x168] sm:$0xf]
      %v660 = vld [vmem:[%s1 + $0x16c] sm:$0xf]
      %v661 = vld [vmem:[%s1 + $0x170] sm:$0xf]
      %v662 = vld [vmem:[%s1 + $0x174] sm:$0xf]
      %v663 = vld [vmem:[%s1 + $0x178] sm:$0xf]
      %v664 = vld [vmem:[%s1 + $0x17c] sm:$0xf]
      %v665 = vld [vmem:[%s1 + $0x180] sm:$0xf]
      %v666 = vld [vmem:[%s1 + $0x184] sm:$0xf]
      %v667 = vld [vmem:[%s1 + $0x188] sm:$0xf]
      %v668 = vld [vmem:[%s1 + $0x18c] sm:$0xf]
      %v669 = vld [vmem:[%s1 + $0x190] sm:$0xf]
      %v670 = vld [vmem:[%s1 + $0x194] sm:$0xf]
      %v671 = vld [vmem:[%s1 + $0x198] sm:$0xf]
      %v672 = vld [vmem:[%s1 + $0x19c] sm:$0xf]
      %v673 = vld [vmem:[%s1 + $0x1a0] sm:$0xf]
      %v674 = vld [vmem:[%s1 + $0x1a4] sm:$0xf]
      %v675 = vld [vmem:[%s1 + $0x1a8] sm:$0xf]
      %v676 = vld [vmem:[%s1 + $0x1ac] sm:$0xf]
      %v677 = vld [vmem:[%s1 + $0x1b0] sm:$0xf]
      %v678 = vld [vmem:[%s1 + $0x1b4] sm:$0xf]
      %v679 = vld [vmem:[%s1 + $0x1b8] sm:$0xf]
      %v680 = vld [vmem:[%s1 + $0x1bc] sm:$0xf]
      %v681 = vld [vmem:[%s1 + $0x1c0] sm:$0xf]
      %v682 = vld [vmem:[%s1 + $0x1c4] sm:$0xf]
      %v683 = vld [vmem:[%s1 + $0x1c8] sm:$0xf]
      %v684 = vld [vmem:[%s1 + $0x1cc] sm:$0xf]
      %v685 = vld [vmem:[%s1 + $0x1d0] sm:$0xf]
      %v686 = vld [vmem:[%s1 + $0x1d4] sm:$0xf]
      %v687 = vld [vmem:[%s1 + $0x1d8] sm:$0xf]
      %v688 = vld [vmem:[%s1 + $0x1dc] sm:$0xf]
      %v689 = vld [vmem:[%s1 + $0x1e0] sm:$0xf]
      %v690 = vld [vmem:[%s1 + $0x1e4] sm:$0xf]
      %v691 = vld [vmem:[%s1 + $0x1e8] sm:$0xf]
      %v692 = vld [vmem:[%s1 + $0x1ec] sm:$0xf]
      %v693 = vld [vmem:[%s1 + $0x1f0] sm:$0xf]
      %v694 = vld [vmem:[%s1 + $0x1f4] sm:$0xf]
      %v695 = vld [vmem:[%s1 + $0x1f8] sm:$0xf]
      %v696 = vld [vmem:[%s1 + $0x1fc] sm:$0xf]
      %v697 = vld [vmem:[%s1 + $0x200] sm:$0xf]
      %v698 = vld [vmem:[%s1 + $0x204] sm:$0xf]
      %v699 = vld [vmem:[%s1 + $0x208] sm:$0xf]
      %v700 = vld [vmem:[%s1 + $0x20c] sm:$0xf]
      %v701 = vld [vmem:[%s1 + $0x210] sm:$0xf]
      %v702 = vld [vmem:[%s1 + $0x214] sm:$0xf]
      %v703 = vld [vmem:[%s1 + $0x218] sm:$0xf]
      %v704 = vld [vmem:[%s1 + $0x21c] sm:$0xf]
      %v705 = vld [vmem:[%s1 + $0x220] sm:$0xf]
      %v706 = vld [vmem:[%s1 + $0x224] sm:$0xf]
      %v707 = vld [vmem:[%s1 + $0x228] sm:$0xf]
      %v708 = vld [vmem:[%s1 + $0x22c] sm:$0xf]
      %v709 = vld [vmem:[%s1 + $0x230] sm:$0xf]
      %v710 = vld [vmem:[%s1 + $0x234] sm:$0xf]
      %v711 = vld [vmem:[%s1 + $0x238] sm:$0xf]
      %v712 = vld [vmem:[%s1 + $0x23c] sm:$0xf]
      %v713 = vld [vmem:[%s2] sm:$0x1]
      %v715 = vlaneseq
      %v716 = vshrl.u32 %v715, 7
      %v717 = vsub.s32 0, %v716
      %v718 = vrot.slane %v713, %v717
      %v864 = vunpack.c.l.b16 %v569
      %v865 = vunpack.c.l.b16 %v570
      %v866 = vunpack.c.l.b16 %v571
      %v867 = vunpack.c.l.b16 %v572
      %v868 = vunpack.c.l.b16 %v573
      %v869 = vunpack.c.l.b16 %v574
      %v870 = vunpack.c.l.b16 %v575
      %v871 = vunpack.c.l.b16 %v576
      %v872 = vunpack.c.l.b16 %v577
      %v873 = vunpack.c.l.b16 %v578
      %v874 = vunpack.c.l.b16 %v579
      %v875 = vunpack.c.l.b16 %v580
      %v876 = vunpack.c.l.b16 %v581
      %v877 = vunpack.c.l.b16 %v582
      %v878 = vunpack.c.l.b16 %v583
      %v879 = vunpack.c.l.b16 %v584
      %v880 = vunpack.c.l.b16 %v585
      %v881 = vunpack.c.l.b16 %v586
      %v882 = vunpack.c.l.b16 %v587
      %v883 = vunpack.c.l.b16 %v588
      %v884 = vunpack.c.l.b16 %v589
      %v885 = vunpack.c.l.b16 %v590
      %v886 = vunpack.c.l.b16 %v591
      %v887 = vunpack.c.l.b16 %v592
      %v888 = vunpack.c.l.b16 %v593
      %v889 = vunpack.c.l.b16 %v594
      %v890 = vunpack.c.l.b16 %v595
      %v891 = vunpack.c.l.b16 %v596
      %v892 = vunpack.c.l.b16 %v597
      %v893 = vunpack.c.l.b16 %v598
      %v894 = vunpack.c.l.b16 %v599
      %v895 = vunpack.c.l.b16 %v600
      %v896 = vunpack.c.l.b16 %v601
      %v897 = vunpack.c.l.b16 %v602
      %v898 = vunpack.c.l.b16 %v603
      %v899 = vunpack.c.l.b16 %v604
      %v900 = vunpack.c.l.b16 %v605
      %v901 = vunpack.c.l.b16 %v606
      %v902 = vunpack.c.l.b16 %v607
      %v903 = vunpack.c.l.b16 %v608
      %v904 = vunpack.c.l.b16 %v609
      %v905 = vunpack.c.l.b16 %v610
      %v906 = vunpack.c.l.b16 %v611
      %v907 = vunpack.c.l.b16 %v612
      %v908 = vunpack.c.l.b16 %v613
      %v909 = vunpack.c.l.b16 %v614
      %v910 = vunpack.c.l.b16 %v615
      %v911 = vunpack.c.l.b16 %v616
      %v912 = vunpack.c.l.b16 %v617
      %v913 = vunpack.c.l.b16 %v618
      %v914 = vunpack.c.l.b16 %v619
      %v915 = vunpack.c.l.b16 %v620
      %v916 = vunpack.c.l.b16 %v621
      %v917 = vunpack.c.l.b16 %v622
      %v918 = vunpack.c.l.b16 %v623
      %v919 = vunpack.c.l.b16 %v624
      %v920 = vunpack.c.l.b16 %v625
      %v921 = vunpack.c.l.b16 %v626
      %v922 = vunpack.c.l.b16 %v627
      %v923 = vunpack.c.l.b16 %v628
      %v924 = vunpack.c.l.b16 %v629
      %v925 = vunpack.c.l.b16 %v630
      %v926 = vunpack.c.l.b16 %v631
      %v927 = vunpack.c.l.b16 %v632
      %v928 = vunpack.c.l.b16 %v633
      %v929 = vunpack.c.l.b16 %v634
      %v930 = vunpack.c.l.b16 %v635
      %v931 = vunpack.c.l.b16 %v636
      %v932 = vunpack.c.l.b16 %v637
      %v933 = vunpack.c.l.b16 %v638
      %v934 = vunpack.c.l.b16 %v639
      %v935 = vunpack.c.l.b16 %v640
      %v936 = vunpack.c.l.b16 %v641
      %v937 = vunpack.c.l.b16 %v642
      %v938 = vunpack.c.l.b16 %v643
      %v939 = vunpack.c.l.b16 %v644
      %v940 = vunpack.c.l.b16 %v645
      %v941 = vunpack.c.l.b16 %v646
      %v942 = vunpack.c.l.b16 %v647
      %v943 = vunpack.c.l.b16 %v648
      %v944 = vunpack.c.l.b16 %v649
      %v945 = vunpack.c.l.b16 %v650
      %v946 = vunpack.c.l.b16 %v651
      %v947 = vunpack.c.l.b16 %v652
      %v948 = vunpack.c.l.b16 %v653
      %v949 = vunpack.c.l.b16 %v654
      %v950 = vunpack.c.l.b16 %v655
      %v951 = vunpack.c.l.b16 %v656
      %v952 = vunpack.c.l.b16 %v657
      %v953 = vunpack.c.l.b16 %v658
      %v954 = vunpack.c.l.b16 %v659
      %v955 = vunpack.c.l.b16 %v660
      %v956 = vunpack.c.l.b16 %v661
      %v957 = vunpack.c.l.b16 %v662
      %v958 = vunpack.c.l.b16 %v663
      %v959 = vunpack.c.l.b16 %v664
      %v960 = vunpack.c.l.b16 %v665
      %v961 = vunpack.c.l.b16 %v666
      %v962 = vunpack.c.l.b16 %v667
      %v963 = vunpack.c.l.b16 %v668
      %v964 = vunpack.c.l.b16 %v669
      %v965 = vunpack.c.l.b16 %v670
      %v966 = vunpack.c.l.b16 %v671
      %v967 = vunpack.c.l.b16 %v672
      %v968 = vunpack.c.l.b16 %v673
      %v969 = vunpack.c.l.b16 %v674
      %v970 = vunpack.c.l.b16 %v675
      %v971 = vunpack.c.l.b16 %v676
      %v972 = vunpack.c.l.b16 %v677
      %v973 = vunpack.c.l.b16 %v678
      %v974 = vunpack.c.l.b16 %v679
      %v975 = vunpack.c.l.b16 %v680
      %v976 = vunpack.c.l.b16 %v681
      %v977 = vunpack.c.l.b16 %v682
      %v978 = vunpack.c.l.b16 %v683
      %v979 = vunpack.c.l.b16 %v684
      %v980 = vunpack.c.l.b16 %v685
      %v981 = vunpack.c.l.b16 %v686
      %v982 = vunpack.c.l.b16 %v687
      %v983 = vunpack.c.l.b16 %v688
      %v984 = vunpack.c.l.b16 %v689
      %v985 = vunpack.c.l.b16 %v690
      %v986 = vunpack.c.l.b16 %v691
      %v987 = vunpack.c.l.b16 %v692
      %v988 = vunpack.c.l.b16 %v693
      %v989 = vunpack.c.l.b16 %v694
      %v990 = vunpack.c.l.b16 %v695
      %v991 = vunpack.c.l.b16 %v696
      %v992 = vunpack.c.l.b16 %v697
      %v993 = vunpack.c.l.b16 %v698
      %v994 = vunpack.c.l.b16 %v699
      %v995 = vunpack.c.l.b16 %v700
      %v996 = vunpack.c.l.b16 %v701
      %v997 = vunpack.c.l.b16 %v702
      %v998 = vunpack.c.l.b16 %v703
      %v999 = vunpack.c.l.b16 %v704
      %v1000 = vunpack.c.l.b16 %v705
      %v1001 = vunpack.c.l.b16 %v706
      %v1002 = vunpack.c.l.b16 %v707
      %v1003 = vunpack.c.l.b16 %v708
      %v1004 = vunpack.c.l.b16 %v709
      %v1005 = vunpack.c.l.b16 %v710
      %v1006 = vunpack.c.l.b16 %v711
      %v1007 = vunpack.c.l.b16 %v712
      %v1008 = vpack.c.b16 %v865, %v864
      %v1009 = vpack.c.b16 %v867, %v866
      %v1010 = vpack.c.b16 %v869, %v868
      %v1011 = vpack.c.b16 %v871, %v870
      %v1012 = vpack.c.b16 %v873, %v872
      %v1013 = vpack.c.b16 %v875, %v874
      %v1014 = vpack.c.b16 %v877, %v876
      %v1015 = vpack.c.b16 %v879, %v878
      %v1016 = vpack.c.b16 %v881, %v880
      %v1017 = vpack.c.b16 %v883, %v882
      %v1018 = vpack.c.b16 %v885, %v884
      %v1019 = vpack.c.b16 %v887, %v886
      %v1020 = vpack.c.b16 %v889, %v888
      %v1021 = vpack.c.b16 %v891, %v890
      %v1022 = vpack.c.b16 %v893, %v892
      %v1023 = vpack.c.b16 %v895, %v894
      %v1024 = vpack.c.b16 %v897, %v896
      %v1025 = vpack.c.b16 %v899, %v898
      %v1026 = vpack.c.b16 %v901, %v900
      %v1027 = vpack.c.b16 %v903, %v902
      %v1028 = vpack.c.b16 %v905, %v904
      %v1029 = vpack.c.b16 %v907, %v906
      %v1030 = vpack.c.b16 %v909, %v908
      %v1031 = vpack.c.b16 %v911, %v910
      %v1032 = vpack.c.b16 %v913, %v912
      %v1033 = vpack.c.b16 %v915, %v914
      %v1034 = vpack.c.b16 %v917, %v916
      %v1035 = vpack.c.b16 %v919, %v918
      %v1036 = vpack.c.b16 %v921, %v920
      %v1037 = vpack.c.b16 %v923, %v922
      %v1038 = vpack.c.b16 %v925, %v924
      %v1039 = vpack.c.b16 %v927, %v926
      %v1040 = vpack.c.b16 %v929, %v928
      %v1041 = vpack.c.b16 %v931, %v930
      %v1042 = vpack.c.b16 %v933, %v932
      %v1043 = vpack.c.b16 %v935, %v934
      %v1044 = vpack.c.b16 %v937, %v936
      %v1045 = vpack.c.b16 %v939, %v938
      %v1046 = vpack.c.b16 %v941, %v940
      %v1047 = vpack.c.b16 %v943, %v942
      %v1048 = vpack.c.b16 %v945, %v944
      %v1049 = vpack.c.b16 %v947, %v946
      %v1050 = vpack.c.b16 %v949, %v948
      %v1051 = vpack.c.b16 %v951, %v950
      %v1052 = vpack.c.b16 %v953, %v952
      %v1053 = vpack.c.b16 %v955, %v954
      %v1054 = vpack.c.b16 %v957, %v956
      %v1055 = vpack.c.b16 %v959, %v958
      %v1056 = vpack.c.b16 %v961, %v960
      %v1057 = vpack.c.b16 %v963, %v962
      %v1058 = vpack.c.b16 %v965, %v964
      %v1059 = vpack.c.b16 %v967, %v966
      %v1060 = vpack.c.b16 %v969, %v968
      %v1061 = vpack.c.b16 %v971, %v970
      %v1062 = vpack.c.b16 %v973, %v972
      %v1063 = vpack.c.b16 %v975, %v974
      %v1064 = vpack.c.b16 %v977, %v976
      %v1065 = vpack.c.b16 %v979, %v978
      %v1066 = vpack.c.b16 %v981, %v980
      %v1067 = vpack.c.b16 %v983, %v982
      %v1068 = vpack.c.b16 %v985, %v984
      %v1069 = vpack.c.b16 %v987, %v986
      %v1070 = vpack.c.b16 %v989, %v988
      %v1071 = vpack.c.b16 %v991, %v990
      %v1072 = vpack.c.b16 %v993, %v992
      %v1073 = vpack.c.b16 %v995, %v994
      %v1074 = vpack.c.b16 %v997, %v996
      %v1075 = vpack.c.b16 %v999, %v998
      %v1076 = vpack.c.b16 %v1001, %v1000
      %v1077 = vpack.c.b16 %v1003, %v1002
      %v1078 = vpack.c.b16 %v1005, %v1004
      %v1079 = vpack.c.b16 %v1007, %v1006
      %1152 = vmatprep.subr.bf16.mxu0 0
      %1153 = vmatpush1.bf16.msra.mxu0 %v1015
      %1154 = vmatprep.subr.bf16.mxu0 0
      %1155 = vmatpush1.bf16.msra.mxu0 %v1014
      %1156 = vmatprep.subr.bf16.mxu0 0
      %1157 = vmatpush1.bf16.msra.mxu0 %v1013
      %1158 = vmatprep.subr.bf16.mxu0 0
      %1159 = vmatpush1.bf16.msra.mxu0 %v1012
      %1160 = vmatprep.subr.bf16.mxu0 0
      %1161 = vmatpush1.bf16.msra.mxu0 %v1011
      %1162 = vmatprep.subr.bf16.mxu0 0
      %1163 = vmatpush1.bf16.msra.mxu0 %v1010
      %1164 = vmatprep.subr.bf16.mxu0 0
      %1165 = vmatpush1.bf16.msra.mxu0 %v1009
      %1166 = vmatprep.subr.bf16.mxu0 0
      %1167 = vmatpush1.bf16.msra.mxu0 %v1008
      %1168 = vmatprep.subr.bf16.mxu0 0
      %1169 = vmatpush2.bf16.msra.mxu0 %v1023
      %1170 = vmatprep.subr.bf16.mxu0 0
      %1171 = vmatpush2.bf16.msra.mxu0 %v1022
      %1172 = vmatprep.subr.bf16.mxu0 0
      %1173 = vmatpush2.bf16.msra.mxu0 %v1021
      %1174 = vmatprep.subr.bf16.mxu0 0
      %1175 = vmatpush2.bf16.msra.mxu0 %v1020
      %1176 = vmatprep.subr.bf16.mxu0 0
      %1177 = vmatpush2.bf16.msra.mxu0 %v1019
      %1178 = vmatprep.subr.bf16.mxu0 0
      %1179 = vmatpush2.bf16.msra.mxu0 %v1018
      %1180 = vmatprep.subr.bf16.mxu0 0
      %1181 = vmatpush2.bf16.msra.mxu0 %v1017
      %1182 = vmatprep.subr.bf16.mxu0 0
      %1183 = vmatpush2.bf16.msra.mxu0 %v1016
      %1184 = vmatprep.mubr.bf16.mxu0 %v513
      %1185 = vmatmul.mubr.bf16.gmra.mxu0 %v497
      %v1186 = vpop.f32.mrf.mxu0
      %v1187 = vadd.f32 %v718, %v1186
      %v1188 = vpop.f32.mrf.mxu0
      %v1189 = vpop.f32.mrf.mxu0
      %v1190 = vadd.f32 %v718, %v1189
      %v1191 = vpop.f32.mrf.mxu0
      %1192 = vmatprep.mubr.bf16.mxu0 %v514
      %1193 = vmatmul.mubr.bf16.gmra.mxu0 %v498
      %v1194 = vpop.f32.mrf.mxu0
      %v1195 = vadd.f32 %v718, %v1194
      %v1196 = vpop.f32.mrf.mxu0
      %v1197 = vpop.f32.mrf.mxu0
      %v1198 = vadd.f32 %v718, %v1197
      %v1199 = vpop.f32.mrf.mxu0
      %1200 = vmatprep.mubr.bf16.mxu0 %v515
      %1201 = vmatmul.mubr.bf16.gmra.mxu0 %v499
      %v1202 = vpop.f32.mrf.mxu0
      %v1203 = vadd.f32 %v718, %v1202
      %v1204 = vpop.f32.mrf.mxu0
      %v1205 = vpop.f32.mrf.mxu0
      %v1206 = vadd.f32 %v718, %v1205
      %v1207 = vpop.f32.mrf.mxu0
      %1208 = vmatprep.mubr.bf16.mxu0 %v516
      %1209 = vmatmul.mubr.bf16.gmra.mxu0 %v500
      %v1210 = vpop.f32.mrf.mxu0
      %v1211 = vadd.f32 %v718, %v1210
      %v1212 = vpop.f32.mrf.mxu0
      %v1213 = vpop.f32.mrf.mxu0
      %v1214 = vadd.f32 %v718, %v1213
      %v1215 = vpop.f32.mrf.mxu0
      %1216 = vdwg.mxu0
      %1217 = vmatprep.subr.bf16.mxu0 0
      %1218 = vmatpush1.bf16.msra.mxu0 %v1031
      %1219 = vmatprep.subr.bf16.mxu0 0
      %1220 = vmatpush1.bf16.msra.mxu0 %v1030
      %1221 = vmatprep.subr.bf16.mxu0 0
      %1222 = vmatpush1.bf16.msra.mxu0 %v1029
      %1223 = vmatprep.subr.bf16.mxu0 0
      %1224 = vmatpush1.bf16.msra.mxu0 %v1028
      %1225 = vmatprep.subr.bf16.mxu0 0
      %1226 = vmatpush1.bf16.msra.mxu0 %v1027
      %1227 = vmatprep.subr.bf16.mxu0 0
      %1228 = vmatpush1.bf16.msra.mxu0 %v1026
      %1229 = vmatprep.subr.bf16.mxu0 0
      %1230 = vmatpush1.bf16.msra.mxu0 %v1025
      %1231 = vmatprep.subr.bf16.mxu0 0
      %1232 = vmatpush1.bf16.msra.mxu0 %v1024
      %1233 = vmatprep.subr.bf16.mxu0 0
      %1234 = vmatpush2.bf16.msra.mxu0 %v1039
      %1235 = vmatprep.subr.bf16.mxu0 0
      %1236 = vmatpush2.bf16.msra.mxu0 %v1038
      %1237 = vmatprep.subr.bf16.mxu0 0
      %1238 = vmatpush2.bf16.msra.mxu0 %v1037
      %1239 = vmatprep.subr.bf16.mxu0 0
      %1240 = vmatpush2.bf16.msra.mxu0 %v1036
      %1241 = vmatprep.subr.bf16.mxu0 0
      %1242 = vmatpush2.bf16.msra.mxu0 %v1035
      %1243 = vmatprep.subr.bf16.mxu0 0
      %1244 = vmatpush2.bf16.msra.mxu0 %v1034
      %1245 = vmatprep.subr.bf16.mxu0 0
      %1246 = vmatpush2.bf16.msra.mxu0 %v1033
      %1247 = vmatprep.subr.bf16.mxu0 0
      %1248 = vmatpush2.bf16.msra.mxu0 %v1032
      %1249 = vmatprep.mubr.bf16.mxu0 %v537
      %1250 = vmatmul.mubr.bf16.gmra.mxu0 %v529
      %v1251 = vpop.f32.mrf.mxu0
      %v1252 = vadd.f32 %v1187, %v1251
      %v1253 = vpop.f32.mrf.mxu0
      %v1254 = vpop.f32.mrf.mxu0
      %v1255 = vadd.f32 %v1190, %v1254
      %v1256 = vpop.f32.mrf.mxu0
      %1257 = vmatprep.mubr.bf16.mxu0 %v538
      %1258 = vmatmul.mubr.bf16.gmra.mxu0 %v530
      %v1259 = vpop.f32.mrf.mxu0
      %v1260 = vadd.f32 %v1195, %v1259
      %v1261 = vpop.f32.mrf.mxu0
      %v1262 = vpop.f32.mrf.mxu0
      %v1263 = vadd.f32 %v1198, %v1262
      %v1264 = vpop.f32.mrf.mxu0
      %1265 = vmatprep.mubr.bf16.mxu0 %v539
      %1266 = vmatmul.mubr.bf16.gmra.mxu0 %v531
      %v1267 = vpop.f32.mrf.mxu0
      %v1268 = vadd.f32 %v1203, %v1267
      %v1269 = vpop.f32.mrf.mxu0
      %v1270 = vpop.f32.mrf.mxu0
      %v1271 = vadd.f32 %v1206, %v1270
      %v1272 = vpop.f32.mrf.mxu0
      %1273 = vmatprep.mubr.bf16.mxu0 %v540
      %1274 = vmatmul.mubr.bf16.gmra.mxu0 %v532
      %v1275 = vpop.f32.mrf.mxu0
      %v1276 = vadd.f32 %v1211, %v1275
      %v1277 = vpop.f32.mrf.mxu0
      %v1278 = vpop.f32.mrf.mxu0
      %v1279 = vadd.f32 %v1214, %v1278
      %v1280 = vpop.f32.mrf.mxu0
      %1281 = vdwg.mxu0
      %1282 = vmatprep.subr.bf16.mxu0 0
      %1283 = vmatpush1.bf16.msra.mxu0 %v1047
      %1284 = vmatprep.subr.bf16.mxu0 0
      %1285 = vmatpush1.bf16.msra.mxu0 %v1046
      %1286 = vmatprep.subr.bf16.mxu0 0
      %1287 = vmatpush1.bf16.msra.mxu0 %v1045
      %1288 = vmatprep.subr.bf16.mxu0 0
      %1289 = vmatpush1.bf16.msra.mxu0 %v1044
      %1290 = vmatprep.subr.bf16.mxu0 0
      %1291 = vmatpush1.bf16.msra.mxu0 %v1043
      %1292 = vmatprep.subr.bf16.mxu0 0
      %1293 = vmatpush1.bf16.msra.mxu0 %v1042
      %1294 = vmatprep.subr.bf16.mxu0 0
      %1295 = vmatpush1.bf16.msra.mxu0 %v1041
      %1296 = vmatprep.subr.bf16.mxu0 0
      %1297 = vmatpush1.bf16.msra.mxu0 %v1040
      %1298 = vmatprep.subr.bf16.mxu0 0
      %1299 = vmatpush2.bf16.msra.mxu0 %v1055
      %1300 = vmatprep.subr.bf16.mxu0 0
      %1301 = vmatpush2.bf16.msra.mxu0 %v1054
      %1302 = vmatprep.subr.bf16.mxu0 0
      %1303 = vmatpush2.bf16.msra.mxu0 %v1053
      %1304 = vmatprep.subr.bf16.mxu0 0
      %1305 = vmatpush2.bf16.msra.mxu0 %v1052
      %1306 = vmatprep.subr.bf16.mxu0 0
      %1307 = vmatpush2.bf16.msra.mxu0 %v1051
      %1308 = vmatprep.subr.bf16.mxu0 0
      %1309 = vmatpush2.bf16.msra.mxu0 %v1050
      %1310 = vmatprep.subr.bf16.mxu0 0
      %1311 = vmatpush2.bf16.msra.mxu0 %v1049
      %1312 = vmatprep.subr.bf16.mxu0 0
      %1313 = vmatpush2.bf16.msra.mxu0 %v1048
      %1314 = vmatprep.mubr.bf16.mxu0 %v555
      %1315 = vmatmul.mubr.bf16.gmra.mxu0 %v546
      %v1316 = vpop.f32.mrf.mxu0
      %v1317 = vadd.f32 %v1252, %v1316
      %v1318 = vpop.f32.mrf.mxu0
      %v1319 = vpop.f32.mrf.mxu0
      %v1320 = vadd.f32 %v1255, %v1319
      %v1321 = vpop.f32.mrf.mxu0
      %1322 = vmatprep.mubr.bf16.mxu0 %v556
      %1323 = vmatmul.mubr.bf16.gmra.mxu0 %v547
      %v1324 = vpop.f32.mrf.mxu0
      %v1325 = vadd.f32 %v1260, %v1324
      %v1326 = vpop.f32.mrf.mxu0
      %v1327 = vpop.f32.mrf.mxu0
      %v1328 = vadd.f32 %v1263, %v1327
      %v1329 = vpop.f32.mrf.mxu0
      %1330 = vmatprep.mubr.bf16.mxu0 %v557
      %1331 = vmatmul.mubr.bf16.gmra.mxu0 %v548
      %v1332 = vpop.f32.mrf.mxu0
      %v1333 = vadd.f32 %v1268, %v1332
      %v1334 = vpop.f32.mrf.mxu0
      %v1335 = vpop.f32.mrf.mxu0
      %v1336 = vadd.f32 %v1271, %v1335
      %v1337 = vpop.f32.mrf.mxu0
      %1338 = vmatprep.mubr.bf16.mxu0 %v558
      %1339 = vmatmul.mubr.bf16.gmra.mxu0 %v549
      %v1340 = vpop.f32.mrf.mxu0
      %v1341 = vadd.f32 %v1276, %v1340
      %v1342 = vpop.f32.mrf.mxu0
      %v1343 = vpop.f32.mrf.mxu0
      %v1344 = vadd.f32 %v1279, %v1343
      %v1345 = vpop.f32.mrf.mxu0
      %1346 = vdwg.mxu0
      %1347 = vmatprep.subr.bf16.mxu0 0
      %1348 = vmatpush1.bf16.msra.mxu0 %v1063
      %1349 = vmatprep.subr.bf16.mxu0 0
      %1350 = vmatpush1.bf16.msra.mxu0 %v1062
      %1351 = vmatprep.subr.bf16.mxu0 0
      %1352 = vmatpush1.bf16.msra.mxu0 %v1061
      %1353 = vmatprep.subr.bf16.mxu0 0
      %1354 = vmatpush1.bf16.msra.mxu0 %v1060
      %1355 = vmatprep.subr.bf16.mxu0 0
      %1356 = vmatpush1.bf16.msra.mxu0 %v1059
      %1357 = vmatprep.subr.bf16.mxu0 0
      %1358 = vmatpush1.bf16.msra.mxu0 %v1058
      %1359 = vmatprep.subr.bf16.mxu0 0
      %1360 = vmatpush1.bf16.msra.mxu0 %v1057
      %1361 = vmatprep.subr.bf16.mxu0 0
      %1362 = vmatpush1.bf16.msra.mxu0 %v1056
      %1363 = vmatprep.subr.bf16.mxu0 0
      %1364 = vmatpush2.bf16.msra.mxu0 %v1071
      %1365 = vmatprep.subr.bf16.mxu0 0
      %1366 = vmatpush2.bf16.msra.mxu0 %v1070
      %1367 = vmatprep.subr.bf16.mxu0 0
      %1368 = vmatpush2.bf16.msra.mxu0 %v1069
      %1369 = vmatprep.subr.bf16.mxu0 0
      %1370 = vmatpush2.bf16.msra.mxu0 %v1068
      %1371 = vmatprep.subr.bf16.mxu0 0
      %1372 = vmatpush2.bf16.msra.mxu0 %v1067
      %1373 = vmatprep.subr.bf16.mxu0 0
      %1374 = vmatpush2.bf16.msra.mxu0 %v1066
      %1375 = vmatprep.subr.bf16.mxu0 0
      %1376 = vmatpush2.bf16.msra.mxu0 %v1065
      %1377 = vmatprep.subr.bf16.mxu0 0
      %1378 = vmatpush2.bf16.msra.mxu0 %v1064
      %1379 = vmatprep.mubr.bf16.mxu0 %v514
      %1380 = vmatmul.mubr.bf16.gmra.mxu0 %v498
      %v1381 = vpop.f32.mrf.mxu0
      %v1382 = vadd.f32 %v1317, %v1381
      %v1383 = vpop.f32.mrf.mxu0
      %v1384 = vpop.f32.mrf.mxu0
      %v1385 = vadd.f32 %v1320, %v1384
      %v1386 = vpop.f32.mrf.mxu0
      %1387 = vmatprep.mubr.bf16.mxu0 %v515
      %1388 = vmatmul.mubr.bf16.gmra.mxu0 %v499
      %v1389 = vpop.f32.mrf.mxu0
      %v1390 = vadd.f32 %v1325, %v1389
      %v1391 = vpop.f32.mrf.mxu0
      %v1392 = vpop.f32.mrf.mxu0
      %v1393 = vadd.f32 %v1328, %v1392
      %v1394 = vpop.f32.mrf.mxu0
      %1395 = vmatprep.mubr.bf16.mxu0 %v516
      %1396 = vmatmul.mubr.bf16.gmra.mxu0 %v500
      %v1397 = vpop.f32.mrf.mxu0
      %v1398 = vadd.f32 %v1333, %v1397
      %v1399 = vpop.f32.mrf.mxu0
      %v1400 = vpop.f32.mrf.mxu0
      %v1401 = vadd.f32 %v1336, %v1400
      %v1402 = vpop.f32.mrf.mxu0
      %1403 = vmatprep.mubr.bf16.mxu0 %v565
      %1404 = vmatmul.mubr.bf16.gmra.mxu0 %v563
      %v1405 = vpop.f32.mrf.mxu0
      %v1406 = vadd.f32 %v1341, %v1405
      %v1407 = vpop.f32.mrf.mxu0
      %v1408 = vpop.f32.mrf.mxu0
      %v1409 = vadd.f32 %v1344, %v1408
      %v1410 = vpop.f32.mrf.mxu0
      %1411 = vdwg.mxu0
      %1412 = vmatprep.subr.bf16.mxu0 0
      %1413 = vmatpush1.bf16.msra.mxu0 %v1079
      %1414 = vmatprep.subr.bf16.mxu0 0
      %1415 = vmatpush1.bf16.msra.mxu0 %v1078
      %1416 = vmatprep.subr.bf16.mxu0 0
      %1417 = vmatpush1.bf16.msra.mxu0 %v1077
      %1418 = vmatprep.subr.bf16.mxu0 0
      %1419 = vmatpush1.bf16.msra.mxu0 %v1076
      %1420 = vmatprep.subr.bf16.mxu0 0
      %1421 = vmatpush1.bf16.msra.mxu0 %v1075
      %1422 = vmatprep.subr.bf16.mxu0 0
      %1423 = vmatpush1.bf16.msra.mxu0 %v1074
      %1424 = vmatprep.subr.bf16.mxu0 0
      %1425 = vmatpush1.bf16.msra.mxu0 %v1073
      %1426 = vmatprep.subr.bf16.mxu0 0
      %1427 = vmatpush1.bf16.msra.mxu0 %v1072
      %1428 = vmatprep.subr.bf16.mxu0 0
      %1429 = vmatpush2.bf16.msra.mxu0 0
      %1430 = vmatprep.subr.bf16.mxu0 0
      %1431 = vmatpush2.bf16.msra.mxu0 0
      %1432 = vmatprep.subr.bf16.mxu0 0
      %1433 = vmatpush2.bf16.msra.mxu0 0
      %1434 = vmatprep.subr.bf16.mxu0 0
      %1435 = vmatpush2.bf16.msra.mxu0 0
      %1436 = vmatprep.subr.bf16.mxu0 0
      %1437 = vmatpush2.bf16.msra.mxu0 0
      %1438 = vmatprep.subr.bf16.mxu0 0
      %1439 = vmatpush2.bf16.msra.mxu0 0
      %1440 = vmatprep.subr.bf16.mxu0 0
      %1441 = vmatpush2.bf16.msra.mxu0 0
      %1442 = vmatprep.subr.bf16.mxu0 0
      %1443 = vmatpush2.bf16.msra.mxu0 0
      %1444 = vmatprep.mubr.bf16.mxu0 0
      %1445 = vmatmul.mubr.bf16.gmra.mxu0 %v530
      %v1446 = vpop.f32.mrf.mxu0
      %v1447 = vadd.f32 %v1382, %v1446
      %v1448 = vpop.f32.mrf.mxu0
      %v1449 = vpop.f32.mrf.mxu0
      %v1450 = vadd.f32 %v1385, %v1449
      %v1451 = vpop.f32.mrf.mxu0
      %1452 = vmatprep.mubr.bf16.mxu0 0
      %1453 = vmatmul.mubr.bf16.gmra.mxu0 %v531
      %v1454 = vpop.f32.mrf.mxu0
      %v1455 = vadd.f32 %v1390, %v1454
      %v1456 = vpop.f32.mrf.mxu0
      %v1457 = vpop.f32.mrf.mxu0
      %v1458 = vadd.f32 %v1393, %v1457
      %v1459 = vpop.f32.mrf.mxu0
      %1460 = vmatprep.mubr.bf16.mxu0 0
      %1461 = vmatmul.mubr.bf16.gmra.mxu0 %v532
      %v1462 = vpop.f32.mrf.mxu0
      %v1463 = vadd.f32 %v1398, %v1462
      %v1464 = vpop.f32.mrf.mxu0
      %v1465 = vpop.f32.mrf.mxu0
      %v1466 = vadd.f32 %v1401, %v1465
      %v1467 = vpop.f32.mrf.mxu0
      %1468 = vmatprep.mubr.bf16.mxu0 0
      %1469 = vmatmul.mubr.bf16.gmra.mxu0 %v567
      %v1470 = vpop.f32.mrf.mxu0
      %v1471 = vadd.f32 %v1406, %v1470
      %v1472 = vpop.f32.mrf.mxu0
      %v1473 = vpop.f32.mrf.mxu0
      %v1474 = vadd.f32 %v1409, %v1473
      %v1475 = vpop.f32.mrf.mxu0
      %1476 = vdwg.mxu0
      %1477 = vst [vmem:[%s170] sm:$0xff] %v1447
      %1478 = vst [vmem:[%s170 + $0x8] sm:$0xff] %v1450
      %1479 = vst [vmem:[%s170 + $0x10] sm:$0xff] %v1455
      %1480 = vst [vmem:[%s170 + $0x18] sm:$0xff] %v1458
      %1481 = vst [vmem:[%s170 + $0x20] sm:$0xff] %v1463
      %1482 = vst [vmem:[%s170 + $0x28] sm:$0xff] %v1466
      %1483 = vst [vmem:[%s170 + $0x30] sm:$0xff] %v1471
      %1484 = vst [vmem:[%s170 + $0x38] sm:$0xff] %v1474
      %p1485 = scmp.lt.s32.totalorder %s14, 1
      %s1486 = scalar_select %p1485, %s14, 1
      %s1487 = smul.addr %s1486, 8
      %s1488 = smul.addr %s1487, 8
      %s1489 = scalar_lea.vmem %s3, %s1488
      // Predicated region
      $region33: #{rcan_forward.13} parent=31 // pred_check
        %p1490 = pneg %p100
      $region34: #{rcan_forward.13} parent=31 // pred_check_branch
        %1492 = sbr.rel (%p1490) target = $region36
      $region35: #{rcan_forward.13} parent=31 // pred_region
        _
      $region36: #{rcan_forward.13} parent=31 // pred_fallthru
        _
    $region32: #{rcan_forward.13} parent=5 // pred_fallthru
      _
    %p1493 = scmp.le.s32.totalorder 2, %s9
    // Predicated region
    $region37: #{rcan_forward.13} parent=5 // pred_check
      %p1494 = pneg %p1493
    $region38: #{rcan_forward.13} parent=5 // pred_check_branch
      %1496 = sbr.rel (%p1494) target = $region40
    $region39: #{rcan_forward.13} parent=5 // pred_region
      %s1497 = ssub.s32 %s9, 2
      // Predicated region
      $region41: #{rcan_forward.13} parent=39 // pred_check
        %p1498 = pneg %p106
      $region42: #{rcan_forward.13} parent=39 // pred_check_branch
        %1500 = sbr.rel (%p1498) target = $region44
      $region43: #{rcan_forward.13} parent=39 // pred_region
        %p1501 = scmp.lt.s32.totalorder %s15, 1
        %s1502 = scalar_select %p1501, %s15, 1
        %s1503 = smul.addr %s1502, 8
        %s1504 = smul.addr %s1503, 8
        %s1505 = scalar_lea.vmem %s3, %s1504
      $region44: #{rcan_forward.13} parent=39 // pred_fallthru
        _
    $region40: #{rcan_forward.13} parent=5 // pred_fallthru
      _
  $region6: #{rcan_forward.13} parent=0 // loop_footer
    %s13 = sadd.s32 1, %s9
  $region7: #{rcan_forward.13} parent=0 // loop_footer_branch
    %8 = sbr.rel target = $region3
  $region8: #{rcan_forward.13} parent=0 // loop_exit
    _

// kernel: rcan_forward.12
$region0: #{rcan_forward.12}
  #allocation0 [shape = 'u32[]', space=smem, size = 0x4, offset = 0x4, fixed_abs, tag = 'smem constant byte address 0x4 - core index']
  #allocation1 [shape = 'u32[144,128]{1,0:T(1,128)}', space=vmem, size = 0x12000, scoped, tag = 'internal scratch']
  %s0 = inlined_call_operand.vmem [shape: f32[2,8,8,128], index: 0, kind: input, shape index: {}]
  %s1 = inlined_call_operand.vmem [shape: bf16[1152,128], index: 1, kind: input, shape index: {}]
  %s2 = inlined_call_operand.vmem [shape: f32[1,128], index: 2, kind: input, shape index: {}]
  %s3 = inlined_call_operand.vmem [shape: bf16[1152,128], index: 3, kind: input, shape index: {}]
  %s4 = inlined_call_operand.vmem [shape: f32[1,128], index: 4, kind: input, shape index: {}]
  %s5 = inlined_call_operand.vmem [shape: bf16[128,128], index: 5, kind: input, shape index: {}]
  %s6 = inlined_call_operand.vmem [shape: f32[1,128], index: 6, kind: input, shape index: {}]
  %s7 = inlined_call_operand.vmem [shape: bf16[128,128], index: 7, kind: input, shape index: {}]
  %s8 = inlined_call_operand.vmem [shape: f32[1,128], index: 8, kind: input, shape index: {}]
  %s9 = inlined_call_operand.vmem [shape: f32[2,8,8,128], index: 9, kind: output, shape index: {}]
  %s10 = sld [smem:[#allocation0]]
  $region69: #{rcan_forward.12} parent=0
    _
  %s12 = ssub.s32 1, %s10
  %s13 = scalar_select 0, %s12, %s10
  loop: start=0, step=1, limit=4
  $region2: #{rcan_forward.12} parent=0 // loop_pre_header
    _
  $region3: #{rcan_forward.12} parent=0 // loop_header
    %s15 = sphi 0, %s19
    %p16 = scmp.ge.s32.totalorder %s15, 4
    %s25 = sphi 0, %s27
    %s28 = sphi 0, %s25
    %s29 = sphi 0, %s28
    %s45 = sphi 0, %s29
    %s49 = sphi 0, %s49
    %s51 = sphi 0, %s49
    %s52 = sphi 0, %s51
    %s66 = sphi 0, %s52
    %s70 = sphi 0, %s70
    %s72 = sphi 0, %s70
    %s73 = sphi 0, %s72
    %s87 = sphi 0, %s73
    %s91 = sphi 0, %s91
    %s93 = sphi 0, %s91
    %s94 = sphi 0, %s93
    %s108 = sphi 0, %s94
    %s112 = sphi 0, %s112
    %s114 = sphi 0, %s112
    %s115 = sphi 0, %s114
    %s129 = sphi 0, %s115
    %s133 = sphi 0, %s133
    %s135 = sphi 0, %s133
    %s136 = sphi 0, %s135
    %s150 = sphi 0, %s136
    %s154 = sphi 0, %s154
    %s156 = sphi 0, %s154
    %s157 = sphi 0, %s156
    %s171 = sphi 0, %s157
    %s175 = sphi 0, %s175
    %s177 = sphi 0, %s175
    %s178 = sphi 0, %s177
    %s192 = sphi 0, %s178
    %s196 = sphi 0, %s196
    %s198 = sphi 0, %s196
    %s199 = sphi 0, %s198
    %s213 = sphi 0, %s199
    %s219 = sphi 0, %s221
    %s222 = sphi 0, %s219
    %s223 = sphi 0, %s222
    %s239 = sphi 0, %s223
  $region4: #{rcan_forward.12} parent=0 // loop_header_branch
    %18 = sbr.rel (%p16) target = $region8
  $region5: #{rcan_forward.12} parent=0 // loop_body
    %s20 = ssub.s32 %s15, 1
    %s21 = ssub.s32 %s15, 2
    %s22 = sadd.s32 %s15, 1
    %s23 = ssub.s32 %s15, %s22
    %p24 = scmp.eq.s32.totalorder %s23, 0
    %s26 = sadd.s32 %s25, 1
    %s27 = scalar_select %p24, %s25, %s26
    %p30 = pneg %p24
    %p31 = scmp.eq.s32.totalorder %s15, 1
    %p32 = por %p30, %p31
    %p33 = scmp.ne.s32.totalorder %s25, %s28
    %p34 = scmp.eq.s32.totalorder %s15, 0
    %p35 = por %p33, %p34
    %p36 = scmp.ne.s32.totalorder %s25, %s28
    %p37 = scmp.eq.s32.totalorder %s20, 1
    %p38 = por %p36, %p37
    %p39 = scmp.ne.s32.totalorder %s28, %s29
    %p40 = scmp.eq.s32.totalorder %s20, 0
    %p41 = por %p39, %p40
    %p42 = scmp.ne.s32.totalorder %s28, %s29
    %p43 = scmp.eq.s32.totalorder %s21, 1
    %p44 = por %p42, %p43
    %p46 = scmp.ne.s32.totalorder %s29, %s45
    %p47 = scmp.eq.s32.totalorder %s21, 0
    %p48 = por %p46, %p47
    %s50 = sadd.s32 %s49, 1
    %p53 = scmp.eq.s32.totalorder %s15, 1
    %p54 = scmp.ne.s32.totalorder %s49, %s51
    %p55 = scmp.eq.s32.totalorder %s15, 0
    %p56 = por %p54, %p55
    %p57 = scmp.ne.s32.totalorder %s49, %s51
    %p58 = scmp.eq.s32.totalorder %s20, 1
    %p59 = por %p57, %p58
    %p60 = scmp.ne.s32.totalorder %s51, %s52
    %p61 = scmp.eq.s32.totalorder %s20, 0
    %p62 = por %p60, %p61
    %p63 = scmp.ne.s32.totalorder %s51, %s52
    %p64 = scmp.eq.s32.totalorder %s21, 1
    %p65 = por %p63, %p64
    %p67 = scmp.ne.s32.totalorder %s52, %s66
    %p68 = scmp.eq.s32.totalorder %s21, 0
    %p69 = por %p67, %p68
    %s71 = sadd.s32 %s70, 1
    %p74 = scmp.eq.s32.totalorder %s15, 1
    %p75 = scmp.ne.s32.totalorder %s70, %s72
    %p76 = scmp.eq.s32.totalorder %s15, 0
    %p77 = por %p75, %p76
    %p78 = scmp.ne.s32.totalorder %s70, %s72
    %p79 = scmp.eq.s32.totalorder %s20, 1
    %p80 = por %p78, %p79
    %p81 = scmp.ne.s32.totalorder %s72, %s73
    %p82 = scmp.eq.s32.totalorder %s20, 0
    %p83 = por %p81, %p82
    %p84 = scmp.ne.s32.totalorder %s72, %s73
    %p85 = scmp.eq.s32.totalorder %s21, 1
    %p86 = por %p84, %p85
    %p88 = scmp.ne.s32.totalorder %s73, %s87
    %p89 = scmp.eq.s32.totalorder %s21, 0
    %p90 = por %p88, %p89
    %s92 = sadd.s32 %s91, 1
    %p95 = scmp.eq.s32.totalorder %s15, 1
    %p96 = scmp.ne.s32.totalorder %s91, %s93
    %p97 = scmp.eq.s32.totalorder %s15, 0
    %p98 = por %p96, %p97
    %p99 = scmp.ne.s32.totalorder %s91, %s93
    %p100 = scmp.eq.s32.totalorder %s20, 1
    %p101 = por %p99, %p100
    %p102 = scmp.ne.s32.totalorder %s93, %s94
    %p103 = scmp.eq.s32.totalorder %s20, 0
    %p104 = por %p102, %p103
    %p105 = scmp.ne.s32.totalorder %s93, %s94
    %p106 = scmp.eq.s32.totalorder %s21, 1
    %p107 = por %p105, %p106
    %p109 = scmp.ne.s32.totalorder %s94, %s108
    %p110 = scmp.eq.s32.totalorder %s21, 0
    %p111 = por %p109, %p110
    %s113 = sadd.s32 %s112, 1
    %p116 = scmp.eq.s32.totalorder %s15, 1
    %p117 = scmp.ne.s32.totalorder %s112, %s114
    %p118 = scmp.eq.s32.totalorder %s15, 0
    %p119 = por %p117, %p118
    %p120 = scmp.ne.s32.totalorder %s112, %s114
    %p121 = scmp.eq.s32.totalorder %s20, 1
    %p122 = por %p120, %p121
    %p123 = scmp.ne.s32.totalorder %s114, %s115
    %p124 = scmp.eq.s32.totalorder %s20, 0
    %p125 = por %p123, %p124
    %p126 = scmp.ne.s32.totalorder %s114, %s115
    %p127 = scmp.eq.s32.totalorder %s21, 1
    %p128 = por %p126, %p127
    %p130 = scmp.ne.s32.totalorder %s115, %s129
    %p131 = scmp.eq.s32.totalorder %s21, 0
    %p132 = por %p130, %p131
    %s134 = sadd.s32 %s133, 1
    %p137 = scmp.eq.s32.totalorder %s15, 1
    %p138 = scmp.ne.s32.totalorder %s133, %s135
    %p139 = scmp.eq.s32.totalorder %s15, 0
    %p140 = por %p138, %p139
    %p141 = scmp.ne.s32.totalorder %s133, %s135
    %p142 = scmp.eq.s32.totalorder %s20, 1
    %p143 = por %p141, %p142
    %p144 = scmp.ne.s32.totalorder %s135, %s136
    %p145 = scmp.eq.s32.totalorder %s20, 0
    %p146 = por %p144, %p145
    %p147 = scmp.ne.s32.totalorder %s135, %s136
    %p148 = scmp.eq.s32.totalorder %s21, 1
    %p149 = por %p147, %p148
    %p151 = scmp.ne.s32.totalorder %s136, %s150
    %p152 = scmp.eq.s32.totalorder %s21, 0
    %p153 = por %p151, %p152
    %s155 = sadd.s32 %s154, 1
    %p158 = scmp.eq.s32.totalorder %s15, 1
    %p159 = scmp.ne.s32.totalorder %s154, %s156
    %p160 = scmp.eq.s32.totalorder %s15, 0
    %p161 = por %p159, %p160
    %p162 = scmp.ne.s32.totalorder %s154, %s156
    %p163 = scmp.eq.s32.totalorder %s20, 1
    %p164 = por %p162, %p163
    %p165 = scmp.ne.s32.totalorder %s156, %s157
    %p166 = scmp.eq.s32.totalorder %s20, 0
    %p167 = por %p165, %p166
    %p168 = scmp.ne.s32.totalorder %s156, %s157
    %p169 = scmp.eq.s32.totalorder %s21, 1
    %p170 = por %p168, %p169
    %p172 = scmp.ne.s32.totalorder %s157, %s171
    %p173 = scmp.eq.s32.totalorder %s21, 0
    %p174 = por %p172, %p173
    %s176 = sadd.s32 %s175, 1
    %p179 = scmp.eq.s32.totalorder %s15, 1
    %p180 = scmp.ne.s32.totalorder %s175, %s177
    %p181 = scmp.eq.s32.totalorder %s15, 0
    %p182 = por %p180, %p181
    %p183 = scmp.ne.s32.totalorder %s175, %s177
    %p184 = scmp.eq.s32.totalorder %s20, 1
    %p185 = por %p183, %p184
    %p186 = scmp.ne.s32.totalorder %s177, %s178
    %p187 = scmp.eq.s32.totalorder %s20, 0
    %p188 = por %p186, %p187
    %p189 = scmp.ne.s32.totalorder %s177, %s178
    %p190 = scmp.eq.s32.totalorder %s21, 1
    %p191 = por %p189, %p190
    %p193 = scmp.ne.s32.totalorder %s178, %s192
    %p194 = scmp.eq.s32.totalorder %s21, 0
    %p195 = por %p193, %p194
    %s197 = sadd.s32 %s196, 1
    %p200 = scmp.eq.s32.totalorder %s15, 1
    %p201 = scmp.ne.s32.totalorder %s196, %s198
    %p202 = scmp.eq.s32.totalorder %s15, 0
    %p203 = por %p201, %p202
    %p204 = scmp.ne.s32.totalorder %s196, %s198
    %p205 = scmp.eq.s32.totalorder %s20, 1
    %p206 = por %p204, %p205
    %p207 = scmp.ne.s32.totalorder %s198, %s199
    %p208 = scmp.eq.s32.totalorder %s20, 0
    %p209 = por %p207, %p208
    %p210 = scmp.ne.s32.totalorder %s198, %s199
    %p211 = scmp.eq.s32.totalorder %s21, 1
    %p212 = por %p210, %p211
    %p214 = scmp.ne.s32.totalorder %s199, %s213
    %p215 = scmp.eq.s32.totalorder %s21, 0
    %p216 = por %p214, %p215
    %s217 = ssub.s32 %s15, %s22
    %p218 = scmp.eq.s32.totalorder %s217, 0
    %s220 = sadd.s32 %s219, 1
    %s221 = scalar_select %p218, %s219, %s220
    %p224 = pneg %p218
    %p225 = scmp.eq.s32.totalorder %s15, 1
    %p226 = por %p224, %p225
    %p227 = scmp.ne.s32.totalorder %s219, %s222
    %p228 = scmp.eq.s32.totalorder %s15, 0
    %p229 = por %p227, %p228
    %p230 = scmp.ne.s32.totalorder %s219, %s222
    %p231 = scmp.eq.s32.totalorder %s20, 1
    %p232 = por %p230, %p231
    %p233 = scmp.ne.s32.totalorder %s222, %s223
    %p234 = scmp.eq.s32.totalorder %s20, 0
    %p235 = por %p233, %p234
    %p236 = scmp.ne.s32.totalorder %s222, %s223
    %p237 = scmp.eq.s32.totalorder %s21, 1
    %p238 = por %p236, %p237
    %p240 = scmp.ne.s32.totalorder %s223, %s239
    %p241 = scmp.eq.s32.totalorder %s21, 0
    %p242 = por %p240, %p241
    %p243 = scmp.le.s32.totalorder 1, %s15
    %p244 = scmp.lt.s32.totalorder %s15, 3
    %p245 = pnand %p243, %p244
    %p246 = pneg %p245
    // Predicated region
    $region9: #{rcan_forward.12} parent=5 // pred_check
      _
    $region10: #{rcan_forward.12} parent=5 // pred_check_branch
      %248 = sbr.rel (%p245) target = $region12
    $region11: #{rcan_forward.12} parent=5 // pred_region
      %s249 = ssub.s32 %s15, 1
      // Predicated region
      $region13: #{rcan_forward.12} parent=11 // pred_check
        %p250 = pneg %p62
      $region14: #{rcan_forward.12} parent=11 // pred_check_branch
        %252 = sbr.rel (%p250) target = $region16
      $region15: #{rcan_forward.12} parent=11 // pred_region
        _
      $region16: #{rcan_forward.12} parent=11 // pred_fallthru
        _
      // Predicated region
      $region17: #{rcan_forward.12} parent=11 // pred_check
        %p253 = pneg %p83
      $region18: #{rcan_forward.12} parent=11 // pred_check_branch
        %255 = sbr.rel (%p253) target = $region20
      $region19: #{rcan_forward.12} parent=11 // pred_region
        _
      $region20: #{rcan_forward.12} parent=11 // pred_fallthru
        _
      // Predicated region
      $region21: #{rcan_forward.12} parent=11 // pred_check
        %p256 = pneg %p104
      $region22: #{rcan_forward.12} parent=11 // pred_check_branch
        %258 = sbr.rel (%p256) target = $region24
      $region23: #{rcan_forward.12} parent=11 // pred_region
        _
      $region24: #{rcan_forward.12} parent=11 // pred_fallthru
        _
      // Predicated region
      $region25: #{rcan_forward.12} parent=11 // pred_check
        %p259 = pneg %p125
      $region26: #{rcan_forward.12} parent=11 // pred_check_branch
        %261 = sbr.rel (%p259) target = $region28
      $region27: #{rcan_forward.12} parent=11 // pred_region
        _
      $region28: #{rcan_forward.12} parent=11 // pred_fallthru
        _
      // Predicated region
      $region29: #{rcan_forward.12} parent=11 // pred_check
        %p262 = pneg %p146
      $region30: #{rcan_forward.12} parent=11 // pred_check_branch
        %264 = sbr.rel (%p262) target = $region32
      $region31: #{rcan_forward.12} parent=11 // pred_region
        _
      $region32: #{rcan_forward.12} parent=11 // pred_fallthru
        _
      // Predicated region
      $region33: #{rcan_forward.12} parent=11 // pred_check
        %p265 = pneg %p167
      $region34: #{rcan_forward.12} parent=11 // pred_check_branch
        %267 = sbr.rel (%p265) target = $region36
      $region35: #{rcan_forward.12} parent=11 // pred_region
        _
      $region36: #{rcan_forward.12} parent=11 // pred_fallthru
        _
      // Predicated region
      $region37: #{rcan_forward.12} parent=11 // pred_check
        %p268 = pneg %p188
      $region38: #{rcan_forward.12} parent=11 // pred_check_branch
        %270 = sbr.rel (%p268) target = $region40
      $region39: #{rcan_forward.12} parent=11 // pred_region
        _
      $region40: #{rcan_forward.12} parent=11 // pred_fallthru
        _
      // Predicated region
      $region41: #{rcan_forward.12} parent=11 // pred_check
        %p271 = pneg %p209
      $region42: #{rcan_forward.12} parent=11 // pred_check_branch
        %273 = sbr.rel (%p271) target = $region44
      $region43: #{rcan_forward.12} parent=11 // pred_region
        _
      $region44: #{rcan_forward.12} parent=11 // pred_fallthru
        _
    $region12: #{rcan_forward.12} parent=5 // pred_fallthru
      _
    %p274 = scmp.lt.s32.totalorder %s15, 2
    // Predicated region
    $region45: #{rcan_forward.12} parent=5 // pred_check
      %p275 = pneg %p274
    $region46: #{rcan_forward.12} parent=5 // pred_check_branch
      %277 = sbr.rel (%p275) target = $region48
    $region47: #{rcan_forward.12} parent=5 // pred_region
      // Predicated region
      $region49: #{rcan_forward.12} parent=47 // pred_check
        %p278 = pneg %p35
      $region50: #{rcan_forward.12} parent=47 // pred_check_branch
        %280 = sbr.rel (%p278) target = $region52
      $region51: #{rcan_forward.12} parent=47 // pred_region
        %p281 = scmp.lt.s32.totalorder %s15, 1
        %s282 = scalar_select %p281, %s15, 1
        %s283 = smul.addr %s282, 8
        %s284 = smul.addr %s283, 8
        %s285 = scalar_lea.vmem %s0, %s284
      $region52: #{rcan_forward.12} parent=47 // pred_fallthru
        _
    $region48: #{rcan_forward.12} parent=5 // pred_fallthru
      _
    %p286 = scmp.le.s32.totalorder 1, %s15
    %p287 = scmp.lt.s32.totalorder %s15, 3
    %p288 = pnand %p286, %p287
    %p289 = pneg %p288
    // Predicated region
    $region53: #{rcan_forward.12} parent=5 // pred_check
      _
    $region54: #{rcan_forward.12} parent=5 // pred_check_branch
      %291 = sbr.rel (%p288) target = $region56
    $region55: #{rcan_forward.12} parent=5 // pred_region
      %s292 = ssub.s32 %s15, 1
      %p293 = scmp.lt.s32.totalorder %s20, 1
      %s294 = scalar_select %p293, %s20, 1
      %s295 = smul.addr %s294, 8
      %s296 = smul.addr %s295, 8
      %s297 = scalar_lea.vmem %s0, %s296
      %p298 = pneg %p41
      %p299 = pneg %p38
      %p300 = pneg %p62
      %p301 = pneg %p59
      %p302 = pneg %p83
      %p303 = pneg %p80
      %p304 = pneg %p104
      %p305 = pneg %p101
      %p306 = pneg %p125
      %p307 = pneg %p122
      %p308 = pneg %p146
      %p309 = pneg %p143
      %p310 = pneg %p167
      %p311 = pneg %p164
      %p312 = pneg %p188
      %p313 = pneg %p185
      %p314 = pneg %p209
      %p315 = pneg %p206
      %p316 = pneg %p235
      %p317 = pneg %p232
      %p318 = scmp.lt.s32.totalorder %s20, 1
      %s319 = scalar_select %p318, %s20, 1
      %s320 = smul.addr %s319, 8
      %s321 = smul.addr %s320, 8
      %s322 = scalar_lea.vmem %s9, %s321
      %p323 = scmp.lt.s32.totalorder %s20, 1
      %s324 = scalar_select %p323, %s20, 1
      %s325 = smul.addr %s324, 8
      %s326 = smul.addr %s325, 8
      %s327 = scalar_lea.vmem %s0, %s326
      %p328 = scmp.lt.s32.totalorder %s20, 1
      %s329 = scalar_select %p328, %s20, 1
      %s330 = smul.addr %s329, 8
      %s331 = smul.addr %s330, 8
      %s332 = scalar_lea.vmem %s9, %s331
      %v334 = vld [vmem:[%s327] sm:$0xff]
      %v335 = vld [vmem:[%s327 + $0x8] sm:$0xff]
      %v336 = vld [vmem:[%s327 + $0x10] sm:$0xff]
      %v337 = vld [vmem:[%s327 + $0x18] sm:$0xff]
      %v338 = vld [vmem:[%s327 + $0x20] sm:$0xff]
      %v339 = vld [vmem:[%s327 + $0x28] sm:$0xff]
      %v340 = vld [vmem:[%s327 + $0x30] sm:$0xff]
      %v341 = vld [vmem:[%s327 + $0x38] sm:$0xff]
      %v342 = vpack.c.bf16 %v334, %v334
      %v343 = vpack.c.bf16 %v335, %v335
      %v344 = vpack.c.bf16 %v336, %v336
      %v345 = vpack.c.bf16 %v337, %v337
      %v346 = vpack.c.bf16 %v338, %v338
      %v347 = vpack.c.bf16 %v339, %v339
      %v348 = vpack.c.bf16 %v340, %v340
      %v349 = vpack.c.bf16 %v341, %v341
      %v351 = vshrl.u32 0, 16
      %v353 = vrot.slane %v351, 7
      %v354 = vshll.u32 0, 16
      %v356 = vor.u32 %v353, %v354
      %v358 = vshrl.u32 %v342, 16
      %v360 = vrot.slane %v358, 7
      %v361 = vshll.u32 %v342, 16
      %v363 = vor.u32 %v360, %v361
      %v365 = vshrl.u32 %v343, 16
      %v367 = vrot.slane %v365, 7
      %v368 = vshll.u32 %v343, 16
      %v370 = vor.u32 %v367, %v368
      %v372 = vshrl.u32 %v344, 16
      %v374 = vrot.slane %v372, 7
      %v375 = vshll.u32 %v344, 16
      %v377 = vor.u32 %v374, %v375
      %v379 = vshrl.u32 %v345, 16
      %v381 = vrot.slane %v379, 7
      %v382 = vshll.u32 %v345, 16
      %v384 = vor.u32 %v381, %v382
      %v386 = vshrl.u32 %v346, 16
      %v388 = vrot.slane %v386, 7
      %v389 = vshll.u32 %v346, 16
      %v391 = vor.u32 %v388, %v389
      %v393 = vshrl.u32 %v347, 16
      %v395 = vrot.slane %v393, 7
      %v396 = vshll.u32 %v347, 16
      %v398 = vor.u32 %v395, %v396
      %v400 = vshrl.u32 %v348, 16
      %v402 = vrot.slane %v400, 7
      %v403 = vshll.u32 %v348, 16
      %v405 = vor.u32 %v402, %v403
      %v407 = vshrl.u32 %v349, 16
      %v409 = vrot.slane %v407, 7
      %v410 = vshll.u32 %v349, 16
      %v412 = vor.u32 %v409, %v410
      %vm422 = vcmask 1040384
      %vm423 = vsmask.f32 256
      %vm424 = vmand %vm422, %vm423
      %v425 = vsel %vm424, 0, %v356
      %v426 = vsel %vm424, 0, %v363
      %v427 = vsel %vm424, 0, %v370
      %v428 = vsel %vm424, 0, %v377
      %v429 = vsel %vm424, 0, %v384
      %v430 = vsel %vm424, 0, %v391
      %v431 = vsel %vm424, 0, %v398
      %v432 = vsel %vm424, 0, %v405
      %v433 = vsel %vm424, 0, %v412
      %vm434 = vcmask 1044480
      %vm435 = vsmask.f32 4352
      %vm436 = vmand %vm434, %vm435
      %v437 = vsel %vm436, %v425, 0
      %v438 = vsel %vm436, %v426, 0
      %v439 = vsel %vm436, %v427, 0
      %v440 = vsel %vm436, %v428, 0
      %v441 = vsel %vm436, %v429, 0
      %v442 = vsel %vm436, %v430, 0
      %v443 = vsel %vm436, %v431, 0
      %v444 = vsel %vm436, %v432, 0
      %v445 = vsel %vm436, %v433, 0
      %v454 = vunpack.c.l.b16 %v437
      %v455 = vunpack.c.h.b16 %v437
      %v456 = vunpack.c.l.b16 %v438
      %v457 = vunpack.c.h.b16 %v438
      %v458 = vunpack.c.l.b16 %v439
      %v459 = vunpack.c.h.b16 %v439
      %v460 = vunpack.c.l.b16 %v440
      %v461 = vunpack.c.h.b16 %v440
      %v462 = vunpack.c.l.b16 %v441
      %v463 = vunpack.c.h.b16 %v441
      %v464 = vunpack.c.l.b16 %v442
      %v465 = vunpack.c.h.b16 %v442
      %v466 = vunpack.c.l.b16 %v443
      %v467 = vunpack.c.h.b16 %v443
      %v468 = vunpack.c.l.b16 %v444
      %v469 = vunpack.c.h.b16 %v444
      %v470 = vpack.c.b16 %v454, %v454
      %v471 = vpack.c.b16 %v455, %v455
      %v472 = vpack.c.b16 %v456, %v456
      %v473 = vpack.c.b16 %v457, %v457
      %v474 = vpack.c.b16 %v458, %v458
      %v475 = vpack.c.b16 %v459, %v459
      %v476 = vpack.c.b16 %v460, %v460
      %v477 = vpack.c.b16 %v461, %v461
      %v478 = vpack.c.b16 %v462, %v462
      %v479 = vpack.c.b16 %v463, %v463
      %v480 = vpack.c.b16 %v464, %v464
      %v481 = vpack.c.b16 %v465, %v465
      %v482 = vpack.c.b16 %v466, %v466
      %v483 = vpack.c.b16 %v467, %v467
      %v484 = vpack.c.b16 %v468, %v468
      %v485 = vpack.c.b16 %v469, %v469
      %vm486 = vsmask.f32 3328
      %vm487 = vsmask.f32 7440
      %vm488 = vmor %vm486, %vm487
      %v490 = vshrl.u32 %v470, 16
      %v492 = vrot.slane %v490, 4
      %v493 = vshll.u32 %v470, 16
      %v495 = vrot.slane %v493, 5
      %v496 = vor.u32 %v492, %v495
      %v497 = vrot.slane %v496, 4
      %v499 = vshll.u32 %v471, 16
      %v501 = vrot.slane %v499, 5
      %v502 = vsel %vm488, %v497, %v501
      %v504 = vshrl.u32 %v472, 16
      %v506 = vrot.slane %v504, 4
      %v507 = vshll.u32 %v472, 16
      %v509 = vrot.slane %v507, 5
      %v510 = vor.u32 %v506, %v509
      %v511 = vrot.slane %v510, 4
      %v513 = vshll.u32 %v473, 16
      %v515 = vrot.slane %v513, 5
      %v516 = vsel %vm488, %v511, %v515
      %v518 = vshrl.u32 %v474, 16
      %v520 = vrot.slane %v518, 4
      %v521 = vshll.u32 %v474, 16
      %v523 = vrot.slane %v521, 5
      %v524 = vor.u32 %v520, %v523
      %v525 = vrot.slane %v524, 4
      %v527 = vshll.u32 %v475, 16
      %v529 = vrot.slane %v527, 5
      %v530 = vsel %vm488, %v525, %v529
      %v532 = vshrl.u32 %v476, 16
      %v534 = vrot.slane %v532, 4
      %v535 = vshll.u32 %v476, 16
      %v537 = vrot.slane %v535, 5
      %v538 = vor.u32 %v534, %v537
      %v539 = vrot.slane %v538, 4
      %v541 = vshll.u32 %v477, 16
      %v543 = vrot.slane %v541, 5
      %v544 = vsel %vm488, %v539, %v543
      %v546 = vshrl.u32 %v478, 16
      %v548 = vrot.slane %v546, 4
      %v549 = vshll.u32 %v478, 16
      %v551 = vrot.slane %v549, 5
      %v552 = vor.u32 %v548, %v551
      %v553 = vrot.slane %v552, 4
      %v555 = vshll.u32 %v479, 16
      %v557 = vrot.slane %v555, 5
      %v558 = vsel %vm488, %v553, %v557
      %v560 = vshrl.u32 %v480, 16
      %v562 = vrot.slane %v560, 4
      %v563 = vshll.u32 %v480, 16
      %v565 = vrot.slane %v563, 5
      %v566 = vor.u32 %v562, %v565
      %v567 = vrot.slane %v566, 4
      %v569 = vshll.u32 %v481, 16
      %v571 = vrot.slane %v569, 5
      %v572 = vsel %vm488, %v567, %v571
      %v574 = vshrl.u32 %v482, 16
      %v576 = vrot.slane %v574, 4
      %v577 = vshll.u32 %v482, 16
      %v579 = vrot.slane %v577, 5
      %v580 = vor.u32 %v576, %v579
      %v581 = vrot.slane %v580, 4
      %v583 = vshll.u32 %v483, 16
      %v585 = vrot.slane %v583, 5
      %v586 = vsel %vm488, %v581, %v585
      %v588 = vshrl.u32 %v484, 16
      %v590 = vrot.slane %v588, 4
      %v591 = vshll.u32 %v484, 16
      %v593 = vrot.slane %v591, 5
      %v594 = vor.u32 %v590, %v593
      %v595 = vrot.slane %v594, 4
      %v597 = vshll.u32 %v485, 16
      %v599 = vrot.slane %v597, 5
      %v600 = vsel %vm488, %v595, %v599
      %vm601 = vcmask 1042432
      %vm602 = vcmask 1046532
      %vm603 = vmor %vm601, %vm602
      %v604 = vrot.slane %v470, 5
      %v605 = vrot.slane %v604, 4
      %v606 = vrot.slane %v471, 5
      %v607 = vsel %vm603, %v605, %v606
      %v608 = vrot.slane %v472, 5
      %v609 = vrot.slane %v608, 4
      %v610 = vrot.slane %v473, 5
      %v611 = vsel %vm603, %v609, %v610
      %v612 = vrot.slane %v474, 5
      %v613 = vrot.slane %v612, 4
      %v614 = vrot.slane %v475, 5
      %v615 = vsel %vm603, %v613, %v614
      %v616 = vrot.slane %v476, 5
      %v617 = vrot.slane %v616, 4
      %v618 = vrot.slane %v477, 5
      %v619 = vsel %vm603, %v617, %v618
      %v620 = vrot.slane %v478, 5
      %v621 = vrot.slane %v620, 4
      %v622 = vrot.slane %v479, 5
      %v623 = vsel %vm603, %v621, %v622
      %v624 = vrot.slane %v480, 5
      %v625 = vrot.slane %v624, 4
      %v626 = vrot.slane %v481, 5
      %v627 = vsel %vm603, %v625, %v626
      %v628 = vrot.slane %v482, 5
      %v629 = vrot.slane %v628, 4
      %v630 = vrot.slane %v483, 5
      %v631 = vsel %vm603, %v629, %v630
      %v632 = vrot.slane %v484, 5
      %v633 = vrot.slane %v632, 4
      %v634 = vrot.slane %v485, 5
      %v635 = vsel %vm603, %v633, %v634
      %v637 = vunpack.c.l.b16 %v445
      %v638 = vunpack.c.h.b16 %v445
      %v639 = vpack.c.b16 %v637, %v637
      %v640 = vpack.c.b16 %v638, %v638
      %v642 = vshrl.u32 %v639, 16
      %v644 = vrot.slane %v642, 4
      %v645 = vshll.u32 %v639, 16
      %v647 = vrot.slane %v645, 5
      %v648 = vor.u32 %v644, %v647
      %v649 = vrot.slane %v648, 4
      %v651 = vshll.u32 %v640, 16
      %v653 = vrot.slane %v651, 5
      %v654 = vsel %vm488, %v649, %v653
      %v655 = vrot.slane %v639, 5
      %v656 = vrot.slane %v655, 4
      %v657 = vrot.slane %v640, 5
      %v658 = vsel %vm603, %v656, %v657
      %v659 = vpack.c.b16 %v456, %v454
      %v660 = vpack.c.b16 %v460, %v458
      %v661 = vpack.c.b16 %v464, %v462
      %v662 = vpack.c.b16 %v468, %v466
      %v667 = vunpack.c.l.b16 %v502
      %v668 = vunpack.c.l.b16 %v516
      %v669 = vunpack.c.l.b16 %v530
      %v670 = vunpack.c.l.b16 %v544
      %v671 = vunpack.c.l.b16 %v558
      %v672 = vunpack.c.l.b16 %v572
      %v673 = vunpack.c.l.b16 %v586
      %v674 = vunpack.c.l.b16 %v600
      %v675 = vpack.c.b16 %v668, %v667
      %v676 = vpack.c.b16 %v670, %v669
      %v677 = vpack.c.b16 %v672, %v671
      %v678 = vpack.c.b16 %v674, %v673
      %v683 = vunpack.c.l.b16 %v607
      %v684 = vunpack.c.l.b16 %v611
      %v685 = vunpack.c.l.b16 %v615
      %v686 = vunpack.c.l.b16 %v619
      %v687 = vunpack.c.l.b16 %v623
      %v688 = vunpack.c.l.b16 %v627
      %v689 = vunpack.c.l.b16 %v631
      %v690 = vunpack.c.l.b16 %v635
      %v691 = vpack.c.b16 %v684, %v683
      %v692 = vpack.c.b16 %v686, %v685
      %v693 = vpack.c.b16 %v688, %v687
      %v694 = vpack.c.b16 %v690, %v689
      %v699 = vpack.c.b16 %v458, %v456
      %v700 = vpack.c.b16 %v462, %v460
      %v701 = vpack.c.b16 %v466, %v464
      %v702 = vpack.c.b16 %v637, %v468
      %v707 = vunpack.c.l.b16 %v654
      %v708 = vpack.c.b16 %v669, %v668
      %v709 = vpack.c.b16 %v671, %v670
      %v710 = vpack.c.b16 %v673, %v672
      %v711 = vpack.c.b16 %v707, %v674
      %v716 = vunpack.c.l.b16 %v658
      %v717 = vpack.c.b16 %v685, %v684
      %v718 = vpack.c.b16 %v687, %v686
      %v719 = vpack.c.b16 %v689, %v688
      %v720 = vpack.c.b16 %v716, %v690
      %v725 = vpack.c.b16 %v454, %v637
      %v727 = vpack.c.b16 %v667, %v707
      %v729 = vpack.c.b16 %v683, %v716
      %v731 = vld [vmem:[%s1] sm:$0xf]
      %v732 = vld [vmem:[%s1 + $0x4] sm:$0xf]
      %v733 = vld [vmem:[%s1 + $0x8] sm:$0xf]
      %v734 = vld [vmem:[%s1 + $0xc] sm:$0xf]
      %v735 = vld [vmem:[%s1 + $0x10] sm:$0xf]
      %v736 = vld [vmem:[%s1 + $0x14] sm:$0xf]
      %v737 = vld [vmem:[%s1 + $0x18] sm:$0xf]
      %v738 = vld [vmem:[%s1 + $0x1c] sm:$0xf]
      %v739 = vld [vmem:[%s1 + $0x20] sm:$0xf]
      %v740 = vld [vmem:[%s1 + $0x24] sm:$0xf]
      %v741 = vld [vmem:[%s1 + $0x28] sm:$0xf]
      %v742 = vld [vmem:[%s1 + $0x2c] sm:$0xf]
      %v743 = vld [vmem:[%s1 + $0x30] sm:$0xf]
      %v744 = vld [vmem:[%s1 + $0x34] sm:$0xf]
      %v745 = vld [vmem:[%s1 + $0x38] sm:$0xf]
      %v746 = vld [vmem:[%s1 + $0x3c] sm:$0xf]
      %v747 = vld [vmem:[%s1 + $0x40] sm:$0xf]
      %v748 = vld [vmem:[%s1 + $0x44] sm:$0xf]
      %v749 = vld [vmem:[%s1 + $0x48] sm:$0xf]
      %v750 = vld [vmem:[%s1 + $0x4c] sm:$0xf]
      %v751 = vld [vmem:[%s1 + $0x50] sm:$0xf]
      %v752 = vld [vmem:[%s1 + $0x54] sm:$0xf]
      %v753 = vld [vmem:[%s1 + $0x58] sm:$0xf]
      %v754 = vld [vmem:[%s1 + $0x5c] sm:$0xf]
      %v755 = vld [vmem:[%s1 + $0x60] sm:$0xf]
      %v756 = vld [vmem:[%s1 + $0x64] sm:$0xf]
      %v757 = vld [vmem:[%s1 + $0x68] sm:$0xf]
      %v758 = vld [vmem:[%s1 + $0x6c] sm:$0xf]
      %v759 = vld [vmem:[%s1 + $0x70] sm:$0xf]
      %v760 = vld [vmem:[%s1 + $0x74] sm:$0xf]
      %v761 = vld [vmem:[%s1 + $0x78] sm:$0xf]
      %v762 = vld [vmem:[%s1 + $0x7c] sm:$0xf]
      %v763 = vld [vmem:[%s1 + $0x80] sm:$0xf]
      %v764 = vld [vmem:[%s1 + $0x84] sm:$0xf]
      %v765 = vld [vmem:[%s1 + $0x88] sm:$0xf]
      %v766 = vld [vmem:[%s1 + $0x8c] sm:$0xf]
      %v767 = vld [vmem:[%s1 + $0x90] sm:$0xf]
      %v768 = vld [vmem:[%s1 + $0x94] sm:$0xf]
      %v769 = vld [vmem:[%s1 + $0x98] sm:$0xf]
      %v770 = vld [vmem:[%s1 + $0x9c] sm:$0xf]
      %v771 = vld [vmem:[%s1 + $0xa0] sm:$0xf]
      %v772 = vld [vmem:[%s1 + $0xa4] sm:$0xf]
      %v773 = vld [vmem:[%s1 + $0xa8] sm:$0xf]
      %v774 = vld [vmem:[%s1 + $0xac] sm:$0xf]
      %v775 = vld [vmem:[%s1 + $0xb0] sm:$0xf]
      %v776 = vld [vmem:[%s1 + $0xb4] sm:$0xf]
      %v777 = vld [vmem:[%s1 + $0xb8] sm:$0xf]
      %v778 = vld [vmem:[%s1 + $0xbc] sm:$0xf]
      %v779 = vld [vmem:[%s1 + $0xc0] sm:$0xf]
      %v780 = vld [vmem:[%s1 + $0xc4] sm:$0xf]
      %v781 = vld [vmem:[%s1 + $0xc8] sm:$0xf]
      %v782 = vld [vmem:[%s1 + $0xcc] sm:$0xf]
      %v783 = vld [vmem:[%s1 + $0xd0] sm:$0xf]
      %v784 = vld [vmem:[%s1 + $0xd4] sm:$0xf]
      %v785 = vld [vmem:[%s1 + $0xd8] sm:$0xf]
      %v786 = vld [vmem:[%s1 + $0xdc] sm:$0xf]
      %v787 = vld [vmem:[%s1 + $0xe0] sm:$0xf]
      %v788 = vld [vmem:[%s1 + $0xe4] sm:$0xf]
      %v789 = vld [vmem:[%s1 + $0xe8] sm:$0xf]
      %v790 = vld [vmem:[%s1 + $0xec] sm:$0xf]
      %v791 = vld [vmem:[%s1 + $0xf0] sm:$0xf]
      %v792 = vld [vmem:[%s1 + $0xf4] sm:$0xf]
      %v793 = vld [vmem:[%s1 + $0xf8] sm:$0xf]
      %v794 = vld [vmem:[%s1 + $0xfc] sm:$0xf]
      %v795 = vld [vmem:[%s1 + $0x100] sm:$0xf]
      %v796 = vld [vmem:[%s1 + $0x104] sm:$0xf]
      %v797 = vld [vmem:[%s1 + $0x108] sm:$0xf]
      %v798 = vld [vmem:[%s1 + $0x10c] sm:$0xf]
      %v799 = vld [vmem:[%s1 + $0x110] sm:$0xf]
      %v800 = vld [vmem:[%s1 + $0x114] sm:$0xf]
      %v801 = vld [vmem:[%s1 + $0x118] sm:$0xf]
      %v802 = vld [vmem:[%s1 + $0x11c] sm:$0xf]
      %v803 = vld [vmem:[%s1 + $0x120] sm:$0xf]
      %v804 = vld [vmem:[%s1 + $0x124] sm:$0xf]
      %v805 = vld [vmem:[%s1 + $0x128] sm:$0xf]
      %v806 = vld [vmem:[%s1 + $0x12c] sm:$0xf]
      %v807 = vld [vmem:[%s1 + $0x130] sm:$0xf]
      %v808 = vld [vmem:[%s1 + $0x134] sm:$0xf]
      %v809 = vld [vmem:[%s1 + $0x138] sm:$0xf]
      %v810 = vld [vmem:[%s1 + $0x13c] sm:$0xf]
      %v811 = vld [vmem:[%s1 + $0x140] sm:$0xf]
      %v812 = vld [vmem:[%s1 + $0x144] sm:$0xf]
      %v813 = vld [vmem:[%s1 + $0x148] sm:$0xf]
      %v814 = vld [vmem:[%s1 + $0x14c] sm:$0xf]
      %v815 = vld [vmem:[%s1 + $0x150] sm:$0xf]
      %v816 = vld [vmem:[%s1 + $0x154] sm:$0xf]
      %v817 = vld [vmem:[%s1 + $0x158] sm:$0xf]
      %v818 = vld [vmem:[%s1 + $0x15c] sm:$0xf]
      %v819 = vld [vmem:[%s1 + $0x160] sm:$0xf]
      %v820 = vld [vmem:[%s1 + $0x164] sm:$0xf]
      %v821 = vld [vmem:[%s1 + $0x168] sm:$0xf]
      %v822 = vld [vmem:[%s1 + $0x16c] sm:$0xf]
      %v823 = vld [vmem:[%s1 + $0x170] sm:$0xf]
      %v824 = vld [vmem:[%s1 + $0x174] sm:$0xf]
      %v825 = vld [vmem:[%s1 + $0x178] sm:$0xf]
      %v826 = vld [vmem:[%s1 + $0x17c] sm:$0xf]
      %v827 = vld [vmem:[%s1 + $0x180] sm:$0xf]
      %v828 = vld [vmem:[%s1 + $0x184] sm:$0xf]
      %v829 = vld [vmem:[%s1 + $0x188] sm:$0xf]
      %v830 = vld [vmem:[%s1 + $0x18c] sm:$0xf]
      %v831 = vld [vmem:[%s1 + $0x190] sm:$0xf]
      %v832 = vld [vmem:[%s1 + $0x194] sm:$0xf]
      %v833 = vld [vmem:[%s1 + $0x198] sm:$0xf]
      %v834 = vld [vmem:[%s1 + $0x19c] sm:$0xf]
      %v835 = vld [vmem:[%s1 + $0x1a0] sm:$0xf]
      %v836 = vld [vmem:[%s1 + $0x1a4] sm:$0xf]
      %v837 = vld [vmem:[%s1 + $0x1a8] sm:$0xf]
      %v838 = vld [vmem:[%s1 + $0x1ac] sm:$0xf]
      %v839 = vld [vmem:[%s1 + $0x1b0] sm:$0xf]
      %v840 = vld [vmem:[%s1 + $0x1b4] sm:$0xf]
      %v841 = vld [vmem:[%s1 + $0x1b8] sm:$0xf]
      %v842 = vld [vmem:[%s1 + $0x1bc] sm:$0xf]
      %v843 = vld [vmem:[%s1 + $0x1c0] sm:$0xf]
      %v844 = vld [vmem:[%s1 + $0x1c4] sm:$0xf]
      %v845 = vld [vmem:[%s1 + $0x1c8] sm:$0xf]
      %v846 = vld [vmem:[%s1 + $0x1cc] sm:$0xf]
      %v847 = vld [vmem:[%s1 + $0x1d0] sm:$0xf]
      %v848 = vld [vmem:[%s1 + $0x1d4] sm:$0xf]
      %v849 = vld [vmem:[%s1 + $0x1d8] sm:$0xf]
      %v850 = vld [vmem:[%s1 + $0x1dc] sm:$0xf]
      %v851 = vld [vmem:[%s1 + $0x1e0] sm:$0xf]
      %v852 = vld [vmem:[%s1 + $0x1e4] sm:$0xf]
      %v853 = vld [vmem:[%s1 + $0x1e8] sm:$0xf]
      %v854 = vld [vmem:[%s1 + $0x1ec] sm:$0xf]
      %v855 = vld [vmem:[%s1 + $0x1f0] sm:$0xf]
      %v856 = vld [vmem:[%s1 + $0x1f4] sm:$0xf]
      %v857 = vld [vmem:[%s1 + $0x1f8] sm:$0xf]
      %v858 = vld [vmem:[%s1 + $0x1fc] sm:$0xf]
      %v859 = vld [vmem:[%s1 + $0x200] sm:$0xf]
      %v860 = vld [vmem:[%s1 + $0x204] sm:$0xf]
      %v861 = vld [vmem:[%s1 + $0x208] sm:$0xf]
      %v862 = vld [vmem:[%s1 + $0x20c] sm:$0xf]
      %v863 = vld [vmem:[%s1 + $0x210] sm:$0xf]
      %v864 = vld [vmem:[%s1 + $0x214] sm:$0xf]
      %v865 = vld [vmem:[%s1 + $0x218] sm:$0xf]
      %v866 = vld [vmem:[%s1 + $0x21c] sm:$0xf]
      %v867 = vld [vmem:[%s1 + $0x220] sm:$0xf]
      %v868 = vld [vmem:[%s1 + $0x224] sm:$0xf]
      %v869 = vld [vmem:[%s1 + $0x228] sm:$0xf]
      %v870 = vld [vmem:[%s1 + $0x22c] sm:$0xf]
      %v871 = vld [vmem:[%s1 + $0x230] sm:$0xf]
      %v872 = vld [vmem:[%s1 + $0x234] sm:$0xf]
      %v873 = vld [vmem:[%s1 + $0x238] sm:$0xf]
      %v874 = vld [vmem:[%s1 + $0x23c] sm:$0xf]
      %v875 = vld [vmem:[%s2] sm:$0x1]
      %v877 = vlaneseq
      %v878 = vshrl.u32 %v877, 7
      %v879 = vsub.s32 0, %v878
      %v880 = vrot.slane %v875, %v879
      %v1026 = vunpack.c.l.b16 %v731
      %v1027 = vunpack.c.l.b16 %v732
      %v1028 = vunpack.c.l.b16 %v733
      %v1029 = vunpack.c.l.b16 %v734
      %v1030 = vunpack.c.l.b16 %v735
      %v1031 = vunpack.c.l.b16 %v736
      %v1032 = vunpack.c.l.b16 %v737
      %v1033 = vunpack.c.l.b16 %v738
      %v1034 = vunpack.c.l.b16 %v739
      %v1035 = vunpack.c.l.b16 %v740
      %v1036 = vunpack.c.l.b16 %v741
      %v1037 = vunpack.c.l.b16 %v742
      %v1038 = vunpack.c.l.b16 %v743
      %v1039 = vunpack.c.l.b16 %v744
      %v1040 = vunpack.c.l.b16 %v745
      %v1041 = vunpack.c.l.b16 %v746
      %v1042 = vunpack.c.l.b16 %v747
      %v1043 = vunpack.c.l.b16 %v748
      %v1044 = vunpack.c.l.b16 %v749
      %v1045 = vunpack.c.l.b16 %v750
      %v1046 = vunpack.c.l.b16 %v751
      %v1047 = vunpack.c.l.b16 %v752
      %v1048 = vunpack.c.l.b16 %v753
      %v1049 = vunpack.c.l.b16 %v754
      %v1050 = vunpack.c.l.b16 %v755
      %v1051 = vunpack.c.l.b16 %v756
      %v1052 = vunpack.c.l.b16 %v757
      %v1053 = vunpack.c.l.b16 %v758
      %v1054 = vunpack.c.l.b16 %v759
      %v1055 = vunpack.c.l.b16 %v760
      %v1056 = vunpack.c.l.b16 %v761
      %v1057 = vunpack.c.l.b16 %v762
      %v1058 = vunpack.c.l.b16 %v763
      %v1059 = vunpack.c.l.b16 %v764
      %v1060 = vunpack.c.l.b16 %v765
      %v1061 = vunpack.c.l.b16 %v766
      %v1062 = vunpack.c.l.b16 %v767
      %v1063 = vunpack.c.l.b16 %v768
      %v1064 = vunpack.c.l.b16 %v769
      %v1065 = vunpack.c.l.b16 %v770
      %v1066 = vunpack.c.l.b16 %v771
      %v1067 = vunpack.c.l.b16 %v772
      %v1068 = vunpack.c.l.b16 %v773
      %v1069 = vunpack.c.l.b16 %v774
      %v1070 = vunpack.c.l.b16 %v775
      %v1071 = vunpack.c.l.b16 %v776
      %v1072 = vunpack.c.l.b16 %v777
      %v1073 = vunpack.c.l.b16 %v778
      %v1074 = vunpack.c.l.b16 %v779
      %v1075 = vunpack.c.l.b16 %v780
      %v1076 = vunpack.c.l.b16 %v781
      %v1077 = vunpack.c.l.b16 %v782
      %v1078 = vunpack.c.l.b16 %v783
      %v1079 = vunpack.c.l.b16 %v784
      %v1080 = vunpack.c.l.b16 %v785
      %v1081 = vunpack.c.l.b16 %v786
      %v1082 = vunpack.c.l.b16 %v787
      %v1083 = vunpack.c.l.b16 %v788
      %v1084 = vunpack.c.l.b16 %v789
      %v1085 = vunpack.c.l.b16 %v790
      %v1086 = vunpack.c.l.b16 %v791
      %v1087 = vunpack.c.l.b16 %v792
      %v1088 = vunpack.c.l.b16 %v793
      %v1089 = vunpack.c.l.b16 %v794
      %v1090 = vunpack.c.l.b16 %v795
      %v1091 = vunpack.c.l.b16 %v796
      %v1092 = vunpack.c.l.b16 %v797
      %v1093 = vunpack.c.l.b16 %v798
      %v1094 = vunpack.c.l.b16 %v799
      %v1095 = vunpack.c.l.b16 %v800
      %v1096 = vunpack.c.l.b16 %v801
      %v1097 = vunpack.c.l.b16 %v802
      %v1098 = vunpack.c.l.b16 %v803
      %v1099 = vunpack.c.l.b16 %v804
      %v1100 = vunpack.c.l.b16 %v805
      %v1101 = vunpack.c.l.b16 %v806
      %v1102 = vunpack.c.l.b16 %v807
      %v1103 = vunpack.c.l.b16 %v808
      %v1104 = vunpack.c.l.b16 %v809
      %v1105 = vunpack.c.l.b16 %v810
      %v1106 = vunpack.c.l.b16 %v811
      %v1107 = vunpack.c.l.b16 %v812
      %v1108 = vunpack.c.l.b16 %v813
      %v1109 = vunpack.c.l.b16 %v814
      %v1110 = vunpack.c.l.b16 %v815
      %v1111 = vunpack.c.l.b16 %v816
      %v1112 = vunpack.c.l.b16 %v817
      %v1113 = vunpack.c.l.b16 %v818
      %v1114 = vunpack.c.l.b16 %v819
      %v1115 = vunpack.c.l.b16 %v820
      %v1116 = vunpack.c.l.b16 %v821
      %v1117 = vunpack.c.l.b16 %v822
      %v1118 = vunpack.c.l.b16 %v823
      %v1119 = vunpack.c.l.b16 %v824
      %v1120 = vunpack.c.l.b16 %v825
      %v1121 = vunpack.c.l.b16 %v826
      %v1122 = vunpack.c.l.b16 %v827
      %v1123 = vunpack.c.l.b16 %v828
      %v1124 = vunpack.c.l.b16 %v829
      %v1125 = vunpack.c.l.b16 %v830
      %v1126 = vunpack.c.l.b16 %v831
      %v1127 = vunpack.c.l.b16 %v832
      %v1128 = vunpack.c.l.b16 %v833
      %v1129 = vunpack.c.l.b16 %v834
      %v1130 = vunpack.c.l.b16 %v835
      %v1131 = vunpack.c.l.b16 %v836
      %v1132 = vunpack.c.l.b16 %v837
      %v1133 = vunpack.c.l.b16 %v838
      %v1134 = vunpack.c.l.b16 %v839
      %v1135 = vunpack.c.l.b16 %v840
      %v1136 = vunpack.c.l.b16 %v841
      %v1137 = vunpack.c.l.b16 %v842
      %v1138 = vunpack.c.l.b16 %v843
      %v1139 = vunpack.c.l.b16 %v844
      %v1140 = vunpack.c.l.b16 %v845
      %v1141 = vunpack.c.l.b16 %v846
      %v1142 = vunpack.c.l.b16 %v847
      %v1143 = vunpack.c.l.b16 %v848
      %v1144 = vunpack.c.l.b16 %v849
      %v1145 = vunpack.c.l.b16 %v850
      %v1146 = vunpack.c.l.b16 %v851
      %v1147 = vunpack.c.l.b16 %v852
      %v1148 = vunpack.c.l.b16 %v853
      %v1149 = vunpack.c.l.b16 %v854
      %v1150 = vunpack.c.l.b16 %v855
      %v1151 = vunpack.c.l.b16 %v856
      %v1152 = vunpack.c.l.b16 %v857
      %v1153 = vunpack.c.l.b16 %v858
      %v1154 = vunpack.c.l.b16 %v859
      %v1155 = vunpack.c.l.b16 %v860
      %v1156 = vunpack.c.l.b16 %v861
      %v1157 = vunpack.c.l.b16 %v862
      %v1158 = vunpack.c.l.b16 %v863
      %v1159 = vunpack.c.l.b16 %v864
      %v1160 = vunpack.c.l.b16 %v865
      %v1161 = vunpack.c.l.b16 %v866
      %v1162 = vunpack.c.l.b16 %v867
      %v1163 = vunpack.c.l.b16 %v868
      %v1164 = vunpack.c.l.b16 %v869
      %v1165 = vunpack.c.l.b16 %v870
      %v1166 = vunpack.c.l.b16 %v871
      %v1167 = vunpack.c.l.b16 %v872
      %v1168 = vunpack.c.l.b16 %v873
      %v1169 = vunpack.c.l.b16 %v874
      %v1170 = vpack.c.b16 %v1027, %v1026
      %v1171 = vpack.c.b16 %v1029, %v1028
      %v1172 = vpack.c.b16 %v1031, %v1030
      %v1173 = vpack.c.b16 %v1033, %v1032
      %v1174 = vpack.c.b16 %v1035, %v1034
      %v1175 = vpack.c.b16 %v1037, %v1036
      %v1176 = vpack.c.b16 %v1039, %v1038
      %v1177 = vpack.c.b16 %v1041, %v1040
      %v1178 = vpack.c.b16 %v1043, %v1042
      %v1179 = vpack.c.b16 %v1045, %v1044
      %v1180 = vpack.c.b16 %v1047, %v1046
      %v1181 = vpack.c.b16 %v1049, %v1048
      %v1182 = vpack.c.b16 %v1051, %v1050
      %v1183 = vpack.c.b16 %v1053, %v1052
      %v1184 = vpack.c.b16 %v1055, %v1054
      %v1185 = vpack.c.b16 %v1057, %v1056
      %v1186 = vpack.c.b16 %v1059, %v1058
      %v1187 = vpack.c.b16 %v1061, %v1060
      %v1188 = vpack.c.b16 %v1063, %v1062
      %v1189 = vpack.c.b16 %v1065, %v1064
      %v1190 = vpack.c.b16 %v1067, %v1066
      %v1191 = vpack.c.b16 %v1069, %v1068
      %v1192 = vpack.c.b16 %v1071, %v1070
      %v1193 = vpack.c.b16 %v1073, %v1072
      %v1194 = vpack.c.b16 %v1075, %v1074
      %v1195 = vpack.c.b16 %v1077, %v1076
      %v1196 = vpack.c.b16 %v1079, %v1078
      %v1197 = vpack.c.b16 %v1081, %v1080
      %v1198 = vpack.c.b16 %v1083, %v1082
      %v1199 = vpack.c.b16 %v1085, %v1084
      %v1200 = vpack.c.b16 %v1087, %v1086
      %v1201 = vpack.c.b16 %v1089, %v1088
      %v1202 = vpack.c.b16 %v1091, %v1090
      %v1203 = vpack.c.b16 %v1093, %v1092
      %v1204 = vpack.c.b16 %v1095, %v1094
      %v1205 = vpack.c.b16 %v1097, %v1096
      %v1206 = vpack.c.b16 %v1099, %v1098
      %v1207 = vpack.c.b16 %v1101, %v1100
      %v1208 = vpack.c.b16 %v1103, %v1102
      %v1209 = vpack.c.b16 %v1105, %v1104
      %v1210 = vpack.c.b16 %v1107, %v1106
      %v1211 = vpack.c.b16 %v1109, %v1108
      %v1212 = vpack.c.b16 %v1111, %v1110
      %v1213 = vpack.c.b16 %v1113, %v1112
      %v1214 = vpack.c.b16 %v1115, %v1114
      %v1215 = vpack.c.b16 %v1117, %v1116
      %v1216 = vpack.c.b16 %v1119, %v1118
      %v1217 = vpack.c.b16 %v1121, %v1120
      %v1218 = vpack.c.b16 %v1123, %v1122
      %v1219 = vpack.c.b16 %v1125, %v1124
      %v1220 = vpack.c.b16 %v1127, %v1126
      %v1221 = vpack.c.b16 %v1129, %v1128
      %v1222 = vpack.c.b16 %v1131, %v1130
      %v1223 = vpack.c.b16 %v1133, %v1132
      %v1224 = vpack.c.b16 %v1135, %v1134
      %v1225 = vpack.c.b16 %v1137, %v1136
      %v1226 = vpack.c.b16 %v1139, %v1138
      %v1227 = vpack.c.b16 %v1141, %v1140
      %v1228 = vpack.c.b16 %v1143, %v1142
      %v1229 = vpack.c.b16 %v1145, %v1144
      %v1230 = vpack.c.b16 %v1147, %v1146
      %v1231 = vpack.c.b16 %v1149, %v1148
      %v1232 = vpack.c.b16 %v1151, %v1150
      %v1233 = vpack.c.b16 %v1153, %v1152
      %v1234 = vpack.c.b16 %v1155, %v1154
      %v1235 = vpack.c.b16 %v1157, %v1156
      %v1236 = vpack.c.b16 %v1159, %v1158
      %v1237 = vpack.c.b16 %v1161, %v1160
      %v1238 = vpack.c.b16 %v1163, %v1162
      %v1239 = vpack.c.b16 %v1165, %v1164
      %v1240 = vpack.c.b16 %v1167, %v1166
      %v1241 = vpack.c.b16 %v1169, %v1168
      %1314 = vmatprep.subr.bf16.mxu0 0
      %1315 = vmatpush1.bf16.msra.mxu0 %v1177
      %1316 = vmatprep.subr.bf16.mxu0 0
      %1317 = vmatpush1.bf16.msra.mxu0 %v1176
      %1318 = vmatprep.subr.bf16.mxu0 0
      %1319 = vmatpush1.bf16.msra.mxu0 %v1175
      %1320 = vmatprep.subr.bf16.mxu0 0
      %1321 = vmatpush1.bf16.msra.mxu0 %v1174
      %1322 = vmatprep.subr.bf16.mxu0 0
      %1323 = vmatpush1.bf16.msra.mxu0 %v1173
      %1324 = vmatprep.subr.bf16.mxu0 0
      %1325 = vmatpush1.bf16.msra.mxu0 %v1172
      %1326 = vmatprep.subr.bf16.mxu0 0
      %1327 = vmatpush1.bf16.msra.mxu0 %v1171
      %1328 = vmatprep.subr.bf16.mxu0 0
      %1329 = vmatpush1.bf16.msra.mxu0 %v1170
      %1330 = vmatprep.subr.bf16.mxu0 0
      %1331 = vmatpush2.bf16.msra.mxu0 %v1185
      %1332 = vmatprep.subr.bf16.mxu0 0
      %1333 = vmatpush2.bf16.msra.mxu0 %v1184
      %1334 = vmatprep.subr.bf16.mxu0 0
      %1335 = vmatpush2.bf16.msra.mxu0 %v1183
      %1336 = vmatprep.subr.bf16.mxu0 0
      %1337 = vmatpush2.bf16.msra.mxu0 %v1182
      %1338 = vmatprep.subr.bf16.mxu0 0
      %1339 = vmatpush2.bf16.msra.mxu0 %v1181
      %1340 = vmatprep.subr.bf16.mxu0 0
      %1341 = vmatpush2.bf16.msra.mxu0 %v1180
      %1342 = vmatprep.subr.bf16.mxu0 0
      %1343 = vmatpush2.bf16.msra.mxu0 %v1179
      %1344 = vmatprep.subr.bf16.mxu0 0
      %1345 = vmatpush2.bf16.msra.mxu0 %v1178
      %1346 = vmatprep.mubr.bf16.mxu0 %v675
      %1347 = vmatmul.mubr.bf16.gmra.mxu0 %v659
      %v1348 = vpop.f32.mrf.mxu0
      %v1349 = vadd.f32 %v880, %v1348
      %v1350 = vpop.f32.mrf.mxu0
      %v1351 = vpop.f32.mrf.mxu0
      %v1352 = vadd.f32 %v880, %v1351
      %v1353 = vpop.f32.mrf.mxu0
      %1354 = vmatprep.mubr.bf16.mxu0 %v676
      %1355 = vmatmul.mubr.bf16.gmra.mxu0 %v660
      %v1356 = vpop.f32.mrf.mxu0
      %v1357 = vadd.f32 %v880, %v1356
      %v1358 = vpop.f32.mrf.mxu0
      %v1359 = vpop.f32.mrf.mxu0
      %v1360 = vadd.f32 %v880, %v1359
      %v1361 = vpop.f32.mrf.mxu0
      %1362 = vmatprep.mubr.bf16.mxu0 %v677
      %1363 = vmatmul.mubr.bf16.gmra.mxu0 %v661
      %v1364 = vpop.f32.mrf.mxu0
      %v1365 = vadd.f32 %v880, %v1364
      %v1366 = vpop.f32.mrf.mxu0
      %v1367 = vpop.f32.mrf.mxu0
      %v1368 = vadd.f32 %v880, %v1367
      %v1369 = vpop.f32.mrf.mxu0
      %1370 = vmatprep.mubr.bf16.mxu0 %v678
      %1371 = vmatmul.mubr.bf16.gmra.mxu0 %v662
      %v1372 = vpop.f32.mrf.mxu0
      %v1373 = vadd.f32 %v880, %v1372
      %v1374 = vpop.f32.mrf.mxu0
      %v1375 = vpop.f32.mrf.mxu0
      %v1376 = vadd.f32 %v880, %v1375
      %v1377 = vpop.f32.mrf.mxu0
      %1378 = vdwg.mxu0
      %1379 = vmatprep.subr.bf16.mxu0 0
      %1380 = vmatpush1.bf16.msra.mxu0 %v1193
      %1381 = vmatprep.subr.bf16.mxu0 0
      %1382 = vmatpush1.bf16.msra.mxu0 %v1192
      %1383 = vmatprep.subr.bf16.mxu0 0
      %1384 = vmatpush1.bf16.msra.mxu0 %v1191
      %1385 = vmatprep.subr.bf16.mxu0 0
      %1386 = vmatpush1.bf16.msra.mxu0 %v1190
      %1387 = vmatprep.subr.bf16.mxu0 0
      %1388 = vmatpush1.bf16.msra.mxu0 %v1189
      %1389 = vmatprep.subr.bf16.mxu0 0
      %1390 = vmatpush1.bf16.msra.mxu0 %v1188
      %1391 = vmatprep.subr.bf16.mxu0 0
      %1392 = vmatpush1.bf16.msra.mxu0 %v1187
      %1393 = vmatprep.subr.bf16.mxu0 0
      %1394 = vmatpush1.bf16.msra.mxu0 %v1186
      %1395 = vmatprep.subr.bf16.mxu0 0
      %1396 = vmatpush2.bf16.msra.mxu0 %v1201
      %1397 = vmatprep.subr.bf16.mxu0 0
      %1398 = vmatpush2.bf16.msra.mxu0 %v1200
      %1399 = vmatprep.subr.bf16.mxu0 0
      %1400 = vmatpush2.bf16.msra.mxu0 %v1199
      %1401 = vmatprep.subr.bf16.mxu0 0
      %1402 = vmatpush2.bf16.msra.mxu0 %v1198
      %1403 = vmatprep.subr.bf16.mxu0 0
      %1404 = vmatpush2.bf16.msra.mxu0 %v1197
      %1405 = vmatprep.subr.bf16.mxu0 0
      %1406 = vmatpush2.bf16.msra.mxu0 %v1196
      %1407 = vmatprep.subr.bf16.mxu0 0
      %1408 = vmatpush2.bf16.msra.mxu0 %v1195
      %1409 = vmatprep.subr.bf16.mxu0 0
      %1410 = vmatpush2.bf16.msra.mxu0 %v1194
      %1411 = vmatprep.mubr.bf16.mxu0 %v699
      %1412 = vmatmul.mubr.bf16.gmra.mxu0 %v691
      %v1413 = vpop.f32.mrf.mxu0
      %v1414 = vadd.f32 %v1349, %v1413
      %v1415 = vpop.f32.mrf.mxu0
      %v1416 = vpop.f32.mrf.mxu0
      %v1417 = vadd.f32 %v1352, %v1416
      %v1418 = vpop.f32.mrf.mxu0
      %1419 = vmatprep.mubr.bf16.mxu0 %v700
      %1420 = vmatmul.mubr.bf16.gmra.mxu0 %v692
      %v1421 = vpop.f32.mrf.mxu0
      %v1422 = vadd.f32 %v1357, %v1421
      %v1423 = vpop.f32.mrf.mxu0
      %v1424 = vpop.f32.mrf.mxu0
      %v1425 = vadd.f32 %v1360, %v1424
      %v1426 = vpop.f32.mrf.mxu0
      %1427 = vmatprep.mubr.bf16.mxu0 %v701
      %1428 = vmatmul.mubr.bf16.gmra.mxu0 %v693
      %v1429 = vpop.f32.mrf.mxu0
      %v1430 = vadd.f32 %v1365, %v1429
      %v1431 = vpop.f32.mrf.mxu0
      %v1432 = vpop.f32.mrf.mxu0
      %v1433 = vadd.f32 %v1368, %v1432
      %v1434 = vpop.f32.mrf.mxu0
      %1435 = vmatprep.mubr.bf16.mxu0 %v702
      %1436 = vmatmul.mubr.bf16.gmra.mxu0 %v694
      %v1437 = vpop.f32.mrf.mxu0
      %v1438 = vadd.f32 %v1373, %v1437
      %v1439 = vpop.f32.mrf.mxu0
      %v1440 = vpop.f32.mrf.mxu0
      %v1441 = vadd.f32 %v1376, %v1440
      %v1442 = vpop.f32.mrf.mxu0
      %1443 = vdwg.mxu0
      %1444 = vmatprep.subr.bf16.mxu0 0
      %1445 = vmatpush1.bf16.msra.mxu0 %v1209
      %1446 = vmatprep.subr.bf16.mxu0 0
      %1447 = vmatpush1.bf16.msra.mxu0 %v1208
      %1448 = vmatprep.subr.bf16.mxu0 0
      %1449 = vmatpush1.bf16.msra.mxu0 %v1207
      %1450 = vmatprep.subr.bf16.mxu0 0
      %1451 = vmatpush1.bf16.msra.mxu0 %v1206
      %1452 = vmatprep.subr.bf16.mxu0 0
      %1453 = vmatpush1.bf16.msra.mxu0 %v1205
      %1454 = vmatprep.subr.bf16.mxu0 0
      %1455 = vmatpush1.bf16.msra.mxu0 %v1204
      %1456 = vmatprep.subr.bf16.mxu0 0
      %1457 = vmatpush1.bf16.msra.mxu0 %v1203
      %1458 = vmatprep.subr.bf16.mxu0 0
      %1459 = vmatpush1.bf16.msra.mxu0 %v1202
      %1460 = vmatprep.subr.bf16.mxu0 0
      %1461 = vmatpush2.bf16.msra.mxu0 %v1217
      %1462 = vmatprep.subr.bf16.mxu0 0
      %1463 = vmatpush2.bf16.msra.mxu0 %v1216
      %1464 = vmatprep.subr.bf16.mxu0 0
      %1465 = vmatpush2.bf16.msra.mxu0 %v1215
      %1466 = vmatprep.subr.bf16.mxu0 0
      %1467 = vmatpush2.bf16.msra.mxu0 %v1214
      %1468 = vmatprep.subr.bf16.mxu0 0
      %1469 = vmatpush2.bf16.msra.mxu0 %v1213
      %1470 = vmatprep.subr.bf16.mxu0 0
      %1471 = vmatpush2.bf16.msra.mxu0 %v1212
      %1472 = vmatprep.subr.bf16.mxu0 0
      %1473 = vmatpush2.bf16.msra.mxu0 %v1211
      %1474 = vmatprep.subr.bf16.mxu0 0
      %1475 = vmatpush2.bf16.msra.mxu0 %v1210
      %1476 = vmatprep.mubr.bf16.mxu0 %v717
      %1477 = vmatmul.mubr.bf16.gmra.mxu0 %v708
      %v1478 = vpop.f32.mrf.mxu0
      %v1479 = vadd.f32 %v1414, %v1478
      %v1480 = vpop.f32.mrf.mxu0
      %v1481 = vpop.f32.mrf.mxu0
      %v1482 = vadd.f32 %v1417, %v1481
      %v1483 = vpop.f32.mrf.mxu0
      %1484 = vmatprep.mubr.bf16.mxu0 %v718
      %1485 = vmatmul.mubr.bf16.gmra.mxu0 %v709
      %v1486 = vpop.f32.mrf.mxu0
      %v1487 = vadd.f32 %v1422, %v1486
      %v1488 = vpop.f32.mrf.mxu0
      %v1489 = vpop.f32.mrf.mxu0
      %v1490 = vadd.f32 %v1425, %v1489
      %v1491 = vpop.f32.mrf.mxu0
      %1492 = vmatprep.mubr.bf16.mxu0 %v719
      %1493 = vmatmul.mubr.bf16.gmra.mxu0 %v710
      %v1494 = vpop.f32.mrf.mxu0
      %v1495 = vadd.f32 %v1430, %v1494
      %v1496 = vpop.f32.mrf.mxu0
      %v1497 = vpop.f32.mrf.mxu0
      %v1498 = vadd.f32 %v1433, %v1497
      %v1499 = vpop.f32.mrf.mxu0
      %1500 = vmatprep.mubr.bf16.mxu0 %v720
      %1501 = vmatmul.mubr.bf16.gmra.mxu0 %v711
      %v1502 = vpop.f32.mrf.mxu0
      %v1503 = vadd.f32 %v1438, %v1502
      %v1504 = vpop.f32.mrf.mxu0
      %v1505 = vpop.f32.mrf.mxu0
      %v1506 = vadd.f32 %v1441, %v1505
      %v1507 = vpop.f32.mrf.mxu0
      %1508 = vdwg.mxu0
      %1509 = vmatprep.subr.bf16.mxu0 0
      %1510 = vmatpush1.bf16.msra.mxu0 %v1225
      %1511 = vmatprep.subr.bf16.mxu0 0
      %1512 = vmatpush1.bf16.msra.mxu0 %v1224
      %1513 = vmatprep.subr.bf16.mxu0 0
      %1514 = vmatpush1.bf16.msra.mxu0 %v1223
      %1515 = vmatprep.subr.bf16.mxu0 0
      %1516 = vmatpush1.bf16.msra.mxu0 %v1222
      %1517 = vmatprep.subr.bf16.mxu0 0
      %1518 = vmatpush1.bf16.msra.mxu0 %v1221
      %1519 = vmatprep.subr.bf16.mxu0 0
      %1520 = vmatpush1.bf16.msra.mxu0 %v1220
      %1521 = vmatprep.subr.bf16.mxu0 0
      %1522 = vmatpush1.bf16.msra.mxu0 %v1219
      %1523 = vmatprep.subr.bf16.mxu0 0
      %1524 = vmatpush1.bf16.msra.mxu0 %v1218
      %1525 = vmatprep.subr.bf16.mxu0 0
      %1526 = vmatpush2.bf16.msra.mxu0 %v1233
      %1527 = vmatprep.subr.bf16.mxu0 0
      %1528 = vmatpush2.bf16.msra.mxu0 %v1232
      %1529 = vmatprep.subr.bf16.mxu0 0
      %1530 = vmatpush2.bf16.msra.mxu0 %v1231
      %1531 = vmatprep.subr.bf16.mxu0 0
      %1532 = vmatpush2.bf16.msra.mxu0 %v1230
      %1533 = vmatprep.subr.bf16.mxu0 0
      %1534 = vmatpush2.bf16.msra.mxu0 %v1229
      %1535 = vmatprep.subr.bf16.mxu0 0
      %1536 = vmatpush2.bf16.msra.mxu0 %v1228
      %1537 = vmatprep.subr.bf16.mxu0 0
      %1538 = vmatpush2.bf16.msra.mxu0 %v1227
      %1539 = vmatprep.subr.bf16.mxu0 0
      %1540 = vmatpush2.bf16.msra.mxu0 %v1226
      %1541 = vmatprep.mubr.bf16.mxu0 %v676
      %1542 = vmatmul.mubr.bf16.gmra.mxu0 %v660
      %v1543 = vpop.f32.mrf.mxu0
      %v1544 = vadd.f32 %v1479, %v1543
      %v1545 = vpop.f32.mrf.mxu0
      %v1546 = vpop.f32.mrf.mxu0
      %v1547 = vadd.f32 %v1482, %v1546
      %v1548 = vpop.f32.mrf.mxu0
      %1549 = vmatprep.mubr.bf16.mxu0 %v677
      %1550 = vmatmul.mubr.bf16.gmra.mxu0 %v661
      %v1551 = vpop.f32.mrf.mxu0
      %v1552 = vadd.f32 %v1487, %v1551
      %v1553 = vpop.f32.mrf.mxu0
      %v1554 = vpop.f32.mrf.mxu0
      %v1555 = vadd.f32 %v1490, %v1554
      %v1556 = vpop.f32.mrf.mxu0
      %1557 = vmatprep.mubr.bf16.mxu0 %v678
      %1558 = vmatmul.mubr.bf16.gmra.mxu0 %v662
      %v1559 = vpop.f32.mrf.mxu0
      %v1560 = vadd.f32 %v1495, %v1559
      %v1561 = vpop.f32.mrf.mxu0
      %v1562 = vpop.f32.mrf.mxu0
      %v1563 = vadd.f32 %v1498, %v1562
      %v1564 = vpop.f32.mrf.mxu0
      %1565 = vmatprep.mubr.bf16.mxu0 %v727
      %1566 = vmatmul.mubr.bf16.gmra.mxu0 %v725
      %v1567 = vpop.f32.mrf.mxu0
      %v1568 = vadd.f32 %v1503, %v1567
      %v1569 = vpop.f32.mrf.mxu0
      %v1570 = vpop.f32.mrf.mxu0
      %v1571 = vadd.f32 %v1506, %v1570
      %v1572 = vpop.f32.mrf.mxu0
      %1573 = vdwg.mxu0
      %1574 = vmatprep.subr.bf16.mxu0 0
      %1575 = vmatpush1.bf16.msra.mxu0 %v1241
      %1576 = vmatprep.subr.bf16.mxu0 0
      %1577 = vmatpush1.bf16.msra.mxu0 %v1240
      %1578 = vmatprep.subr.bf16.mxu0 0
      %1579 = vmatpush1.bf16.msra.mxu0 %v1239
      %1580 = vmatprep.subr.bf16.mxu0 0
      %1581 = vmatpush1.bf16.msra.mxu0 %v1238
      %1582 = vmatprep.subr.bf16.mxu0 0
      %1583 = vmatpush1.bf16.msra.mxu0 %v1237
      %1584 = vmatprep.subr.bf16.mxu0 0
      %1585 = vmatpush1.bf16.msra.mxu0 %v1236
      %1586 = vmatprep.subr.bf16.mxu0 0
      %1587 = vmatpush1.bf16.msra.mxu0 %v1235
      %1588 = vmatprep.subr.bf16.mxu0 0
      %1589 = vmatpush1.bf16.msra.mxu0 %v1234
      %1590 = vmatprep.subr.bf16.mxu0 0
      %1591 = vmatpush2.bf16.msra.mxu0 0
      %1592 = vmatprep.subr.bf16.mxu0 0
      %1593 = vmatpush2.bf16.msra.mxu0 0
      %1594 = vmatprep.subr.bf16.mxu0 0
      %1595 = vmatpush2.bf16.msra.mxu0 0
      %1596 = vmatprep.subr.bf16.mxu0 0
      %1597 = vmatpush2.bf16.msra.mxu0 0
      %1598 = vmatprep.subr.bf16.mxu0 0
      %1599 = vmatpush2.bf16.msra.mxu0 0
      %1600 = vmatprep.subr.bf16.mxu0 0
      %1601 = vmatpush2.bf16.msra.mxu0 0
      %1602 = vmatprep.subr.bf16.mxu0 0
      %1603 = vmatpush2.bf16.msra.mxu0 0
      %1604 = vmatprep.subr.bf16.mxu0 0
      %1605 = vmatpush2.bf16.msra.mxu0 0
      %1606 = vmatprep.mubr.bf16.mxu0 0
      %1607 = vmatmul.mubr.bf16.gmra.mxu0 %v692
      %v1608 = vpop.f32.mrf.mxu0
      %v1609 = vadd.f32 %v1544, %v1608
      %v1610 = vpop.f32.mrf.mxu0
      %v1611 = vpop.f32.mrf.mxu0
      %v1612 = vadd.f32 %v1547, %v1611
      %v1613 = vpop.f32.mrf.mxu0
      %1614 = vmatprep.mubr.bf16.mxu0 0
      %1615 = vmatmul.mubr.bf16.gmra.mxu0 %v693
      %v1616 = vpop.f32.mrf.mxu0
      %v1617 = vadd.f32 %v1552, %v1616
      %v1618 = vpop.f32.mrf.mxu0
      %v1619 = vpop.f32.mrf.mxu0
      %v1620 = vadd.f32 %v1555, %v1619
      %v1621 = vpop.f32.mrf.mxu0
      %1622 = vmatprep.mubr.bf16.mxu0 0
      %1623 = vmatmul.mubr.bf16.gmra.mxu0 %v694
      %v1624 = vpop.f32.mrf.mxu0
      %v1625 = vadd.f32 %v1560, %v1624
      %v1626 = vpop.f32.mrf.mxu0
      %v1627 = vpop.f32.mrf.mxu0
      %v1628 = vadd.f32 %v1563, %v1627
      %v1629 = vpop.f32.mrf.mxu0
      %1630 = vmatprep.mubr.bf16.mxu0 0
      %1631 = vmatmul.mubr.bf16.gmra.mxu0 %v729
      %v1632 = vpop.f32.mrf.mxu0
      %v1633 = vadd.f32 %v1568, %v1632
      %v1634 = vpop.f32.mrf.mxu0
      %v1635 = vpop.f32.mrf.mxu0
      %v1636 = vadd.f32 %v1571, %v1635
      %v1637 = vpop.f32.mrf.mxu0
      %1638 = vdwg.mxu0
      %v1639 = vmax.f32 %v1609, 0.0
      %v1640 = vmax.f32 %v1612, 0.0
      %v1641 = vmax.f32 %v1617, 0.0
      %v1642 = vmax.f32 %v1620, 0.0
      %v1643 = vmax.f32 %v1625, 0.0
      %v1644 = vmax.f32 %v1628, 0.0
      %v1645 = vmax.f32 %v1633, 0.0
      %v1646 = vmax.f32 %v1636, 0.0
      %v1647 = vpack.c.bf16 %v1640, %v1639
      %v1648 = vpack.c.bf16 %v1642, %v1641
      %v1649 = vpack.c.bf16 %v1644, %v1643
      %v1650 = vpack.c.bf16 %v1646, %v1645
      %v1655 = vunpack.c.l.b16 %v1647
      %v1656 = vunpack.c.h.b16 %v1647
      %v1657 = vunpack.c.l.b16 %v1648
      %v1658 = vunpack.c.h.b16 %v1648
      %v1659 = vunpack.c.l.b16 %v1649
      %v1660 = vunpack.c.h.b16 %v1649
      %v1661 = vunpack.c.l.b16 %v1650
      %v1662 = vunpack.c.h.b16 %v1650
      %v1663 = vpack.c.b16 %v1655, %v1655
      %v1664 = vpack.c.b16 %v1656, %v1656
      %v1665 = vpack.c.b16 %v1657, %v1657
      %v1666 = vpack.c.b16 %v1658, %v1658
      %v1667 = vpack.c.b16 %v1659, %v1659
      %v1668 = vpack.c.b16 %v1660, %v1660
      %v1669 = vpack.c.b16 %v1661, %v1661
      %v1670 = vpack.c.b16 %v1662, %v1662
      %v1672 = vshrl.u32 %v1663, 16
      %v1674 = vrot.slane %v1672, 7
      %v1675 = vshll.u32 %v1663, 16
      %v1677 = vor.u32 %v1674, %v1675
      %v1679 = vshrl.u32 %v1664, 16
      %v1681 = vrot.slane %v1679, 7
      %v1682 = vshll.u32 %v1664, 16
      %v1684 = vor.u32 %v1681, %v1682
      %v1686 = vshrl.u32 %v1665, 16
      %v1688 = vrot.slane %v1686, 7
      %v1689 = vshll.u32 %v1665, 16
      %v1691 = vor.u32 %v1688, %v1689
      %v1693 = vshrl.u32 %v1666, 16
      %v1695 = vrot.slane %v1693, 7
      %v1696 = vshll.u32 %v1666, 16
      %v1698 = vor.u32 %v1695, %v1696
      %v1700 = vshrl.u32 %v1667, 16
      %v1702 = vrot.slane %v1700, 7
      %v1703 = vshll.u32 %v1667, 16
      %v1705 = vor.u32 %v1702, %v1703
      %v1707 = vshrl.u32 %v1668, 16
      %v1709 = vrot.slane %v1707, 7
      %v1710 = vshll.u32 %v1668, 16
      %v1712 = vor.u32 %v1709, %v1710
      %v1714 = vshrl.u32 %v1669, 16
      %v1716 = vrot.slane %v1714, 7
      %v1717 = vshll.u32 %v1669, 16
      %v1719 = vor.u32 %v1716, %v1717
      %v1721 = vshrl.u32 %v1670, 16
      %v1723 = vrot.slane %v1721, 7
      %v1724 = vshll.u32 %v1670, 16
      %v1726 = vor.u32 %v1723, %v1724
      %v1735 = vsel %vm424, 0, %v1677
      %v1736 = vsel %vm424, 0, %v1684
      %v1737 = vsel %vm424, 0, %v1691
      %v1738 = vsel %vm424, 0, %v1698
      %v1739 = vsel %vm424, 0, %v1705
      %v1740 = vsel %vm424, 0, %v1712
      %v1741 = vsel %vm424, 0, %v1719
      %v1742 = vsel %vm424, 0, %v1726
      %v1743 = vsel %vm436, %v1735, 0
      %v1744 = vsel %vm436, %v1736, 0
      %v1745 = vsel %vm436, %v1737, 0
      %v1746 = vsel %vm436, %v1738, 0
      %v1747 = vsel %vm436, %v1739, 0
      %v1748 = vsel %vm436, %v1740, 0
      %v1749 = vsel %vm436, %v1741, 0
      %v1750 = vsel %vm436, %v1742, 0
      %v1758 = vunpack.c.l.b16 %v1743
      %v1759 = vunpack.c.h.b16 %v1743
      %v1760 = vunpack.c.l.b16 %v1744
      %v1761 = vunpack.c.h.b16 %v1744
      %v1762 = vunpack.c.l.b16 %v1745
      %v1763 = vunpack.c.h.b16 %v1745
      %v1764 = vunpack.c.l.b16 %v1746
      %v1765 = vunpack.c.h.b16 %v1746
      %v1766 = vunpack.c.l.b16 %v1747
      %v1767 = vunpack.c.h.b16 %v1747
      %v1768 = vunpack.c.l.b16 %v1748
      %v1769 = vunpack.c.h.b16 %v1748
      %v1770 = vunpack.c.l.b16 %v1749
      %v1771 = vunpack.c.h.b16 %v1749
      %v1772 = vpack.c.b16 %v1758, %v1758
      %v1773 = vpack.c.b16 %v1759, %v1759
      %v1774 = vpack.c.b16 %v1760, %v1760
      %v1775 = vpack.c.b16 %v1761, %v1761
      %v1776 = vpack.c.b16 %v1762, %v1762
      %v1777 = vpack.c.b16 %v1763, %v1763
      %v1778 = vpack.c.b16 %v1764, %v1764
      %v1779 = vpack.c.b16 %v1765, %v1765
      %v1780 = vpack.c.b16 %v1766, %v1766
      %v1781 = vpack.c.b16 %v1767, %v1767
      %v1782 = vpack.c.b16 %v1768, %v1768
      %v1783 = vpack.c.b16 %v1769, %v1769
      %v1784 = vpack.c.b16 %v1770, %v1770
      %v1785 = vpack.c.b16 %v1771, %v1771
      %v1787 = vshrl.u32 %v1772, 16
      %v1789 = vrot.slane %v1787, 4
      %v1790 = vshll.u32 %v1772, 16
      %v1792 = vrot.slane %v1790, 5
      %v1793 = vor.u32 %v1789, %v1792
      %v1794 = vrot.slane %v1793, 4
      %v1796 = vshll.u32 %v1773, 16
      %v1798 = vrot.slane %v1796, 5
      %v1799 = vsel %vm488, %v1794, %v1798
      %v1801 = vshrl.u32 %v1774, 16
      %v1803 = vrot.slane %v1801, 4
      %v1804 = vshll.u32 %v1774, 16
      %v1806 = vrot.slane %v1804, 5
      %v1807 = vor.u32 %v1803, %v1806
      %v1808 = vrot.slane %v1807, 4
      %v1810 = vshll.u32 %v1775, 16
      %v1812 = vrot.slane %v1810, 5
      %v1813 = vsel %vm488, %v1808, %v1812
      %v1815 = vshrl.u32 %v1776, 16
      %v1817 = vrot.slane %v1815, 4
      %v1818 = vshll.u32 %v1776, 16
      %v1820 = vrot.slane %v1818, 5
      %v1821 = vor.u32 %v1817, %v1820
      %v1822 = vrot.slane %v1821, 4
      %v1824 = vshll.u32 %v1777, 16
      %v1826 = vrot.slane %v1824, 5
      %v1827 = vsel %vm488, %v1822, %v1826
      %v1829 = vshrl.u32 %v1778, 16
      %v1831 = vrot.slane %v1829, 4
      %v1832 = vshll.u32 %v1778, 16
      %v1834 = vrot.slane %v1832, 5
      %v1835 = vor.u32 %v1831, %v1834
      %v1836 = vrot.slane %v1835, 4
      %v1838 = vshll.u32 %v1779, 16
      %v1840 = vrot.slane %v1838, 5
      %v1841 = vsel %vm488, %v1836, %v1840
      %v1843 = vshrl.u32 %v1780, 16
      %v1845 = vrot.slane %v1843, 4
      %v1846 = vshll.u32 %v1780, 16
      %v1848 = vrot.slane %v1846, 5
      %v1849 = vor.u32 %v1845, %v1848
      %v1850 = vrot.slane %v1849, 4
      %v1852 = vshll.u32 %v1781, 16
      %v1854 = vrot.slane %v1852, 5
      %v1855 = vsel %vm488, %v1850, %v1854
      %v1857 = vshrl.u32 %v1782, 16
      %v1859 = vrot.slane %v1857, 4
      %v1860 = vshll.u32 %v1782, 16
      %v1862 = vrot.slane %v1860, 5
      %v1863 = vor.u32 %v1859, %v1862
      %v1864 = vrot.slane %v1863, 4
      %v1866 = vshll.u32 %v1783, 16
      %v1868 = vrot.slane %v1866, 5
      %v1869 = vsel %vm488, %v1864, %v1868
      %v1871 = vshrl.u32 %v1784, 16
      %v1873 = vrot.slane %v1871, 4
      %v1874 = vshll.u32 %v1784, 16
      %v1876 = vrot.slane %v1874, 5
      %v1877 = vor.u32 %v1873, %v1876
      %v1878 = vrot.slane %v1877, 4
      %v1880 = vshll.u32 %v1785, 16
      %v1882 = vrot.slane %v1880, 5
      %v1883 = vsel %vm488, %v1878, %v1882
      %v1884 = vrot.slane %v1772, 5
      %v1885 = vrot.slane %v1884, 4
      %v1886 = vrot.slane %v1773, 5
      %v1887 = vsel %vm603, %v1885, %v1886
      %v1888 = vrot.slane %v1774, 5
      %v1889 = vrot.slane %v1888, 4
      %v1890 = vrot.slane %v1775, 5
      %v1891 = vsel %vm603, %v1889, %v1890
      %v1892 = vrot.slane %v1776, 5
      %v1893 = vrot.slane %v1892, 4
      %v1894 = vrot.slane %v1777, 5
      %v1895 = vsel %vm603, %v1893, %v1894
      %v1896 = vrot.slane %v1778, 5
      %v1897 = vrot.slane %v1896, 4
      %v1898 = vrot.slane %v1779, 5
      %v1899 = vsel %vm603, %v1897, %v1898
      %v1900 = vrot.slane %v1780, 5
      %v1901 = vrot.slane %v1900, 4
      %v1902 = vrot.slane %v1781, 5
      %v1903 = vsel %vm603, %v1901, %v1902
      %v1904 = vrot.slane %v1782, 5
      %v1905 = vrot.slane %v1904, 4
      %v1906 = vrot.slane %v1783, 5
      %v1907 = vsel %vm603, %v1905, %v1906
      %v1908 = vrot.slane %v1784, 5
      %v1909 = vrot.slane %v1908, 4
      %v1910 = vrot.slane %v1785, 5
      %v1911 = vsel %vm603, %v1909, %v1910
      %v1913 = vunpack.c.l.b16 %v1750
      %v1914 = vunpack.c.h.b16 %v1750
      %v1915 = vpack.c.b16 %v1913, %v1913
      %v1916 = vpack.c.b16 %v1914, %v1914
      %v1918 = vshrl.u32 %v1915, 16
      %v1920 = vrot.slane %v1918, 4
      %v1921 = vshll.u32 %v1915, 16
      %v1923 = vrot.slane %v1921, 5
      %v1924 = vor.u32 %v1920, %v1923
      %v1925 = vrot.slane %v1924, 4
      %v1927 = vshll.u32 %v1916, 16
      %v1929 = vrot.slane %v1927, 5
      %v1930 = vsel %vm488, %v1925, %v1929
      %v1931 = vrot.slane %v1915, 5
      %v1932 = vrot.slane %v1931, 4
      %v1933 = vrot.slane %v1916, 5
      %v1934 = vsel %vm603, %v1932, %v1933
      %v1935 = vpack.c.b16 %v1758, %v454
      %v1936 = vpack.c.b16 %v1762, %v1760
      %v1937 = vpack.c.b16 %v1766, %v1764
      %v1938 = vpack.c.b16 %v1770, %v1768
      %v1943 = vunpack.c.l.b16 %v1799
      %v1944 = vunpack.c.l.b16 %v1813
      %v1945 = vunpack.c.l.b16 %v1827
      %v1946 = vunpack.c.l.b16 %v1841
      %v1947 = vunpack.c.l.b16 %v1855
      %v1948 = vunpack.c.l.b16 %v1869
      %v1949 = vunpack.c.l.b16 %v1883
      %v1950 = vpack.c.b16 %v1943, %v667
      %v1951 = vpack.c.b16 %v1945, %v1944
      %v1952 = vpack.c.b16 %v1947, %v1946
      %v1953 = vpack.c.b16 %v1949, %v1948
      %v1958 = vunpack.c.l.b16 %v1887
      %v1959 = vunpack.c.l.b16 %v1891
      %v1960 = vunpack.c.l.b16 %v1895
      %v1961 = vunpack.c.l.b16 %v1899
      %v1962 = vunpack.c.l.b16 %v1903
      %v1963 = vunpack.c.l.b16 %v1907
      %v1964 = vunpack.c.l.b16 %v1911
      %v1965 = vpack.c.b16 %v1958, %v683
      %v1966 = vpack.c.b16 %v1960, %v1959
      %v1967 = vpack.c.b16 %v1962, %v1961
      %v1968 = vpack.c.b16 %v1964, %v1963
      %v1973 = vpack.c.b16 %v1760, %v1758
      %v1974 = vpack.c.b16 %v1764, %v1762
      %v1975 = vpack.c.b16 %v1768, %v1766
      %v1976 = vpack.c.b16 %v1913, %v1770
      %v1981 = vunpack.c.l.b16 %v1930
      %v1982 = vpack.c.b16 %v1944, %v1943
      %v1983 = vpack.c.b16 %v1946, %v1945
      %v1984 = vpack.c.b16 %v1948, %v1947
      %v1985 = vpack.c.b16 %v1981, %v1949
      %v1990 = vunpack.c.l.b16 %v1934
      %v1991 = vpack.c.b16 %v1959, %v1958
      %v1992 = vpack.c.b16 %v1961, %v1960
      %v1993 = vpack.c.b16 %v1963, %v1962
      %v1994 = vpack.c.b16 %v1990, %v1964
      %v1999 = vpack.c.b16 %v454, %v1913
      %v2001 = vpack.c.b16 %v667, %v1981
      %v2003 = vpack.c.b16 %v683, %v1990
      %v2005 = vld [vmem:[%s3] sm:$0xf]
      %v2006 = vld [vmem:[%s3 + $0x4] sm:$0xf]
      %v2007 = vld [vmem:[%s3 + $0x8] sm:$0xf]
      %v2008 = vld [vmem:[%s3 + $0xc] sm:$0xf]
      %v2009 = vld [vmem:[%s3 + $0x10] sm:$0xf]
      %v2010 = vld [vmem:[%s3 + $0x14] sm:$0xf]
      %v2011 = vld [vmem:[%s3 + $0x18] sm:$0xf]
      %v2012 = vld [vmem:[%s3 + $0x1c] sm:$0xf]
      %v2013 = vld [vmem:[%s3 + $0x20] sm:$0xf]
      %v2014 = vld [vmem:[%s3 + $0x24] sm:$0xf]
      %v2015 = vld [vmem:[%s3 + $0x28] sm:$0xf]
      %v2016 = vld [vmem:[%s3 + $0x2c] sm:$0xf]
      %v2017 = vld [vmem:[%s3 + $0x30] sm:$0xf]
      %v2018 = vld [vmem:[%s3 + $0x34] sm:$0xf]
      %v2019 = vld [vmem:[%s3 + $0x38] sm:$0xf]
      %v2020 = vld [vmem:[%s3 + $0x3c] sm:$0xf]
      %v2021 = vld [vmem:[%s3 + $0x40] sm:$0xf]
      %v2022 = vld [vmem:[%s3 + $0x44] sm:$0xf]
      %v2023 = vld [vmem:[%s3 + $0x48] sm:$0xf]
      %v2024 = vld [vmem:[%s3 + $0x4c] sm:$0xf]
      %v2025 = vld [vmem:[%s3 + $0x50] sm:$0xf]
      %v2026 = vld [vmem:[%s3 + $0x54] sm:$0xf]
      %v2027 = vld [vmem:[%s3 + $0x58] sm:$0xf]
      %v2028 = vld [vmem:[%s3 + $0x5c] sm:$0xf]
      %v2029 = vld [vmem:[%s3 + $0x60] sm:$0xf]
      %v2030 = vld [vmem:[%s3 + $0x64] sm:$0xf]
      %v2031 = vld [vmem:[%s3 + $0x68] sm:$0xf]
      %v2032 = vld [vmem:[%s3 + $0x6c] sm:$0xf]
      %v2033 = vld [vmem:[%s3 + $0x70] sm:$0xf]
      %v2034 = vld [vmem:[%s3 + $0x74] sm:$0xf]
      %v2035 = vld [vmem:[%s3 + $0x78] sm:$0xf]
      %v2036 = vld [vmem:[%s3 + $0x7c] sm:$0xf]
      %v2037 = vld [vmem:[%s3 + $0x80] sm:$0xf]
      %v2038 = vld [vmem:[%s3 + $0x84] sm:$0xf]
      %v2039 = vld [vmem:[%s3 + $0x88] sm:$0xf]
      %v2040 = vld [vmem:[%s3 + $0x8c] sm:$0xf]
      %v2041 = vld [vmem:[%s3 + $0x90] sm:$0xf]
      %v2042 = vld [vmem:[%s3 + $0x94] sm:$0xf]
      %v2043 = vld [vmem:[%s3 + $0x98] sm:$0xf]
      %v2044 = vld [vmem:[%s3 + $0x9c] sm:$0xf]
      %v2045 = vld [vmem:[%s3 + $0xa0] sm:$0xf]
      %v2046 = vld [vmem:[%s3 + $0xa4] sm:$0xf]
      %v2047 = vld [vmem:[%s3 + $0xa8] sm:$0xf]
      %v2048 = vld [vmem:[%s3 + $0xac] sm:$0xf]
      %v2049 = vld [vmem:[%s3 + $0xb0] sm:$0xf]
      %v2050 = vld [vmem:[%s3 + $0xb4] sm:$0xf]
      %v2051 = vld [vmem:[%s3 + $0xb8] sm:$0xf]
      %v2052 = vld [vmem:[%s3 + $0xbc] sm:$0xf]
      %v2053 = vld [vmem:[%s3 + $0xc0] sm:$0xf]
      %v2054 = vld [vmem:[%s3 + $0xc4] sm:$0xf]
      %v2055 = vld [vmem:[%s3 + $0xc8] sm:$0xf]
      %v2056 = vld [vmem:[%s3 + $0xcc] sm:$0xf]
      %v2057 = vld [vmem:[%s3 + $0xd0] sm:$0xf]
      %v2058 = vld [vmem:[%s3 + $0xd4] sm:$0xf]
      %v2059 = vld [vmem:[%s3 + $0xd8] sm:$0xf]
      %v2060 = vld [vmem:[%s3 + $0xdc] sm:$0xf]
      %v2061 = vld [vmem:[%s3 + $0xe0] sm:$0xf]
      %v2062 = vld [vmem:[%s3 + $0xe4] sm:$0xf]
      %v2063 = vld [vmem:[%s3 + $0xe8] sm:$0xf]
      %v2064 = vld [vmem:[%s3 + $0xec] sm:$0xf]
      %v2065 = vld [vmem:[%s3 + $0xf0] sm:$0xf]
      %v2066 = vld [vmem:[%s3 + $0xf4] sm:$0xf]
      %v2067 = vld [vmem:[%s3 + $0xf8] sm:$0xf]
      %v2068 = vld [vmem:[%s3 + $0xfc] sm:$0xf]
      %v2069 = vld [vmem:[%s3 + $0x100] sm:$0xf]
      %v2070 = vld [vmem:[%s3 + $0x104] sm:$0xf]
      %v2071 = vld [vmem:[%s3 + $0x108] sm:$0xf]
      %v2072 = vld [vmem:[%s3 + $0x10c] sm:$0xf]
      %v2073 = vld [vmem:[%s3 + $0x110] sm:$0xf]
      %v2074 = vld [vmem:[%s3 + $0x114] sm:$0xf]
      %v2075 = vld [vmem:[%s3 + $0x118] sm:$0xf]
      %v2076 = vld [vmem:[%s3 + $0x11c] sm:$0xf]
      %v2077 = vld [vmem:[%s3 + $0x120] sm:$0xf]
      %v2078 = vld [vmem:[%s3 + $0x124] sm:$0xf]
      %v2079 = vld [vmem:[%s3 + $0x128] sm:$0xf]
      %v2080 = vld [vmem:[%s3 + $0x12c] sm:$0xf]
      %v2081 = vld [vmem:[%s3 + $0x130] sm:$0xf]
      %v2082 = vld [vmem:[%s3 + $0x134] sm:$0xf]
      %v2083 = vld [vmem:[%s3 + $0x138] sm:$0xf]
      %v2084 = vld [vmem:[%s3 + $0x13c] sm:$0xf]
      %v2085 = vld [vmem:[%s3 + $0x140] sm:$0xf]
      %v2086 = vld [vmem:[%s3 + $0x144] sm:$0xf]
      %v2087 = vld [vmem:[%s3 + $0x148] sm:$0xf]
      %v2088 = vld [vmem:[%s3 + $0x14c] sm:$0xf]
      %v2089 = vld [vmem:[%s3 + $0x150] sm:$0xf]
      %v2090 = vld [vmem:[%s3 + $0x154] sm:$0xf]
      %v2091 = vld [vmem:[%s3 + $0x158] sm:$0xf]
      %v2092 = vld [vmem:[%s3 + $0x15c] sm:$0xf]
      %v2093 = vld [vmem:[%s3 + $0x160] sm:$0xf]
      %v2094 = vld [vmem:[%s3 + $0x164] sm:$0xf]
      %v2095 = vld [vmem:[%s3 + $0x168] sm:$0xf]
      %v2096 = vld [vmem:[%s3 + $0x16c] sm:$0xf]
      %v2097 = vld [vmem:[%s3 + $0x170] sm:$0xf]
      %v2098 = vld [vmem:[%s3 + $0x174] sm:$0xf]
      %v2099 = vld [vmem:[%s3 + $0x178] sm:$0xf]
      %v2100 = vld [vmem:[%s3 + $0x17c] sm:$0xf]
      %v2101 = vld [vmem:[%s3 + $0x180] sm:$0xf]
      %v2102 = vld [vmem:[%s3 + $0x184] sm:$0xf]
      %v2103 = vld [vmem:[%s3 + $0x188] sm:$0xf]
      %v2104 = vld [vmem:[%s3 + $0x18c] sm:$0xf]
      %v2105 = vld [vmem:[%s3 + $0x190] sm:$0xf]
      %v2106 = vld [vmem:[%s3 + $0x194] sm:$0xf]
      %v2107 = vld [vmem:[%s3 + $0x198] sm:$0xf]
      %v2108 = vld [vmem:[%s3 + $0x19c] sm:$0xf]
      %v2109 = vld [vmem:[%s3 + $0x1a0] sm:$0xf]
      %v2110 = vld [vmem:[%s3 + $0x1a4] sm:$0xf]
      %v2111 = vld [vmem:[%s3 + $0x1a8] sm:$0xf]
      %v2112 = vld [vmem:[%s3 + $0x1ac] sm:$0xf]
      %v2113 = vld [vmem:[%s3 + $0x1b0] sm:$0xf]
      %v2114 = vld [vmem:[%s3 + $0x1b4] sm:$0xf]
      %v2115 = vld [vmem:[%s3 + $0x1b8] sm:$0xf]
      %v2116 = vld [vmem:[%s3 + $0x1bc] sm:$0xf]
      %v2117 = vld [vmem:[%s3 + $0x1c0] sm:$0xf]
      %v2118 = vld [vmem:[%s3 + $0x1c4] sm:$0xf]
      %v2119 = vld [vmem:[%s3 + $0x1c8] sm:$0xf]
      %v2120 = vld [vmem:[%s3 + $0x1cc] sm:$0xf]
      %v2121 = vld [vmem:[%s3 + $0x1d0] sm:$0xf]
      %v2122 = vld [vmem:[%s3 + $0x1d4] sm:$0xf]
      %v2123 = vld [vmem:[%s3 + $0x1d8] sm:$0xf]
      %v2124 = vld [vmem:[%s3 + $0x1dc] sm:$0xf]
      %v2125 = vld [vmem:[%s3 + $0x1e0] sm:$0xf]
      %v2126 = vld [vmem:[%s3 + $0x1e4] sm:$0xf]
      %v2127 = vld [vmem:[%s3 + $0x1e8] sm:$0xf]
      %v2128 = vld [vmem:[%s3 + $0x1ec] sm:$0xf]
      %v2129 = vld [vmem:[%s3 + $0x1f0] sm:$0xf]
      %v2130 = vld [vmem:[%s3 + $0x1f4] sm:$0xf]
      %v2131 = vld [vmem:[%s3 + $0x1f8] sm:$0xf]
      %v2132 = vld [vmem:[%s3 + $0x1fc] sm:$0xf]
      %v2133 = vld [vmem:[%s3 + $0x200] sm:$0xf]
      %v2134 = vld [vmem:[%s3 + $0x204] sm:$0xf]
      %v2135 = vld [vmem:[%s3 + $0x208] sm:$0xf]
      %v2136 = vld [vmem:[%s3 + $0x20c] sm:$0xf]
      %v2137 = vld [vmem:[%s3 + $0x210] sm:$0xf]
      %v2138 = vld [vmem:[%s3 + $0x214] sm:$0xf]
      %v2139 = vld [vmem:[%s3 + $0x218] sm:$0xf]
      %v2140 = vld [vmem:[%s3 + $0x21c] sm:$0xf]
      %v2141 = vld [vmem:[%s3 + $0x220] sm:$0xf]
      %v2142 = vld [vmem:[%s3 + $0x224] sm:$0xf]
      %v2143 = vld [vmem:[%s3 + $0x228] sm:$0xf]
      %v2144 = vld [vmem:[%s3 + $0x22c] sm:$0xf]
      %v2145 = vld [vmem:[%s3 + $0x230] sm:$0xf]
      %v2146 = vld [vmem:[%s3 + $0x234] sm:$0xf]
      %v2147 = vld [vmem:[%s3 + $0x238] sm:$0xf]
      %v2148 = vld [vmem:[%s3 + $0x23c] sm:$0xf]
      %v2149 = vld [vmem:[%s4] sm:$0x1]
      %v2151 = vlaneseq
      %v2152 = vshrl.u32 %v2151, 7
      %v2153 = vsub.s32 0, %v2152
      %v2154 = vrot.slane %v2149, %v2153
      %v2300 = vunpack.c.l.b16 %v2005
      %v2301 = vunpack.c.l.b16 %v2006
      %v2302 = vunpack.c.l.b16 %v2007
      %v2303 = vunpack.c.l.b16 %v2008
      %v2304 = vunpack.c.l.b16 %v2009
      %v2305 = vunpack.c.l.b16 %v2010
      %v2306 = vunpack.c.l.b16 %v2011
      %v2307 = vunpack.c.l.b16 %v2012
      %v2308 = vunpack.c.l.b16 %v2013
      %v2309 = vunpack.c.l.b16 %v2014
      %v2310 = vunpack.c.l.b16 %v2015
      %v2311 = vunpack.c.l.b16 %v2016
      %v2312 = vunpack.c.l.b16 %v2017
      %v2313 = vunpack.c.l.b16 %v2018
      %v2314 = vunpack.c.l.b16 %v2019
      %v2315 = vunpack.c.l.b16 %v2020
      %v2316 = vunpack.c.l.b16 %v2021
      %v2317 = vunpack.c.l.b16 %v2022
      %v2318 = vunpack.c.l.b16 %v2023
      %v2319 = vunpack.c.l.b16 %v2024
      %v2320 = vunpack.c.l.b16 %v2025
      %v2321 = vunpack.c.l.b16 %v2026
      %v2322 = vunpack.c.l.b16 %v2027
      %v2323 = vunpack.c.l.b16 %v2028
      %v2324 = vunpack.c.l.b16 %v2029
      %v2325 = vunpack.c.l.b16 %v2030
      %v2326 = vunpack.c.l.b16 %v2031
      %v2327 = vunpack.c.l.b16 %v2032
      %v2328 = vunpack.c.l.b16 %v2033
      %v2329 = vunpack.c.l.b16 %v2034
      %v2330 = vunpack.c.l.b16 %v2035
      %v2331 = vunpack.c.l.b16 %v2036
      %v2332 = vunpack.c.l.b16 %v2037
      %v2333 = vunpack.c.l.b16 %v2038
      %v2334 = vunpack.c.l.b16 %v2039
      %v2335 = vunpack.c.l.b16 %v2040
      %v2336 = vunpack.c.l.b16 %v2041
      %v2337 = vunpack.c.l.b16 %v2042
      %v2338 = vunpack.c.l.b16 %v2043
      %v2339 = vunpack.c.l.b16 %v2044
      %v2340 = vunpack.c.l.b16 %v2045
      %v2341 = vunpack.c.l.b16 %v2046
      %v2342 = vunpack.c.l.b16 %v2047
      %v2343 = vunpack.c.l.b16 %v2048
      %v2344 = vunpack.c.l.b16 %v2049
      %v2345 = vunpack.c.l.b16 %v2050
      %v2346 = vunpack.c.l.b16 %v2051
      %v2347 = vunpack.c.l.b16 %v2052
      %v2348 = vunpack.c.l.b16 %v2053
      %v2349 = vunpack.c.l.b16 %v2054
      %v2350 = vunpack.c.l.b16 %v2055
      %v2351 = vunpack.c.l.b16 %v2056
      %v2352 = vunpack.c.l.b16 %v2057
      %v2353 = vunpack.c.l.b16 %v2058
      %v2354 = vunpack.c.l.b16 %v2059
      %v2355 = vunpack.c.l.b16 %v2060
      %v2356 = vunpack.c.l.b16 %v2061
      %v2357 = vunpack.c.l.b16 %v2062
      %v2358 = vunpack.c.l.b16 %v2063
      %v2359 = vunpack.c.l.b16 %v2064
      %v2360 = vunpack.c.l.b16 %v2065
      %v2361 = vunpack.c.l.b16 %v2066
      %v2362 = vunpack.c.l.b16 %v2067
      %v2363 = vunpack.c.l.b16 %v2068
      %v2364 = vunpack.c.l.b16 %v2069
      %v2365 = vunpack.c.l.b16 %v2070
      %v2366 = vunpack.c.l.b16 %v2071
      %v2367 = vunpack.c.l.b16 %v2072
      %v2368 = vunpack.c.l.b16 %v2073
      %v2369 = vunpack.c.l.b16 %v2074
      %v2370 = vunpack.c.l.b16 %v2075
      %v2371 = vunpack.c.l.b16 %v2076
      %v2372 = vunpack.c.l.b16 %v2077
      %v2373 = vunpack.c.l.b16 %v2078
      %v2374 = vunpack.c.l.b16 %v2079
      %v2375 = vunpack.c.l.b16 %v2080
      %v2376 = vunpack.c.l.b16 %v2081
      %v2377 = vunpack.c.l.b16 %v2082
      %v2378 = vunpack.c.l.b16 %v2083
      %v2379 = vunpack.c.l.b16 %v2084
      %v2380 = vunpack.c.l.b16 %v2085
      %v2381 = vunpack.c.l.b16 %v2086
      %v2382 = vunpack.c.l.b16 %v2087
      %v2383 = vunpack.c.l.b16 %v2088
      %v2384 = vunpack.c.l.b16 %v2089
      %v2385 = vunpack.c.l.b16 %v2090
      %v2386 = vunpack.c.l.b16 %v2091
      %v2387 = vunpack.c.l.b16 %v2092
      %v2388 = vunpack.c.l.b16 %v2093
      %v2389 = vunpack.c.l.b16 %v2094
      %v2390 = vunpack.c.l.b16 %v2095
      %v2391 = vunpack.c.l.b16 %v2096
      %v2392 = vunpack.c.l.b16 %v2097
      %v2393 = vunpack.c.l.b16 %v2098
      %v2394 = vunpack.c.l.b16 %v2099
      %v2395 = vunpack.c.l.b16 %v2100
      %v2396 = vunpack.c.l.b16 %v2101
      %v2397 = vunpack.c.l.b16 %v2102
      %v2398 = vunpack.c.l.b16 %v2103
      %v2399 = vunpack.c.l.b16 %v2104
      %v2400 = vunpack.c.l.b16 %v2105
      %v2401 = vunpack.c.l.b16 %v2106
      %v2402 = vunpack.c.l.b16 %v2107
      %v2403 = vunpack.c.l.b16 %v2108
      %v2404 = vunpack.c.l.b16 %v2109
      %v2405 = vunpack.c.l.b16 %v2110
      %v2406 = vunpack.c.l.b16 %v2111
      %v2407 = vunpack.c.l.b16 %v2112
      %v2408 = vunpack.c.l.b16 %v2113
      %v2409 = vunpack.c.l.b16 %v2114
      %v2410 = vunpack.c.l.b16 %v2115
      %v2411 = vunpack.c.l.b16 %v2116
      %v2412 = vunpack.c.l.b16 %v2117
      %v2413 = vunpack.c.l.b16 %v2118
      %v2414 = vunpack.c.l.b16 %v2119
      %v2415 = vunpack.c.l.b16 %v2120
      %v2416 = vunpack.c.l.b16 %v2121
      %v2417 = vunpack.c.l.b16 %v2122
      %v2418 = vunpack.c.l.b16 %v2123
      %v2419 = vunpack.c.l.b16 %v2124
      %v2420 = vunpack.c.l.b16 %v2125
      %v2421 = vunpack.c.l.b16 %v2126
      %v2422 = vunpack.c.l.b16 %v2127
      %v2423 = vunpack.c.l.b16 %v2128
      %v2424 = vunpack.c.l.b16 %v2129
      %v2425 = vunpack.c.l.b16 %v2130
      %v2426 = vunpack.c.l.b16 %v2131
      %v2427 = vunpack.c.l.b16 %v2132
      %v2428 = vunpack.c.l.b16 %v2133
      %v2429 = vunpack.c.l.b16 %v2134
      %v2430 = vunpack.c.l.b16 %v2135
      %v2431 = vunpack.c.l.b16 %v2136
      %v2432 = vunpack.c.l.b16 %v2137
      %v2433 = vunpack.c.l.b16 %v2138
      %v2434 = vunpack.c.l.b16 %v2139
      %v2435 = vunpack.c.l.b16 %v2140
      %v2436 = vunpack.c.l.b16 %v2141
      %v2437 = vunpack.c.l.b16 %v2142
      %v2438 = vunpack.c.l.b16 %v2143
      %v2439 = vunpack.c.l.b16 %v2144
      %v2440 = vunpack.c.l.b16 %v2145
      %v2441 = vunpack.c.l.b16 %v2146
      %v2442 = vunpack.c.l.b16 %v2147
      %v2443 = vunpack.c.l.b16 %v2148
      %v2444 = vpack.c.b16 %v2301, %v2300
      %v2445 = vpack.c.b16 %v2303, %v2302
      %v2446 = vpack.c.b16 %v2305, %v2304
      %v2447 = vpack.c.b16 %v2307, %v2306
      %v2448 = vpack.c.b16 %v2309, %v2308
      %v2449 = vpack.c.b16 %v2311, %v2310
      %v2450 = vpack.c.b16 %v2313, %v2312
      %v2451 = vpack.c.b16 %v2315, %v2314
      %v2452 = vpack.c.b16 %v2317, %v2316
      %v2453 = vpack.c.b16 %v2319, %v2318
      %v2454 = vpack.c.b16 %v2321, %v2320
      %v2455 = vpack.c.b16 %v2323, %v2322
      %v2456 = vpack.c.b16 %v2325, %v2324
      %v2457 = vpack.c.b16 %v2327, %v2326
      %v2458 = vpack.c.b16 %v2329, %v2328
      %v2459 = vpack.c.b16 %v2331, %v2330
      %v2460 = vpack.c.b16 %v2333, %v2332
      %v2461 = vpack.c.b16 %v2335, %v2334
      %v2462 = vpack.c.b16 %v2337, %v2336
      %v2463 = vpack.c.b16 %v2339, %v2338
      %v2464 = vpack.c.b16 %v2341, %v2340
      %v2465 = vpack.c.b16 %v2343, %v2342
      %v2466 = vpack.c.b16 %v2345, %v2344
      %v2467 = vpack.c.b16 %v2347, %v2346
      %v2468 = vpack.c.b16 %v2349, %v2348
      %v2469 = vpack.c.b16 %v2351, %v2350
      %v2470 = vpack.c.b16 %v2353, %v2352
      %v2471 = vpack.c.b16 %v2355, %v2354
      %v2472 = vpack.c.b16 %v2357, %v2356
      %v2473 = vpack.c.b16 %v2359, %v2358
      %v2474 = vpack.c.b16 %v2361, %v2360
      %v2475 = vpack.c.b16 %v2363, %v2362
      %v2476 = vpack.c.b16 %v2365, %v2364
      %v2477 = vpack.c.b16 %v2367, %v2366
      %v2478 = vpack.c.b16 %v2369, %v2368
      %v2479 = vpack.c.b16 %v2371, %v2370
      %v2480 = vpack.c.b16 %v2373, %v2372
      %v2481 = vpack.c.b16 %v2375, %v2374
      %v2482 = vpack.c.b16 %v2377, %v2376
      %v2483 = vpack.c.b16 %v2379, %v2378
      %v2484 = vpack.c.b16 %v2381, %v2380
      %v2485 = vpack.c.b16 %v2383, %v2382
      %v2486 = vpack.c.b16 %v2385, %v2384
      %v2487 = vpack.c.b16 %v2387, %v2386
      %v2488 = vpack.c.b16 %v2389, %v2388
      %v2489 = vpack.c.b16 %v2391, %v2390
      %v2490 = vpack.c.b16 %v2393, %v2392
      %v2491 = vpack.c.b16 %v2395, %v2394
      %v2492 = vpack.c.b16 %v2397, %v2396
      %v2493 = vpack.c.b16 %v2399, %v2398
      %v2494 = vpack.c.b16 %v2401, %v2400
      %v2495 = vpack.c.b16 %v2403, %v2402
      %v2496 = vpack.c.b16 %v2405, %v2404
      %v2497 = vpack.c.b16 %v2407, %v2406
      %v2498 = vpack.c.b16 %v2409, %v2408
      %v2499 = vpack.c.b16 %v2411, %v2410
      %v2500 = vpack.c.b16 %v2413, %v2412
      %v2501 = vpack.c.b16 %v2415, %v2414
      %v2502 = vpack.c.b16 %v2417, %v2416
      %v2503 = vpack.c.b16 %v2419, %v2418
      %v2504 = vpack.c.b16 %v2421, %v2420
      %v2505 = vpack.c.b16 %v2423, %v2422
      %v2506 = vpack.c.b16 %v2425, %v2424
      %v2507 = vpack.c.b16 %v2427, %v2426
      %v2508 = vpack.c.b16 %v2429, %v2428
      %v2509 = vpack.c.b16 %v2431, %v2430
      %v2510 = vpack.c.b16 %v2433, %v2432
      %v2511 = vpack.c.b16 %v2435, %v2434
      %v2512 = vpack.c.b16 %v2437, %v2436
      %v2513 = vpack.c.b16 %v2439, %v2438
      %v2514 = vpack.c.b16 %v2441, %v2440
      %v2515 = vpack.c.b16 %v2443, %v2442
      %2588 = vmatprep.subr.bf16.mxu0 0
      %2589 = vmatpush1.bf16.msra.mxu0 %v2451
      %2590 = vmatprep.subr.bf16.mxu0 0
      %2591 = vmatpush1.bf16.msra.mxu0 %v2450
      %2592 = vmatprep.subr.bf16.mxu0 0
      %2593 = vmatpush1.bf16.msra.mxu0 %v2449
      %2594 = vmatprep.subr.bf16.mxu0 0
      %2595 = vmatpush1.bf16.msra.mxu0 %v2448
      %2596 = vmatprep.subr.bf16.mxu0 0
      %2597 = vmatpush1.bf16.msra.mxu0 %v2447
      %2598 = vmatprep.subr.bf16.mxu0 0
      %2599 = vmatpush1.bf16.msra.mxu0 %v2446
      %2600 = vmatprep.subr.bf16.mxu0 0
      %2601 = vmatpush1.bf16.msra.mxu0 %v2445
      %2602 = vmatprep.subr.bf16.mxu0 0
      %2603 = vmatpush1.bf16.msra.mxu0 %v2444
      %2604 = vmatprep.subr.bf16.mxu0 0
      %2605 = vmatpush2.bf16.msra.mxu0 %v2459
      %2606 = vmatprep.subr.bf16.mxu0 0
      %2607 = vmatpush2.bf16.msra.mxu0 %v2458
      %2608 = vmatprep.subr.bf16.mxu0 0
      %2609 = vmatpush2.bf16.msra.mxu0 %v2457
      %2610 = vmatprep.subr.bf16.mxu0 0
      %2611 = vmatpush2.bf16.msra.mxu0 %v2456
      %2612 = vmatprep.subr.bf16.mxu0 0
      %2613 = vmatpush2.bf16.msra.mxu0 %v2455
      %2614 = vmatprep.subr.bf16.mxu0 0
      %2615 = vmatpush2.bf16.msra.mxu0 %v2454
      %2616 = vmatprep.subr.bf16.mxu0 0
      %2617 = vmatpush2.bf16.msra.mxu0 %v2453
      %2618 = vmatprep.subr.bf16.mxu0 0
      %2619 = vmatpush2.bf16.msra.mxu0 %v2452
      %2620 = vmatprep.mubr.bf16.mxu0 %v1950
      %2621 = vmatmul.mubr.bf16.gmra.mxu0 %v1935
      %v2622 = vpop.f32.mrf.mxu0
      %v2623 = vadd.f32 %v2154, %v2622
      %v2624 = vpop.f32.mrf.mxu0
      %v2625 = vpop.f32.mrf.mxu0
      %v2626 = vadd.f32 %v2154, %v2625
      %v2627 = vpop.f32.mrf.mxu0
      %2628 = vmatprep.mubr.bf16.mxu0 %v1951
      %2629 = vmatmul.mubr.bf16.gmra.mxu0 %v1936
      %v2630 = vpop.f32.mrf.mxu0
      %v2631 = vadd.f32 %v2154, %v2630
      %v2632 = vpop.f32.mrf.mxu0
      %v2633 = vpop.f32.mrf.mxu0
      %v2634 = vadd.f32 %v2154, %v2633
      %v2635 = vpop.f32.mrf.mxu0
      %2636 = vmatprep.mubr.bf16.mxu0 %v1952
      %2637 = vmatmul.mubr.bf16.gmra.mxu0 %v1937
      %v2638 = vpop.f32.mrf.mxu0
      %v2639 = vadd.f32 %v2154, %v2638
      %v2640 = vpop.f32.mrf.mxu0
      %v2641 = vpop.f32.mrf.mxu0
      %v2642 = vadd.f32 %v2154, %v2641
      %v2643 = vpop.f32.mrf.mxu0
      %2644 = vmatprep.mubr.bf16.mxu0 %v1953
      %2645 = vmatmul.mubr.bf16.gmra.mxu0 %v1938
      %v2646 = vpop.f32.mrf.mxu0
      %v2647 = vadd.f32 %v2154, %v2646
      %v2648 = vpop.f32.mrf.mxu0
      %v2649 = vpop.f32.mrf.mxu0
      %v2650 = vadd.f32 %v2154, %v2649
      %v2651 = vpop.f32.mrf.mxu0
      %2652 = vdwg.mxu0
      %2653 = vmatprep.subr.bf16.mxu0 0
      %2654 = vmatpush1.bf16.msra.mxu0 %v2467
      %2655 = vmatprep.subr.bf16.mxu0 0
      %2656 = vmatpush1.bf16.msra.mxu0 %v2466
      %2657 = vmatprep.subr.bf16.mxu0 0
      %2658 = vmatpush1.bf16.msra.mxu0 %v2465
      %2659 = vmatprep.subr.bf16.mxu0 0
      %2660 = vmatpush1.bf16.msra.mxu0 %v2464
      %2661 = vmatprep.subr.bf16.mxu0 0
      %2662 = vmatpush1.bf16.msra.mxu0 %v2463
      %2663 = vmatprep.subr.bf16.mxu0 0
      %2664 = vmatpush1.bf16.msra.mxu0 %v2462
      %2665 = vmatprep.subr.bf16.mxu0 0
      %2666 = vmatpush1.bf16.msra.mxu0 %v2461
      %2667 = vmatprep.subr.bf16.mxu0 0
      %2668 = vmatpush1.bf16.msra.mxu0 %v2460
      %2669 = vmatprep.subr.bf16.mxu0 0
      %2670 = vmatpush2.bf16.msra.mxu0 %v2475
      %2671 = vmatprep.subr.bf16.mxu0 0
      %2672 = vmatpush2.bf16.msra.mxu0 %v2474
      %2673 = vmatprep.subr.bf16.mxu0 0
      %2674 = vmatpush2.bf16.msra.mxu0 %v2473
      %2675 = vmatprep.subr.bf16.mxu0 0
      %2676 = vmatpush2.bf16.msra.mxu0 %v2472
      %2677 = vmatprep.subr.bf16.mxu0 0
      %2678 = vmatpush2.bf16.msra.mxu0 %v2471
      %2679 = vmatprep.subr.bf16.mxu0 0
      %2680 = vmatpush2.bf16.msra.mxu0 %v2470
      %2681 = vmatprep.subr.bf16.mxu0 0
      %2682 = vmatpush2.bf16.msra.mxu0 %v2469
      %2683 = vmatprep.subr.bf16.mxu0 0
      %2684 = vmatpush2.bf16.msra.mxu0 %v2468
      %2685 = vmatprep.mubr.bf16.mxu0 %v1973
      %2686 = vmatmul.mubr.bf16.gmra.mxu0 %v1965
      %v2687 = vpop.f32.mrf.mxu0
      %v2688 = vadd.f32 %v2623, %v2687
      %v2689 = vpop.f32.mrf.mxu0
      %v2690 = vpop.f32.mrf.mxu0
      %v2691 = vadd.f32 %v2626, %v2690
      %v2692 = vpop.f32.mrf.mxu0
      %2693 = vmatprep.mubr.bf16.mxu0 %v1974
      %2694 = vmatmul.mubr.bf16.gmra.mxu0 %v1966
      %v2695 = vpop.f32.mrf.mxu0
      %v2696 = vadd.f32 %v2631, %v2695
      %v2697 = vpop.f32.mrf.mxu0
      %v2698 = vpop.f32.mrf.mxu0
      %v2699 = vadd.f32 %v2634, %v2698
      %v2700 = vpop.f32.mrf.mxu0
      %2701 = vmatprep.mubr.bf16.mxu0 %v1975
      %2702 = vmatmul.mubr.bf16.gmra.mxu0 %v1967
      %v2703 = vpop.f32.mrf.mxu0
      %v2704 = vadd.f32 %v2639, %v2703
      %v2705 = vpop.f32.mrf.mxu0
      %v2706 = vpop.f32.mrf.mxu0
      %v2707 = vadd.f32 %v2642, %v2706
      %v2708 = vpop.f32.mrf.mxu0
      %2709 = vmatprep.mubr.bf16.mxu0 %v1976
      %2710 = vmatmul.mubr.bf16.gmra.mxu0 %v1968
      %v2711 = vpop.f32.mrf.mxu0
      %v2712 = vadd.f32 %v2647, %v2711
      %v2713 = vpop.f32.mrf.mxu0
      %v2714 = vpop.f32.mrf.mxu0
      %v2715 = vadd.f32 %v2650, %v2714
      %v2716 = vpop.f32.mrf.mxu0
      %2717 = vdwg.mxu0
      %2718 = vmatprep.subr.bf16.mxu0 0
      %2719 = vmatpush1.bf16.msra.mxu0 %v2483
      %2720 = vmatprep.subr.bf16.mxu0 0
      %2721 = vmatpush1.bf16.msra.mxu0 %v2482
      %2722 = vmatprep.subr.bf16.mxu0 0
      %2723 = vmatpush1.bf16.msra.mxu0 %v2481
      %2724 = vmatprep.subr.bf16.mxu0 0
      %2725 = vmatpush1.bf16.msra.mxu0 %v2480
      %2726 = vmatprep.subr.bf16.mxu0 0
      %2727 = vmatpush1.bf16.msra.mxu0 %v2479
      %2728 = vmatprep.subr.bf16.mxu0 0
      %2729 = vmatpush1.bf16.msra.mxu0 %v2478
      %2730 = vmatprep.subr.bf16.mxu0 0
      %2731 = vmatpush1.bf16.msra.mxu0 %v2477
      %2732 = vmatprep.subr.bf16.mxu0 0
      %2733 = vmatpush1.bf16.msra.mxu0 %v2476
      %2734 = vmatprep.subr.bf16.mxu0 0
      %2735 = vmatpush2.bf16.msra.mxu0 %v2491
      %2736 = vmatprep.subr.bf16.mxu0 0
      %2737 = vmatpush2.bf16.msra.mxu0 %v2490
      %2738 = vmatprep.subr.bf16.mxu0 0
      %2739 = vmatpush2.bf16.msra.mxu0 %v2489
      %2740 = vmatprep.subr.bf16.mxu0 0
      %2741 = vmatpush2.bf16.msra.mxu0 %v2488
      %2742 = vmatprep.subr.bf16.mxu0 0
      %2743 = vmatpush2.bf16.msra.mxu0 %v2487
      %2744 = vmatprep.subr.bf16.mxu0 0
      %2745 = vmatpush2.bf16.msra.mxu0 %v2486
      %2746 = vmatprep.subr.bf16.mxu0 0
      %2747 = vmatpush2.bf16.msra.mxu0 %v2485
      %2748 = vmatprep.subr.bf16.mxu0 0
      %2749 = vmatpush2.bf16.msra.mxu0 %v2484
      %2750 = vmatprep.mubr.bf16.mxu0 %v1991
      %2751 = vmatmul.mubr.bf16.gmra.mxu0 %v1982
      %v2752 = vpop.f32.mrf.mxu0
      %v2753 = vadd.f32 %v2688, %v2752
      %v2754 = vpop.f32.mrf.mxu0
      %v2755 = vpop.f32.mrf.mxu0
      %v2756 = vadd.f32 %v2691, %v2755
      %v2757 = vpop.f32.mrf.mxu0
      %2758 = vmatprep.mubr.bf16.mxu0 %v1992
      %2759 = vmatmul.mubr.bf16.gmra.mxu0 %v1983
      %v2760 = vpop.f32.mrf.mxu0
      %v2761 = vadd.f32 %v2696, %v2760
      %v2762 = vpop.f32.mrf.mxu0
      %v2763 = vpop.f32.mrf.mxu0
      %v2764 = vadd.f32 %v2699, %v2763
      %v2765 = vpop.f32.mrf.mxu0
      %2766 = vmatprep.mubr.bf16.mxu0 %v1993
      %2767 = vmatmul.mubr.bf16.gmra.mxu0 %v1984
      %v2768 = vpop.f32.mrf.mxu0
      %v2769 = vadd.f32 %v2704, %v2768
      %v2770 = vpop.f32.mrf.mxu0
      %v2771 = vpop.f32.mrf.mxu0
      %v2772 = vadd.f32 %v2707, %v2771
      %v2773 = vpop.f32.mrf.mxu0
      %2774 = vmatprep.mubr.bf16.mxu0 %v1994
      %2775 = vmatmul.mubr.bf16.gmra.mxu0 %v1985
      %v2776 = vpop.f32.mrf.mxu0
      %v2777 = vadd.f32 %v2712, %v2776
      %v2778 = vpop.f32.mrf.mxu0
      %v2779 = vpop.f32.mrf.mxu0
      %v2780 = vadd.f32 %v2715, %v2779
      %v2781 = vpop.f32.mrf.mxu0
      %2782 = vdwg.mxu0
      %2783 = vmatprep.subr.bf16.mxu0 0
      %2784 = vmatpush1.bf16.msra.mxu0 %v2499
      %2785 = vmatprep.subr.bf16.mxu0 0
      %2786 = vmatpush1.bf16.msra.mxu0 %v2498
      %2787 = vmatprep.subr.bf16.mxu0 0
      %2788 = vmatpush1.bf16.msra.mxu0 %v2497
      %2789 = vmatprep.subr.bf16.mxu0 0
      %2790 = vmatpush1.bf16.msra.mxu0 %v2496
      %2791 = vmatprep.subr.bf16.mxu0 0
      %2792 = vmatpush1.bf16.msra.mxu0 %v2495
      %2793 = vmatprep.subr.bf16.mxu0 0
      %2794 = vmatpush1.bf16.msra.mxu0 %v2494
      %2795 = vmatprep.subr.bf16.mxu0 0
      %2796 = vmatpush1.bf16.msra.mxu0 %v2493
      %2797 = vmatprep.subr.bf16.mxu0 0
      %2798 = vmatpush1.bf16.msra.mxu0 %v2492
      %2799 = vmatprep.subr.bf16.mxu0 0
      %2800 = vmatpush2.bf16.msra.mxu0 %v2507
      %2801 = vmatprep.subr.bf16.mxu0 0
      %2802 = vmatpush2.bf16.msra.mxu0 %v2506
      %2803 = vmatprep.subr.bf16.mxu0 0
      %2804 = vmatpush2.bf16.msra.mxu0 %v2505
      %2805 = vmatprep.subr.bf16.mxu0 0
      %2806 = vmatpush2.bf16.msra.mxu0 %v2504
      %2807 = vmatprep.subr.bf16.mxu0 0
      %2808 = vmatpush2.bf16.msra.mxu0 %v2503
      %2809 = vmatprep.subr.bf16.mxu0 0
      %2810 = vmatpush2.bf16.msra.mxu0 %v2502
      %2811 = vmatprep.subr.bf16.mxu0 0
      %2812 = vmatpush2.bf16.msra.mxu0 %v2501
      %2813 = vmatprep.subr.bf16.mxu0 0
      %2814 = vmatpush2.bf16.msra.mxu0 %v2500
      %2815 = vmatprep.mubr.bf16.mxu0 %v1951
      %2816 = vmatmul.mubr.bf16.gmra.mxu0 %v1936
      %v2817 = vpop.f32.mrf.mxu0
      %v2818 = vadd.f32 %v2753, %v2817
      %v2819 = vpop.f32.mrf.mxu0
      %v2820 = vpop.f32.mrf.mxu0
      %v2821 = vadd.f32 %v2756, %v2820
      %v2822 = vpop.f32.mrf.mxu0
      %2823 = vmatprep.mubr.bf16.mxu0 %v1952
      %2824 = vmatmul.mubr.bf16.gmra.mxu0 %v1937
      %v2825 = vpop.f32.mrf.mxu0
      %v2826 = vadd.f32 %v2761, %v2825
      %v2827 = vpop.f32.mrf.mxu0
      %v2828 = vpop.f32.mrf.mxu0
      %v2829 = vadd.f32 %v2764, %v2828
      %v2830 = vpop.f32.mrf.mxu0
      %2831 = vmatprep.mubr.bf16.mxu0 %v1953
      %2832 = vmatmul.mubr.bf16.gmra.mxu0 %v1938
      %v2833 = vpop.f32.mrf.mxu0
      %v2834 = vadd.f32 %v2769, %v2833
      %v2835 = vpop.f32.mrf.mxu0
      %v2836 = vpop.f32.mrf.mxu0
      %v2837 = vadd.f32 %v2772, %v2836
      %v2838 = vpop.f32.mrf.mxu0
      %2839 = vmatprep.mubr.bf16.mxu0 %v2001
      %2840 = vmatmul.mubr.bf16.gmra.mxu0 %v1999
      %v2841 = vpop.f32.mrf.mxu0
      %v2842 = vadd.f32 %v2777, %v2841
      %v2843 = vpop.f32.mrf.mxu0
      %v2844 = vpop.f32.mrf.mxu0
      %v2845 = vadd.f32 %v2780, %v2844
      %v2846 = vpop.f32.mrf.mxu0
      %2847 = vdwg.mxu0
      %2848 = vmatprep.subr.bf16.mxu0 0
      %2849 = vmatpush1.bf16.msra.mxu0 %v2515
      %2850 = vmatprep.subr.bf16.mxu0 0
      %2851 = vmatpush1.bf16.msra.mxu0 %v2514
      %2852 = vmatprep.subr.bf16.mxu0 0
      %2853 = vmatpush1.bf16.msra.mxu0 %v2513
      %2854 = vmatprep.subr.bf16.mxu0 0
      %2855 = vmatpush1.bf16.msra.mxu0 %v2512
      %2856 = vmatprep.subr.bf16.mxu0 0
      %2857 = vmatpush1.bf16.msra.mxu0 %v2511
      %2858 = vmatprep.subr.bf16.mxu0 0
      %2859 = vmatpush1.bf16.msra.mxu0 %v2510
      %2860 = vmatprep.subr.bf16.mxu0 0
      %2861 = vmatpush1.bf16.msra.mxu0 %v2509
      %2862 = vmatprep.subr.bf16.mxu0 0
      %2863 = vmatpush1.bf16.msra.mxu0 %v2508
      %2864 = vmatprep.subr.bf16.mxu0 0
      %2865 = vmatpush2.bf16.msra.mxu0 0
      %2866 = vmatprep.subr.bf16.mxu0 0
      %2867 = vmatpush2.bf16.msra.mxu0 0
      %2868 = vmatprep.subr.bf16.mxu0 0
      %2869 = vmatpush2.bf16.msra.mxu0 0
      %2870 = vmatprep.subr.bf16.mxu0 0
      %2871 = vmatpush2.bf16.msra.mxu0 0
      %2872 = vmatprep.subr.bf16.mxu0 0
      %2873 = vmatpush2.bf16.msra.mxu0 0
      %2874 = vmatprep.subr.bf16.mxu0 0
      %2875 = vmatpush2.bf16.msra.mxu0 0
      %2876 = vmatprep.subr.bf16.mxu0 0
      %2877 = vmatpush2.bf16.msra.mxu0 0
      %2878 = vmatprep.subr.bf16.mxu0 0
      %2879 = vmatpush2.bf16.msra.mxu0 0
      %2880 = vmatprep.mubr.bf16.mxu0 0
      %2881 = vmatmul.mubr.bf16.gmra.mxu0 %v1966
      %v2882 = vpop.f32.mrf.mxu0
      %v2883 = vadd.f32 %v2818, %v2882
      %v2884 = vpop.f32.mrf.mxu0
      %v2885 = vpop.f32.mrf.mxu0
      %v2886 = vadd.f32 %v2821, %v2885
      %v2887 = vpop.f32.mrf.mxu0
      %2888 = vmatprep.mubr.bf16.mxu0 0
      %2889 = vmatmul.mubr.bf16.gmra.mxu0 %v1967
      %v2890 = vpop.f32.mrf.mxu0
      %v2891 = vadd.f32 %v2826, %v2890
      %v2892 = vpop.f32.mrf.mxu0
      %v2893 = vpop.f32.mrf.mxu0
      %v2894 = vadd.f32 %v2829, %v2893
      %v2895 = vpop.f32.mrf.mxu0
      %2896 = vmatprep.mubr.bf16.mxu0 0
      %2897 = vmatmul.mubr.bf16.gmra.mxu0 %v1968
      %v2898 = vpop.f32.mrf.mxu0
      %v2899 = vadd.f32 %v2834, %v2898
      %v2900 = vpop.f32.mrf.mxu0
      %v2901 = vpop.f32.mrf.mxu0
      %v2902 = vadd.f32 %v2837, %v2901
      %v2903 = vpop.f32.mrf.mxu0
      %2904 = vmatprep.mubr.bf16.mxu0 0
      %2905 = vmatmul.mubr.bf16.gmra.mxu0 %v2003
      %v2906 = vpop.f32.mrf.mxu0
      %v2907 = vadd.f32 %v2842, %v2906
      %v2908 = vpop.f32.mrf.mxu0
      %v2909 = vpop.f32.mrf.mxu0
      %v2910 = vadd.f32 %v2845, %v2909
      %v2911 = vpop.f32.mrf.mxu0
      %2912 = vdwg.mxu0
      %v2913 = vadd.f32 %v2883, %v2886
      %v2914 = vadd.f32 %v2913, %v2891
      %v2915 = vadd.f32 %v2914, %v2894
      %v2916 = vadd.f32 %v2915, %v2899
      %v2917 = vadd.f32 %v2916, %v2902
      %v2918 = vadd.f32 %v2917, %v2907
      %v2919 = vadd.f32 %v2918, %v2910
      %v2920 = vrot.slane %v2919, 4
      %v2921 = vadd.f32 %v2919, %v2920
      %v2922 = vrot.slane %v2921, 2
      %v2923 = vadd.f32 %v2921, %v2922
      %v2924 = vrot.slane %v2923, 1
      %v2925 = vadd.f32 %v2923, %v2924
      %v2926 = vmul.f32 %v2925, 0.015625
      %v2927 = vld [vmem:[%s5] sm:$0xf]
      %v2928 = vld [vmem:[%s5 + $0x4] sm:$0xf]
      %v2929 = vld [vmem:[%s5 + $0x8] sm:$0xf]
      %v2930 = vld [vmem:[%s5 + $0xc] sm:$0xf]
      %v2931 = vld [vmem:[%s5 + $0x10] sm:$0xf]
      %v2932 = vld [vmem:[%s5 + $0x14] sm:$0xf]
      %v2933 = vld [vmem:[%s5 + $0x18] sm:$0xf]
      %v2934 = vld [vmem:[%s5 + $0x1c] sm:$0xf]
      %v2935 = vld [vmem:[%s5 + $0x20] sm:$0xf]
      %v2936 = vld [vmem:[%s5 + $0x24] sm:$0xf]
      %v2937 = vld [vmem:[%s5 + $0x28] sm:$0xf]
      %v2938 = vld [vmem:[%s5 + $0x2c] sm:$0xf]
      %v2939 = vld [vmem:[%s5 + $0x30] sm:$0xf]
      %v2940 = vld [vmem:[%s5 + $0x34] sm:$0xf]
      %v2941 = vld [vmem:[%s5 + $0x38] sm:$0xf]
      %v2942 = vld [vmem:[%s5 + $0x3c] sm:$0xf]
      %v2943 = vunpack.c.l.bf16 %v2927
      %v2944 = vunpack.c.l.bf16 %v2928
      %v2945 = vunpack.c.l.bf16 %v2929
      %v2946 = vunpack.c.l.bf16 %v2930
      %v2947 = vunpack.c.l.bf16 %v2931
      %v2948 = vunpack.c.l.bf16 %v2932
      %v2949 = vunpack.c.l.bf16 %v2933
      %v2950 = vunpack.c.l.bf16 %v2934
      %v2951 = vunpack.c.l.bf16 %v2935
      %v2952 = vunpack.c.l.bf16 %v2936
      %v2953 = vunpack.c.l.bf16 %v2937
      %v2954 = vunpack.c.l.bf16 %v2938
      %v2955 = vunpack.c.l.bf16 %v2939
      %v2956 = vunpack.c.l.bf16 %v2940
      %v2957 = vunpack.c.l.bf16 %v2941
      %v2958 = vunpack.c.l.bf16 %v2942
      %v2959 = vld [vmem:[%s6] sm:$0x1]
      %2960 = vmatprep.subr.mxu0 0.0
      %2961 = vmatpush1.msra.mxu0 %v2958
      %2962 = vmatprep.subr.mxu0 0.0
      %2963 = vmatpush1.msra.mxu0 %v2957
      %2964 = vmatprep.subr.mxu0 0.0
      %2965 = vmatpush1.msra.mxu0 %v2956
      %2966 = vmatprep.subr.mxu0 0.0
      %2967 = vmatpush1.msra.mxu0 %v2955
      %2968 = vmatprep.subr.mxu0 0.0
      %2969 = vmatpush1.msra.mxu0 %v2954
      %2970 = vmatprep.subr.mxu0 0.0
      %2971 = vmatpush1.msra.mxu0 %v2953
      %2972 = vmatprep.subr.mxu0 0.0
      %2973 = vmatpush1.msra.mxu0 %v2952
      %2974 = vmatprep.subr.mxu0 0.0
      %2975 = vmatpush1.msra.mxu0 %v2951
      %2976 = vmatprep.subr.mxu0 0.0
      %2977 = vmatpush1.msra.mxu0 %v2950
      %2978 = vmatprep.subr.mxu0 0.0
      %2979 = vmatpush1.msra.mxu0 %v2949
      %2980 = vmatprep.subr.mxu0 0.0
      %2981 = vmatpush1.msra.mxu0 %v2948
      %2982 = vmatprep.subr.mxu0 0.0
      %2983 = vmatpush1.msra.mxu0 %v2947
      %2984 = vmatprep.subr.mxu0 0.0
      %2985 = vmatpush1.msra.mxu0 %v2946
      %2986 = vmatprep.subr.mxu0 0.0
      %2987 = vmatpush1.msra.mxu0 %v2945
      %2988 = vmatprep.subr.mxu0 0.0
      %2989 = vmatpush1.msra.mxu0 %v2944
      %2990 = vmatprep.subr.mxu0 0.0
      %2991 = vmatpush1.msra.mxu0 %v2943
      %2992 = vmatprep.subr.mxu0 0.0
      %2993 = vmatpush2.msra.mxu0 0.0
      %2994 = vmatprep.subr.mxu0 0.0
      %2995 = vmatpush2.msra.mxu0 0.0
      %2996 = vmatprep.subr.mxu0 0.0
      %2997 = vmatpush2.msra.mxu0 0.0
      %2998 = vmatprep.subr.mxu0 0.0
      %2999 = vmatpush2.msra.mxu0 0.0
      %3000 = vmatprep.subr.mxu0 0.0
      %3001 = vmatpush2.msra.mxu0 0.0
      %3002 = vmatprep.subr.mxu0 0.0
      %3003 = vmatpush2.msra.mxu0 0.0
      %3004 = vmatprep.subr.mxu0 0.0
      %3005 = vmatpush2.msra.mxu0 0.0
      %3006 = vmatprep.subr.mxu0 0.0
      %3007 = vmatpush2.msra.mxu0 0.0
      %3008 = vmatprep.subr.mxu0 0.0
      %3009 = vmatpush2.msra.mxu0 0.0
      %3010 = vmatprep.subr.mxu0 0.0
      %3011 = vmatpush2.msra.mxu0 0.0
      %3012 = vmatprep.subr.mxu0 0.0
      %3013 = vmatpush2.msra.mxu0 0.0
      %3014 = vmatprep.subr.mxu0 0.0
      %3015 = vmatpush2.msra.mxu0 0.0
      %3016 = vmatprep.subr.mxu0 0.0
      %3017 = vmatpush2.msra.mxu0 0.0
      %3018 = vmatprep.subr.mxu0 0.0
      %3019 = vmatpush2.msra.mxu0 0.0
      %3020 = vmatprep.subr.mxu0 0.0
      %3021 = vmatpush2.msra.mxu0 0.0
      %3022 = vmatprep.subr.mxu0 0.0
      %3023 = vmatpush2.msra.mxu0 0.0
      %3024 = vmatprep.mubr.f32.mxu0 0.0
      %3025 = vmatmul.mubr.f32.gmra.mxu0 %v2926
      %v3026 = vpop.f32.mrf.mxu0
      %v3027 = vadd.f32 %v2959, %v3026
      %v3028 = vpop.f32.mrf.mxu0
      %3029 = vdwg.mxu0
      %v3030 = vmax.f32 %v3027, 0.0
      %v3031 = vld [vmem:[%s7] sm:$0xf]
      %v3032 = vld [vmem:[%s7 + $0x4] sm:$0xf]
      %v3033 = vld [vmem:[%s7 + $0x8] sm:$0xf]
      %v3034 = vld [vmem:[%s7 + $0xc] sm:$0xf]
      %v3035 = vld [vmem:[%s7 + $0x10] sm:$0xf]
      %v3036 = vld [vmem:[%s7 + $0x14] sm:$0xf]
      %v3037 = vld [vmem:[%s7 + $0x18] sm:$0xf]
      %v3038 = vld [vmem:[%s7 + $0x1c] sm:$0xf]
      %v3039 = vld [vmem:[%s7 + $0x20] sm:$0xf]
      %v3040 = vld [vmem:[%s7 + $0x24] sm:$0xf]
      %v3041 = vld [vmem:[%s7 + $0x28] sm:$0xf]
      %v3042 = vld [vmem:[%s7 + $0x2c] sm:$0xf]
      %v3043 = vld [vmem:[%s7 + $0x30] sm:$0xf]
      %v3044 = vld [vmem:[%s7 + $0x34] sm:$0xf]
      %v3045 = vld [vmem:[%s7 + $0x38] sm:$0xf]
      %v3046 = vld [vmem:[%s7 + $0x3c] sm:$0xf]
      %v3047 = vunpack.c.l.bf16 %v3031
      %v3048 = vunpack.c.l.bf16 %v3032
      %v3049 = vunpack.c.l.bf16 %v3033
      %v3050 = vunpack.c.l.bf16 %v3034
      %v3051 = vunpack.c.l.bf16 %v3035
      %v3052 = vunpack.c.l.bf16 %v3036
      %v3053 = vunpack.c.l.bf16 %v3037
      %v3054 = vunpack.c.l.bf16 %v3038
      %v3055 = vunpack.c.l.bf16 %v3039
      %v3056 = vunpack.c.l.bf16 %v3040
      %v3057 = vunpack.c.l.bf16 %v3041
      %v3058 = vunpack.c.l.bf16 %v3042
      %v3059 = vunpack.c.l.bf16 %v3043
      %v3060 = vunpack.c.l.bf16 %v3044
      %v3061 = vunpack.c.l.bf16 %v3045
      %v3062 = vunpack.c.l.bf16 %v3046
      %v3063 = vld [vmem:[%s8] sm:$0x1]
      %3064 = vmatprep.subr.mxu0 0.0
      %3065 = vmatpush1.msra.mxu0 %v3062
      %3066 = vmatprep.subr.mxu0 0.0
      %3067 = vmatpush1.msra.mxu0 %v3061
      %3068 = vmatprep.subr.mxu0 0.0
      %3069 = vmatpush1.msra.mxu0 %v3060
      %3070 = vmatprep.subr.mxu0 0.0
      %3071 = vmatpush1.msra.mxu0 %v3059
      %3072 = vmatprep.subr.mxu0 0.0
      %3073 = vmatpush1.msra.mxu0 %v3058
      %3074 = vmatprep.subr.mxu0 0.0
      %3075 = vmatpush1.msra.mxu0 %v3057
      %3076 = vmatprep.subr.mxu0 0.0
      %3077 = vmatpush1.msra.mxu0 %v3056
      %3078 = vmatprep.subr.mxu0 0.0
      %3079 = vmatpush1.msra.mxu0 %v3055
      %3080 = vmatprep.subr.mxu0 0.0
      %3081 = vmatpush1.msra.mxu0 %v3054
      %3082 = vmatprep.subr.mxu0 0.0
      %3083 = vmatpush1.msra.mxu0 %v3053
      %3084 = vmatprep.subr.mxu0 0.0
      %3085 = vmatpush1.msra.mxu0 %v3052
      %3086 = vmatprep.subr.mxu0 0.0
      %3087 = vmatpush1.msra.mxu0 %v3051
      %3088 = vmatprep.subr.mxu0 0.0
      %3089 = vmatpush1.msra.mxu0 %v3050
      %3090 = vmatprep.subr.mxu0 0.0
      %3091 = vmatpush1.msra.mxu0 %v3049
      %3092 = vmatprep.subr.mxu0 0.0
      %3093 = vmatpush1.msra.mxu0 %v3048
      %3094 = vmatprep.subr.mxu0 0.0
      %3095 = vmatpush1.msra.mxu0 %v3047
      %3096 = vmatprep.subr.mxu0 0.0
      %3097 = vmatpush2.msra.mxu0 0.0
      %3098 = vmatprep.subr.mxu0 0.0
      %3099 = vmatpush2.msra.mxu0 0.0
      %3100 = vmatprep.subr.mxu0 0.0
      %3101 = vmatpush2.msra.mxu0 0.0
      %3102 = vmatprep.subr.mxu0 0.0
      %3103 = vmatpush2.msra.mxu0 0.0
      %3104 = vmatprep.subr.mxu0 0.0
      %3105 = vmatpush2.msra.mxu0 0.0
      %3106 = vmatprep.subr.mxu0 0.0
      %3107 = vmatpush2.msra.mxu0 0.0
      %3108 = vmatprep.subr.mxu0 0.0
      %3109 = vmatpush2.msra.mxu0 0.0
      %3110 = vmatprep.subr.mxu0 0.0
      %3111 = vmatpush2.msra.mxu0 0.0
      %3112 = vmatprep.subr.mxu0 0.0
      %3113 = vmatpush2.msra.mxu0 0.0
      %3114 = vmatprep.subr.mxu0 0.0
      %3115 = vmatpush2.msra.mxu0 0.0
      %3116 = vmatprep.subr.mxu0 0.0
      %3117 = vmatpush2.msra.mxu0 0.0
      %3118 = vmatprep.subr.mxu0 0.0
      %3119 = vmatpush2.msra.mxu0 0.0
      %3120 = vmatprep.subr.mxu0 0.0
      %3121 = vmatpush2.msra.mxu0 0.0
      %3122 = vmatprep.subr.mxu0 0.0
      %3123 = vmatpush2.msra.mxu0 0.0
      %3124 = vmatprep.subr.mxu0 0.0
      %3125 = vmatpush2.msra.mxu0 0.0
      %3126 = vmatprep.subr.mxu0 0.0
      %3127 = vmatpush2.msra.mxu0 0.0
      %3128 = vmatprep.mubr.f32.mxu0 0.0
      %3129 = vmatmul.mubr.f32.gmra.mxu0 %v3030
      %v3130 = vpop.f32.mrf.mxu0
      %v3131 = vadd.f32 %v3063, %v3130
      %v3132 = vpop.f32.mrf.mxu0
      %3133 = vdwg.mxu0
      %v3134 = vxor.u32 %v3131, 2147483648
      %v3135 = vmul.f32 %v3134, 1.442695
      %v3136 = vpow.pop %v3135
      %v3137 = vadd.f32 %v3136, 1.0
      %v3138 = vrcp.pop %v3137
      %v3139 = vmul.f32 1.0, %v3138
      %v3140 = vlaneseq
      %v3141 = vshrl.u32 %v3140, 7
      %v3142 = vsub.s32 0, %v3141
      %v3143 = vrot.slane %v3139, %v3142
      %v3144 = vmul.f32 %v2883, %v3143
      %v3145 = vmul.f32 %v2886, %v3143
      %v3146 = vmul.f32 %v2891, %v3143
      %v3147 = vmul.f32 %v2894, %v3143
      %v3148 = vmul.f32 %v2899, %v3143
      %v3149 = vmul.f32 %v2902, %v3143
      %v3150 = vmul.f32 %v2907, %v3143
      %v3151 = vmul.f32 %v2910, %v3143
      %v3152 = vadd.f32 %v3144, %v334
      %v3153 = vadd.f32 %v3145, %v335
      %v3154 = vadd.f32 %v3146, %v336
      %v3155 = vadd.f32 %v3147, %v337
      %v3156 = vadd.f32 %v3148, %v338
      %v3157 = vadd.f32 %v3149, %v339
      %v3158 = vadd.f32 %v3150, %v340
      %v3159 = vadd.f32 %v3151, %v341
      %3160 = vst [vmem:[%s332] sm:$0xff] %v3152
      %3161 = vst [vmem:[%s332 + $0x8] sm:$0xff] %v3153
      %3162 = vst [vmem:[%s332 + $0x10] sm:$0xff] %v3154
      %3163 = vst [vmem:[%s332 + $0x18] sm:$0xff] %v3155
      %3164 = vst [vmem:[%s332 + $0x20] sm:$0xff] %v3156
      %3165 = vst [vmem:[%s332 + $0x28] sm:$0xff] %v3157
      %3166 = vst [vmem:[%s332 + $0x30] sm:$0xff] %v3158
      %3167 = vst [vmem:[%s332 + $0x38] sm:$0xff] %v3159
      %p3168 = scmp.lt.s32.totalorder %s20, 1
      %s3169 = scalar_select %p3168, %s20, 1
      %s3170 = smul.addr %s3169, 8
      %s3171 = smul.addr %s3170, 8
      %s3172 = scalar_lea.vmem %s9, %s3171
      // Predicated region
      $region57: #{rcan_forward.12} parent=55 // pred_check
        %p3173 = pneg %p232
      $region58: #{rcan_forward.12} parent=55 // pred_check_branch
        %3175 = sbr.rel (%p3173) target = $region60
      $region59: #{rcan_forward.12} parent=55 // pred_region
        _
      $region60: #{rcan_forward.12} parent=55 // pred_fallthru
        _
    $region56: #{rcan_forward.12} parent=5 // pred_fallthru
      _
    %p3176 = scmp.le.s32.totalorder 2, %s15
    // Predicated region
    $region61: #{rcan_forward.12} parent=5 // pred_check
      %p3177 = pneg %p3176
    $region62: #{rcan_forward.12} parent=5 // pred_check_branch
      %3179 = sbr.rel (%p3177) target = $region64
    $region63: #{rcan_forward.12} parent=5 // pred_region
      %s3180 = ssub.s32 %s15, 2
      // Predicated region
      $region65: #{rcan_forward.12} parent=63 // pred_check
        %p3181 = pneg %p238
      $region66: #{rcan_forward.12} parent=63 // pred_check_branch
        %3183 = sbr.rel (%p3181) target = $region68
      $region67: #{rcan_forward.12} parent=63 // pred_region
        %p3184 = scmp.lt.s32.totalorder %s21, 1
        %s3185 = scalar_select %p3184, %s21, 1
        %s3186 = smul.addr %s3185, 8
        %s3187 = smul.addr %s3186, 8
        %s3188 = scalar_lea.vmem %s9, %s3187
      $region68: #{rcan_forward.12} parent=63 // pred_fallthru
        _
    $region64: #{rcan_forward.12} parent=5 // pred_fallthru
      _
  $region6: #{rcan_forward.12} parent=0 // loop_footer
    %s19 = sadd.s32 1, %s15
  $region7: #{rcan_forward.12} parent=0 // loop_footer_branch
    %14 = sbr.rel target = $region3
  $region8: #{rcan_forward.12} parent=0 // loop_exit
    _

// kernel: rcan_forward.11
$region0: #{rcan_forward.11}
  #allocation0 [shape = 'u32[]', space=smem, size = 0x4, offset = 0x4, fixed_abs, tag = 'smem constant byte address 0x4 - core index']
  #allocation1 [shape = 'u32[144,128]{1,0:T(1,128)}', space=vmem, size = 0x12000, scoped, tag = 'internal scratch']
  %s0 = inlined_call_operand.vmem [shape: f32[2,8,8,128], index: 0, kind: input, shape index: {}]
  %s1 = inlined_call_operand.vmem [shape: bf16[1152,128], index: 1, kind: input, shape index: {}]
  %s2 = inlined_call_operand.vmem [shape: f32[1,128], index: 2, kind: input, shape index: {}]
  %s3 = inlined_call_operand.vmem [shape: bf16[1152,128], index: 3, kind: input, shape index: {}]
  %s4 = inlined_call_operand.vmem [shape: f32[1,128], index: 4, kind: input, shape index: {}]
  %s5 = inlined_call_operand.vmem [shape: bf16[128,128], index: 5, kind: input, shape index: {}]
  %s6 = inlined_call_operand.hbm [shape: f32[1,128], index: 6, kind: input, shape index: {}]
  %s7 = inlined_call_operand.vmem [shape: bf16[128,128], index: 7, kind: input, shape index: {}]
  %s8 = inlined_call_operand.hbm [shape: f32[1,128], index: 8, kind: input, shape index: {}]
  %s9 = inlined_call_operand.vmem [shape: f32[2,8,8,128], index: 9, kind: output, shape index: {}]
  %s10 = sld [smem:[#allocation0]]
  $region77: #{rcan_forward.11} parent=0
    _
  %s12 = ssub.s32 1, %s10
  %s13 = scalar_select 0, %s12, %s10
  $region1: #{rcan_forward.11} parent=0
    #allocation2 [shape = 'u8[512]{0}', space=vmem, size = 0x400, scoped, tag = 'input window, operand 6, single buffered']
    #allocation3 [shape = 's32[2]{0}', space=sflag, size = 0x8, scoped, tag = 'scoped memory for rcan_forward.11']
    #allocation4 [shape = 'u8[512]{0}', space=vmem, size = 0x400, scoped, tag = 'input window, operand 8, single buffered']
    #allocation5 [shape = 's32[1]{0}', space=sflag, size = 0x4, scoped, tag = 'scoped memory for rcan_forward.11']
    %14 = vsyncpa [#allocation3], 0
    %15 = vsyncpa [#allocation5], 0
    loop: start=0, step=1, limit=4
    $region2: #{rcan_forward.11} parent=1 // loop_pre_header
      _
    $region3: #{rcan_forward.11} parent=1 // loop_header
      %s17 = sphi 0, %s21
      %p18 = scmp.ge.s32.totalorder %s17, 4
      %s27 = sphi 0, %s29
      %s30 = sphi 0, %s27
      %s31 = sphi 0, %s30
      %s47 = sphi 0, %s31
      %s51 = sphi 0, %s51
      %s53 = sphi 0, %s51
      %s54 = sphi 0, %s53
      %s68 = sphi 0, %s54
      %s72 = sphi 0, %s72
      %s74 = sphi 0, %s72
      %s75 = sphi 0, %s74
      %s89 = sphi 0, %s75
      %s93 = sphi 0, %s93
      %s95 = sphi 0, %s93
      %s96 = sphi 0, %s95
      %s110 = sphi 0, %s96
      %s114 = sphi 0, %s114
      %s116 = sphi 0, %s114
      %s117 = sphi 0, %s116
      %s131 = sphi 0, %s117
      %s135 = sphi 0, %s135
      %s137 = sphi 0, %s135
      %s138 = sphi 0, %s137
      %s152 = sphi 0, %s138
      %s156 = sphi 0, %s156
      %s158 = sphi 0, %s156
      %s159 = sphi 0, %s158
      %s173 = sphi 0, %s159
      %s177 = sphi 0, %s177
      %s179 = sphi 0, %s177
      %s180 = sphi 0, %s179
      %s194 = sphi 0, %s180
      %s198 = sphi 0, %s198
      %s200 = sphi 0, %s198
      %s201 = sphi 0, %s200
      %s215 = sphi 0, %s201
      %s221 = sphi 0, %s223
      %s224 = sphi 0, %s221
      %s225 = sphi 0, %s224
      %s241 = sphi 0, %s225
    $region4: #{rcan_forward.11} parent=1 // loop_header_branch
      %20 = sbr.rel (%p18) target = $region8
    $region5: #{rcan_forward.11} parent=1 // loop_body
      %s22 = ssub.s32 %s17, 1
      %s23 = ssub.s32 %s17, 2
      %s24 = sadd.s32 %s17, 1
      %s25 = ssub.s32 %s17, %s24
      %p26 = scmp.eq.s32.totalorder %s25, 0
      %s28 = sadd.s32 %s27, 1
      %s29 = scalar_select %p26, %s27, %s28
      %p32 = pneg %p26
      %p33 = scmp.eq.s32.totalorder %s17, 1
      %p34 = por %p32, %p33
      %p35 = scmp.ne.s32.totalorder %s27, %s30
      %p36 = scmp.eq.s32.totalorder %s17, 0
      %p37 = por %p35, %p36
      %p38 = scmp.ne.s32.totalorder %s27, %s30
      %p39 = scmp.eq.s32.totalorder %s22, 1
      %p40 = por %p38, %p39
      %p41 = scmp.ne.s32.totalorder %s30, %s31
      %p42 = scmp.eq.s32.totalorder %s22, 0
      %p43 = por %p41, %p42
      %p44 = scmp.ne.s32.totalorder %s30, %s31
      %p45 = scmp.eq.s32.totalorder %s23, 1
      %p46 = por %p44, %p45
      %p48 = scmp.ne.s32.totalorder %s31, %s47
      %p49 = scmp.eq.s32.totalorder %s23, 0
      %p50 = por %p48, %p49
      %s52 = sadd.s32 %s51, 1
      %p55 = scmp.eq.s32.totalorder %s17, 1
      %p56 = scmp.ne.s32.totalorder %s51, %s53
      %p57 = scmp.eq.s32.totalorder %s17, 0
      %p58 = por %p56, %p57
      %p59 = scmp.ne.s32.totalorder %s51, %s53
      %p60 = scmp.eq.s32.totalorder %s22, 1
      %p61 = por %p59, %p60
      %p62 = scmp.ne.s32.totalorder %s53, %s54
      %p63 = scmp.eq.s32.totalorder %s22, 0
      %p64 = por %p62, %p63
      %p65 = scmp.ne.s32.totalorder %s53, %s54
      %p66 = scmp.eq.s32.totalorder %s23, 1
      %p67 = por %p65, %p66
      %p69 = scmp.ne.s32.totalorder %s54, %s68
      %p70 = scmp.eq.s32.totalorder %s23, 0
      %p71 = por %p69, %p70
      %s73 = sadd.s32 %s72, 1
      %p76 = scmp.eq.s32.totalorder %s17, 1
      %p77 = scmp.ne.s32.totalorder %s72, %s74
      %p78 = scmp.eq.s32.totalorder %s17, 0
      %p79 = por %p77, %p78
      %p80 = scmp.ne.s32.totalorder %s72, %s74
      %p81 = scmp.eq.s32.totalorder %s22, 1
      %p82 = por %p80, %p81
      %p83 = scmp.ne.s32.totalorder %s74, %s75
      %p84 = scmp.eq.s32.totalorder %s22, 0
      %p85 = por %p83, %p84
      %p86 = scmp.ne.s32.totalorder %s74, %s75
      %p87 = scmp.eq.s32.totalorder %s23, 1
      %p88 = por %p86, %p87
      %p90 = scmp.ne.s32.totalorder %s75, %s89
      %p91 = scmp.eq.s32.totalorder %s23, 0
      %p92 = por %p90, %p91
      %s94 = sadd.s32 %s93, 1
      %p97 = scmp.eq.s32.totalorder %s17, 1
      %p98 = scmp.ne.s32.totalorder %s93, %s95
      %p99 = scmp.eq.s32.totalorder %s17, 0
      %p100 = por %p98, %p99
      %p101 = scmp.ne.s32.totalorder %s93, %s95
      %p102 = scmp.eq.s32.totalorder %s22, 1
      %p103 = por %p101, %p102
      %p104 = scmp.ne.s32.totalorder %s95, %s96
      %p105 = scmp.eq.s32.totalorder %s22, 0
      %p106 = por %p104, %p105
      %p107 = scmp.ne.s32.totalorder %s95, %s96
      %p108 = scmp.eq.s32.totalorder %s23, 1
      %p109 = por %p107, %p108
      %p111 = scmp.ne.s32.totalorder %s96, %s110
      %p112 = scmp.eq.s32.totalorder %s23, 0
      %p113 = por %p111, %p112
      %s115 = sadd.s32 %s114, 1
      %p118 = scmp.eq.s32.totalorder %s17, 1
      %p119 = scmp.ne.s32.totalorder %s114, %s116
      %p120 = scmp.eq.s32.totalorder %s17, 0
      %p121 = por %p119, %p120
      %p122 = scmp.ne.s32.totalorder %s114, %s116
      %p123 = scmp.eq.s32.totalorder %s22, 1
      %p124 = por %p122, %p123
      %p125 = scmp.ne.s32.totalorder %s116, %s117
      %p126 = scmp.eq.s32.totalorder %s22, 0
      %p127 = por %p125, %p126
      %p128 = scmp.ne.s32.totalorder %s116, %s117
      %p129 = scmp.eq.s32.totalorder %s23, 1
      %p130 = por %p128, %p129
      %p132 = scmp.ne.s32.totalorder %s117, %s131
      %p133 = scmp.eq.s32.totalorder %s23, 0
      %p134 = por %p132, %p133
      %s136 = sadd.s32 %s135, 1
      %p139 = scmp.eq.s32.totalorder %s17, 1
      %p140 = scmp.ne.s32.totalorder %s135, %s137
      %p141 = scmp.eq.s32.totalorder %s17, 0
      %p142 = por %p140, %p141
      %p143 = scmp.ne.s32.totalorder %s135, %s137
      %p144 = scmp.eq.s32.totalorder %s22, 1
      %p145 = por %p143, %p144
      %p146 = scmp.ne.s32.totalorder %s137, %s138
      %p147 = scmp.eq.s32.totalorder %s22, 0
      %p148 = por %p146, %p147
      %p149 = scmp.ne.s32.totalorder %s137, %s138
      %p150 = scmp.eq.s32.totalorder %s23, 1
      %p151 = por %p149, %p150
      %p153 = scmp.ne.s32.totalorder %s138, %s152
      %p154 = scmp.eq.s32.totalorder %s23, 0
      %p155 = por %p153, %p154
      %s157 = sadd.s32 %s156, 1
      %p160 = scmp.eq.s32.totalorder %s17, 1
      %p161 = scmp.ne.s32.totalorder %s156, %s158
      %p162 = scmp.eq.s32.totalorder %s17, 0
      %p163 = por %p161, %p162
      %p164 = scmp.ne.s32.totalorder %s156, %s158
      %p165 = scmp.eq.s32.totalorder %s22, 1
      %p166 = por %p164, %p165
      %p167 = scmp.ne.s32.totalorder %s158, %s159
      %p168 = scmp.eq.s32.totalorder %s22, 0
      %p169 = por %p167, %p168
      %p170 = scmp.ne.s32.totalorder %s158, %s159
      %p171 = scmp.eq.s32.totalorder %s23, 1
      %p172 = por %p170, %p171
      %p174 = scmp.ne.s32.totalorder %s159, %s173
      %p175 = scmp.eq.s32.totalorder %s23, 0
      %p176 = por %p174, %p175
      %s178 = sadd.s32 %s177, 1
      %p181 = scmp.eq.s32.totalorder %s17, 1
      %p182 = scmp.ne.s32.totalorder %s177, %s179
      %p183 = scmp.eq.s32.totalorder %s17, 0
      %p184 = por %p182, %p183
      %p185 = scmp.ne.s32.totalorder %s177, %s179
      %p186 = scmp.eq.s32.totalorder %s22, 1
      %p187 = por %p185, %p186
      %p188 = scmp.ne.s32.totalorder %s179, %s180
      %p189 = scmp.eq.s32.totalorder %s22, 0
      %p190 = por %p188, %p189
      %p191 = scmp.ne.s32.totalorder %s179, %s180
      %p192 = scmp.eq.s32.totalorder %s23, 1
      %p193 = por %p191, %p192
      %p195 = scmp.ne.s32.totalorder %s180, %s194
      %p196 = scmp.eq.s32.totalorder %s23, 0
      %p197 = por %p195, %p196
      %s199 = sadd.s32 %s198, 1
      %p202 = scmp.eq.s32.totalorder %s17, 1
      %p203 = scmp.ne.s32.totalorder %s198, %s200
      %p204 = scmp.eq.s32.totalorder %s17, 0
      %p205 = por %p203, %p204
      %p206 = scmp.ne.s32.totalorder %s198, %s200
      %p207 = scmp.eq.s32.totalorder %s22, 1
      %p208 = por %p206, %p207
      %p209 = scmp.ne.s32.totalorder %s200, %s201
      %p210 = scmp.eq.s32.totalorder %s22, 0
      %p211 = por %p209, %p210
      %p212 = scmp.ne.s32.totalorder %s200, %s201
      %p213 = scmp.eq.s32.totalorder %s23, 1
      %p214 = por %p212, %p213
      %p216 = scmp.ne.s32.totalorder %s201, %s215
      %p217 = scmp.eq.s32.totalorder %s23, 0
      %p218 = por %p216, %p217
      %s219 = ssub.s32 %s17, %s24
      %p220 = scmp.eq.s32.totalorder %s219, 0
      %s222 = sadd.s32 %s221, 1
      %s223 = scalar_select %p220, %s221, %s222
      %p226 = pneg %p220
      %p227 = scmp.eq.s32.totalorder %s17, 1
      %p228 = por %p226, %p227
      %p229 = scmp.ne.s32.totalorder %s221, %s224
      %p230 = scmp.eq.s32.totalorder %s17, 0
      %p231 = por %p229, %p230
      %p232 = scmp.ne.s32.totalorder %s221, %s224
      %p233 = scmp.eq.s32.totalorder %s22, 1
      %p234 = por %p232, %p233
      %p235 = scmp.ne.s32.totalorder %s224, %s225
      %p236 = scmp.eq.s32.totalorder %s22, 0
      %p237 = por %p235, %p236
      %p238 = scmp.ne.s32.totalorder %s224, %s225
      %p239 = scmp.eq.s32.totalorder %s23, 1
      %p240 = por %p238, %p239
      %p242 = scmp.ne.s32.totalorder %s225, %s241
      %p243 = scmp.eq.s32.totalorder %s23, 0
      %p244 = por %p242, %p243
      %p245 = scmp.le.s32.totalorder 1, %s17
      %p246 = scmp.lt.s32.totalorder %s17, 3
      %p247 = pnand %p245, %p246
      %p248 = pneg %p247
      // Predicated region
      $region9: #{rcan_forward.11} parent=5 // pred_check
        _
      $region10: #{rcan_forward.11} parent=5 // pred_check_branch
        %250 = sbr.rel (%p247) target = $region12
      $region11: #{rcan_forward.11} parent=5 // pred_region
        %s251 = ssub.s32 %s17, 1
        // Predicated region
        $region13: #{rcan_forward.11} parent=11 // pred_check
          %p252 = pneg %p64
        $region14: #{rcan_forward.11} parent=11 // pred_check_branch
          %254 = sbr.rel (%p252) target = $region16
        $region15: #{rcan_forward.11} parent=11 // pred_region
          _
        $region16: #{rcan_forward.11} parent=11 // pred_fallthru
          _
        // Predicated region
        $region17: #{rcan_forward.11} parent=11 // pred_check
          %p255 = pneg %p85
        $region18: #{rcan_forward.11} parent=11 // pred_check_branch
          %257 = sbr.rel (%p255) target = $region20
        $region19: #{rcan_forward.11} parent=11 // pred_region
          _
        $region20: #{rcan_forward.11} parent=11 // pred_fallthru
          _
        // Predicated region
        $region21: #{rcan_forward.11} parent=11 // pred_check
          %p258 = pneg %p106
        $region22: #{rcan_forward.11} parent=11 // pred_check_branch
          %260 = sbr.rel (%p258) target = $region24
        $region23: #{rcan_forward.11} parent=11 // pred_region
          _
        $region24: #{rcan_forward.11} parent=11 // pred_fallthru
          _
        // Predicated region
        $region25: #{rcan_forward.11} parent=11 // pred_check
          %p261 = pneg %p127
        $region26: #{rcan_forward.11} parent=11 // pred_check_branch
          %263 = sbr.rel (%p261) target = $region28
        $region27: #{rcan_forward.11} parent=11 // pred_region
          _
        $region28: #{rcan_forward.11} parent=11 // pred_fallthru
          _
        // Predicated region
        $region29: #{rcan_forward.11} parent=11 // pred_check
          %p264 = pneg %p148
        $region30: #{rcan_forward.11} parent=11 // pred_check_branch
          %266 = sbr.rel (%p264) target = $region32
        $region31: #{rcan_forward.11} parent=11 // pred_region
          _
        $region32: #{rcan_forward.11} parent=11 // pred_fallthru
          _
        // Predicated region
        $region33: #{rcan_forward.11} parent=11 // pred_check
          %p267 = pneg %p169
        $region34: #{rcan_forward.11} parent=11 // pred_check_branch
          %269 = sbr.rel (%p267) target = $region36
        $region35: #{rcan_forward.11} parent=11 // pred_region
          %s271 = ssub.s32 16, 16
          %272 = vsyncadd [#allocation3], %s271
          %s274 = sshll.u32 [#allocation2], 4
          %s275 = int_to_ptr.vmem [resolvable:$true] %s274
          %277 = dma.hbm_to_vmem [thread:$0]  %s6, 16, %s275, [#allocation3]
        $region36: #{rcan_forward.11} parent=11 // pred_fallthru
          _
        // Predicated region
        $region37: #{rcan_forward.11} parent=11 // pred_check
          %p278 = pneg %p190
        $region38: #{rcan_forward.11} parent=11 // pred_check_branch
          %280 = sbr.rel (%p278) target = $region40
        $region39: #{rcan_forward.11} parent=11 // pred_region
          _
        $region40: #{rcan_forward.11} parent=11 // pred_fallthru
          _
        // Predicated region
        $region41: #{rcan_forward.11} parent=11 // pred_check
          %p281 = pneg %p211
        $region42: #{rcan_forward.11} parent=11 // pred_check_branch
          %283 = sbr.rel (%p281) target = $region44
        $region43: #{rcan_forward.11} parent=11 // pred_region
          %s285 = ssub.s32 16, 16
          %286 = vsyncadd [#allocation5], %s285
          %s288 = sshll.u32 [#allocation4], 4
          %s289 = int_to_ptr.vmem [resolvable:$true] %s288
          %291 = dma.hbm_to_vmem [thread:$0]  %s8, 16, %s289, [#allocation5]
        $region44: #{rcan_forward.11} parent=11 // pred_fallthru
          _
      $region12: #{rcan_forward.11} parent=5 // pred_fallthru
        _
      %p292 = scmp.lt.s32.totalorder %s17, 2
      // Predicated region
      $region45: #{rcan_forward.11} parent=5 // pred_check
        %p293 = pneg %p292
      $region46: #{rcan_forward.11} parent=5 // pred_check_branch
        %295 = sbr.rel (%p293) target = $region48
      $region47: #{rcan_forward.11} parent=5 // pred_region
        // Predicated region
        $region49: #{rcan_forward.11} parent=47 // pred_check
          %p296 = pneg %p37
        $region50: #{rcan_forward.11} parent=47 // pred_check_branch
          %298 = sbr.rel (%p296) target = $region52
        $region51: #{rcan_forward.11} parent=47 // pred_region
          %p299 = scmp.lt.s32.totalorder %s17, 1
          %s300 = scalar_select %p299, %s17, 1
          %s301 = smul.addr %s300, 8
          %s302 = smul.addr %s301, 8
          %s303 = scalar_lea.vmem %s0, %s302
        $region52: #{rcan_forward.11} parent=47 // pred_fallthru
          _
      $region48: #{rcan_forward.11} parent=5 // pred_fallthru
        _
      %p304 = scmp.le.s32.totalorder 1, %s17
      %p305 = scmp.lt.s32.totalorder %s17, 3
      %p306 = pnand %p304, %p305
      %p307 = pneg %p306
      // Predicated region
      $region53: #{rcan_forward.11} parent=5 // pred_check
        _
      $region54: #{rcan_forward.11} parent=5 // pred_check_branch
        %309 = sbr.rel (%p306) target = $region56
      $region55: #{rcan_forward.11} parent=5 // pred_region
        %s310 = ssub.s32 %s17, 1
        // Predicated region
        $region57: #{rcan_forward.11} parent=55 // pred_check
          %p311 = pneg %p169
        $region58: #{rcan_forward.11} parent=55 // pred_check_branch
          %313 = sbr.rel (%p311) target = $region60
        $region59: #{rcan_forward.11} parent=55 // pred_region
          %314 = dma.done [#allocation3], 16
        $region60: #{rcan_forward.11} parent=55 // pred_fallthru
          _
        // Predicated region
        $region61: #{rcan_forward.11} parent=55 // pred_check
          %p315 = pneg %p211
        $region62: #{rcan_forward.11} parent=55 // pred_check_branch
          %317 = sbr.rel (%p315) target = $region64
        $region63: #{rcan_forward.11} parent=55 // pred_region
          %318 = dma.done [#allocation5], 16
        $region64: #{rcan_forward.11} parent=55 // pred_fallthru
          _
        %p319 = scmp.lt.s32.totalorder %s22, 1
        %s320 = scalar_select %p319, %s22, 1
        %s321 = smul.addr %s320, 8
        %s322 = smul.addr %s321, 8
        %s323 = scalar_lea.vmem %s0, %s322
        %p324 = pneg %p43
        %p325 = pneg %p40
        %p326 = pneg %p64
        %p327 = pneg %p61
        %p328 = pneg %p85
        %p329 = pneg %p82
        %p330 = pneg %p106
        %p331 = pneg %p103
        %p332 = pneg %p127
        %p333 = pneg %p124
        %p334 = pneg %p148
        %p335 = pneg %p145
        %p336 = pneg %p169
        %p337 = pneg %p166
        %p338 = pneg %p190
        %p339 = pneg %p187
        %p340 = pneg %p211
        %p341 = pneg %p208
        %p342 = pneg %p237
        %p343 = pneg %p234
        %p344 = scmp.lt.s32.totalorder %s22, 1
        %s345 = scalar_select %p344, %s22, 1
        %s346 = smul.addr %s345, 8
        %s347 = smul.addr %s346, 8
        %s348 = scalar_lea.vmem %s9, %s347
        %p349 = scmp.lt.s32.totalorder %s22, 1
        %s350 = scalar_select %p349, %s22, 1
        %s351 = smul.addr %s350, 8
        %s352 = smul.addr %s351, 8
        %s353 = scalar_lea.vmem %s0, %s352
        %p354 = scmp.lt.s32.totalorder %s22, 1
        %s355 = scalar_select %p354, %s22, 1
        %s356 = smul.addr %s355, 8
        %s357 = smul.addr %s356, 8
        %s358 = scalar_lea.vmem %s9, %s357
        %v360 = vld [vmem:[%s353] sm:$0xff]
        %v361 = vld [vmem:[%s353 + $0x8] sm:$0xff]
        %v362 = vld [vmem:[%s353 + $0x10] sm:$0xff]
        %v363 = vld [vmem:[%s353 + $0x18] sm:$0xff]
        %v364 = vld [vmem:[%s353 + $0x20] sm:$0xff]
        %v365 = vld [vmem:[%s353 + $0x28] sm:$0xff]
        %v366 = vld [vmem:[%s353 + $0x30] sm:$0xff]
        %v367 = vld [vmem:[%s353 + $0x38] sm:$0xff]
        %v368 = vpack.c.bf16 %v360, %v360
        %v369 = vpack.c.bf16 %v361, %v361
        %v370 = vpack.c.bf16 %v362, %v362
        %v371 = vpack.c.bf16 %v363, %v363
        %v372 = vpack.c.bf16 %v364, %v364
        %v373 = vpack.c.bf16 %v365, %v365
        %v374 = vpack.c.bf16 %v366, %v366
        %v375 = vpack.c.bf16 %v367, %v367
        %v377 = vshrl.u32 0, 16
        %v379 = vrot.slane %v377, 7
        %v380 = vshll.u32 0, 16
        %v382 = vor.u32 %v379, %v380
        %v384 = vshrl.u32 %v368, 16
        %v386 = vrot.slane %v384, 7
        %v387 = vshll.u32 %v368, 16
        %v389 = vor.u32 %v386, %v387
        %v391 = vshrl.u32 %v369, 16
        %v393 = vrot.slane %v391, 7
        %v394 = vshll.u32 %v369, 16
        %v396 = vor.u32 %v393, %v394
        %v398 = vshrl.u32 %v370, 16
        %v400 = vrot.slane %v398, 7
        %v401 = vshll.u32 %v370, 16
        %v403 = vor.u32 %v400, %v401
        %v405 = vshrl.u32 %v371, 16
        %v407 = vrot.slane %v405, 7
        %v408 = vshll.u32 %v371, 16
        %v410 = vor.u32 %v407, %v408
        %v412 = vshrl.u32 %v372, 16
        %v414 = vrot.slane %v412, 7
        %v415 = vshll.u32 %v372, 16
        %v417 = vor.u32 %v414, %v415
        %v419 = vshrl.u32 %v373, 16
        %v421 = vrot.slane %v419, 7
        %v422 = vshll.u32 %v373, 16
        %v424 = vor.u32 %v421, %v422
        %v426 = vshrl.u32 %v374, 16
        %v428 = vrot.slane %v426, 7
        %v429 = vshll.u32 %v374, 16
        %v431 = vor.u32 %v428, %v429
        %v433 = vshrl.u32 %v375, 16
        %v435 = vrot.slane %v433, 7
        %v436 = vshll.u32 %v375, 16
        %v438 = vor.u32 %v435, %v436
        %vm448 = vcmask 1040384
        %vm449 = vsmask.f32 256
        %vm450 = vmand %vm448, %vm449
        %v451 = vsel %vm450, 0, %v382
        %v452 = vsel %vm450, 0, %v389
        %v453 = vsel %vm450, 0, %v396
        %v454 = vsel %vm450, 0, %v403
        %v455 = vsel %vm450, 0, %v410
        %v456 = vsel %vm450, 0, %v417
        %v457 = vsel %vm450, 0, %v424
        %v458 = vsel %vm450, 0, %v431
        %v459 = vsel %vm450, 0, %v438
        %vm460 = vcmask 1044480
        %vm461 = vsmask.f32 4352
        %vm462 = vmand %vm460, %vm461
        %v463 = vsel %vm462, %v451, 0
        %v464 = vsel %vm462, %v452, 0
        %v465 = vsel %vm462, %v453, 0
        %v466 = vsel %vm462, %v454, 0
        %v467 = vsel %vm462, %v455, 0
        %v468 = vsel %vm462, %v456, 0
        %v469 = vsel %vm462, %v457, 0
        %v470 = vsel %vm462, %v458, 0
        %v471 = vsel %vm462, %v459, 0
        %v480 = vunpack.c.l.b16 %v463
        %v481 = vunpack.c.h.b16 %v463
        %v482 = vunpack.c.l.b16 %v464
        %v483 = vunpack.c.h.b16 %v464
        %v484 = vunpack.c.l.b16 %v465
        %v485 = vunpack.c.h.b16 %v465
        %v486 = vunpack.c.l.b16 %v466
        %v487 = vunpack.c.h.b16 %v466
        %v488 = vunpack.c.l.b16 %v467
        %v489 = vunpack.c.h.b16 %v467
        %v490 = vunpack.c.l.b16 %v468
        %v491 = vunpack.c.h.b16 %v468
        %v492 = vunpack.c.l.b16 %v469
        %v493 = vunpack.c.h.b16 %v469
        %v494 = vunpack.c.l.b16 %v470
        %v495 = vunpack.c.h.b16 %v470
        %v496 = vpack.c.b16 %v480, %v480
        %v497 = vpack.c.b16 %v481, %v481
        %v498 = vpack.c.b16 %v482, %v482
        %v499 = vpack.c.b16 %v483, %v483
        %v500 = vpack.c.b16 %v484, %v484
        %v501 = vpack.c.b16 %v485, %v485
        %v502 = vpack.c.b16 %v486, %v486
        %v503 = vpack.c.b16 %v487, %v487
        %v504 = vpack.c.b16 %v488, %v488
        %v505 = vpack.c.b16 %v489, %v489
        %v506 = vpack.c.b16 %v490, %v490
        %v507 = vpack.c.b16 %v491, %v491
        %v508 = vpack.c.b16 %v492, %v492
        %v509 = vpack.c.b16 %v493, %v493
        %v510 = vpack.c.b16 %v494, %v494
        %v511 = vpack.c.b16 %v495, %v495
        %vm512 = vsmask.f32 3328
        %vm513 = vsmask.f32 7440
        %vm514 = vmor %vm512, %vm513
        %v516 = vshrl.u32 %v496, 16
        %v518 = vrot.slane %v516, 4
        %v519 = vshll.u32 %v496, 16
        %v521 = vrot.slane %v519, 5
        %v522 = vor.u32 %v518, %v521
        %v523 = vrot.slane %v522, 4
        %v525 = vshll.u32 %v497, 16
        %v527 = vrot.slane %v525, 5
        %v528 = vsel %vm514, %v523, %v527
        %v530 = vshrl.u32 %v498, 16
        %v532 = vrot.slane %v530, 4
        %v533 = vshll.u32 %v498, 16
        %v535 = vrot.slane %v533, 5
        %v536 = vor.u32 %v532, %v535
        %v537 = vrot.slane %v536, 4
        %v539 = vshll.u32 %v499, 16
        %v541 = vrot.slane %v539, 5
        %v542 = vsel %vm514, %v537, %v541
        %v544 = vshrl.u32 %v500, 16
        %v546 = vrot.slane %v544, 4
        %v547 = vshll.u32 %v500, 16
        %v549 = vrot.slane %v547, 5
        %v550 = vor.u32 %v546, %v549
        %v551 = vrot.slane %v550, 4
        %v553 = vshll.u32 %v501, 16
        %v555 = vrot.slane %v553, 5
        %v556 = vsel %vm514, %v551, %v555
        %v558 = vshrl.u32 %v502, 16
        %v560 = vrot.slane %v558, 4
        %v561 = vshll.u32 %v502, 16
        %v563 = vrot.slane %v561, 5
        %v564 = vor.u32 %v560, %v563
        %v565 = vrot.slane %v564, 4
        %v567 = vshll.u32 %v503, 16
        %v569 = vrot.slane %v567, 5
        %v570 = vsel %vm514, %v565, %v569
        %v572 = vshrl.u32 %v504, 16
        %v574 = vrot.slane %v572, 4
        %v575 = vshll.u32 %v504, 16
        %v577 = vrot.slane %v575, 5
        %v578 = vor.u32 %v574, %v577
        %v579 = vrot.slane %v578, 4
        %v581 = vshll.u32 %v505, 16
        %v583 = vrot.slane %v581, 5
        %v584 = vsel %vm514, %v579, %v583
        %v586 = vshrl.u32 %v506, 16
        %v588 = vrot.slane %v586, 4
        %v589 = vshll.u32 %v506, 16
        %v591 = vrot.slane %v589, 5
        %v592 = vor.u32 %v588, %v591
        %v593 = vrot.slane %v592, 4
        %v595 = vshll.u32 %v507, 16
        %v597 = vrot.slane %v595, 5
        %v598 = vsel %vm514, %v593, %v597
        %v600 = vshrl.u32 %v508, 16
        %v602 = vrot.slane %v600, 4
        %v603 = vshll.u32 %v508, 16
        %v605 = vrot.slane %v603, 5
        %v606 = vor.u32 %v602, %v605
        %v607 = vrot.slane %v606, 4
        %v609 = vshll.u32 %v509, 16
        %v611 = vrot.slane %v609, 5
        %v612 = vsel %vm514, %v607, %v611
        %v614 = vshrl.u32 %v510, 16
        %v616 = vrot.slane %v614, 4
        %v617 = vshll.u32 %v510, 16
        %v619 = vrot.slane %v617, 5
        %v620 = vor.u32 %v616, %v619
        %v621 = vrot.slane %v620, 4
        %v623 = vshll.u32 %v511, 16
        %v625 = vrot.slane %v623, 5
        %v626 = vsel %vm514, %v621, %v625
        %vm627 = vcmask 1042432
        %vm628 = vcmask 1046532
        %vm629 = vmor %vm627, %vm628
        %v630 = vrot.slane %v496, 5
        %v631 = vrot.slane %v630, 4
        %v632 = vrot.slane %v497, 5
        %v633 = vsel %vm629, %v631, %v632
        %v634 = vrot.slane %v498, 5
        %v635 = vrot.slane %v634, 4
        %v636 = vrot.slane %v499, 5
        %v637 = vsel %vm629, %v635, %v636
        %v638 = vrot.slane %v500, 5
        %v639 = vrot.slane %v638, 4
        %v640 = vrot.slane %v501, 5
        %v641 = vsel %vm629, %v639, %v640
        %v642 = vrot.slane %v502, 5
        %v643 = vrot.slane %v642, 4
        %v644 = vrot.slane %v503, 5
        %v645 = vsel %vm629, %v643, %v644
        %v646 = vrot.slane %v504, 5
        %v647 = vrot.slane %v646, 4
        %v648 = vrot.slane %v505, 5
        %v649 = vsel %vm629, %v647, %v648
        %v650 = vrot.slane %v506, 5
        %v651 = vrot.slane %v650, 4
        %v652 = vrot.slane %v507, 5
        %v653 = vsel %vm629, %v651, %v652
        %v654 = vrot.slane %v508, 5
        %v655 = vrot.slane %v654, 4
        %v656 = vrot.slane %v509, 5
        %v657 = vsel %vm629, %v655, %v656
        %v658 = vrot.slane %v510, 5
        %v659 = vrot.slane %v658, 4
        %v660 = vrot.slane %v511, 5
        %v661 = vsel %vm629, %v659, %v660
        %v663 = vunpack.c.l.b16 %v471
        %v664 = vunpack.c.h.b16 %v471
        %v665 = vpack.c.b16 %v663, %v663
        %v666 = vpack.c.b16 %v664, %v664
        %v668 = vshrl.u32 %v665, 16
        %v670 = vrot.slane %v668, 4
        %v671 = vshll.u32 %v665, 16
        %v673 = vrot.slane %v671, 5
        %v674 = vor.u32 %v670, %v673
        %v675 = vrot.slane %v674, 4
        %v677 = vshll.u32 %v666, 16
        %v679 = vrot.slane %v677, 5
        %v680 = vsel %vm514, %v675, %v679
        %v681 = vrot.slane %v665, 5
        %v682 = vrot.slane %v681, 4
        %v683 = vrot.slane %v666, 5
        %v684 = vsel %vm629, %v682, %v683
        %v685 = vpack.c.b16 %v482, %v480
        %v686 = vpack.c.b16 %v486, %v484
        %v687 = vpack.c.b16 %v490, %v488
        %v688 = vpack.c.b16 %v494, %v492
        %v693 = vunpack.c.l.b16 %v528
        %v694 = vunpack.c.l.b16 %v542
        %v695 = vunpack.c.l.b16 %v556
        %v696 = vunpack.c.l.b16 %v570
        %v697 = vunpack.c.l.b16 %v584
        %v698 = vunpack.c.l.b16 %v598
        %v699 = vunpack.c.l.b16 %v612
        %v700 = vunpack.c.l.b16 %v626
        %v701 = vpack.c.b16 %v694, %v693
        %v702 = vpack.c.b16 %v696, %v695
        %v703 = vpack.c.b16 %v698, %v697
        %v704 = vpack.c.b16 %v700, %v699
        %v709 = vunpack.c.l.b16 %v633
        %v710 = vunpack.c.l.b16 %v637
        %v711 = vunpack.c.l.b16 %v641
        %v712 = vunpack.c.l.b16 %v645
        %v713 = vunpack.c.l.b16 %v649
        %v714 = vunpack.c.l.b16 %v653
        %v715 = vunpack.c.l.b16 %v657
        %v716 = vunpack.c.l.b16 %v661
        %v717 = vpack.c.b16 %v710, %v709
        %v718 = vpack.c.b16 %v712, %v711
        %v719 = vpack.c.b16 %v714, %v713
        %v720 = vpack.c.b16 %v716, %v715
        %v725 = vpack.c.b16 %v484, %v482
        %v726 = vpack.c.b16 %v488, %v486
        %v727 = vpack.c.b16 %v492, %v490
        %v728 = vpack.c.b16 %v663, %v494
        %v733 = vunpack.c.l.b16 %v680
        %v734 = vpack.c.b16 %v695, %v694
        %v735 = vpack.c.b16 %v697, %v696
        %v736 = vpack.c.b16 %v699, %v698
        %v737 = vpack.c.b16 %v733, %v700
        %v742 = vunpack.c.l.b16 %v684
        %v743 = vpack.c.b16 %v711, %v710
        %v744 = vpack.c.b16 %v713, %v712
        %v745 = vpack.c.b16 %v715, %v714
        %v746 = vpack.c.b16 %v742, %v716
        %v751 = vpack.c.b16 %v480, %v663
        %v753 = vpack.c.b16 %v693, %v733
        %v755 = vpack.c.b16 %v709, %v742
        %v757 = vld [vmem:[%s1] sm:$0xf]
        %v758 = vld [vmem:[%s1 + $0x4] sm:$0xf]
        %v759 = vld [vmem:[%s1 + $0x8] sm:$0xf]
        %v760 = vld [vmem:[%s1 + $0xc] sm:$0xf]
        %v761 = vld [vmem:[%s1 + $0x10] sm:$0xf]
        %v762 = vld [vmem:[%s1 + $0x14] sm:$0xf]
        %v763 = vld [vmem:[%s1 + $0x18] sm:$0xf]
        %v764 = vld [vmem:[%s1 + $0x1c] sm:$0xf]
        %v765 = vld [vmem:[%s1 + $0x20] sm:$0xf]
        %v766 = vld [vmem:[%s1 + $0x24] sm:$0xf]
        %v767 = vld [vmem:[%s1 + $0x28] sm:$0xf]
        %v768 = vld [vmem:[%s1 + $0x2c] sm:$0xf]
        %v769 = vld [vmem:[%s1 + $0x30] sm:$0xf]
        %v770 = vld [vmem:[%s1 + $0x34] sm:$0xf]
        %v771 = vld [vmem:[%s1 + $0x38] sm:$0xf]
        %v772 = vld [vmem:[%s1 + $0x3c] sm:$0xf]
        %v773 = vld [vmem:[%s1 + $0x40] sm:$0xf]
        %v774 = vld [vmem:[%s1 + $0x44] sm:$0xf]
        %v775 = vld [vmem:[%s1 + $0x48] sm:$0xf]
        %v776 = vld [vmem:[%s1 + $0x4c] sm:$0xf]
        %v777 = vld [vmem:[%s1 + $0x50] sm:$0xf]
        %v778 = vld [vmem:[%s1 + $0x54] sm:$0xf]
        %v779 = vld [vmem:[%s1 + $0x58] sm:$0xf]
        %v780 = vld [vmem:[%s1 + $0x5c] sm:$0xf]
        %v781 = vld [vmem:[%s1 + $0x60] sm:$0xf]
        %v782 = vld [vmem:[%s1 + $0x64] sm:$0xf]
        %v783 = vld [vmem:[%s1 + $0x68] sm:$0xf]
        %v784 = vld [vmem:[%s1 + $0x6c] sm:$0xf]
        %v785 = vld [vmem:[%s1 + $0x70] sm:$0xf]
        %v786 = vld [vmem:[%s1 + $0x74] sm:$0xf]
        %v787 = vld [vmem:[%s1 + $0x78] sm:$0xf]
        %v788 = vld [vmem:[%s1 + $0x7c] sm:$0xf]
        %v789 = vld [vmem:[%s1 + $0x80] sm:$0xf]
        %v790 = vld [vmem:[%s1 + $0x84] sm:$0xf]
        %v791 = vld [vmem:[%s1 + $0x88] sm:$0xf]
        %v792 = vld [vmem:[%s1 + $0x8c] sm:$0xf]
        %v793 = vld [vmem:[%s1 + $0x90] sm:$0xf]
        %v794 = vld [vmem:[%s1 + $0x94] sm:$0xf]
        %v795 = vld [vmem:[%s1 + $0x98] sm:$0xf]
        %v796 = vld [vmem:[%s1 + $0x9c] sm:$0xf]
        %v797 = vld [vmem:[%s1 + $0xa0] sm:$0xf]
        %v798 = vld [vmem:[%s1 + $0xa4] sm:$0xf]
        %v799 = vld [vmem:[%s1 + $0xa8] sm:$0xf]
        %v800 = vld [vmem:[%s1 + $0xac] sm:$0xf]
        %v801 = vld [vmem:[%s1 + $0xb0] sm:$0xf]
        %v802 = vld [vmem:[%s1 + $0xb4] sm:$0xf]
        %v803 = vld [vmem:[%s1 + $0xb8] sm:$0xf]
        %v804 = vld [vmem:[%s1 + $0xbc] sm:$0xf]
        %v805 = vld [vmem:[%s1 + $0xc0] sm:$0xf]
        %v806 = vld [vmem:[%s1 + $0xc4] sm:$0xf]
        %v807 = vld [vmem:[%s1 + $0xc8] sm:$0xf]
        %v808 = vld [vmem:[%s1 + $0xcc] sm:$0xf]
        %v809 = vld [vmem:[%s1 + $0xd0] sm:$0xf]
        %v810 = vld [vmem:[%s1 + $0xd4] sm:$0xf]
        %v811 = vld [vmem:[%s1 + $0xd8] sm:$0xf]
        %v812 = vld [vmem:[%s1 + $0xdc] sm:$0xf]
        %v813 = vld [vmem:[%s1 + $0xe0] sm:$0xf]
        %v814 = vld [vmem:[%s1 + $0xe4] sm:$0xf]
        %v815 = vld [vmem:[%s1 + $0xe8] sm:$0xf]
        %v816 = vld [vmem:[%s1 + $0xec] sm:$0xf]
        %v817 = vld [vmem:[%s1 + $0xf0] sm:$0xf]
        %v818 = vld [vmem:[%s1 + $0xf4] sm:$0xf]
        %v819 = vld [vmem:[%s1 + $0xf8] sm:$0xf]
        %v820 = vld [vmem:[%s1 + $0xfc] sm:$0xf]
        %v821 = vld [vmem:[%s1 + $0x100] sm:$0xf]
        %v822 = vld [vmem:[%s1 + $0x104] sm:$0xf]
        %v823 = vld [vmem:[%s1 + $0x108] sm:$0xf]
        %v824 = vld [vmem:[%s1 + $0x10c] sm:$0xf]
        %v825 = vld [vmem:[%s1 + $0x110] sm:$0xf]
        %v826 = vld [vmem:[%s1 + $0x114] sm:$0xf]
        %v827 = vld [vmem:[%s1 + $0x118] sm:$0xf]
        %v828 = vld [vmem:[%s1 + $0x11c] sm:$0xf]
        %v829 = vld [vmem:[%s1 + $0x120] sm:$0xf]
        %v830 = vld [vmem:[%s1 + $0x124] sm:$0xf]
        %v831 = vld [vmem:[%s1 + $0x128] sm:$0xf]
        %v832 = vld [vmem:[%s1 + $0x12c] sm:$0xf]
        %v833 = vld [vmem:[%s1 + $0x130] sm:$0xf]
        %v834 = vld [vmem:[%s1 + $0x134] sm:$0xf]
        %v835 = vld [vmem:[%s1 + $0x138] sm:$0xf]
        %v836 = vld [vmem:[%s1 + $0x13c] sm:$0xf]
        %v837 = vld [vmem:[%s1 + $0x140] sm:$0xf]
        %v838 = vld [vmem:[%s1 + $0x144] sm:$0xf]
        %v839 = vld [vmem:[%s1 + $0x148] sm:$0xf]
        %v840 = vld [vmem:[%s1 + $0x14c] sm:$0xf]
        %v841 = vld [vmem:[%s1 + $0x150] sm:$0xf]
        %v842 = vld [vmem:[%s1 + $0x154] sm:$0xf]
        %v843 = vld [vmem:[%s1 + $0x158] sm:$0xf]
        %v844 = vld [vmem:[%s1 + $0x15c] sm:$0xf]
        %v845 = vld [vmem:[%s1 + $0x160] sm:$0xf]
        %v846 = vld [vmem:[%s1 + $0x164] sm:$0xf]
        %v847 = vld [vmem:[%s1 + $0x168] sm:$0xf]
        %v848 = vld [vmem:[%s1 + $0x16c] sm:$0xf]
        %v849 = vld [vmem:[%s1 + $0x170] sm:$0xf]
        %v850 = vld [vmem:[%s1 + $0x174] sm:$0xf]
        %v851 = vld [vmem:[%s1 + $0x178] sm:$0xf]
        %v852 = vld [vmem:[%s1 + $0x17c] sm:$0xf]
        %v853 = vld [vmem:[%s1 + $0x180] sm:$0xf]
        %v854 = vld [vmem:[%s1 + $0x184] sm:$0xf]
        %v855 = vld [vmem:[%s1 + $0x188] sm:$0xf]
        %v856 = vld [vmem:[%s1 + $0x18c] sm:$0xf]
        %v857 = vld [vmem:[%s1 + $0x190] sm:$0xf]
        %v858 = vld [vmem:[%s1 + $0x194] sm:$0xf]
        %v859 = vld [vmem:[%s1 + $0x198] sm:$0xf]
        %v860 = vld [vmem:[%s1 + $0x19c] sm:$0xf]
        %v861 = vld [vmem:[%s1 + $0x1a0] sm:$0xf]
        %v862 = vld [vmem:[%s1 + $0x1a4] sm:$0xf]
        %v863 = vld [vmem:[%s1 + $0x1a8] sm:$0xf]
        %v864 = vld [vmem:[%s1 + $0x1ac] sm:$0xf]
        %v865 = vld [vmem:[%s1 + $0x1b0] sm:$0xf]
        %v866 = vld [vmem:[%s1 + $0x1b4] sm:$0xf]
        %v867 = vld [vmem:[%s1 + $0x1b8] sm:$0xf]
        %v868 = vld [vmem:[%s1 + $0x1bc] sm:$0xf]
        %v869 = vld [vmem:[%s1 + $0x1c0] sm:$0xf]
        %v870 = vld [vmem:[%s1 + $0x1c4] sm:$0xf]
        %v871 = vld [vmem:[%s1 + $0x1c8] sm:$0xf]
        %v872 = vld [vmem:[%s1 + $0x1cc] sm:$0xf]
        %v873 = vld [vmem:[%s1 + $0x1d0] sm:$0xf]
        %v874 = vld [vmem:[%s1 + $0x1d4] sm:$0xf]
        %v875 = vld [vmem:[%s1 + $0x1d8] sm:$0xf]
        %v876 = vld [vmem:[%s1 + $0x1dc] sm:$0xf]
        %v877 = vld [vmem:[%s1 + $0x1e0] sm:$0xf]
        %v878 = vld [vmem:[%s1 + $0x1e4] sm:$0xf]
        %v879 = vld [vmem:[%s1 + $0x1e8] sm:$0xf]
        %v880 = vld [vmem:[%s1 + $0x1ec] sm:$0xf]
        %v881 = vld [vmem:[%s1 + $0x1f0] sm:$0xf]
        %v882 = vld [vmem:[%s1 + $0x1f4] sm:$0xf]
        %v883 = vld [vmem:[%s1 + $0x1f8] sm:$0xf]
        %v884 = vld [vmem:[%s1 + $0x1fc] sm:$0xf]
        %v885 = vld [vmem:[%s1 + $0x200] sm:$0xf]
        %v886 = vld [vmem:[%s1 + $0x204] sm:$0xf]
        %v887 = vld [vmem:[%s1 + $0x208] sm:$0xf]
        %v888 = vld [vmem:[%s1 + $0x20c] sm:$0xf]
        %v889 = vld [vmem:[%s1 + $0x210] sm:$0xf]
        %v890 = vld [vmem:[%s1 + $0x214] sm:$0xf]
        %v891 = vld [vmem:[%s1 + $0x218] sm:$0xf]
        %v892 = vld [vmem:[%s1 + $0x21c] sm:$0xf]
        %v893 = vld [vmem:[%s1 + $0x220] sm:$0xf]
        %v894 = vld [vmem:[%s1 + $0x224] sm:$0xf]
        %v895 = vld [vmem:[%s1 + $0x228] sm:$0xf]
        %v896 = vld [vmem:[%s1 + $0x22c] sm:$0xf]
        %v897 = vld [vmem:[%s1 + $0x230] sm:$0xf]
        %v898 = vld [vmem:[%s1 + $0x234] sm:$0xf]
        %v899 = vld [vmem:[%s1 + $0x238] sm:$0xf]
        %v900 = vld [vmem:[%s1 + $0x23c] sm:$0xf]
        %v901 = vld [vmem:[%s2] sm:$0x1]
        %v903 = vlaneseq
        %v904 = vshrl.u32 %v903, 7
        %v905 = vsub.s32 0, %v904
        %v906 = vrot.slane %v901, %v905
        %v1052 = vunpack.c.l.b16 %v757
        %v1053 = vunpack.c.l.b16 %v758
        %v1054 = vunpack.c.l.b16 %v759
        %v1055 = vunpack.c.l.b16 %v760
        %v1056 = vunpack.c.l.b16 %v761
        %v1057 = vunpack.c.l.b16 %v762
        %v1058 = vunpack.c.l.b16 %v763
        %v1059 = vunpack.c.l.b16 %v764
        %v1060 = vunpack.c.l.b16 %v765
        %v1061 = vunpack.c.l.b16 %v766
        %v1062 = vunpack.c.l.b16 %v767
        %v1063 = vunpack.c.l.b16 %v768
        %v1064 = vunpack.c.l.b16 %v769
        %v1065 = vunpack.c.l.b16 %v770
        %v1066 = vunpack.c.l.b16 %v771
        %v1067 = vunpack.c.l.b16 %v772
        %v1068 = vunpack.c.l.b16 %v773
        %v1069 = vunpack.c.l.b16 %v774
        %v1070 = vunpack.c.l.b16 %v775
        %v1071 = vunpack.c.l.b16 %v776
        %v1072 = vunpack.c.l.b16 %v777
        %v1073 = vunpack.c.l.b16 %v778
        %v1074 = vunpack.c.l.b16 %v779
        %v1075 = vunpack.c.l.b16 %v780
        %v1076 = vunpack.c.l.b16 %v781
        %v1077 = vunpack.c.l.b16 %v782
        %v1078 = vunpack.c.l.b16 %v783
        %v1079 = vunpack.c.l.b16 %v784
        %v1080 = vunpack.c.l.b16 %v785
        %v1081 = vunpack.c.l.b16 %v786
        %v1082 = vunpack.c.l.b16 %v787
        %v1083 = vunpack.c.l.b16 %v788
        %v1084 = vunpack.c.l.b16 %v789
        %v1085 = vunpack.c.l.b16 %v790
        %v1086 = vunpack.c.l.b16 %v791
        %v1087 = vunpack.c.l.b16 %v792
        %v1088 = vunpack.c.l.b16 %v793
        %v1089 = vunpack.c.l.b16 %v794
        %v1090 = vunpack.c.l.b16 %v795
        %v1091 = vunpack.c.l.b16 %v796
        %v1092 = vunpack.c.l.b16 %v797
        %v1093 = vunpack.c.l.b16 %v798
        %v1094 = vunpack.c.l.b16 %v799
        %v1095 = vunpack.c.l.b16 %v800
        %v1096 = vunpack.c.l.b16 %v801
        %v1097 = vunpack.c.l.b16 %v802
        %v1098 = vunpack.c.l.b16 %v803
        %v1099 = vunpack.c.l.b16 %v804
        %v1100 = vunpack.c.l.b16 %v805
        %v1101 = vunpack.c.l.b16 %v806
        %v1102 = vunpack.c.l.b16 %v807
        %v1103 = vunpack.c.l.b16 %v808
        %v1104 = vunpack.c.l.b16 %v809
        %v1105 = vunpack.c.l.b16 %v810
        %v1106 = vunpack.c.l.b16 %v811
        %v1107 = vunpack.c.l.b16 %v812
        %v1108 = vunpack.c.l.b16 %v813
        %v1109 = vunpack.c.l.b16 %v814
        %v1110 = vunpack.c.l.b16 %v815
        %v1111 = vunpack.c.l.b16 %v816
        %v1112 = vunpack.c.l.b16 %v817
        %v1113 = vunpack.c.l.b16 %v818
        %v1114 = vunpack.c.l.b16 %v819
        %v1115 = vunpack.c.l.b16 %v820
        %v1116 = vunpack.c.l.b16 %v821
        %v1117 = vunpack.c.l.b16 %v822
        %v1118 = vunpack.c.l.b16 %v823
        %v1119 = vunpack.c.l.b16 %v824
        %v1120 = vunpack.c.l.b16 %v825
        %v1121 = vunpack.c.l.b16 %v826
        %v1122 = vunpack.c.l.b16 %v827
        %v1123 = vunpack.c.l.b16 %v828
        %v1124 = vunpack.c.l.b16 %v829
        %v1125 = vunpack.c.l.b16 %v830
        %v1126 = vunpack.c.l.b16 %v831
        %v1127 = vunpack.c.l.b16 %v832
        %v1128 = vunpack.c.l.b16 %v833
        %v1129 = vunpack.c.l.b16 %v834
        %v1130 = vunpack.c.l.b16 %v835
        %v1131 = vunpack.c.l.b16 %v836
        %v1132 = vunpack.c.l.b16 %v837
        %v1133 = vunpack.c.l.b16 %v838
        %v1134 = vunpack.c.l.b16 %v839
        %v1135 = vunpack.c.l.b16 %v840
        %v1136 = vunpack.c.l.b16 %v841
        %v1137 = vunpack.c.l.b16 %v842
        %v1138 = vunpack.c.l.b16 %v843
        %v1139 = vunpack.c.l.b16 %v844
        %v1140 = vunpack.c.l.b16 %v845
        %v1141 = vunpack.c.l.b16 %v846
        %v1142 = vunpack.c.l.b16 %v847
        %v1143 = vunpack.c.l.b16 %v848
        %v1144 = vunpack.c.l.b16 %v849
        %v1145 = vunpack.c.l.b16 %v850
        %v1146 = vunpack.c.l.b16 %v851
        %v1147 = vunpack.c.l.b16 %v852
        %v1148 = vunpack.c.l.b16 %v853
        %v1149 = vunpack.c.l.b16 %v854
        %v1150 = vunpack.c.l.b16 %v855
        %v1151 = vunpack.c.l.b16 %v856
        %v1152 = vunpack.c.l.b16 %v857
        %v1153 = vunpack.c.l.b16 %v858
        %v1154 = vunpack.c.l.b16 %v859
        %v1155 = vunpack.c.l.b16 %v860
        %v1156 = vunpack.c.l.b16 %v861
        %v1157 = vunpack.c.l.b16 %v862
        %v1158 = vunpack.c.l.b16 %v863
        %v1159 = vunpack.c.l.b16 %v864
        %v1160 = vunpack.c.l.b16 %v865
        %v1161 = vunpack.c.l.b16 %v866
        %v1162 = vunpack.c.l.b16 %v867
        %v1163 = vunpack.c.l.b16 %v868
        %v1164 = vunpack.c.l.b16 %v869
        %v1165 = vunpack.c.l.b16 %v870
        %v1166 = vunpack.c.l.b16 %v871
        %v1167 = vunpack.c.l.b16 %v872
        %v1168 = vunpack.c.l.b16 %v873
        %v1169 = vunpack.c.l.b16 %v874
        %v1170 = vunpack.c.l.b16 %v875
        %v1171 = vunpack.c.l.b16 %v876
        %v1172 = vunpack.c.l.b16 %v877
        %v1173 = vunpack.c.l.b16 %v878
        %v1174 = vunpack.c.l.b16 %v879
        %v1175 = vunpack.c.l.b16 %v880
        %v1176 = vunpack.c.l.b16 %v881
        %v1177 = vunpack.c.l.b16 %v882
        %v1178 = vunpack.c.l.b16 %v883
        %v1179 = vunpack.c.l.b16 %v884
        %v1180 = vunpack.c.l.b16 %v885
        %v1181 = vunpack.c.l.b16 %v886
        %v1182 = vunpack.c.l.b16 %v887
        %v1183 = vunpack.c.l.b16 %v888
        %v1184 = vunpack.c.l.b16 %v889
        %v1185 = vunpack.c.l.b16 %v890
        %v1186 = vunpack.c.l.b16 %v891
        %v1187 = vunpack.c.l.b16 %v892
        %v1188 = vunpack.c.l.b16 %v893
        %v1189 = vunpack.c.l.b16 %v894
        %v1190 = vunpack.c.l.b16 %v895
        %v1191 = vunpack.c.l.b16 %v896
        %v1192 = vunpack.c.l.b16 %v897
        %v1193 = vunpack.c.l.b16 %v898
        %v1194 = vunpack.c.l.b16 %v899
        %v1195 = vunpack.c.l.b16 %v900
        %v1196 = vpack.c.b16 %v1053, %v1052
        %v1197 = vpack.c.b16 %v1055, %v1054
        %v1198 = vpack.c.b16 %v1057, %v1056
        %v1199 = vpack.c.b16 %v1059, %v1058
        %v1200 = vpack.c.b16 %v1061, %v1060
        %v1201 = vpack.c.b16 %v1063, %v1062
        %v1202 = vpack.c.b16 %v1065, %v1064
        %v1203 = vpack.c.b16 %v1067, %v1066
        %v1204 = vpack.c.b16 %v1069, %v1068
        %v1205 = vpack.c.b16 %v1071, %v1070
        %v1206 = vpack.c.b16 %v1073, %v1072
        %v1207 = vpack.c.b16 %v1075, %v1074
        %v1208 = vpack.c.b16 %v1077, %v1076
        %v1209 = vpack.c.b16 %v1079, %v1078
        %v1210 = vpack.c.b16 %v1081, %v1080
        %v1211 = vpack.c.b16 %v1083, %v1082
        %v1212 = vpack.c.b16 %v1085, %v1084
        %v1213 = vpack.c.b16 %v1087, %v1086
        %v1214 = vpack.c.b16 %v1089, %v1088
        %v1215 = vpack.c.b16 %v1091, %v1090
        %v1216 = vpack.c.b16 %v1093, %v1092
        %v1217 = vpack.c.b16 %v1095, %v1094
        %v1218 = vpack.c.b16 %v1097, %v1096
        %v1219 = vpack.c.b16 %v1099, %v1098
        %v1220 = vpack.c.b16 %v1101, %v1100
        %v1221 = vpack.c.b16 %v1103, %v1102
        %v1222 = vpack.c.b16 %v1105, %v1104
        %v1223 = vpack.c.b16 %v1107, %v1106
        %v1224 = vpack.c.b16 %v1109, %v1108
        %v1225 = vpack.c.b16 %v1111, %v1110
        %v1226 = vpack.c.b16 %v1113, %v1112
        %v1227 = vpack.c.b16 %v1115, %v1114
        %v1228 = vpack.c.b16 %v1117, %v1116
        %v1229 = vpack.c.b16 %v1119, %v1118
        %v1230 = vpack.c.b16 %v1121, %v1120
        %v1231 = vpack.c.b16 %v1123, %v1122
        %v1232 = vpack.c.b16 %v1125, %v1124
        %v1233 = vpack.c.b16 %v1127, %v1126
        %v1234 = vpack.c.b16 %v1129, %v1128
        %v1235 = vpack.c.b16 %v1131, %v1130
        %v1236 = vpack.c.b16 %v1133, %v1132
        %v1237 = vpack.c.b16 %v1135, %v1134
        %v1238 = vpack.c.b16 %v1137, %v1136
        %v1239 = vpack.c.b16 %v1139, %v1138
        %v1240 = vpack.c.b16 %v1141, %v1140
        %v1241 = vpack.c.b16 %v1143, %v1142
        %v1242 = vpack.c.b16 %v1145, %v1144
        %v1243 = vpack.c.b16 %v1147, %v1146
        %v1244 = vpack.c.b16 %v1149, %v1148
        %v1245 = vpack.c.b16 %v1151, %v1150
        %v1246 = vpack.c.b16 %v1153, %v1152
        %v1247 = vpack.c.b16 %v1155, %v1154
        %v1248 = vpack.c.b16 %v1157, %v1156
        %v1249 = vpack.c.b16 %v1159, %v1158
        %v1250 = vpack.c.b16 %v1161, %v1160
        %v1251 = vpack.c.b16 %v1163, %v1162
        %v1252 = vpack.c.b16 %v1165, %v1164
        %v1253 = vpack.c.b16 %v1167, %v1166
        %v1254 = vpack.c.b16 %v1169, %v1168
        %v1255 = vpack.c.b16 %v1171, %v1170
        %v1256 = vpack.c.b16 %v1173, %v1172
        %v1257 = vpack.c.b16 %v1175, %v1174
        %v1258 = vpack.c.b16 %v1177, %v1176
        %v1259 = vpack.c.b16 %v1179, %v1178
        %v1260 = vpack.c.b16 %v1181, %v1180
        %v1261 = vpack.c.b16 %v1183, %v1182
        %v1262 = vpack.c.b16 %v1185, %v1184
        %v1263 = vpack.c.b16 %v1187, %v1186
        %v1264 = vpack.c.b16 %v1189, %v1188
        %v1265 = vpack.c.b16 %v1191, %v1190
        %v1266 = vpack.c.b16 %v1193, %v1192
        %v1267 = vpack.c.b16 %v1195, %v1194
        %1340 = vmatprep.subr.bf16.mxu0 0
        %1341 = vmatpush1.bf16.msra.mxu0 %v1203
        %1342 = vmatprep.subr.bf16.mxu0 0
        %1343 = vmatpush1.bf16.msra.mxu0 %v1202
        %1344 = vmatprep.subr.bf16.mxu0 0
        %1345 = vmatpush1.bf16.msra.mxu0 %v1201
        %1346 = vmatprep.subr.bf16.mxu0 0
        %1347 = vmatpush1.bf16.msra.mxu0 %v1200
        %1348 = vmatprep.subr.bf16.mxu0 0
        %1349 = vmatpush1.bf16.msra.mxu0 %v1199
        %1350 = vmatprep.subr.bf16.mxu0 0
        %1351 = vmatpush1.bf16.msra.mxu0 %v1198
        %1352 = vmatprep.subr.bf16.mxu0 0
        %1353 = vmatpush1.bf16.msra.mxu0 %v1197
        %1354 = vmatprep.subr.bf16.mxu0 0
        %1355 = vmatpush1.bf16.msra.mxu0 %v1196
        %1356 = vmatprep.subr.bf16.mxu0 0
        %1357 = vmatpush2.bf16.msra.mxu0 %v1211
        %1358 = vmatprep.subr.bf16.mxu0 0
        %1359 = vmatpush2.bf16.msra.mxu0 %v1210
        %1360 = vmatprep.subr.bf16.mxu0 0
        %1361 = vmatpush2.bf16.msra.mxu0 %v1209
        %1362 = vmatprep.subr.bf16.mxu0 0
        %1363 = vmatpush2.bf16.msra.mxu0 %v1208
        %1364 = vmatprep.subr.bf16.mxu0 0
        %1365 = vmatpush2.bf16.msra.mxu0 %v1207
        %1366 = vmatprep.subr.bf16.mxu0 0
        %1367 = vmatpush2.bf16.msra.mxu0 %v1206
        %1368 = vmatprep.subr.bf16.mxu0 0
        %1369 = vmatpush2.bf16.msra.mxu0 %v1205
        %1370 = vmatprep.subr.bf16.mxu0 0
        %1371 = vmatpush2.bf16.msra.mxu0 %v1204
        %1372 = vmatprep.mubr.bf16.mxu0 %v701
        %1373 = vmatmul.mubr.bf16.gmra.mxu0 %v685
        %v1374 = vpop.f32.mrf.mxu0
        %v1375 = vadd.f32 %v906, %v1374
        %v1376 = vpop.f32.mrf.mxu0
        %v1377 = vpop.f32.mrf.mxu0
        %v1378 = vadd.f32 %v906, %v1377
        %v1379 = vpop.f32.mrf.mxu0
        %1380 = vmatprep.mubr.bf16.mxu0 %v702
        %1381 = vmatmul.mubr.bf16.gmra.mxu0 %v686
        %v1382 = vpop.f32.mrf.mxu0
        %v1383 = vadd.f32 %v906, %v1382
        %v1384 = vpop.f32.mrf.mxu0
        %v1385 = vpop.f32.mrf.mxu0
        %v1386 = vadd.f32 %v906, %v1385
        %v1387 = vpop.f32.mrf.mxu0
        %1388 = vmatprep.mubr.bf16.mxu0 %v703
        %1389 = vmatmul.mubr.bf16.gmra.mxu0 %v687
        %v1390 = vpop.f32.mrf.mxu0
        %v1391 = vadd.f32 %v906, %v1390
        %v1392 = vpop.f32.mrf.mxu0
        %v1393 = vpop.f32.mrf.mxu0
        %v1394 = vadd.f32 %v906, %v1393
        %v1395 = vpop.f32.mrf.mxu0
        %1396 = vmatprep.mubr.bf16.mxu0 %v704
        %1397 = vmatmul.mubr.bf16.gmra.mxu0 %v688
        %v1398 = vpop.f32.mrf.mxu0
        %v1399 = vadd.f32 %v906, %v1398
        %v1400 = vpop.f32.mrf.mxu0
        %v1401 = vpop.f32.mrf.mxu0
        %v1402 = vadd.f32 %v906, %v1401
        %v1403 = vpop.f32.mrf.mxu0
        %1404 = vdwg.mxu0
        %1405 = vmatprep.subr.bf16.mxu0 0
        %1406 = vmatpush1.bf16.msra.mxu0 %v1219
        %1407 = vmatprep.subr.bf16.mxu0 0
        %1408 = vmatpush1.bf16.msra.mxu0 %v1218
        %1409 = vmatprep.subr.bf16.mxu0 0
        %1410 = vmatpush1.bf16.msra.mxu0 %v1217
        %1411 = vmatprep.subr.bf16.mxu0 0
        %1412 = vmatpush1.bf16.msra.mxu0 %v1216
        %1413 = vmatprep.subr.bf16.mxu0 0
        %1414 = vmatpush1.bf16.msra.mxu0 %v1215
        %1415 = vmatprep.subr.bf16.mxu0 0
        %1416 = vmatpush1.bf16.msra.mxu0 %v1214
        %1417 = vmatprep.subr.bf16.mxu0 0
        %1418 = vmatpush1.bf16.msra.mxu0 %v1213
        %1419 = vmatprep.subr.bf16.mxu0 0
        %1420 = vmatpush1.bf16.msra.mxu0 %v1212
        %1421 = vmatprep.subr.bf16.mxu0 0
        %1422 = vmatpush2.bf16.msra.mxu0 %v1227
        %1423 = vmatprep.subr.bf16.mxu0 0
        %1424 = vmatpush2.bf16.msra.mxu0 %v1226
        %1425 = vmatprep.subr.bf16.mxu0 0
        %1426 = vmatpush2.bf16.msra.mxu0 %v1225
        %1427 = vmatprep.subr.bf16.mxu0 0
        %1428 = vmatpush2.bf16.msra.mxu0 %v1224
        %1429 = vmatprep.subr.bf16.mxu0 0
        %1430 = vmatpush2.bf16.msra.mxu0 %v1223
        %1431 = vmatprep.subr.bf16.mxu0 0
        %1432 = vmatpush2.bf16.msra.mxu0 %v1222
        %1433 = vmatprep.subr.bf16.mxu0 0
        %1434 = vmatpush2.bf16.msra.mxu0 %v1221
        %1435 = vmatprep.subr.bf16.mxu0 0
        %1436 = vmatpush2.bf16.msra.mxu0 %v1220
        %1437 = vmatprep.mubr.bf16.mxu0 %v725
        %1438 = vmatmul.mubr.bf16.gmra.mxu0 %v717
        %v1439 = vpop.f32.mrf.mxu0
        %v1440 = vadd.f32 %v1375, %v1439
        %v1441 = vpop.f32.mrf.mxu0
        %v1442 = vpop.f32.mrf.mxu0
        %v1443 = vadd.f32 %v1378, %v1442
        %v1444 = vpop.f32.mrf.mxu0
        %1445 = vmatprep.mubr.bf16.mxu0 %v726
        %1446 = vmatmul.mubr.bf16.gmra.mxu0 %v718
        %v1447 = vpop.f32.mrf.mxu0
        %v1448 = vadd.f32 %v1383, %v1447
        %v1449 = vpop.f32.mrf.mxu0
        %v1450 = vpop.f32.mrf.mxu0
        %v1451 = vadd.f32 %v1386, %v1450
        %v1452 = vpop.f32.mrf.mxu0
        %1453 = vmatprep.mubr.bf16.mxu0 %v727
        %1454 = vmatmul.mubr.bf16.gmra.mxu0 %v719
        %v1455 = vpop.f32.mrf.mxu0
        %v1456 = vadd.f32 %v1391, %v1455
        %v1457 = vpop.f32.mrf.mxu0
        %v1458 = vpop.f32.mrf.mxu0
        %v1459 = vadd.f32 %v1394, %v1458
        %v1460 = vpop.f32.mrf.mxu0
        %1461 = vmatprep.mubr.bf16.mxu0 %v728
        %1462 = vmatmul.mubr.bf16.gmra.mxu0 %v720
        %v1463 = vpop.f32.mrf.mxu0
        %v1464 = vadd.f32 %v1399, %v1463
        %v1465 = vpop.f32.mrf.mxu0
        %v1466 = vpop.f32.mrf.mxu0
        %v1467 = vadd.f32 %v1402, %v1466
        %v1468 = vpop.f32.mrf.mxu0
        %1469 = vdwg.mxu0
        %1470 = vmatprep.subr.bf16.mxu0 0
        %1471 = vmatpush1.bf16.msra.mxu0 %v1235
        %1472 = vmatprep.subr.bf16.mxu0 0
        %1473 = vmatpush1.bf16.msra.mxu0 %v1234
        %1474 = vmatprep.subr.bf16.mxu0 0
        %1475 = vmatpush1.bf16.msra.mxu0 %v1233
        %1476 = vmatprep.subr.bf16.mxu0 0
        %1477 = vmatpush1.bf16.msra.mxu0 %v1232
        %1478 = vmatprep.subr.bf16.mxu0 0
        %1479 = vmatpush1.bf16.msra.mxu0 %v1231
        %1480 = vmatprep.subr.bf16.mxu0 0
        %1481 = vmatpush1.bf16.msra.mxu0 %v1230
        %1482 = vmatprep.subr.bf16.mxu0 0
        %1483 = vmatpush1.bf16.msra.mxu0 %v1229
        %1484 = vmatprep.subr.bf16.mxu0 0
        %1485 = vmatpush1.bf16.msra.mxu0 %v1228
        %1486 = vmatprep.subr.bf16.mxu0 0
        %1487 = vmatpush2.bf16.msra.mxu0 %v1243
        %1488 = vmatprep.subr.bf16.mxu0 0
        %1489 = vmatpush2.bf16.msra.mxu0 %v1242
        %1490 = vmatprep.subr.bf16.mxu0 0
        %1491 = vmatpush2.bf16.msra.mxu0 %v1241
        %1492 = vmatprep.subr.bf16.mxu0 0
        %1493 = vmatpush2.bf16.msra.mxu0 %v1240
        %1494 = vmatprep.subr.bf16.mxu0 0
        %1495 = vmatpush2.bf16.msra.mxu0 %v1239
        %1496 = vmatprep.subr.bf16.mxu0 0
        %1497 = vmatpush2.bf16.msra.mxu0 %v1238
        %1498 = vmatprep.subr.bf16.mxu0 0
        %1499 = vmatpush2.bf16.msra.mxu0 %v1237
        %1500 = vmatprep.subr.bf16.mxu0 0
        %1501 = vmatpush2.bf16.msra.mxu0 %v1236
        %1502 = vmatprep.mubr.bf16.mxu0 %v743
        %1503 = vmatmul.mubr.bf16.gmra.mxu0 %v734
        %v1504 = vpop.f32.mrf.mxu0
        %v1505 = vadd.f32 %v1440, %v1504
        %v1506 = vpop.f32.mrf.mxu0
        %v1507 = vpop.f32.mrf.mxu0
        %v1508 = vadd.f32 %v1443, %v1507
        %v1509 = vpop.f32.mrf.mxu0
        %1510 = vmatprep.mubr.bf16.mxu0 %v744
        %1511 = vmatmul.mubr.bf16.gmra.mxu0 %v735
        %v1512 = vpop.f32.mrf.mxu0
        %v1513 = vadd.f32 %v1448, %v1512
        %v1514 = vpop.f32.mrf.mxu0
        %v1515 = vpop.f32.mrf.mxu0
        %v1516 = vadd.f32 %v1451, %v1515
        %v1517 = vpop.f32.mrf.mxu0
        %1518 = vmatprep.mubr.bf16.mxu0 %v745
        %1519 = vmatmul.mubr.bf16.gmra.mxu0 %v736
        %v1520 = vpop.f32.mrf.mxu0
        %v1521 = vadd.f32 %v1456, %v1520
        %v1522 = vpop.f32.mrf.mxu0
        %v1523 = vpop.f32.mrf.mxu0
        %v1524 = vadd.f32 %v1459, %v1523
        %v1525 = vpop.f32.mrf.mxu0
        %1526 = vmatprep.mubr.bf16.mxu0 %v746
        %1527 = vmatmul.mubr.bf16.gmra.mxu0 %v737
        %v1528 = vpop.f32.mrf.mxu0
        %v1529 = vadd.f32 %v1464, %v1528
        %v1530 = vpop.f32.mrf.mxu0
        %v1531 = vpop.f32.mrf.mxu0
        %v1532 = vadd.f32 %v1467, %v1531
        %v1533 = vpop.f32.mrf.mxu0
        %1534 = vdwg.mxu0
        %1535 = vmatprep.subr.bf16.mxu0 0
        %1536 = vmatpush1.bf16.msra.mxu0 %v1251
        %1537 = vmatprep.subr.bf16.mxu0 0
        %1538 = vmatpush1.bf16.msra.mxu0 %v1250
        %1539 = vmatprep.subr.bf16.mxu0 0
        %1540 = vmatpush1.bf16.msra.mxu0 %v1249
        %1541 = vmatprep.subr.bf16.mxu0 0
        %1542 = vmatpush1.bf16.msra.mxu0 %v1248
        %1543 = vmatprep.subr.bf16.mxu0 0
        %1544 = vmatpush1.bf16.msra.mxu0 %v1247
        %1545 = vmatprep.subr.bf16.mxu0 0
        %1546 = vmatpush1.bf16.msra.mxu0 %v1246
        %1547 = vmatprep.subr.bf16.mxu0 0
        %1548 = vmatpush1.bf16.msra.mxu0 %v1245
        %1549 = vmatprep.subr.bf16.mxu0 0
        %1550 = vmatpush1.bf16.msra.mxu0 %v1244
        %1551 = vmatprep.subr.bf16.mxu0 0
        %1552 = vmatpush2.bf16.msra.mxu0 %v1259
        %1553 = vmatprep.subr.bf16.mxu0 0
        %1554 = vmatpush2.bf16.msra.mxu0 %v1258
        %1555 = vmatprep.subr.bf16.mxu0 0
        %1556 = vmatpush2.bf16.msra.mxu0 %v1257
        %1557 = vmatprep.subr.bf16.mxu0 0
        %1558 = vmatpush2.bf16.msra.mxu0 %v1256
        %1559 = vmatprep.subr.bf16.mxu0 0
        %1560 = vmatpush2.bf16.msra.mxu0 %v1255
        %1561 = vmatprep.subr.bf16.mxu0 0
        %1562 = vmatpush2.bf16.msra.mxu0 %v1254
        %1563 = vmatprep.subr.bf16.mxu0 0
        %1564 = vmatpush2.bf16.msra.mxu0 %v1253
        %1565 = vmatprep.subr.bf16.mxu0 0
        %1566 = vmatpush2.bf16.msra.mxu0 %v1252
        %1567 = vmatprep.mubr.bf16.mxu0 %v702
        %1568 = vmatmul.mubr.bf16.gmra.mxu0 %v686
        %v1569 = vpop.f32.mrf.mxu0
        %v1570 = vadd.f32 %v1505, %v1569
        %v1571 = vpop.f32.mrf.mxu0
        %v1572 = vpop.f32.mrf.mxu0
        %v1573 = vadd.f32 %v1508, %v1572
        %v1574 = vpop.f32.mrf.mxu0
        %1575 = vmatprep.mubr.bf16.mxu0 %v703
        %1576 = vmatmul.mubr.bf16.gmra.mxu0 %v687
        %v1577 = vpop.f32.mrf.mxu0
        %v1578 = vadd.f32 %v1513, %v1577
        %v1579 = vpop.f32.mrf.mxu0
        %v1580 = vpop.f32.mrf.mxu0
        %v1581 = vadd.f32 %v1516, %v1580
        %v1582 = vpop.f32.mrf.mxu0
        %1583 = vmatprep.mubr.bf16.mxu0 %v704
        %1584 = vmatmul.mubr.bf16.gmra.mxu0 %v688
        %v1585 = vpop.f32.mrf.mxu0
        %v1586 = vadd.f32 %v1521, %v1585
        %v1587 = vpop.f32.mrf.mxu0
        %v1588 = vpop.f32.mrf.mxu0
        %v1589 = vadd.f32 %v1524, %v1588
        %v1590 = vpop.f32.mrf.mxu0
        %1591 = vmatprep.mubr.bf16.mxu0 %v753
        %1592 = vmatmul.mubr.bf16.gmra.mxu0 %v751
        %v1593 = vpop.f32.mrf.mxu0
        %v1594 = vadd.f32 %v1529, %v1593
        %v1595 = vpop.f32.mrf.mxu0
        %v1596 = vpop.f32.mrf.mxu0
        %v1597 = vadd.f32 %v1532, %v1596
        %v1598 = vpop.f32.mrf.mxu0
        %1599 = vdwg.mxu0
        %1600 = vmatprep.subr.bf16.mxu0 0
        %1601 = vmatpush1.bf16.msra.mxu0 %v1267
        %1602 = vmatprep.subr.bf16.mxu0 0
        %1603 = vmatpush1.bf16.msra.mxu0 %v1266
        %1604 = vmatprep.subr.bf16.mxu0 0
        %1605 = vmatpush1.bf16.msra.mxu0 %v1265
        %1606 = vmatprep.subr.bf16.mxu0 0
        %1607 = vmatpush1.bf16.msra.mxu0 %v1264
        %1608 = vmatprep.subr.bf16.mxu0 0
        %1609 = vmatpush1.bf16.msra.mxu0 %v1263
        %1610 = vmatprep.subr.bf16.mxu0 0
        %1611 = vmatpush1.bf16.msra.mxu0 %v1262
        %1612 = vmatprep.subr.bf16.mxu0 0
        %1613 = vmatpush1.bf16.msra.mxu0 %v1261
        %1614 = vmatprep.subr.bf16.mxu0 0
        %1615 = vmatpush1.bf16.msra.mxu0 %v1260
        %1616 = vmatprep.subr.bf16.mxu0 0
        %1617 = vmatpush2.bf16.msra.mxu0 0
        %1618 = vmatprep.subr.bf16.mxu0 0
        %1619 = vmatpush2.bf16.msra.mxu0 0
        %1620 = vmatprep.subr.bf16.mxu0 0
        %1621 = vmatpush2.bf16.msra.mxu0 0
        %1622 = vmatprep.subr.bf16.mxu0 0
        %1623 = vmatpush2.bf16.msra.mxu0 0
        %1624 = vmatprep.subr.bf16.mxu0 0
        %1625 = vmatpush2.bf16.msra.mxu0 0
        %1626 = vmatprep.subr.bf16.mxu0 0
        %1627 = vmatpush2.bf16.msra.mxu0 0
        %1628 = vmatprep.subr.bf16.mxu0 0
        %1629 = vmatpush2.bf16.msra.mxu0 0
        %1630 = vmatprep.subr.bf16.mxu0 0
        %1631 = vmatpush2.bf16.msra.mxu0 0
        %1632 = vmatprep.mubr.bf16.mxu0 0
        %1633 = vmatmul.mubr.bf16.gmra.mxu0 %v718
        %v1634 = vpop.f32.mrf.mxu0
        %v1635 = vadd.f32 %v1570, %v1634
        %v1636 = vpop.f32.mrf.mxu0
        %v1637 = vpop.f32.mrf.mxu0
        %v1638 = vadd.f32 %v1573, %v1637
        %v1639 = vpop.f32.mrf.mxu0
        %1640 = vmatprep.mubr.bf16.mxu0 0
        %1641 = vmatmul.mubr.bf16.gmra.mxu0 %v719
        %v1642 = vpop.f32.mrf.mxu0
        %v1643 = vadd.f32 %v1578, %v1642
        %v1644 = vpop.f32.mrf.mxu0
        %v1645 = vpop.f32.mrf.mxu0
        %v1646 = vadd.f32 %v1581, %v1645
        %v1647 = vpop.f32.mrf.mxu0
        %1648 = vmatprep.mubr.bf16.mxu0 0
        %1649 = vmatmul.mubr.bf16.gmra.mxu0 %v720
        %v1650 = vpop.f32.mrf.mxu0
        %v1651 = vadd.f32 %v1586, %v1650
        %v1652 = vpop.f32.mrf.mxu0
        %v1653 = vpop.f32.mrf.mxu0
        %v1654 = vadd.f32 %v1589, %v1653
        %v1655 = vpop.f32.mrf.mxu0
        %1656 = vmatprep.mubr.bf16.mxu0 0
        %1657 = vmatmul.mubr.bf16.gmra.mxu0 %v755
        %v1658 = vpop.f32.mrf.mxu0
        %v1659 = vadd.f32 %v1594, %v1658
        %v1660 = vpop.f32.mrf.mxu0
        %v1661 = vpop.f32.mrf.mxu0
        %v1662 = vadd.f32 %v1597, %v1661
        %v1663 = vpop.f32.mrf.mxu0
        %1664 = vdwg.mxu0
        %v1665 = vmax.f32 %v1635, 0.0
        %v1666 = vmax.f32 %v1638, 0.0
        %v1667 = vmax.f32 %v1643, 0.0
        %v1668 = vmax.f32 %v1646, 0.0
        %v1669 = vmax.f32 %v1651, 0.0
        %v1670 = vmax.f32 %v1654, 0.0
        %v1671 = vmax.f32 %v1659, 0.0
        %v1672 = vmax.f32 %v1662, 0.0
        %v1673 = vpack.c.bf16 %v1666, %v1665
        %v1674 = vpack.c.bf16 %v1668, %v1667
        %v1675 = vpack.c.bf16 %v1670, %v1669
        %v1676 = vpack.c.bf16 %v1672, %v1671
        %v1681 = vunpack.c.l.b16 %v1673
        %v1682 = vunpack.c.h.b16 %v1673
        %v1683 = vunpack.c.l.b16 %v1674
        %v1684 = vunpack.c.h.b16 %v1674
        %v1685 = vunpack.c.l.b16 %v1675
        %v1686 = vunpack.c.h.b16 %v1675
        %v1687 = vunpack.c.l.b16 %v1676
        %v1688 = vunpack.c.h.b16 %v1676
        %v1689 = vpack.c.b16 %v1681, %v1681
        %v1690 = vpack.c.b16 %v1682, %v1682
        %v1691 = vpack.c.b16 %v1683, %v1683
        %v1692 = vpack.c.b16 %v1684, %v1684
        %v1693 = vpack.c.b16 %v1685, %v1685
        %v1694 = vpack.c.b16 %v1686, %v1686
        %v1695 = vpack.c.b16 %v1687, %v1687
        %v1696 = vpack.c.b16 %v1688, %v1688
        %v1698 = vshrl.u32 %v1689, 16
        %v1700 = vrot.slane %v1698, 7
        %v1701 = vshll.u32 %v1689, 16
        %v1703 = vor.u32 %v1700, %v1701
        %v1705 = vshrl.u32 %v1690, 16
        %v1707 = vrot.slane %v1705, 7
        %v1708 = vshll.u32 %v1690, 16
        %v1710 = vor.u32 %v1707, %v1708
        %v1712 = vshrl.u32 %v1691, 16
        %v1714 = vrot.slane %v1712, 7
        %v1715 = vshll.u32 %v1691, 16
        %v1717 = vor.u32 %v1714, %v1715
        %v1719 = vshrl.u32 %v1692, 16
        %v1721 = vrot.slane %v1719, 7
        %v1722 = vshll.u32 %v1692, 16
        %v1724 = vor.u32 %v1721, %v1722
        %v1726 = vshrl.u32 %v1693, 16
        %v1728 = vrot.slane %v1726, 7
        %v1729 = vshll.u32 %v1693, 16
        %v1731 = vor.u32 %v1728, %v1729
        %v1733 = vshrl.u32 %v1694, 16
        %v1735 = vrot.slane %v1733, 7
        %v1736 = vshll.u32 %v1694, 16
        %v1738 = vor.u32 %v1735, %v1736
        %v1740 = vshrl.u32 %v1695, 16
        %v1742 = vrot.slane %v1740, 7
        %v1743 = vshll.u32 %v1695, 16
        %v1745 = vor.u32 %v1742, %v1743
        %v1747 = vshrl.u32 %v1696, 16
        %v1749 = vrot.slane %v1747, 7
        %v1750 = vshll.u32 %v1696, 16
        %v1752 = vor.u32 %v1749, %v1750
        %v1761 = vsel %vm450, 0, %v1703
        %v1762 = vsel %vm450, 0, %v1710
        %v1763 = vsel %vm450, 0, %v1717
        %v1764 = vsel %vm450, 0, %v1724
        %v1765 = vsel %vm450, 0, %v1731
        %v1766 = vsel %vm450, 0, %v1738
        %v1767 = vsel %vm450, 0, %v1745
        %v1768 = vsel %vm450, 0, %v1752
        %v1769 = vsel %vm462, %v1761, 0
        %v1770 = vsel %vm462, %v1762, 0
        %v1771 = vsel %vm462, %v1763, 0
        %v1772 = vsel %vm462, %v1764, 0
        %v1773 = vsel %vm462, %v1765, 0
        %v1774 = vsel %vm462, %v1766, 0
        %v1775 = vsel %vm462, %v1767, 0
        %v1776 = vsel %vm462, %v1768, 0
        %v1784 = vunpack.c.l.b16 %v1769
        %v1785 = vunpack.c.h.b16 %v1769
        %v1786 = vunpack.c.l.b16 %v1770
        %v1787 = vunpack.c.h.b16 %v1770
        %v1788 = vunpack.c.l.b16 %v1771
        %v1789 = vunpack.c.h.b16 %v1771
        %v1790 = vunpack.c.l.b16 %v1772
        %v1791 = vunpack.c.h.b16 %v1772
        %v1792 = vunpack.c.l.b16 %v1773
        %v1793 = vunpack.c.h.b16 %v1773
        %v1794 = vunpack.c.l.b16 %v1774
        %v1795 = vunpack.c.h.b16 %v1774
        %v1796 = vunpack.c.l.b16 %v1775
        %v1797 = vunpack.c.h.b16 %v1775
        %v1798 = vpack.c.b16 %v1784, %v1784
        %v1799 = vpack.c.b16 %v1785, %v1785
        %v1800 = vpack.c.b16 %v1786, %v1786
        %v1801 = vpack.c.b16 %v1787, %v1787
        %v1802 = vpack.c.b16 %v1788, %v1788
        %v1803 = vpack.c.b16 %v1789, %v1789
        %v1804 = vpack.c.b16 %v1790, %v1790
        %v1805 = vpack.c.b16 %v1791, %v1791
        %v1806 = vpack.c.b16 %v1792, %v1792
        %v1807 = vpack.c.b16 %v1793, %v1793
        %v1808 = vpack.c.b16 %v1794, %v1794
        %v1809 = vpack.c.b16 %v1795, %v1795
        %v1810 = vpack.c.b16 %v1796, %v1796
        %v1811 = vpack.c.b16 %v1797, %v1797
        %v1813 = vshrl.u32 %v1798, 16
        %v1815 = vrot.slane %v1813, 4
        %v1816 = vshll.u32 %v1798, 16
        %v1818 = vrot.slane %v1816, 5
        %v1819 = vor.u32 %v1815, %v1818
        %v1820 = vrot.slane %v1819, 4
        %v1822 = vshll.u32 %v1799, 16
        %v1824 = vrot.slane %v1822, 5
        %v1825 = vsel %vm514, %v1820, %v1824
        %v1827 = vshrl.u32 %v1800, 16
        %v1829 = vrot.slane %v1827, 4
        %v1830 = vshll.u32 %v1800, 16
        %v1832 = vrot.slane %v1830, 5
        %v1833 = vor.u32 %v1829, %v1832
        %v1834 = vrot.slane %v1833, 4
        %v1836 = vshll.u32 %v1801, 16
        %v1838 = vrot.slane %v1836, 5
        %v1839 = vsel %vm514, %v1834, %v1838
        %v1841 = vshrl.u32 %v1802, 16
        %v1843 = vrot.slane %v1841, 4
        %v1844 = vshll.u32 %v1802, 16
        %v1846 = vrot.slane %v1844, 5
        %v1847 = vor.u32 %v1843, %v1846
        %v1848 = vrot.slane %v1847, 4
        %v1850 = vshll.u32 %v1803, 16
        %v1852 = vrot.slane %v1850, 5
        %v1853 = vsel %vm514, %v1848, %v1852
        %v1855 = vshrl.u32 %v1804, 16
        %v1857 = vrot.slane %v1855, 4
        %v1858 = vshll.u32 %v1804, 16
        %v1860 = vrot.slane %v1858, 5
        %v1861 = vor.u32 %v1857, %v1860
        %v1862 = vrot.slane %v1861, 4
        %v1864 = vshll.u32 %v1805, 16
        %v1866 = vrot.slane %v1864, 5
        %v1867 = vsel %vm514, %v1862, %v1866
        %v1869 = vshrl.u32 %v1806, 16
        %v1871 = vrot.slane %v1869, 4
        %v1872 = vshll.u32 %v1806, 16
        %v1874 = vrot.slane %v1872, 5
        %v1875 = vor.u32 %v1871, %v1874
        %v1876 = vrot.slane %v1875, 4
        %v1878 = vshll.u32 %v1807, 16
        %v1880 = vrot.slane %v1878, 5
        %v1881 = vsel %vm514, %v1876, %v1880
        %v1883 = vshrl.u32 %v1808, 16
        %v1885 = vrot.slane %v1883, 4
        %v1886 = vshll.u32 %v1808, 16
        %v1888 = vrot.slane %v1886, 5
        %v1889 = vor.u32 %v1885, %v1888
        %v1890 = vrot.slane %v1889, 4
        %v1892 = vshll.u32 %v1809, 16
        %v1894 = vrot.slane %v1892, 5
        %v1895 = vsel %vm514, %v1890, %v1894
        %v1897 = vshrl.u32 %v1810, 16
        %v1899 = vrot.slane %v1897, 4
        %v1900 = vshll.u32 %v1810, 16
        %v1902 = vrot.slane %v1900, 5
        %v1903 = vor.u32 %v1899, %v1902
        %v1904 = vrot.slane %v1903, 4
        %v1906 = vshll.u32 %v1811, 16
        %v1908 = vrot.slane %v1906, 5
        %v1909 = vsel %vm514, %v1904, %v1908
        %v1910 = vrot.slane %v1798, 5
        %v1911 = vrot.slane %v1910, 4
        %v1912 = vrot.slane %v1799, 5
        %v1913 = vsel %vm629, %v1911, %v1912
        %v1914 = vrot.slane %v1800, 5
        %v1915 = vrot.slane %v1914, 4
        %v1916 = vrot.slane %v1801, 5
        %v1917 = vsel %vm629, %v1915, %v1916
        %v1918 = vrot.slane %v1802, 5
        %v1919 = vrot.slane %v1918, 4
        %v1920 = vrot.slane %v1803, 5
        %v1921 = vsel %vm629, %v1919, %v1920
        %v1922 = vrot.slane %v1804, 5
        %v1923 = vrot.slane %v1922, 4
        %v1924 = vrot.slane %v1805, 5
        %v1925 = vsel %vm629, %v1923, %v1924
        %v1926 = vrot.slane %v1806, 5
        %v1927 = vrot.slane %v1926, 4
        %v1928 = vrot.slane %v1807, 5
        %v1929 = vsel %vm629, %v1927, %v1928
        %v1930 = vrot.slane %v1808, 5
        %v1931 = vrot.slane %v1930, 4
        %v1932 = vrot.slane %v1809, 5
        %v1933 = vsel %vm629, %v1931, %v1932
        %v1934 = vrot.slane %v1810, 5
        %v1935 = vrot.slane %v1934, 4
        %v1936 = vrot.slane %v1811, 5
        %v1937 = vsel %vm629, %v1935, %v1936
        %v1939 = vunpack.c.l.b16 %v1776
        %v1940 = vunpack.c.h.b16 %v1776
        %v1941 = vpack.c.b16 %v1939, %v1939
        %v1942 = vpack.c.b16 %v1940, %v1940
        %v1944 = vshrl.u32 %v1941, 16
        %v1946 = vrot.slane %v1944, 4
        %v1947 = vshll.u32 %v1941, 16
        %v1949 = vrot.slane %v1947, 5
        %v1950 = vor.u32 %v1946, %v1949
        %v1951 = vrot.slane %v1950, 4
        %v1953 = vshll.u32 %v1942, 16
        %v1955 = vrot.slane %v1953, 5
        %v1956 = vsel %vm514, %v1951, %v1955
        %v1957 = vrot.slane %v1941, 5
        %v1958 = vrot.slane %v1957, 4
        %v1959 = vrot.slane %v1942, 5
        %v1960 = vsel %vm629, %v1958, %v1959
        %v1961 = vpack.c.b16 %v1784, %v480
        %v1962 = vpack.c.b16 %v1788, %v1786
        %v1963 = vpack.c.b16 %v1792, %v1790
        %v1964 = vpack.c.b16 %v1796, %v1794
        %v1969 = vunpack.c.l.b16 %v1825
        %v1970 = vunpack.c.l.b16 %v1839
        %v1971 = vunpack.c.l.b16 %v1853
        %v1972 = vunpack.c.l.b16 %v1867
        %v1973 = vunpack.c.l.b16 %v1881
        %v1974 = vunpack.c.l.b16 %v1895
        %v1975 = vunpack.c.l.b16 %v1909
        %v1976 = vpack.c.b16 %v1969, %v693
        %v1977 = vpack.c.b16 %v1971, %v1970
        %v1978 = vpack.c.b16 %v1973, %v1972
        %v1979 = vpack.c.b16 %v1975, %v1974
        %v1984 = vunpack.c.l.b16 %v1913
        %v1985 = vunpack.c.l.b16 %v1917
        %v1986 = vunpack.c.l.b16 %v1921
        %v1987 = vunpack.c.l.b16 %v1925
        %v1988 = vunpack.c.l.b16 %v1929
        %v1989 = vunpack.c.l.b16 %v1933
        %v1990 = vunpack.c.l.b16 %v1937
        %v1991 = vpack.c.b16 %v1984, %v709
        %v1992 = vpack.c.b16 %v1986, %v1985
        %v1993 = vpack.c.b16 %v1988, %v1987
        %v1994 = vpack.c.b16 %v1990, %v1989
        %v1999 = vpack.c.b16 %v1786, %v1784
        %v2000 = vpack.c.b16 %v1790, %v1788
        %v2001 = vpack.c.b16 %v1794, %v1792
        %v2002 = vpack.c.b16 %v1939, %v1796
        %v2007 = vunpack.c.l.b16 %v1956
        %v2008 = vpack.c.b16 %v1970, %v1969
        %v2009 = vpack.c.b16 %v1972, %v1971
        %v2010 = vpack.c.b16 %v1974, %v1973
        %v2011 = vpack.c.b16 %v2007, %v1975
        %v2016 = vunpack.c.l.b16 %v1960
        %v2017 = vpack.c.b16 %v1985, %v1984
        %v2018 = vpack.c.b16 %v1987, %v1986
        %v2019 = vpack.c.b16 %v1989, %v1988
        %v2020 = vpack.c.b16 %v2016, %v1990
        %v2025 = vpack.c.b16 %v480, %v1939
        %v2027 = vpack.c.b16 %v693, %v2007
        %v2029 = vpack.c.b16 %v709, %v2016
        %v2031 = vld [vmem:[%s3] sm:$0xf]
        %v2032 = vld [vmem:[%s3 + $0x4] sm:$0xf]
        %v2033 = vld [vmem:[%s3 + $0x8] sm:$0xf]
        %v2034 = vld [vmem:[%s3 + $0xc] sm:$0xf]
        %v2035 = vld [vmem:[%s3 + $0x10] sm:$0xf]
        %v2036 = vld [vmem:[%s3 + $0x14] sm:$0xf]
        %v2037 = vld [vmem:[%s3 + $0x18] sm:$0xf]
        %v2038 = vld [vmem:[%s3 + $0x1c] sm:$0xf]
        %v2039 = vld [vmem:[%s3 + $0x20] sm:$0xf]
        %v2040 = vld [vmem:[%s3 + $0x24] sm:$0xf]
        %v2041 = vld [vmem:[%s3 + $0x28] sm:$0xf]
        %v2042 = vld [vmem:[%s3 + $0x2c] sm:$0xf]
        %v2043 = vld [vmem:[%s3 + $0x30] sm:$0xf]
        %v2044 = vld [vmem:[%s3 + $0x34] sm:$0xf]
        %v2045 = vld [vmem:[%s3 + $0x38] sm:$0xf]
        %v2046 = vld [vmem:[%s3 + $0x3c] sm:$0xf]
        %v2047 = vld [vmem:[%s3 + $0x40] sm:$0xf]
        %v2048 = vld [vmem:[%s3 + $0x44] sm:$0xf]
        %v2049 = vld [vmem:[%s3 + $0x48] sm:$0xf]
        %v2050 = vld [vmem:[%s3 + $0x4c] sm:$0xf]
        %v2051 = vld [vmem:[%s3 + $0x50] sm:$0xf]
        %v2052 = vld [vmem:[%s3 + $0x54] sm:$0xf]
        %v2053 = vld [vmem:[%s3 + $0x58] sm:$0xf]
        %v2054 = vld [vmem:[%s3 + $0x5c] sm:$0xf]
        %v2055 = vld [vmem:[%s3 + $0x60] sm:$0xf]
        %v2056 = vld [vmem:[%s3 + $0x64] sm:$0xf]
        %v2057 = vld [vmem:[%s3 + $0x68] sm:$0xf]
        %v2058 = vld [vmem:[%s3 + $0x6c] sm:$0xf]
        %v2059 = vld [vmem:[%s3 + $0x70] sm:$0xf]
        %v2060 = vld [vmem:[%s3 + $0x74] sm:$0xf]
        %v2061 = vld [vmem:[%s3 + $0x78] sm:$0xf]
        %v2062 = vld [vmem:[%s3 + $0x7c] sm:$0xf]
        %v2063 = vld [vmem:[%s3 + $0x80] sm:$0xf]
        %v2064 = vld [vmem:[%s3 + $0x84] sm:$0xf]
        %v2065 = vld [vmem:[%s3 + $0x88] sm:$0xf]
        %v2066 = vld [vmem:[%s3 + $0x8c] sm:$0xf]
        %v2067 = vld [vmem:[%s3 + $0x90] sm:$0xf]
        %v2068 = vld [vmem:[%s3 + $0x94] sm:$0xf]
        %v2069 = vld [vmem:[%s3 + $0x98] sm:$0xf]
        %v2070 = vld [vmem:[%s3 + $0x9c] sm:$0xf]
        %v2071 = vld [vmem:[%s3 + $0xa0] sm:$0xf]
        %v2072 = vld [vmem:[%s3 + $0xa4] sm:$0xf]
        %v2073 = vld [vmem:[%s3 + $0xa8] sm:$0xf]
        %v2074 = vld [vmem:[%s3 + $0xac] sm:$0xf]
        %v2075 = vld [vmem:[%s3 + $0xb0] sm:$0xf]
        %v2076 = vld [vmem:[%s3 + $0xb4] sm:$0xf]
        %v2077 = vld [vmem:[%s3 + $0xb8] sm:$0xf]
        %v2078 = vld [vmem:[%s3 + $0xbc] sm:$0xf]
        %v2079 = vld [vmem:[%s3 + $0xc0] sm:$0xf]
        %v2080 = vld [vmem:[%s3 + $0xc4] sm:$0xf]
        %v2081 = vld [vmem:[%s3 + $0xc8] sm:$0xf]
        %v2082 = vld [vmem:[%s3 + $0xcc] sm:$0xf]
        %v2083 = vld [vmem:[%s3 + $0xd0] sm:$0xf]
        %v2084 = vld [vmem:[%s3 + $0xd4] sm:$0xf]
        %v2085 = vld [vmem:[%s3 + $0xd8] sm:$0xf]
        %v2086 = vld [vmem:[%s3 + $0xdc] sm:$0xf]
        %v2087 = vld [vmem:[%s3 + $0xe0] sm:$0xf]
        %v2088 = vld [vmem:[%s3 + $0xe4] sm:$0xf]
        %v2089 = vld [vmem:[%s3 + $0xe8] sm:$0xf]
        %v2090 = vld [vmem:[%s3 + $0xec] sm:$0xf]
        %v2091 = vld [vmem:[%s3 + $0xf0] sm:$0xf]
        %v2092 = vld [vmem:[%s3 + $0xf4] sm:$0xf]
        %v2093 = vld [vmem:[%s3 + $0xf8] sm:$0xf]
        %v2094 = vld [vmem:[%s3 + $0xfc] sm:$0xf]
        %v2095 = vld [vmem:[%s3 + $0x100] sm:$0xf]
        %v2096 = vld [vmem:[%s3 + $0x104] sm:$0xf]
        %v2097 = vld [vmem:[%s3 + $0x108] sm:$0xf]
        %v2098 = vld [vmem:[%s3 + $0x10c] sm:$0xf]
        %v2099 = vld [vmem:[%s3 + $0x110] sm:$0xf]
        %v2100 = vld [vmem:[%s3 + $0x114] sm:$0xf]
        %v2101 = vld [vmem:[%s3 + $0x118] sm:$0xf]
        %v2102 = vld [vmem:[%s3 + $0x11c] sm:$0xf]
        %v2103 = vld [vmem:[%s3 + $0x120] sm:$0xf]
        %v2104 = vld [vmem:[%s3 + $0x124] sm:$0xf]
        %v2105 = vld [vmem:[%s3 + $0x128] sm:$0xf]
        %v2106 = vld [vmem:[%s3 + $0x12c] sm:$0xf]
        %v2107 = vld [vmem:[%s3 + $0x130] sm:$0xf]
        %v2108 = vld [vmem:[%s3 + $0x134] sm:$0xf]
        %v2109 = vld [vmem:[%s3 + $0x138] sm:$0xf]
        %v2110 = vld [vmem:[%s3 + $0x13c] sm:$0xf]
        %v2111 = vld [vmem:[%s3 + $0x140] sm:$0xf]
        %v2112 = vld [vmem:[%s3 + $0x144] sm:$0xf]
        %v2113 = vld [vmem:[%s3 + $0x148] sm:$0xf]
        %v2114 = vld [vmem:[%s3 + $0x14c] sm:$0xf]
        %v2115 = vld [vmem:[%s3 + $0x150] sm:$0xf]
        %v2116 = vld [vmem:[%s3 + $0x154] sm:$0xf]
        %v2117 = vld [vmem:[%s3 + $0x158] sm:$0xf]
        %v2118 = vld [vmem:[%s3 + $0x15c] sm:$0xf]
        %v2119 = vld [vmem:[%s3 + $0x160] sm:$0xf]
        %v2120 = vld [vmem:[%s3 + $0x164] sm:$0xf]
        %v2121 = vld [vmem:[%s3 + $0x168] sm:$0xf]
        %v2122 = vld [vmem:[%s3 + $0x16c] sm:$0xf]
        %v2123 = vld [vmem:[%s3 + $0x170] sm:$0xf]
        %v2124 = vld [vmem:[%s3 + $0x174] sm:$0xf]
        %v2125 = vld [vmem:[%s3 + $0x178] sm:$0xf]
        %v2126 = vld [vmem:[%s3 + $0x17c] sm:$0xf]
        %v2127 = vld [vmem:[%s3 + $0x180] sm:$0xf]
        %v2128 = vld [vmem:[%s3 + $0x184] sm:$0xf]
        %v2129 = vld [vmem:[%s3 + $0x188] sm:$0xf]
        %v2130 = vld [vmem:[%s3 + $0x18c] sm:$0xf]
        %v2131 = vld [vmem:[%s3 + $0x190] sm:$0xf]
        %v2132 = vld [vmem:[%s3 + $0x194] sm:$0xf]
        %v2133 = vld [vmem:[%s3 + $0x198] sm:$0xf]
        %v2134 = vld [vmem:[%s3 + $0x19c] sm:$0xf]
        %v2135 = vld [vmem:[%s3 + $0x1a0] sm:$0xf]
        %v2136 = vld [vmem:[%s3 + $0x1a4] sm:$0xf]
        %v2137 = vld [vmem:[%s3 + $0x1a8] sm:$0xf]
        %v2138 = vld [vmem:[%s3 + $0x1ac] sm:$0xf]
        %v2139 = vld [vmem:[%s3 + $0x1b0] sm:$0xf]
        %v2140 = vld [vmem:[%s3 + $0x1b4] sm:$0xf]
        %v2141 = vld [vmem:[%s3 + $0x1b8] sm:$0xf]
        %v2142 = vld [vmem:[%s3 + $0x1bc] sm:$0xf]
        %v2143 = vld [vmem:[%s3 + $0x1c0] sm:$0xf]
        %v2144 = vld [vmem:[%s3 + $0x1c4] sm:$0xf]
        %v2145 = vld [vmem:[%s3 + $0x1c8] sm:$0xf]
        %v2146 = vld [vmem:[%s3 + $0x1cc] sm:$0xf]
        %v2147 = vld [vmem:[%s3 + $0x1d0] sm:$0xf]
        %v2148 = vld [vmem:[%s3 + $0x1d4] sm:$0xf]
        %v2149 = vld [vmem:[%s3 + $0x1d8] sm:$0xf]
        %v2150 = vld [vmem:[%s3 + $0x1dc] sm:$0xf]
        %v2151 = vld [vmem:[%s3 + $0x1e0] sm:$0xf]
        %v2152 = vld [vmem:[%s3 + $0x1e4] sm:$0xf]
        %v2153 = vld [vmem:[%s3 + $0x1e8] sm:$0xf]
        %v2154 = vld [vmem:[%s3 + $0x1ec] sm:$0xf]
        %v2155 = vld [vmem:[%s3 + $0x1f0] sm:$0xf]
        %v2156 = vld [vmem:[%s3 + $0x1f4] sm:$0xf]
        %v2157 = vld [vmem:[%s3 + $0x1f8] sm:$0xf]
        %v2158 = vld [vmem:[%s3 + $0x1fc] sm:$0xf]
        %v2159 = vld [vmem:[%s3 + $0x200] sm:$0xf]
        %v2160 = vld [vmem:[%s3 + $0x204] sm:$0xf]
        %v2161 = vld [vmem:[%s3 + $0x208] sm:$0xf]
        %v2162 = vld [vmem:[%s3 + $0x20c] sm:$0xf]
        %v2163 = vld [vmem:[%s3 + $0x210] sm:$0xf]
        %v2164 = vld [vmem:[%s3 + $0x214] sm:$0xf]
        %v2165 = vld [vmem:[%s3 + $0x218] sm:$0xf]
        %v2166 = vld [vmem:[%s3 + $0x21c] sm:$0xf]
        %v2167 = vld [vmem:[%s3 + $0x220] sm:$0xf]
        %v2168 = vld [vmem:[%s3 + $0x224] sm:$0xf]
        %v2169 = vld [vmem:[%s3 + $0x228] sm:$0xf]
        %v2170 = vld [vmem:[%s3 + $0x22c] sm:$0xf]
        %v2171 = vld [vmem:[%s3 + $0x230] sm:$0xf]
        %v2172 = vld [vmem:[%s3 + $0x234] sm:$0xf]
        %v2173 = vld [vmem:[%s3 + $0x238] sm:$0xf]
        %v2174 = vld [vmem:[%s3 + $0x23c] sm:$0xf]
        %v2175 = vld [vmem:[%s4] sm:$0x1]
        %v2177 = vlaneseq
        %v2178 = vshrl.u32 %v2177, 7
        %v2179 = vsub.s32 0, %v2178
        %v2180 = vrot.slane %v2175, %v2179
        %v2326 = vunpack.c.l.b16 %v2031
        %v2327 = vunpack.c.l.b16 %v2032
        %v2328 = vunpack.c.l.b16 %v2033
        %v2329 = vunpack.c.l.b16 %v2034
        %v2330 = vunpack.c.l.b16 %v2035
        %v2331 = vunpack.c.l.b16 %v2036
        %v2332 = vunpack.c.l.b16 %v2037
        %v2333 = vunpack.c.l.b16 %v2038
        %v2334 = vunpack.c.l.b16 %v2039
        %v2335 = vunpack.c.l.b16 %v2040
        %v2336 = vunpack.c.l.b16 %v2041
        %v2337 = vunpack.c.l.b16 %v2042
        %v2338 = vunpack.c.l.b16 %v2043
        %v2339 = vunpack.c.l.b16 %v2044
        %v2340 = vunpack.c.l.b16 %v2045
        %v2341 = vunpack.c.l.b16 %v2046
        %v2342 = vunpack.c.l.b16 %v2047
        %v2343 = vunpack.c.l.b16 %v2048
        %v2344 = vunpack.c.l.b16 %v2049
        %v2345 = vunpack.c.l.b16 %v2050
        %v2346 = vunpack.c.l.b16 %v2051
        %v2347 = vunpack.c.l.b16 %v2052
        %v2348 = vunpack.c.l.b16 %v2053
        %v2349 = vunpack.c.l.b16 %v2054
        %v2350 = vunpack.c.l.b16 %v2055
        %v2351 = vunpack.c.l.b16 %v2056
        %v2352 = vunpack.c.l.b16 %v2057
        %v2353 = vunpack.c.l.b16 %v2058
        %v2354 = vunpack.c.l.b16 %v2059
        %v2355 = vunpack.c.l.b16 %v2060
        %v2356 = vunpack.c.l.b16 %v2061
        %v2357 = vunpack.c.l.b16 %v2062
        %v2358 = vunpack.c.l.b16 %v2063
        %v2359 = vunpack.c.l.b16 %v2064
        %v2360 = vunpack.c.l.b16 %v2065
        %v2361 = vunpack.c.l.b16 %v2066
        %v2362 = vunpack.c.l.b16 %v2067
        %v2363 = vunpack.c.l.b16 %v2068
        %v2364 = vunpack.c.l.b16 %v2069
        %v2365 = vunpack.c.l.b16 %v2070
        %v2366 = vunpack.c.l.b16 %v2071
        %v2367 = vunpack.c.l.b16 %v2072
        %v2368 = vunpack.c.l.b16 %v2073
        %v2369 = vunpack.c.l.b16 %v2074
        %v2370 = vunpack.c.l.b16 %v2075
        %v2371 = vunpack.c.l.b16 %v2076
        %v2372 = vunpack.c.l.b16 %v2077
        %v2373 = vunpack.c.l.b16 %v2078
        %v2374 = vunpack.c.l.b16 %v2079
        %v2375 = vunpack.c.l.b16 %v2080
        %v2376 = vunpack.c.l.b16 %v2081
        %v2377 = vunpack.c.l.b16 %v2082
        %v2378 = vunpack.c.l.b16 %v2083
        %v2379 = vunpack.c.l.b16 %v2084
        %v2380 = vunpack.c.l.b16 %v2085
        %v2381 = vunpack.c.l.b16 %v2086
        %v2382 = vunpack.c.l.b16 %v2087
        %v2383 = vunpack.c.l.b16 %v2088
        %v2384 = vunpack.c.l.b16 %v2089
        %v2385 = vunpack.c.l.b16 %v2090
        %v2386 = vunpack.c.l.b16 %v2091
        %v2387 = vunpack.c.l.b16 %v2092
        %v2388 = vunpack.c.l.b16 %v2093
        %v2389 = vunpack.c.l.b16 %v2094
        %v2390 = vunpack.c.l.b16 %v2095
        %v2391 = vunpack.c.l.b16 %v2096
        %v2392 = vunpack.c.l.b16 %v2097
        %v2393 = vunpack.c.l.b16 %v2098
        %v2394 = vunpack.c.l.b16 %v2099
        %v2395 = vunpack.c.l.b16 %v2100
        %v2396 = vunpack.c.l.b16 %v2101
        %v2397 = vunpack.c.l.b16 %v2102
        %v2398 = vunpack.c.l.b16 %v2103
        %v2399 = vunpack.c.l.b16 %v2104
        %v2400 = vunpack.c.l.b16 %v2105
        %v2401 = vunpack.c.l.b16 %v2106
        %v2402 = vunpack.c.l.b16 %v2107
        %v2403 = vunpack.c.l.b16 %v2108
        %v2404 = vunpack.c.l.b16 %v2109
        %v2405 = vunpack.c.l.b16 %v2110
        %v2406 = vunpack.c.l.b16 %v2111
        %v2407 = vunpack.c.l.b16 %v2112
        %v2408 = vunpack.c.l.b16 %v2113
        %v2409 = vunpack.c.l.b16 %v2114
        %v2410 = vunpack.c.l.b16 %v2115
        %v2411 = vunpack.c.l.b16 %v2116
        %v2412 = vunpack.c.l.b16 %v2117
        %v2413 = vunpack.c.l.b16 %v2118
        %v2414 = vunpack.c.l.b16 %v2119
        %v2415 = vunpack.c.l.b16 %v2120
        %v2416 = vunpack.c.l.b16 %v2121
        %v2417 = vunpack.c.l.b16 %v2122
        %v2418 = vunpack.c.l.b16 %v2123
        %v2419 = vunpack.c.l.b16 %v2124
        %v2420 = vunpack.c.l.b16 %v2125
        %v2421 = vunpack.c.l.b16 %v2126
        %v2422 = vunpack.c.l.b16 %v2127
        %v2423 = vunpack.c.l.b16 %v2128
        %v2424 = vunpack.c.l.b16 %v2129
        %v2425 = vunpack.c.l.b16 %v2130
        %v2426 = vunpack.c.l.b16 %v2131
        %v2427 = vunpack.c.l.b16 %v2132
        %v2428 = vunpack.c.l.b16 %v2133
        %v2429 = vunpack.c.l.b16 %v2134
        %v2430 = vunpack.c.l.b16 %v2135
        %v2431 = vunpack.c.l.b16 %v2136
        %v2432 = vunpack.c.l.b16 %v2137
        %v2433 = vunpack.c.l.b16 %v2138
        %v2434 = vunpack.c.l.b16 %v2139
        %v2435 = vunpack.c.l.b16 %v2140
        %v2436 = vunpack.c.l.b16 %v2141
        %v2437 = vunpack.c.l.b16 %v2142
        %v2438 = vunpack.c.l.b16 %v2143
        %v2439 = vunpack.c.l.b16 %v2144
        %v2440 = vunpack.c.l.b16 %v2145
        %v2441 = vunpack.c.l.b16 %v2146
        %v2442 = vunpack.c.l.b16 %v2147
        %v2443 = vunpack.c.l.b16 %v2148
        %v2444 = vunpack.c.l.b16 %v2149
        %v2445 = vunpack.c.l.b16 %v2150
        %v2446 = vunpack.c.l.b16 %v2151
        %v2447 = vunpack.c.l.b16 %v2152
        %v2448 = vunpack.c.l.b16 %v2153
        %v2449 = vunpack.c.l.b16 %v2154
        %v2450 = vunpack.c.l.b16 %v2155
        %v2451 = vunpack.c.l.b16 %v2156
        %v2452 = vunpack.c.l.b16 %v2157
        %v2453 = vunpack.c.l.b16 %v2158
        %v2454 = vunpack.c.l.b16 %v2159
        %v2455 = vunpack.c.l.b16 %v2160
        %v2456 = vunpack.c.l.b16 %v2161
        %v2457 = vunpack.c.l.b16 %v2162
        %v2458 = vunpack.c.l.b16 %v2163
        %v2459 = vunpack.c.l.b16 %v2164
        %v2460 = vunpack.c.l.b16 %v2165
        %v2461 = vunpack.c.l.b16 %v2166
        %v2462 = vunpack.c.l.b16 %v2167
        %v2463 = vunpack.c.l.b16 %v2168
        %v2464 = vunpack.c.l.b16 %v2169
        %v2465 = vunpack.c.l.b16 %v2170
        %v2466 = vunpack.c.l.b16 %v2171
        %v2467 = vunpack.c.l.b16 %v2172
        %v2468 = vunpack.c.l.b16 %v2173
        %v2469 = vunpack.c.l.b16 %v2174
        %v2470 = vpack.c.b16 %v2327, %v2326
        %v2471 = vpack.c.b16 %v2329, %v2328
        %v2472 = vpack.c.b16 %v2331, %v2330
        %v2473 = vpack.c.b16 %v2333, %v2332
        %v2474 = vpack.c.b16 %v2335, %v2334
        %v2475 = vpack.c.b16 %v2337, %v2336
        %v2476 = vpack.c.b16 %v2339, %v2338
        %v2477 = vpack.c.b16 %v2341, %v2340
        %v2478 = vpack.c.b16 %v2343, %v2342
        %v2479 = vpack.c.b16 %v2345, %v2344
        %v2480 = vpack.c.b16 %v2347, %v2346
        %v2481 = vpack.c.b16 %v2349, %v2348
        %v2482 = vpack.c.b16 %v2351, %v2350
        %v2483 = vpack.c.b16 %v2353, %v2352
        %v2484 = vpack.c.b16 %v2355, %v2354
        %v2485 = vpack.c.b16 %v2357, %v2356
        %v2486 = vpack.c.b16 %v2359, %v2358
        %v2487 = vpack.c.b16 %v2361, %v2360
        %v2488 = vpack.c.b16 %v2363, %v2362
        %v2489 = vpack.c.b16 %v2365, %v2364
        %v2490 = vpack.c.b16 %v2367, %v2366
        %v2491 = vpack.c.b16 %v2369, %v2368
        %v2492 = vpack.c.b16 %v2371, %v2370
        %v2493 = vpack.c.b16 %v2373, %v2372
        %v2494 = vpack.c.b16 %v2375, %v2374
        %v2495 = vpack.c.b16 %v2377, %v2376
        %v2496 = vpack.c.b16 %v2379, %v2378
        %v2497 = vpack.c.b16 %v2381, %v2380
        %v2498 = vpack.c.b16 %v2383, %v2382
        %v2499 = vpack.c.b16 %v2385, %v2384
        %v2500 = vpack.c.b16 %v2387, %v2386
        %v2501 = vpack.c.b16 %v2389, %v2388
        %v2502 = vpack.c.b16 %v2391, %v2390
        %v2503 = vpack.c.b16 %v2393, %v2392
        %v2504 = vpack.c.b16 %v2395, %v2394
        %v2505 = vpack.c.b16 %v2397, %v2396
        %v2506 = vpack.c.b16 %v2399, %v2398
        %v2507 = vpack.c.b16 %v2401, %v2400
        %v2508 = vpack.c.b16 %v2403, %v2402
        %v2509 = vpack.c.b16 %v2405, %v2404
        %v2510 = vpack.c.b16 %v2407, %v2406
        %v2511 = vpack.c.b16 %v2409, %v2408
        %v2512 = vpack.c.b16 %v2411, %v2410
        %v2513 = vpack.c.b16 %v2413, %v2412
        %v2514 = vpack.c.b16 %v2415, %v2414
        %v2515 = vpack.c.b16 %v2417, %v2416
        %v2516 = vpack.c.b16 %v2419, %v2418
        %v2517 = vpack.c.b16 %v2421, %v2420
        %v2518 = vpack.c.b16 %v2423, %v2422
        %v2519 = vpack.c.b16 %v2425, %v2424
        %v2520 = vpack.c.b16 %v2427, %v2426
        %v2521 = vpack.c.b16 %v2429, %v2428
        %v2522 = vpack.c.b16 %v2431, %v2430
        %v2523 = vpack.c.b16 %v2433, %v2432
        %v2524 = vpack.c.b16 %v2435, %v2434
        %v2525 = vpack.c.b16 %v2437, %v2436
        %v2526 = vpack.c.b16 %v2439, %v2438
        %v2527 = vpack.c.b16 %v2441, %v2440
        %v2528 = vpack.c.b16 %v2443, %v2442
        %v2529 = vpack.c.b16 %v2445, %v2444
        %v2530 = vpack.c.b16 %v2447, %v2446
        %v2531 = vpack.c.b16 %v2449, %v2448
        %v2532 = vpack.c.b16 %v2451, %v2450
        %v2533 = vpack.c.b16 %v2453, %v2452
        %v2534 = vpack.c.b16 %v2455, %v2454
        %v2535 = vpack.c.b16 %v2457, %v2456
        %v2536 = vpack.c.b16 %v2459, %v2458
        %v2537 = vpack.c.b16 %v2461, %v2460
        %v2538 = vpack.c.b16 %v2463, %v2462
        %v2539 = vpack.c.b16 %v2465, %v2464
        %v2540 = vpack.c.b16 %v2467, %v2466
        %v2541 = vpack.c.b16 %v2469, %v2468
        %2614 = vmatprep.subr.bf16.mxu0 0
        %2615 = vmatpush1.bf16.msra.mxu0 %v2477
        %2616 = vmatprep.subr.bf16.mxu0 0
        %2617 = vmatpush1.bf16.msra.mxu0 %v2476
        %2618 = vmatprep.subr.bf16.mxu0 0
        %2619 = vmatpush1.bf16.msra.mxu0 %v2475
        %2620 = vmatprep.subr.bf16.mxu0 0
        %2621 = vmatpush1.bf16.msra.mxu0 %v2474
        %2622 = vmatprep.subr.bf16.mxu0 0
        %2623 = vmatpush1.bf16.msra.mxu0 %v2473
        %2624 = vmatprep.subr.bf16.mxu0 0
        %2625 = vmatpush1.bf16.msra.mxu0 %v2472
        %2626 = vmatprep.subr.bf16.mxu0 0
        %2627 = vmatpush1.bf16.msra.mxu0 %v2471
        %2628 = vmatprep.subr.bf16.mxu0 0
        %2629 = vmatpush1.bf16.msra.mxu0 %v2470
        %2630 = vmatprep.subr.bf16.mxu0 0
        %2631 = vmatpush2.bf16.msra.mxu0 %v2485
        %2632 = vmatprep.subr.bf16.mxu0 0
        %2633 = vmatpush2.bf16.msra.mxu0 %v2484
        %2634 = vmatprep.subr.bf16.mxu0 0
        %2635 = vmatpush2.bf16.msra.mxu0 %v2483
        %2636 = vmatprep.subr.bf16.mxu0 0
        %2637 = vmatpush2.bf16.msra.mxu0 %v2482
        %2638 = vmatprep.subr.bf16.mxu0 0
        %2639 = vmatpush2.bf16.msra.mxu0 %v2481
        %2640 = vmatprep.subr.bf16.mxu0 0
        %2641 = vmatpush2.bf16.msra.mxu0 %v2480
        %2642 = vmatprep.subr.bf16.mxu0 0
        %2643 = vmatpush2.bf16.msra.mxu0 %v2479
        %2644 = vmatprep.subr.bf16.mxu0 0
        %2645 = vmatpush2.bf16.msra.mxu0 %v2478
        %2646 = vmatprep.mubr.bf16.mxu0 %v1976
        %2647 = vmatmul.mubr.bf16.gmra.mxu0 %v1961
        %v2648 = vpop.f32.mrf.mxu0
        %v2649 = vadd.f32 %v2180, %v2648
        %v2650 = vpop.f32.mrf.mxu0
        %v2651 = vpop.f32.mrf.mxu0
        %v2652 = vadd.f32 %v2180, %v2651
        %v2653 = vpop.f32.mrf.mxu0
        %2654 = vmatprep.mubr.bf16.mxu0 %v1977
        %2655 = vmatmul.mubr.bf16.gmra.mxu0 %v1962
        %v2656 = vpop.f32.mrf.mxu0
        %v2657 = vadd.f32 %v2180, %v2656
        %v2658 = vpop.f32.mrf.mxu0
        %v2659 = vpop.f32.mrf.mxu0
        %v2660 = vadd.f32 %v2180, %v2659
        %v2661 = vpop.f32.mrf.mxu0
        %2662 = vmatprep.mubr.bf16.mxu0 %v1978
        %2663 = vmatmul.mubr.bf16.gmra.mxu0 %v1963
        %v2664 = vpop.f32.mrf.mxu0
        %v2665 = vadd.f32 %v2180, %v2664
        %v2666 = vpop.f32.mrf.mxu0
        %v2667 = vpop.f32.mrf.mxu0
        %v2668 = vadd.f32 %v2180, %v2667
        %v2669 = vpop.f32.mrf.mxu0
        %2670 = vmatprep.mubr.bf16.mxu0 %v1979
        %2671 = vmatmul.mubr.bf16.gmra.mxu0 %v1964
        %v2672 = vpop.f32.mrf.mxu0
        %v2673 = vadd.f32 %v2180, %v2672
        %v2674 = vpop.f32.mrf.mxu0
        %v2675 = vpop.f32.mrf.mxu0
        %v2676 = vadd.f32 %v2180, %v2675
        %v2677 = vpop.f32.mrf.mxu0
        %2678 = vdwg.mxu0
        %2679 = vmatprep.subr.bf16.mxu0 0
        %2680 = vmatpush1.bf16.msra.mxu0 %v2493
        %2681 = vmatprep.subr.bf16.mxu0 0
        %2682 = vmatpush1.bf16.msra.mxu0 %v2492
        %2683 = vmatprep.subr.bf16.mxu0 0
        %2684 = vmatpush1.bf16.msra.mxu0 %v2491
        %2685 = vmatprep.subr.bf16.mxu0 0
        %2686 = vmatpush1.bf16.msra.mxu0 %v2490
        %2687 = vmatprep.subr.bf16.mxu0 0
        %2688 = vmatpush1.bf16.msra.mxu0 %v2489
        %2689 = vmatprep.subr.bf16.mxu0 0
        %2690 = vmatpush1.bf16.msra.mxu0 %v2488
        %2691 = vmatprep.subr.bf16.mxu0 0
        %2692 = vmatpush1.bf16.msra.mxu0 %v2487
        %2693 = vmatprep.subr.bf16.mxu0 0
        %2694 = vmatpush1.bf16.msra.mxu0 %v2486
        %2695 = vmatprep.subr.bf16.mxu0 0
        %2696 = vmatpush2.bf16.msra.mxu0 %v2501
        %2697 = vmatprep.subr.bf16.mxu0 0
        %2698 = vmatpush2.bf16.msra.mxu0 %v2500
        %2699 = vmatprep.subr.bf16.mxu0 0
        %2700 = vmatpush2.bf16.msra.mxu0 %v2499
        %2701 = vmatprep.subr.bf16.mxu0 0
        %2702 = vmatpush2.bf16.msra.mxu0 %v2498
        %2703 = vmatprep.subr.bf16.mxu0 0
        %2704 = vmatpush2.bf16.msra.mxu0 %v2497
        %2705 = vmatprep.subr.bf16.mxu0 0
        %2706 = vmatpush2.bf16.msra.mxu0 %v2496
        %2707 = vmatprep.subr.bf16.mxu0 0
        %2708 = vmatpush2.bf16.msra.mxu0 %v2495
        %2709 = vmatprep.subr.bf16.mxu0 0
        %2710 = vmatpush2.bf16.msra.mxu0 %v2494
        %2711 = vmatprep.mubr.bf16.mxu0 %v1999
        %2712 = vmatmul.mubr.bf16.gmra.mxu0 %v1991
        %v2713 = vpop.f32.mrf.mxu0
        %v2714 = vadd.f32 %v2649, %v2713
        %v2715 = vpop.f32.mrf.mxu0
        %v2716 = vpop.f32.mrf.mxu0
        %v2717 = vadd.f32 %v2652, %v2716
        %v2718 = vpop.f32.mrf.mxu0
        %2719 = vmatprep.mubr.bf16.mxu0 %v2000
        %2720 = vmatmul.mubr.bf16.gmra.mxu0 %v1992
        %v2721 = vpop.f32.mrf.mxu0
        %v2722 = vadd.f32 %v2657, %v2721
        %v2723 = vpop.f32.mrf.mxu0
        %v2724 = vpop.f32.mrf.mxu0
        %v2725 = vadd.f32 %v2660, %v2724
        %v2726 = vpop.f32.mrf.mxu0
        %2727 = vmatprep.mubr.bf16.mxu0 %v2001
        %2728 = vmatmul.mubr.bf16.gmra.mxu0 %v1993
        %v2729 = vpop.f32.mrf.mxu0
        %v2730 = vadd.f32 %v2665, %v2729
        %v2731 = vpop.f32.mrf.mxu0
        %v2732 = vpop.f32.mrf.mxu0
        %v2733 = vadd.f32 %v2668, %v2732
        %v2734 = vpop.f32.mrf.mxu0
        %2735 = vmatprep.mubr.bf16.mxu0 %v2002
        %2736 = vmatmul.mubr.bf16.gmra.mxu0 %v1994
        %v2737 = vpop.f32.mrf.mxu0
        %v2738 = vadd.f32 %v2673, %v2737
        %v2739 = vpop.f32.mrf.mxu0
        %v2740 = vpop.f32.mrf.mxu0
        %v2741 = vadd.f32 %v2676, %v2740
        %v2742 = vpop.f32.mrf.mxu0
        %2743 = vdwg.mxu0
        %2744 = vmatprep.subr.bf16.mxu0 0
        %2745 = vmatpush1.bf16.msra.mxu0 %v2509
        %2746 = vmatprep.subr.bf16.mxu0 0
        %2747 = vmatpush1.bf16.msra.mxu0 %v2508
        %2748 = vmatprep.subr.bf16.mxu0 0
        %2749 = vmatpush1.bf16.msra.mxu0 %v2507
        %2750 = vmatprep.subr.bf16.mxu0 0
        %2751 = vmatpush1.bf16.msra.mxu0 %v2506
        %2752 = vmatprep.subr.bf16.mxu0 0
        %2753 = vmatpush1.bf16.msra.mxu0 %v2505
        %2754 = vmatprep.subr.bf16.mxu0 0
        %2755 = vmatpush1.bf16.msra.mxu0 %v2504
        %2756 = vmatprep.subr.bf16.mxu0 0
        %2757 = vmatpush1.bf16.msra.mxu0 %v2503
        %2758 = vmatprep.subr.bf16.mxu0 0
        %2759 = vmatpush1.bf16.msra.mxu0 %v2502
        %2760 = vmatprep.subr.bf16.mxu0 0
        %2761 = vmatpush2.bf16.msra.mxu0 %v2517
        %2762 = vmatprep.subr.bf16.mxu0 0
        %2763 = vmatpush2.bf16.msra.mxu0 %v2516
        %2764 = vmatprep.subr.bf16.mxu0 0
        %2765 = vmatpush2.bf16.msra.mxu0 %v2515
        %2766 = vmatprep.subr.bf16.mxu0 0
        %2767 = vmatpush2.bf16.msra.mxu0 %v2514
        %2768 = vmatprep.subr.bf16.mxu0 0
        %2769 = vmatpush2.bf16.msra.mxu0 %v2513
        %2770 = vmatprep.subr.bf16.mxu0 0
        %2771 = vmatpush2.bf16.msra.mxu0 %v2512
        %2772 = vmatprep.subr.bf16.mxu0 0
        %2773 = vmatpush2.bf16.msra.mxu0 %v2511
        %2774 = vmatprep.subr.bf16.mxu0 0
        %2775 = vmatpush2.bf16.msra.mxu0 %v2510
        %2776 = vmatprep.mubr.bf16.mxu0 %v2017
        %2777 = vmatmul.mubr.bf16.gmra.mxu0 %v2008
        %v2778 = vpop.f32.mrf.mxu0
        %v2779 = vadd.f32 %v2714, %v2778
        %v2780 = vpop.f32.mrf.mxu0
        %v2781 = vpop.f32.mrf.mxu0
        %v2782 = vadd.f32 %v2717, %v2781
        %v2783 = vpop.f32.mrf.mxu0
        %2784 = vmatprep.mubr.bf16.mxu0 %v2018
        %2785 = vmatmul.mubr.bf16.gmra.mxu0 %v2009
        %v2786 = vpop.f32.mrf.mxu0
        %v2787 = vadd.f32 %v2722, %v2786
        %v2788 = vpop.f32.mrf.mxu0
        %v2789 = vpop.f32.mrf.mxu0
        %v2790 = vadd.f32 %v2725, %v2789
        %v2791 = vpop.f32.mrf.mxu0
        %2792 = vmatprep.mubr.bf16.mxu0 %v2019
        %2793 = vmatmul.mubr.bf16.gmra.mxu0 %v2010
        %v2794 = vpop.f32.mrf.mxu0
        %v2795 = vadd.f32 %v2730, %v2794
        %v2796 = vpop.f32.mrf.mxu0
        %v2797 = vpop.f32.mrf.mxu0
        %v2798 = vadd.f32 %v2733, %v2797
        %v2799 = vpop.f32.mrf.mxu0
        %2800 = vmatprep.mubr.bf16.mxu0 %v2020
        %2801 = vmatmul.mubr.bf16.gmra.mxu0 %v2011
        %v2802 = vpop.f32.mrf.mxu0
        %v2803 = vadd.f32 %v2738, %v2802
        %v2804 = vpop.f32.mrf.mxu0
        %v2805 = vpop.f32.mrf.mxu0
        %v2806 = vadd.f32 %v2741, %v2805
        %v2807 = vpop.f32.mrf.mxu0
        %2808 = vdwg.mxu0
        %2809 = vmatprep.subr.bf16.mxu0 0
        %2810 = vmatpush1.bf16.msra.mxu0 %v2525
        %2811 = vmatprep.subr.bf16.mxu0 0
        %2812 = vmatpush1.bf16.msra.mxu0 %v2524
        %2813 = vmatprep.subr.bf16.mxu0 0
        %2814 = vmatpush1.bf16.msra.mxu0 %v2523
        %2815 = vmatprep.subr.bf16.mxu0 0
        %2816 = vmatpush1.bf16.msra.mxu0 %v2522
        %2817 = vmatprep.subr.bf16.mxu0 0
        %2818 = vmatpush1.bf16.msra.mxu0 %v2521
        %2819 = vmatprep.subr.bf16.mxu0 0
        %2820 = vmatpush1.bf16.msra.mxu0 %v2520
        %2821 = vmatprep.subr.bf16.mxu0 0
        %2822 = vmatpush1.bf16.msra.mxu0 %v2519
        %2823 = vmatprep.subr.bf16.mxu0 0
        %2824 = vmatpush1.bf16.msra.mxu0 %v2518
        %2825 = vmatprep.subr.bf16.mxu0 0
        %2826 = vmatpush2.bf16.msra.mxu0 %v2533
        %2827 = vmatprep.subr.bf16.mxu0 0
        %2828 = vmatpush2.bf16.msra.mxu0 %v2532
        %2829 = vmatprep.subr.bf16.mxu0 0
        %2830 = vmatpush2.bf16.msra.mxu0 %v2531
        %2831 = vmatprep.subr.bf16.mxu0 0
        %2832 = vmatpush2.bf16.msra.mxu0 %v2530
        %2833 = vmatprep.subr.bf16.mxu0 0
        %2834 = vmatpush2.bf16.msra.mxu0 %v2529
        %2835 = vmatprep.subr.bf16.mxu0 0
        %2836 = vmatpush2.bf16.msra.mxu0 %v2528
        %2837 = vmatprep.subr.bf16.mxu0 0
        %2838 = vmatpush2.bf16.msra.mxu0 %v2527
        %2839 = vmatprep.subr.bf16.mxu0 0
        %2840 = vmatpush2.bf16.msra.mxu0 %v2526
        %2841 = vmatprep.mubr.bf16.mxu0 %v1977
        %2842 = vmatmul.mubr.bf16.gmra.mxu0 %v1962
        %v2843 = vpop.f32.mrf.mxu0
        %v2844 = vadd.f32 %v2779, %v2843
        %v2845 = vpop.f32.mrf.mxu0
        %v2846 = vpop.f32.mrf.mxu0
        %v2847 = vadd.f32 %v2782, %v2846
        %v2848 = vpop.f32.mrf.mxu0
        %2849 = vmatprep.mubr.bf16.mxu0 %v1978
        %2850 = vmatmul.mubr.bf16.gmra.mxu0 %v1963
        %v2851 = vpop.f32.mrf.mxu0
        %v2852 = vadd.f32 %v2787, %v2851
        %v2853 = vpop.f32.mrf.mxu0
        %v2854 = vpop.f32.mrf.mxu0
        %v2855 = vadd.f32 %v2790, %v2854
        %v2856 = vpop.f32.mrf.mxu0
        %2857 = vmatprep.mubr.bf16.mxu0 %v1979
        %2858 = vmatmul.mubr.bf16.gmra.mxu0 %v1964
        %v2859 = vpop.f32.mrf.mxu0
        %v2860 = vadd.f32 %v2795, %v2859
        %v2861 = vpop.f32.mrf.mxu0
        %v2862 = vpop.f32.mrf.mxu0
        %v2863 = vadd.f32 %v2798, %v2862
        %v2864 = vpop.f32.mrf.mxu0
        %2865 = vmatprep.mubr.bf16.mxu0 %v2027
        %2866 = vmatmul.mubr.bf16.gmra.mxu0 %v2025
        %v2867 = vpop.f32.mrf.mxu0
        %v2868 = vadd.f32 %v2803, %v2867
        %v2869 = vpop.f32.mrf.mxu0
        %v2870 = vpop.f32.mrf.mxu0
        %v2871 = vadd.f32 %v2806, %v2870
        %v2872 = vpop.f32.mrf.mxu0
        %2873 = vdwg.mxu0
        %2874 = vmatprep.subr.bf16.mxu0 0
        %2875 = vmatpush1.bf16.msra.mxu0 %v2541
        %2876 = vmatprep.subr.bf16.mxu0 0
        %2877 = vmatpush1.bf16.msra.mxu0 %v2540
        %2878 = vmatprep.subr.bf16.mxu0 0
        %2879 = vmatpush1.bf16.msra.mxu0 %v2539
        %2880 = vmatprep.subr.bf16.mxu0 0
        %2881 = vmatpush1.bf16.msra.mxu0 %v2538
        %2882 = vmatprep.subr.bf16.mxu0 0
        %2883 = vmatpush1.bf16.msra.mxu0 %v2537
        %2884 = vmatprep.subr.bf16.mxu0 0
        %2885 = vmatpush1.bf16.msra.mxu0 %v2536
        %2886 = vmatprep.subr.bf16.mxu0 0
        %2887 = vmatpush1.bf16.msra.mxu0 %v2535
        %2888 = vmatprep.subr.bf16.mxu0 0
        %2889 = vmatpush1.bf16.msra.mxu0 %v2534
        %2890 = vmatprep.subr.bf16.mxu0 0
        %2891 = vmatpush2.bf16.msra.mxu0 0
        %2892 = vmatprep.subr.bf16.mxu0 0
        %2893 = vmatpush2.bf16.msra.mxu0 0
        %2894 = vmatprep.subr.bf16.mxu0 0
        %2895 = vmatpush2.bf16.msra.mxu0 0
        %2896 = vmatprep.subr.bf16.mxu0 0
        %2897 = vmatpush2.bf16.msra.mxu0 0
        %2898 = vmatprep.subr.bf16.mxu0 0
        %2899 = vmatpush2.bf16.msra.mxu0 0
        %2900 = vmatprep.subr.bf16.mxu0 0
        %2901 = vmatpush2.bf16.msra.mxu0 0
        %2902 = vmatprep.subr.bf16.mxu0 0
        %2903 = vmatpush2.bf16.msra.mxu0 0
        %2904 = vmatprep.subr.bf16.mxu0 0
        %2905 = vmatpush2.bf16.msra.mxu0 0
        %2906 = vmatprep.mubr.bf16.mxu0 0
        %2907 = vmatmul.mubr.bf16.gmra.mxu0 %v1992
        %v2908 = vpop.f32.mrf.mxu0
        %v2909 = vadd.f32 %v2844, %v2908
        %v2910 = vpop.f32.mrf.mxu0
        %v2911 = vpop.f32.mrf.mxu0
        %v2912 = vadd.f32 %v2847, %v2911
        %v2913 = vpop.f32.mrf.mxu0
        %2914 = vmatprep.mubr.bf16.mxu0 0
        %2915 = vmatmul.mubr.bf16.gmra.mxu0 %v1993
        %v2916 = vpop.f32.mrf.mxu0
        %v2917 = vadd.f32 %v2852, %v2916
        %v2918 = vpop.f32.mrf.mxu0
        %v2919 = vpop.f32.mrf.mxu0
        %v2920 = vadd.f32 %v2855, %v2919
        %v2921 = vpop.f32.mrf.mxu0
        %2922 = vmatprep.mubr.bf16.mxu0 0
        %2923 = vmatmul.mubr.bf16.gmra.mxu0 %v1994
        %v2924 = vpop.f32.mrf.mxu0
        %v2925 = vadd.f32 %v2860, %v2924
        %v2926 = vpop.f32.mrf.mxu0
        %v2927 = vpop.f32.mrf.mxu0
        %v2928 = vadd.f32 %v2863, %v2927
        %v2929 = vpop.f32.mrf.mxu0
        %2930 = vmatprep.mubr.bf16.mxu0 0
        %2931 = vmatmul.mubr.bf16.gmra.mxu0 %v2029
        %v2932 = vpop.f32.mrf.mxu0
        %v2933 = vadd.f32 %v2868, %v2932
        %v2934 = vpop.f32.mrf.mxu0
        %v2935 = vpop.f32.mrf.mxu0
        %v2936 = vadd.f32 %v2871, %v2935
        %v2937 = vpop.f32.mrf.mxu0
        %2938 = vdwg.mxu0
        %v2939 = vadd.f32 %v2909, %v2912
        %v2940 = vadd.f32 %v2939, %v2917
        %v2941 = vadd.f32 %v2940, %v2920
        %v2942 = vadd.f32 %v2941, %v2925
        %v2943 = vadd.f32 %v2942, %v2928
        %v2944 = vadd.f32 %v2943, %v2933
        %v2945 = vadd.f32 %v2944, %v2936
        %v2946 = vrot.slane %v2945, 4
        %v2947 = vadd.f32 %v2945, %v2946
        %v2948 = vrot.slane %v2947, 2
        %v2949 = vadd.f32 %v2947, %v2948
        %v2950 = vrot.slane %v2949, 1
        %v2951 = vadd.f32 %v2949, %v2950
        %v2952 = vmul.f32 %v2951, 0.015625
        %v2953 = vld [vmem:[%s5] sm:$0xf]
        %v2954 = vld [vmem:[%s5 + $0x4] sm:$0xf]
        %v2955 = vld [vmem:[%s5 + $0x8] sm:$0xf]
        %v2956 = vld [vmem:[%s5 + $0xc] sm:$0xf]
        %v2957 = vld [vmem:[%s5 + $0x10] sm:$0xf]
        %v2958 = vld [vmem:[%s5 + $0x14] sm:$0xf]
        %v2959 = vld [vmem:[%s5 + $0x18] sm:$0xf]
        %v2960 = vld [vmem:[%s5 + $0x1c] sm:$0xf]
        %v2961 = vld [vmem:[%s5 + $0x20] sm:$0xf]
        %v2962 = vld [vmem:[%s5 + $0x24] sm:$0xf]
        %v2963 = vld [vmem:[%s5 + $0x28] sm:$0xf]
        %v2964 = vld [vmem:[%s5 + $0x2c] sm:$0xf]
        %v2965 = vld [vmem:[%s5 + $0x30] sm:$0xf]
        %v2966 = vld [vmem:[%s5 + $0x34] sm:$0xf]
        %v2967 = vld [vmem:[%s5 + $0x38] sm:$0xf]
        %v2968 = vld [vmem:[%s5 + $0x3c] sm:$0xf]
        %v2969 = vunpack.c.l.bf16 %v2953
        %v2970 = vunpack.c.l.bf16 %v2954
        %v2971 = vunpack.c.l.bf16 %v2955
        %v2972 = vunpack.c.l.bf16 %v2956
        %v2973 = vunpack.c.l.bf16 %v2957
        %v2974 = vunpack.c.l.bf16 %v2958
        %v2975 = vunpack.c.l.bf16 %v2959
        %v2976 = vunpack.c.l.bf16 %v2960
        %v2977 = vunpack.c.l.bf16 %v2961
        %v2978 = vunpack.c.l.bf16 %v2962
        %v2979 = vunpack.c.l.bf16 %v2963
        %v2980 = vunpack.c.l.bf16 %v2964
        %v2981 = vunpack.c.l.bf16 %v2965
        %v2982 = vunpack.c.l.bf16 %v2966
        %v2983 = vunpack.c.l.bf16 %v2967
        %v2984 = vunpack.c.l.bf16 %v2968
        %v2985 = vld [vmem:[#allocation2] sm:$0x1]
        %2986 = vmatprep.subr.mxu0 0.0
        %2987 = vmatpush1.msra.mxu0 %v2984
        %2988 = vmatprep.subr.mxu0 0.0
        %2989 = vmatpush1.msra.mxu0 %v2983
        %2990 = vmatprep.subr.mxu0 0.0
        %2991 = vmatpush1.msra.mxu0 %v2982
        %2992 = vmatprep.subr.mxu0 0.0
        %2993 = vmatpush1.msra.mxu0 %v2981
        %2994 = vmatprep.subr.mxu0 0.0
        %2995 = vmatpush1.msra.mxu0 %v2980
        %2996 = vmatprep.subr.mxu0 0.0
        %2997 = vmatpush1.msra.mxu0 %v2979
        %2998 = vmatprep.subr.mxu0 0.0
        %2999 = vmatpush1.msra.mxu0 %v2978
        %3000 = vmatprep.subr.mxu0 0.0
        %3001 = vmatpush1.msra.mxu0 %v2977
        %3002 = vmatprep.subr.mxu0 0.0
        %3003 = vmatpush1.msra.mxu0 %v2976
        %3004 = vmatprep.subr.mxu0 0.0
        %3005 = vmatpush1.msra.mxu0 %v2975
        %3006 = vmatprep.subr.mxu0 0.0
        %3007 = vmatpush1.msra.mxu0 %v2974
        %3008 = vmatprep.subr.mxu0 0.0
        %3009 = vmatpush1.msra.mxu0 %v2973
        %3010 = vmatprep.subr.mxu0 0.0
        %3011 = vmatpush1.msra.mxu0 %v2972
        %3012 = vmatprep.subr.mxu0 0.0
        %3013 = vmatpush1.msra.mxu0 %v2971
        %3014 = vmatprep.subr.mxu0 0.0
        %3015 = vmatpush1.msra.mxu0 %v2970
        %3016 = vmatprep.subr.mxu0 0.0
        %3017 = vmatpush1.msra.mxu0 %v2969
        %3018 = vmatprep.subr.mxu0 0.0
        %3019 = vmatpush2.msra.mxu0 0.0
        %3020 = vmatprep.subr.mxu0 0.0
        %3021 = vmatpush2.msra.mxu0 0.0
        %3022 = vmatprep.subr.mxu0 0.0
        %3023 = vmatpush2.msra.mxu0 0.0
        %3024 = vmatprep.subr.mxu0 0.0
        %3025 = vmatpush2.msra.mxu0 0.0
        %3026 = vmatprep.subr.mxu0 0.0
        %3027 = vmatpush2.msra.mxu0 0.0
        %3028 = vmatprep.subr.mxu0 0.0
        %3029 = vmatpush2.msra.mxu0 0.0
        %3030 = vmatprep.subr.mxu0 0.0
        %3031 = vmatpush2.msra.mxu0 0.0
        %3032 = vmatprep.subr.mxu0 0.0
        %3033 = vmatpush2.msra.mxu0 0.0
        %3034 = vmatprep.subr.mxu0 0.0
        %3035 = vmatpush2.msra.mxu0 0.0
        %3036 = vmatprep.subr.mxu0 0.0
        %3037 = vmatpush2.msra.mxu0 0.0
        %3038 = vmatprep.subr.mxu0 0.0
        %3039 = vmatpush2.msra.mxu0 0.0
        %3040 = vmatprep.subr.mxu0 0.0
        %3041 = vmatpush2.msra.mxu0 0.0
        %3042 = vmatprep.subr.mxu0 0.0
        %3043 = vmatpush2.msra.mxu0 0.0
        %3044 = vmatprep.subr.mxu0 0.0
        %3045 = vmatpush2.msra.mxu0 0.0
        %3046 = vmatprep.subr.mxu0 0.0
        %3047 = vmatpush2.msra.mxu0 0.0
        %3048 = vmatprep.subr.mxu0 0.0
        %3049 = vmatpush2.msra.mxu0 0.0
        %3050 = vmatprep.mubr.f32.mxu0 0.0
        %3051 = vmatmul.mubr.f32.gmra.mxu0 %v2952
        %v3052 = vpop.f32.mrf.mxu0
        %v3053 = vadd.f32 %v2985, %v3052
        %v3054 = vpop.f32.mrf.mxu0
        %3055 = vdwg.mxu0
        %v3056 = vmax.f32 %v3053, 0.0
        %v3057 = vld [vmem:[%s7] sm:$0xf]
        %v3058 = vld [vmem:[%s7 + $0x4] sm:$0xf]
        %v3059 = vld [vmem:[%s7 + $0x8] sm:$0xf]
        %v3060 = vld [vmem:[%s7 + $0xc] sm:$0xf]
        %v3061 = vld [vmem:[%s7 + $0x10] sm:$0xf]
        %v3062 = vld [vmem:[%s7 + $0x14] sm:$0xf]
        %v3063 = vld [vmem:[%s7 + $0x18] sm:$0xf]
        %v3064 = vld [vmem:[%s7 + $0x1c] sm:$0xf]
        %v3065 = vld [vmem:[%s7 + $0x20] sm:$0xf]
        %v3066 = vld [vmem:[%s7 + $0x24] sm:$0xf]
        %v3067 = vld [vmem:[%s7 + $0x28] sm:$0xf]
        %v3068 = vld [vmem:[%s7 + $0x2c] sm:$0xf]
        %v3069 = vld [vmem:[%s7 + $0x30] sm:$0xf]
        %v3070 = vld [vmem:[%s7 + $0x34] sm:$0xf]
        %v3071 = vld [vmem:[%s7 + $0x38] sm:$0xf]
        %v3072 = vld [vmem:[%s7 + $0x3c] sm:$0xf]
        %v3073 = vunpack.c.l.bf16 %v3057
        %v3074 = vunpack.c.l.bf16 %v3058
        %v3075 = vunpack.c.l.bf16 %v3059
        %v3076 = vunpack.c.l.bf16 %v3060
        %v3077 = vunpack.c.l.bf16 %v3061
        %v3078 = vunpack.c.l.bf16 %v3062
        %v3079 = vunpack.c.l.bf16 %v3063
        %v3080 = vunpack.c.l.bf16 %v3064
        %v3081 = vunpack.c.l.bf16 %v3065
        %v3082 = vunpack.c.l.bf16 %v3066
        %v3083 = vunpack.c.l.bf16 %v3067
        %v3084 = vunpack.c.l.bf16 %v3068
        %v3085 = vunpack.c.l.bf16 %v3069
        %v3086 = vunpack.c.l.bf16 %v3070
        %v3087 = vunpack.c.l.bf16 %v3071
        %v3088 = vunpack.c.l.bf16 %v3072
        %v3089 = vld [vmem:[#allocation4] sm:$0x1]
        %3090 = vmatprep.subr.mxu0 0.0
        %3091 = vmatpush1.msra.mxu0 %v3088
        %3092 = vmatprep.subr.mxu0 0.0
        %3093 = vmatpush1.msra.mxu0 %v3087
        %3094 = vmatprep.subr.mxu0 0.0
        %3095 = vmatpush1.msra.mxu0 %v3086
        %3096 = vmatprep.subr.mxu0 0.0
        %3097 = vmatpush1.msra.mxu0 %v3085
        %3098 = vmatprep.subr.mxu0 0.0
        %3099 = vmatpush1.msra.mxu0 %v3084
        %3100 = vmatprep.subr.mxu0 0.0
        %3101 = vmatpush1.msra.mxu0 %v3083
        %3102 = vmatprep.subr.mxu0 0.0
        %3103 = vmatpush1.msra.mxu0 %v3082
        %3104 = vmatprep.subr.mxu0 0.0
        %3105 = vmatpush1.msra.mxu0 %v3081
        %3106 = vmatprep.subr.mxu0 0.0
        %3107 = vmatpush1.msra.mxu0 %v3080
        %3108 = vmatprep.subr.mxu0 0.0
        %3109 = vmatpush1.msra.mxu0 %v3079
        %3110 = vmatprep.subr.mxu0 0.0
        %3111 = vmatpush1.msra.mxu0 %v3078
        %3112 = vmatprep.subr.mxu0 0.0
        %3113 = vmatpush1.msra.mxu0 %v3077
        %3114 = vmatprep.subr.mxu0 0.0
        %3115 = vmatpush1.msra.mxu0 %v3076
        %3116 = vmatprep.subr.mxu0 0.0
        %3117 = vmatpush1.msra.mxu0 %v3075
        %3118 = vmatprep.subr.mxu0 0.0
        %3119 = vmatpush1.msra.mxu0 %v3074
        %3120 = vmatprep.subr.mxu0 0.0
        %3121 = vmatpush1.msra.mxu0 %v3073
        %3122 = vmatprep.subr.mxu0 0.0
        %3123 = vmatpush2.msra.mxu0 0.0
        %3124 = vmatprep.subr.mxu0 0.0
        %3125 = vmatpush2.msra.mxu0 0.0
        %3126 = vmatprep.subr.mxu0 0.0
        %3127 = vmatpush2.msra.mxu0 0.0
        %3128 = vmatprep.subr.mxu0 0.0
        %3129 = vmatpush2.msra.mxu0 0.0
        %3130 = vmatprep.subr.mxu0 0.0
        %3131 = vmatpush2.msra.mxu0 0.0
        %3132 = vmatprep.subr.mxu0 0.0
        %3133 = vmatpush2.msra.mxu0 0.0
        %3134 = vmatprep.subr.mxu0 0.0
        %3135 = vmatpush2.msra.mxu0 0.0
        %3136 = vmatprep.subr.mxu0 0.0
        %3137 = vmatpush2.msra.mxu0 0.0
        %3138 = vmatprep.subr.mxu0 0.0
        %3139 = vmatpush2.msra.mxu0 0.0
        %3140 = vmatprep.subr.mxu0 0.0
        %3141 = vmatpush2.msra.mxu0 0.0
        %3142 = vmatprep.subr.mxu0 0.0
        %3143 = vmatpush2.msra.mxu0 0.0
        %3144 = vmatprep.subr.mxu0 0.0
        %3145 = vmatpush2.msra.mxu0 0.0
        %3146 = vmatprep.subr.mxu0 0.0
        %3147 = vmatpush2.msra.mxu0 0.0
        %3148 = vmatprep.subr.mxu0 0.0
        %3149 = vmatpush2.msra.mxu0 0.0
        %3150 = vmatprep.subr.mxu0 0.0
        %3151 = vmatpush2.msra.mxu0 0.0
        %3152 = vmatprep.subr.mxu0 0.0
        %3153 = vmatpush2.msra.mxu0 0.0
        %3154 = vmatprep.mubr.f32.mxu0 0.0
        %3155 = vmatmul.mubr.f32.gmra.mxu0 %v3056
        %v3156 = vpop.f32.mrf.mxu0
        %v3157 = vadd.f32 %v3089, %v3156
        %v3158 = vpop.f32.mrf.mxu0
        %3159 = vdwg.mxu0
        %v3160 = vxor.u32 %v3157, 2147483648
        %v3161 = vmul.f32 %v3160, 1.442695
        %v3162 = vpow.pop %v3161
        %v3163 = vadd.f32 %v3162, 1.0
        %v3164 = vrcp.pop %v3163
        %v3165 = vmul.f32 1.0, %v3164
        %v3166 = vlaneseq
        %v3167 = vshrl.u32 %v3166, 7
        %v3168 = vsub.s32 0, %v3167
        %v3169 = vrot.slane %v3165, %v3168
        %v3170 = vmul.f32 %v2909, %v3169
        %v3171 = vmul.f32 %v2912, %v3169
        %v3172 = vmul.f32 %v2917, %v3169
        %v3173 = vmul.f32 %v2920, %v3169
        %v3174 = vmul.f32 %v2925, %v3169
        %v3175 = vmul.f32 %v2928, %v3169
        %v3176 = vmul.f32 %v2933, %v3169
        %v3177 = vmul.f32 %v2936, %v3169
        %v3178 = vadd.f32 %v3170, %v360
        %v3179 = vadd.f32 %v3171, %v361
        %v3180 = vadd.f32 %v3172, %v362
        %v3181 = vadd.f32 %v3173, %v363
        %v3182 = vadd.f32 %v3174, %v364
        %v3183 = vadd.f32 %v3175, %v365
        %v3184 = vadd.f32 %v3176, %v366
        %v3185 = vadd.f32 %v3177, %v367
        %3186 = vst [vmem:[%s358] sm:$0xff] %v3178
        %3187 = vst [vmem:[%s358 + $0x8] sm:$0xff] %v3179
        %3188 = vst [vmem:[%s358 + $0x10] sm:$0xff] %v3180
        %3189 = vst [vmem:[%s358 + $0x18] sm:$0xff] %v3181
        %3190 = vst [vmem:[%s358 + $0x20] sm:$0xff] %v3182
        %3191 = vst [vmem:[%s358 + $0x28] sm:$0xff] %v3183
        %3192 = vst [vmem:[%s358 + $0x30] sm:$0xff] %v3184
        %3193 = vst [vmem:[%s358 + $0x38] sm:$0xff] %v3185
        %p3194 = scmp.lt.s32.totalorder %s22, 1
        %s3195 = scalar_select %p3194, %s22, 1
        %s3196 = smul.addr %s3195, 8
        %s3197 = smul.addr %s3196, 8
        %s3198 = scalar_lea.vmem %s9, %s3197
        // Predicated region
        $region65: #{rcan_forward.11} parent=55 // pred_check
          %p3199 = pneg %p234
        $region66: #{rcan_forward.11} parent=55 // pred_check_branch
          %3201 = sbr.rel (%p3199) target = $region68
        $region67: #{rcan_forward.11} parent=55 // pred_region
          _
        $region68: #{rcan_forward.11} parent=55 // pred_fallthru
          _
      $region56: #{rcan_forward.11} parent=5 // pred_fallthru
        _
      %p3202 = scmp.le.s32.totalorder 2, %s17
      // Predicated region
      $region69: #{rcan_forward.11} parent=5 // pred_check
        %p3203 = pneg %p3202
      $region70: #{rcan_forward.11} parent=5 // pred_check_branch
        %3205 = sbr.rel (%p3203) target = $region72
      $region71: #{rcan_forward.11} parent=5 // pred_region
        %s3206 = ssub.s32 %s17, 2
        // Predicated region
        $region73: #{rcan_forward.11} parent=71 // pred_check
          %p3207 = pneg %p240
        $region74: #{rcan_forward.11} parent=71 // pred_check_branch
          %3209 = sbr.rel (%p3207) target = $region76
        $region75: #{rcan_forward.11} parent=71 // pred_region
          %p3210 = scmp.lt.s32.totalorder %s23, 1
          %s3211 = scalar_select %p3210, %s23, 1
          %s3212 = smul.addr %s3211, 8
          %s3213 = smul.addr %s3212, 8
          %s3214 = scalar_lea.vmem %s9, %s3213
        $region76: #{rcan_forward.11} parent=71 // pred_fallthru
          _
      $region72: #{rcan_forward.11} parent=5 // pred_fallthru
        _
    $region6: #{rcan_forward.11} parent=1 // loop_footer
      %s21 = sadd.s32 1, %s17
    $region7: #{rcan_forward.11} parent=1 // loop_footer_branch
      %16 = sbr.rel target = $region3
    $region8: #{rcan_forward.11} parent=1 // loop_exit
      _
    %3215 = vsyncpa [#allocation3], 1
    %s3216 = scalar_lea.sflag [#allocation3], 1
    %3217 = vsyncpa %s3216, 1
    %3218 = vsyncpa [#allocation5], 1

// kernel: rcan_forward.19
$region0: #{rcan_forward.19}
  #allocation0 [shape = 'u32[]', space=smem, size = 0x4, offset = 0x4, fixed_abs, tag = 'smem constant byte address 0x4 - core index']
  #allocation1 [shape = 'u32[144,128]{1,0:T(1,128)}', space=vmem, size = 0x12000, scoped, tag = 'internal scratch']
  %s0 = inlined_call_operand.vmem [shape: f32[2,16,16,128], index: 0, kind: input, shape index: {}]
  %s1 = inlined_call_operand.vmem [shape: bf16[1152,128], index: 1, kind: input, shape index: {}]
  %s2 = inlined_call_operand.vmem [shape: f32[1,128], index: 2, kind: input, shape index: {}]
  %s3 = inlined_call_operand.vmem [shape: f32[2,16,16,128], index: 3, kind: output, shape index: {}]
  %s4 = sld [smem:[#allocation0]]
  $region45: #{rcan_forward.19} parent=0
    _
  %s6 = ssub.s32 1, %s4
  %s7 = scalar_select 0, %s6, %s4
  loop: start=0, step=1, limit=4
  $region2: #{rcan_forward.19} parent=0 // loop_pre_header
    _
  $region3: #{rcan_forward.19} parent=0 // loop_header
    %s9 = sphi 0, %s13
    %p10 = scmp.ge.s32.totalorder %s9, 4
    %s19 = sphi 0, %s21
    %s22 = sphi 0, %s19
    %s23 = sphi 0, %s22
    %s39 = sphi 0, %s23
    %s43 = sphi 0, %s43
    %s45 = sphi 0, %s43
    %s46 = sphi 0, %s45
    %s60 = sphi 0, %s46
    %s64 = sphi 0, %s64
    %s66 = sphi 0, %s64
    %s67 = sphi 0, %s66
    %s81 = sphi 0, %s67
    %s87 = sphi 0, %s89
    %s90 = sphi 0, %s87
    %s91 = sphi 0, %s90
    %s107 = sphi 0, %s91
  $region4: #{rcan_forward.19} parent=0 // loop_header_branch
    %12 = sbr.rel (%p10) target = $region8
  $region5: #{rcan_forward.19} parent=0 // loop_body
    %s14 = ssub.s32 %s9, 1
    %s15 = ssub.s32 %s9, 2
    %s16 = sadd.s32 %s9, 1
    %s17 = ssub.s32 %s9, %s16
    %p18 = scmp.eq.s32.totalorder %s17, 0
    %s20 = sadd.s32 %s19, 1
    %s21 = scalar_select %p18, %s19, %s20
    %p24 = pneg %p18
    %p25 = scmp.eq.s32.totalorder %s9, 1
    %p26 = por %p24, %p25
    %p27 = scmp.ne.s32.totalorder %s19, %s22
    %p28 = scmp.eq.s32.totalorder %s9, 0
    %p29 = por %p27, %p28
    %p30 = scmp.ne.s32.totalorder %s19, %s22
    %p31 = scmp.eq.s32.totalorder %s14, 1
    %p32 = por %p30, %p31
    %p33 = scmp.ne.s32.totalorder %s22, %s23
    %p34 = scmp.eq.s32.totalorder %s14, 0
    %p35 = por %p33, %p34
    %p36 = scmp.ne.s32.totalorder %s22, %s23
    %p37 = scmp.eq.s32.totalorder %s15, 1
    %p38 = por %p36, %p37
    %p40 = scmp.ne.s32.totalorder %s23, %s39
    %p41 = scmp.eq.s32.totalorder %s15, 0
    %p42 = por %p40, %p41
    %s44 = sadd.s32 %s43, 1
    %p47 = scmp.eq.s32.totalorder %s9, 1
    %p48 = scmp.ne.s32.totalorder %s43, %s45
    %p49 = scmp.eq.s32.totalorder %s9, 0
    %p50 = por %p48, %p49
    %p51 = scmp.ne.s32.totalorder %s43, %s45
    %p52 = scmp.eq.s32.totalorder %s14, 1
    %p53 = por %p51, %p52
    %p54 = scmp.ne.s32.totalorder %s45, %s46
    %p55 = scmp.eq.s32.totalorder %s14, 0
    %p56 = por %p54, %p55
    %p57 = scmp.ne.s32.totalorder %s45, %s46
    %p58 = scmp.eq.s32.totalorder %s15, 1
    %p59 = por %p57, %p58
    %p61 = scmp.ne.s32.totalorder %s46, %s60
    %p62 = scmp.eq.s32.totalorder %s15, 0
    %p63 = por %p61, %p62
    %s65 = sadd.s32 %s64, 1
    %p68 = scmp.eq.s32.totalorder %s9, 1
    %p69 = scmp.ne.s32.totalorder %s64, %s66
    %p70 = scmp.eq.s32.totalorder %s9, 0
    %p71 = por %p69, %p70
    %p72 = scmp.ne.s32.totalorder %s64, %s66
    %p73 = scmp.eq.s32.totalorder %s14, 1
    %p74 = por %p72, %p73
    %p75 = scmp.ne.s32.totalorder %s66, %s67
    %p76 = scmp.eq.s32.totalorder %s14, 0
    %p77 = por %p75, %p76
    %p78 = scmp.ne.s32.totalorder %s66, %s67
    %p79 = scmp.eq.s32.totalorder %s15, 1
    %p80 = por %p78, %p79
    %p82 = scmp.ne.s32.totalorder %s67, %s81
    %p83 = scmp.eq.s32.totalorder %s15, 0
    %p84 = por %p82, %p83
    %s85 = ssub.s32 %s9, %s16
    %p86 = scmp.eq.s32.totalorder %s85, 0
    %s88 = sadd.s32 %s87, 1
    %s89 = scalar_select %p86, %s87, %s88
    %p92 = pneg %p86
    %p93 = scmp.eq.s32.totalorder %s9, 1
    %p94 = por %p92, %p93
    %p95 = scmp.ne.s32.totalorder %s87, %s90
    %p96 = scmp.eq.s32.totalorder %s9, 0
    %p97 = por %p95, %p96
    %p98 = scmp.ne.s32.totalorder %s87, %s90
    %p99 = scmp.eq.s32.totalorder %s14, 1
    %p100 = por %p98, %p99
    %p101 = scmp.ne.s32.totalorder %s90, %s91
    %p102 = scmp.eq.s32.totalorder %s14, 0
    %p103 = por %p101, %p102
    %p104 = scmp.ne.s32.totalorder %s90, %s91
    %p105 = scmp.eq.s32.totalorder %s15, 1
    %p106 = por %p104, %p105
    %p108 = scmp.ne.s32.totalorder %s91, %s107
    %p109 = scmp.eq.s32.totalorder %s15, 0
    %p110 = por %p108, %p109
    %p111 = scmp.le.s32.totalorder 1, %s9
    %p112 = scmp.lt.s32.totalorder %s9, 3
    %p113 = pnand %p111, %p112
    %p114 = pneg %p113
    // Predicated region
    $region9: #{rcan_forward.19} parent=5 // pred_check
      _
    $region10: #{rcan_forward.19} parent=5 // pred_check_branch
      %116 = sbr.rel (%p113) target = $region12
    $region11: #{rcan_forward.19} parent=5 // pred_region
      %s117 = ssub.s32 %s9, 1
      // Predicated region
      $region13: #{rcan_forward.19} parent=11 // pred_check
        %p118 = pneg %p56
      $region14: #{rcan_forward.19} parent=11 // pred_check_branch
        %120 = sbr.rel (%p118) target = $region16
      $region15: #{rcan_forward.19} parent=11 // pred_region
        _
      $region16: #{rcan_forward.19} parent=11 // pred_fallthru
        _
      // Predicated region
      $region17: #{rcan_forward.19} parent=11 // pred_check
        %p121 = pneg %p77
      $region18: #{rcan_forward.19} parent=11 // pred_check_branch
        %123 = sbr.rel (%p121) target = $region20
      $region19: #{rcan_forward.19} parent=11 // pred_region
        _
      $region20: #{rcan_forward.19} parent=11 // pred_fallthru
        _
    $region12: #{rcan_forward.19} parent=5 // pred_fallthru
      _
    %p124 = scmp.lt.s32.totalorder %s9, 2
    // Predicated region
    $region21: #{rcan_forward.19} parent=5 // pred_check
      %p125 = pneg %p124
    $region22: #{rcan_forward.19} parent=5 // pred_check_branch
      %127 = sbr.rel (%p125) target = $region24
    $region23: #{rcan_forward.19} parent=5 // pred_region
      // Predicated region
      $region25: #{rcan_forward.19} parent=23 // pred_check
        %p128 = pneg %p29
      $region26: #{rcan_forward.19} parent=23 // pred_check_branch
        %130 = sbr.rel (%p128) target = $region28
      $region27: #{rcan_forward.19} parent=23 // pred_region
        %p131 = scmp.lt.s32.totalorder %s9, 1
        %s132 = scalar_select %p131, %s9, 1
        %s133 = smul.addr %s132, 32
        %s134 = smul.addr %s133, 8
        %s135 = scalar_lea.vmem %s0, %s134
      $region28: #{rcan_forward.19} parent=23 // pred_fallthru
        _
    $region24: #{rcan_forward.19} parent=5 // pred_fallthru
      _
    %p136 = scmp.le.s32.totalorder 1, %s9
    %p137 = scmp.lt.s32.totalorder %s9, 3
    %p138 = pnand %p136, %p137
    %p139 = pneg %p138
    // Predicated region
    $region29: #{rcan_forward.19} parent=5 // pred_check
      _
    $region30: #{rcan_forward.19} parent=5 // pred_check_branch
      %141 = sbr.rel (%p138) target = $region32
    $region31: #{rcan_forward.19} parent=5 // pred_region
      %s142 = ssub.s32 %s9, 1
      %p143 = scmp.lt.s32.totalorder %s14, 1
      %s144 = scalar_select %p143, %s14, 1
      %s145 = smul.addr %s144, 32
      %s146 = smul.addr %s145, 8
      %s147 = scalar_lea.vmem %s0, %s146
      %p148 = pneg %p35
      %p149 = pneg %p32
      %p150 = pneg %p56
      %p151 = pneg %p53
      %p152 = pneg %p77
      %p153 = pneg %p74
      %p154 = pneg %p103
      %p155 = pneg %p100
      %p156 = scmp.lt.s32.totalorder %s14, 1
      %s157 = scalar_select %p156, %s14, 1
      %s158 = smul.addr %s157, 32
      %s159 = smul.addr %s158, 8
      %s160 = scalar_lea.vmem %s3, %s159
      %p161 = scmp.lt.s32.totalorder %s14, 1
      %s162 = scalar_select %p161, %s14, 1
      %s163 = smul.addr %s162, 32
      %s164 = smul.addr %s163, 8
      %s165 = scalar_lea.vmem %s0, %s164
      %p166 = scmp.lt.s32.totalorder %s14, 1
      %s167 = scalar_select %p166, %s14, 1
      %s168 = smul.addr %s167, 32
      %s169 = smul.addr %s168, 8
      %s170 = scalar_lea.vmem %s3, %s169
      %v172 = vld [vmem:[%s165] sm:$0xff]
      %v173 = vld [vmem:[%s165 + $0x8] sm:$0xff]
      %v174 = vld [vmem:[%s165 + $0x10] sm:$0xff]
      %v175 = vld [vmem:[%s165 + $0x18] sm:$0xff]
      %v176 = vld [vmem:[%s165 + $0x20] sm:$0xff]
      %v177 = vld [vmem:[%s165 + $0x28] sm:$0xff]
      %v178 = vld [vmem:[%s165 + $0x30] sm:$0xff]
      %v179 = vld [vmem:[%s165 + $0x38] sm:$0xff]
      %v180 = vld [vmem:[%s165 + $0x40] sm:$0xff]
      %v181 = vld [vmem:[%s165 + $0x48] sm:$0xff]
      %v182 = vld [vmem:[%s165 + $0x50] sm:$0xff]
      %v183 = vld [vmem:[%s165 + $0x58] sm:$0xff]
      %v184 = vld [vmem:[%s165 + $0x60] sm:$0xff]
      %v185 = vld [vmem:[%s165 + $0x68] sm:$0xff]
      %v186 = vld [vmem:[%s165 + $0x70] sm:$0xff]
      %v187 = vld [vmem:[%s165 + $0x78] sm:$0xff]
      %v188 = vld [vmem:[%s165 + $0x80] sm:$0xff]
      %v189 = vld [vmem:[%s165 + $0x88] sm:$0xff]
      %v190 = vld [vmem:[%s165 + $0x90] sm:$0xff]
      %v191 = vld [vmem:[%s165 + $0x98] sm:$0xff]
      %v192 = vld [vmem:[%s165 + $0xa0] sm:$0xff]
      %v193 = vld [vmem:[%s165 + $0xa8] sm:$0xff]
      %v194 = vld [vmem:[%s165 + $0xb0] sm:$0xff]
      %v195 = vld [vmem:[%s165 + $0xb8] sm:$0xff]
      %v196 = vld [vmem:[%s165 + $0xc0] sm:$0xff]
      %v197 = vld [vmem:[%s165 + $0xc8] sm:$0xff]
      %v198 = vld [vmem:[%s165 + $0xd0] sm:$0xff]
      %v199 = vld [vmem:[%s165 + $0xd8] sm:$0xff]
      %v200 = vld [vmem:[%s165 + $0xe0] sm:$0xff]
      %v201 = vld [vmem:[%s165 + $0xe8] sm:$0xff]
      %v202 = vld [vmem:[%s165 + $0xf0] sm:$0xff]
      %v203 = vld [vmem:[%s165 + $0xf8] sm:$0xff]
      %v204 = vpack.c.bf16 %v173, %v172
      %v205 = vpack.c.bf16 %v175, %v174
      %v206 = vpack.c.bf16 %v177, %v176
      %v207 = vpack.c.bf16 %v179, %v178
      %v208 = vpack.c.bf16 %v181, %v180
      %v209 = vpack.c.bf16 %v183, %v182
      %v210 = vpack.c.bf16 %v185, %v184
      %v211 = vpack.c.bf16 %v187, %v186
      %v212 = vpack.c.bf16 %v189, %v188
      %v213 = vpack.c.bf16 %v191, %v190
      %v214 = vpack.c.bf16 %v193, %v192
      %v215 = vpack.c.bf16 %v195, %v194
      %v216 = vpack.c.bf16 %v197, %v196
      %v217 = vpack.c.bf16 %v199, %v198
      %v218 = vpack.c.bf16 %v201, %v200
      %v219 = vpack.c.bf16 %v203, %v202
      %v221 = vshrl.u32 0, 16
      %v223 = vrot.slane %v221, 7
      %v224 = vshll.u32 0, 16
      %v226 = vor.u32 %v223, %v224
      %v228 = vshrl.u32 %v204, 16
      %v230 = vrot.slane %v228, 7
      %v231 = vshll.u32 %v204, 16
      %v233 = vor.u32 %v230, %v231
      %v235 = vshrl.u32 %v205, 16
      %v237 = vrot.slane %v235, 7
      %v238 = vshll.u32 %v205, 16
      %v240 = vor.u32 %v237, %v238
      %v242 = vshrl.u32 %v206, 16
      %v244 = vrot.slane %v242, 7
      %v245 = vshll.u32 %v206, 16
      %v247 = vor.u32 %v244, %v245
      %v249 = vshrl.u32 %v207, 16
      %v251 = vrot.slane %v249, 7
      %v252 = vshll.u32 %v207, 16
      %v254 = vor.u32 %v251, %v252
      %v256 = vshrl.u32 %v208, 16
      %v258 = vrot.slane %v256, 7
      %v259 = vshll.u32 %v208, 16
      %v261 = vor.u32 %v258, %v259
      %v263 = vshrl.u32 %v209, 16
      %v265 = vrot.slane %v263, 7
      %v266 = vshll.u32 %v209, 16
      %v268 = vor.u32 %v265, %v266
      %v270 = vshrl.u32 %v210, 16
      %v272 = vrot.slane %v270, 7
      %v273 = vshll.u32 %v210, 16
      %v275 = vor.u32 %v272, %v273
      %v277 = vshrl.u32 %v211, 16
      %v279 = vrot.slane %v277, 7
      %v280 = vshll.u32 %v211, 16
      %v282 = vor.u32 %v279, %v280
      %v284 = vshrl.u32 %v212, 16
      %v286 = vrot.slane %v284, 7
      %v287 = vshll.u32 %v212, 16
      %v289 = vor.u32 %v286, %v287
      %v291 = vshrl.u32 %v213, 16
      %v293 = vrot.slane %v291, 7
      %v294 = vshll.u32 %v213, 16
      %v296 = vor.u32 %v293, %v294
      %v298 = vshrl.u32 %v214, 16
      %v300 = vrot.slane %v298, 7
      %v301 = vshll.u32 %v214, 16
      %v303 = vor.u32 %v300, %v301
      %v305 = vshrl.u32 %v215, 16
      %v307 = vrot.slane %v305, 7
      %v308 = vshll.u32 %v215, 16
      %v310 = vor.u32 %v307, %v308
      %v312 = vshrl.u32 %v216, 16
      %v314 = vrot.slane %v312, 7
      %v315 = vshll.u32 %v216, 16
      %v317 = vor.u32 %v314, %v315
      %v319 = vshrl.u32 %v217, 16
      %v321 = vrot.slane %v319, 7
      %v322 = vshll.u32 %v217, 16
      %v324 = vor.u32 %v321, %v322
      %v326 = vshrl.u32 %v218, 16
      %v328 = vrot.slane %v326, 7
      %v329 = vshll.u32 %v218, 16
      %v331 = vor.u32 %v328, %v329
      %v333 = vshrl.u32 %v219, 16
      %v335 = vrot.slane %v333, 7
      %v336 = vshll.u32 %v219, 16
      %v338 = vor.u32 %v335, %v336
      %vm373 = vcmask 1040384
      %vm374 = vsmask.f32 256
      %vm375 = vmand %vm373, %vm374
      %v376 = vsel %vm375, 0, %v226
      %v377 = vsel %vm375, 0, %v233
      %v378 = vsel %vm375, 0, %v240
      %v379 = vsel %vm375, 0, %v247
      %v380 = vsel %vm375, 0, %v254
      %v381 = vsel %vm375, 0, %v261
      %v382 = vsel %vm375, 0, %v268
      %v383 = vsel %vm375, 0, %v275
      %v384 = vsel %vm375, 0, %v282
      %v385 = vsel %vm375, 0, %v289
      %v386 = vsel %vm375, 0, %v296
      %v387 = vsel %vm375, 0, %v303
      %v388 = vsel %vm375, 0, %v310
      %v389 = vsel %vm375, 0, %v317
      %v390 = vsel %vm375, 0, %v324
      %v391 = vsel %vm375, 0, %v331
      %v392 = vsel %vm375, 0, %v338
      %v393 = vsel %vm375, %v223, 0
      %v394 = vsel %vm375, %v230, 0
      %v395 = vsel %vm375, %v237, 0
      %v396 = vsel %vm375, %v244, 0
      %v397 = vsel %vm375, %v251, 0
      %v398 = vsel %vm375, %v258, 0
      %v399 = vsel %vm375, %v265, 0
      %v400 = vsel %vm375, %v272, 0
      %v401 = vsel %vm375, %v279, 0
      %v402 = vsel %vm375, %v286, 0
      %v403 = vsel %vm375, %v293, 0
      %v404 = vsel %vm375, %v300, 0
      %v405 = vsel %vm375, %v307, 0
      %v406 = vsel %vm375, %v314, 0
      %v407 = vsel %vm375, %v321, 0
      %v408 = vsel %vm375, %v328, 0
      %v409 = vsel %vm375, %v335, 0
      %vm410 = vsmask.f32 7424
      %v412 = vshrl.u32 %v376, 16
      %v414 = vshll.u32 %v376, 16
      %v416 = vrot.slane %v414, 1
      %v417 = vor.u32 %v412, %v416
      %v419 = vshll.u32 %v393, 16
      %v421 = vrot.slane %v419, 1
      %v422 = vsel %vm410, %v417, %v421
      %v424 = vshrl.u32 %v377, 16
      %v426 = vshll.u32 %v377, 16
      %v428 = vrot.slane %v426, 1
      %v429 = vor.u32 %v424, %v428
      %v431 = vshll.u32 %v394, 16
      %v433 = vrot.slane %v431, 1
      %v434 = vsel %vm410, %v429, %v433
      %v436 = vshrl.u32 %v378, 16
      %v438 = vshll.u32 %v378, 16
      %v440 = vrot.slane %v438, 1
      %v441 = vor.u32 %v436, %v440
      %v443 = vshll.u32 %v395, 16
      %v445 = vrot.slane %v443, 1
      %v446 = vsel %vm410, %v441, %v445
      %v448 = vshrl.u32 %v379, 16
      %v450 = vshll.u32 %v379, 16
      %v452 = vrot.slane %v450, 1
      %v453 = vor.u32 %v448, %v452
      %v455 = vshll.u32 %v396, 16
      %v457 = vrot.slane %v455, 1
      %v458 = vsel %vm410, %v453, %v457
      %v460 = vshrl.u32 %v380, 16
      %v462 = vshll.u32 %v380, 16
      %v464 = vrot.slane %v462, 1
      %v465 = vor.u32 %v460, %v464
      %v467 = vshll.u32 %v397, 16
      %v469 = vrot.slane %v467, 1
      %v470 = vsel %vm410, %v465, %v469
      %v472 = vshrl.u32 %v381, 16
      %v474 = vshll.u32 %v381, 16
      %v476 = vrot.slane %v474, 1
      %v477 = vor.u32 %v472, %v476
      %v479 = vshll.u32 %v398, 16
      %v481 = vrot.slane %v479, 1
      %v482 = vsel %vm410, %v477, %v481
      %v484 = vshrl.u32 %v382, 16
      %v486 = vshll.u32 %v382, 16
      %v488 = vrot.slane %v486, 1
      %v489 = vor.u32 %v484, %v488
      %v491 = vshll.u32 %v399, 16
      %v493 = vrot.slane %v491, 1
      %v494 = vsel %vm410, %v489, %v493
      %v496 = vshrl.u32 %v383, 16
      %v498 = vshll.u32 %v383, 16
      %v500 = vrot.slane %v498, 1
      %v501 = vor.u32 %v496, %v500
      %v503 = vshll.u32 %v400, 16
      %v505 = vrot.slane %v503, 1
      %v506 = vsel %vm410, %v501, %v505
      %v508 = vshrl.u32 %v384, 16
      %v510 = vshll.u32 %v384, 16
      %v512 = vrot.slane %v510, 1
      %v513 = vor.u32 %v508, %v512
      %v515 = vshll.u32 %v401, 16
      %v517 = vrot.slane %v515, 1
      %v518 = vsel %vm410, %v513, %v517
      %v520 = vshrl.u32 %v385, 16
      %v522 = vshll.u32 %v385, 16
      %v524 = vrot.slane %v522, 1
      %v525 = vor.u32 %v520, %v524
      %v527 = vshll.u32 %v402, 16
      %v529 = vrot.slane %v527, 1
      %v530 = vsel %vm410, %v525, %v529
      %v532 = vshrl.u32 %v386, 16
      %v534 = vshll.u32 %v386, 16
      %v536 = vrot.slane %v534, 1
      %v537 = vor.u32 %v532, %v536
      %v539 = vshll.u32 %v403, 16
      %v541 = vrot.slane %v539, 1
      %v542 = vsel %vm410, %v537, %v541
      %v544 = vshrl.u32 %v387, 16
      %v546 = vshll.u32 %v387, 16
      %v548 = vrot.slane %v546, 1
      %v549 = vor.u32 %v544, %v548
      %v551 = vshll.u32 %v404, 16
      %v553 = vrot.slane %v551, 1
      %v554 = vsel %vm410, %v549, %v553
      %v556 = vshrl.u32 %v388, 16
      %v558 = vshll.u32 %v388, 16
      %v560 = vrot.slane %v558, 1
      %v561 = vor.u32 %v556, %v560
      %v563 = vshll.u32 %v405, 16
      %v565 = vrot.slane %v563, 1
      %v566 = vsel %vm410, %v561, %v565
      %v568 = vshrl.u32 %v389, 16
      %v570 = vshll.u32 %v389, 16
      %v572 = vrot.slane %v570, 1
      %v573 = vor.u32 %v568, %v572
      %v575 = vshll.u32 %v406, 16
      %v577 = vrot.slane %v575, 1
      %v578 = vsel %vm410, %v573, %v577
      %v580 = vshrl.u32 %v390, 16
      %v582 = vshll.u32 %v390, 16
      %v584 = vrot.slane %v582, 1
      %v585 = vor.u32 %v580, %v584
      %v587 = vshll.u32 %v407, 16
      %v589 = vrot.slane %v587, 1
      %v590 = vsel %vm410, %v585, %v589
      %v592 = vshrl.u32 %v391, 16
      %v594 = vshll.u32 %v391, 16
      %v596 = vrot.slane %v594, 1
      %v597 = vor.u32 %v592, %v596
      %v599 = vshll.u32 %v408, 16
      %v601 = vrot.slane %v599, 1
      %v602 = vsel %vm410, %v597, %v601
      %vm651 = vcmask 1046528
      %v652 = vrot.slane %v376, 1
      %v653 = vrot.slane %v393, 1
      %v654 = vsel %vm651, %v652, %v653
      %v655 = vrot.slane %v377, 1
      %v656 = vrot.slane %v394, 1
      %v657 = vsel %vm651, %v655, %v656
      %v658 = vrot.slane %v378, 1
      %v659 = vrot.slane %v395, 1
      %v660 = vsel %vm651, %v658, %v659
      %v661 = vrot.slane %v379, 1
      %v662 = vrot.slane %v396, 1
      %v663 = vsel %vm651, %v661, %v662
      %v664 = vrot.slane %v380, 1
      %v665 = vrot.slane %v397, 1
      %v666 = vsel %vm651, %v664, %v665
      %v667 = vrot.slane %v381, 1
      %v668 = vrot.slane %v398, 1
      %v669 = vsel %vm651, %v667, %v668
      %v670 = vrot.slane %v382, 1
      %v671 = vrot.slane %v399, 1
      %v672 = vsel %vm651, %v670, %v671
      %v673 = vrot.slane %v383, 1
      %v674 = vrot.slane %v400, 1
      %v675 = vsel %vm651, %v673, %v674
      %v676 = vrot.slane %v384, 1
      %v677 = vrot.slane %v401, 1
      %v678 = vsel %vm651, %v676, %v677
      %v679 = vrot.slane %v385, 1
      %v680 = vrot.slane %v402, 1
      %v681 = vsel %vm651, %v679, %v680
      %v682 = vrot.slane %v386, 1
      %v683 = vrot.slane %v403, 1
      %v684 = vsel %vm651, %v682, %v683
      %v685 = vrot.slane %v387, 1
      %v686 = vrot.slane %v404, 1
      %v687 = vsel %vm651, %v685, %v686
      %v688 = vrot.slane %v388, 1
      %v689 = vrot.slane %v405, 1
      %v690 = vsel %vm651, %v688, %v689
      %v691 = vrot.slane %v389, 1
      %v692 = vrot.slane %v406, 1
      %v693 = vsel %vm651, %v691, %v692
      %v694 = vrot.slane %v390, 1
      %v695 = vrot.slane %v407, 1
      %v696 = vsel %vm651, %v694, %v695
      %v697 = vrot.slane %v391, 1
      %v698 = vrot.slane %v408, 1
      %v699 = vsel %vm651, %v697, %v698
      %v717 = vshrl.u32 %v392, 16
      %v719 = vshll.u32 %v392, 16
      %v721 = vrot.slane %v719, 1
      %v722 = vor.u32 %v717, %v721
      %v724 = vshll.u32 %v409, 16
      %v726 = vrot.slane %v724, 1
      %v727 = vsel %vm410, %v722, %v726
      %v731 = vrot.slane %v392, 1
      %v732 = vrot.slane %v409, 1
      %v733 = vsel %vm651, %v731, %v732
      %v735 = vld [vmem:[%s1] sm:$0xf]
      %v736 = vld [vmem:[%s1 + $0x4] sm:$0xf]
      %v737 = vld [vmem:[%s1 + $0x8] sm:$0xf]
      %v738 = vld [vmem:[%s1 + $0xc] sm:$0xf]
      %v739 = vld [vmem:[%s1 + $0x10] sm:$0xf]
      %v740 = vld [vmem:[%s1 + $0x14] sm:$0xf]
      %v741 = vld [vmem:[%s1 + $0x18] sm:$0xf]
      %v742 = vld [vmem:[%s1 + $0x1c] sm:$0xf]
      %v743 = vld [vmem:[%s1 + $0x20] sm:$0xf]
      %v744 = vld [vmem:[%s1 + $0x24] sm:$0xf]
      %v745 = vld [vmem:[%s1 + $0x28] sm:$0xf]
      %v746 = vld [vmem:[%s1 + $0x2c] sm:$0xf]
      %v747 = vld [vmem:[%s1 + $0x30] sm:$0xf]
      %v748 = vld [vmem:[%s1 + $0x34] sm:$0xf]
      %v749 = vld [vmem:[%s1 + $0x38] sm:$0xf]
      %v750 = vld [vmem:[%s1 + $0x3c] sm:$0xf]
      %v751 = vld [vmem:[%s1 + $0x40] sm:$0xf]
      %v752 = vld [vmem:[%s1 + $0x44] sm:$0xf]
      %v753 = vld [vmem:[%s1 + $0x48] sm:$0xf]
      %v754 = vld [vmem:[%s1 + $0x4c] sm:$0xf]
      %v755 = vld [vmem:[%s1 + $0x50] sm:$0xf]
      %v756 = vld [vmem:[%s1 + $0x54] sm:$0xf]
      %v757 = vld [vmem:[%s1 + $0x58] sm:$0xf]
      %v758 = vld [vmem:[%s1 + $0x5c] sm:$0xf]
      %v759 = vld [vmem:[%s1 + $0x60] sm:$0xf]
      %v760 = vld [vmem:[%s1 + $0x64] sm:$0xf]
      %v761 = vld [vmem:[%s1 + $0x68] sm:$0xf]
      %v762 = vld [vmem:[%s1 + $0x6c] sm:$0xf]
      %v763 = vld [vmem:[%s1 + $0x70] sm:$0xf]
      %v764 = vld [vmem:[%s1 + $0x74] sm:$0xf]
      %v765 = vld [vmem:[%s1 + $0x78] sm:$0xf]
      %v766 = vld [vmem:[%s1 + $0x7c] sm:$0xf]
      %v767 = vld [vmem:[%s1 + $0x80] sm:$0xf]
      %v768 = vld [vmem:[%s1 + $0x84] sm:$0xf]
      %v769 = vld [vmem:[%s1 + $0x88] sm:$0xf]
      %v770 = vld [vmem:[%s1 + $0x8c] sm:$0xf]
      %v771 = vld [vmem:[%s1 + $0x90] sm:$0xf]
      %v772 = vld [vmem:[%s1 + $0x94] sm:$0xf]
      %v773 = vld [vmem:[%s1 + $0x98] sm:$0xf]
      %v774 = vld [vmem:[%s1 + $0x9c] sm:$0xf]
      %v775 = vld [vmem:[%s1 + $0xa0] sm:$0xf]
      %v776 = vld [vmem:[%s1 + $0xa4] sm:$0xf]
      %v777 = vld [vmem:[%s1 + $0xa8] sm:$0xf]
      %v778 = vld [vmem:[%s1 + $0xac] sm:$0xf]
      %v779 = vld [vmem:[%s1 + $0xb0] sm:$0xf]
      %v780 = vld [vmem:[%s1 + $0xb4] sm:$0xf]
      %v781 = vld [vmem:[%s1 + $0xb8] sm:$0xf]
      %v782 = vld [vmem:[%s1 + $0xbc] sm:$0xf]
      %v783 = vld [vmem:[%s1 + $0xc0] sm:$0xf]
      %v784 = vld [vmem:[%s1 + $0xc4] sm:$0xf]
      %v785 = vld [vmem:[%s1 + $0xc8] sm:$0xf]
      %v786 = vld [vmem:[%s1 + $0xcc] sm:$0xf]
      %v787 = vld [vmem:[%s1 + $0xd0] sm:$0xf]
      %v788 = vld [vmem:[%s1 + $0xd4] sm:$0xf]
      %v789 = vld [vmem:[%s1 + $0xd8] sm:$0xf]
      %v790 = vld [vmem:[%s1 + $0xdc] sm:$0xf]
      %v791 = vld [vmem:[%s1 + $0xe0] sm:$0xf]
      %v792 = vld [vmem:[%s1 + $0xe4] sm:$0xf]
      %v793 = vld [vmem:[%s1 + $0xe8] sm:$0xf]
      %v794 = vld [vmem:[%s1 + $0xec] sm:$0xf]
      %v795 = vld [vmem:[%s1 + $0xf0] sm:$0xf]
      %v796 = vld [vmem:[%s1 + $0xf4] sm:$0xf]
      %v797 = vld [vmem:[%s1 + $0xf8] sm:$0xf]
      %v798 = vld [vmem:[%s1 + $0xfc] sm:$0xf]
      %v799 = vld [vmem:[%s1 + $0x100] sm:$0xf]
      %v800 = vld [vmem:[%s1 + $0x104] sm:$0xf]
      %v801 = vld [vmem:[%s1 + $0x108] sm:$0xf]
      %v802 = vld [vmem:[%s1 + $0x10c] sm:$0xf]
      %v803 = vld [vmem:[%s1 + $0x110] sm:$0xf]
      %v804 = vld [vmem:[%s1 + $0x114] sm:$0xf]
      %v805 = vld [vmem:[%s1 + $0x118] sm:$0xf]
      %v806 = vld [vmem:[%s1 + $0x11c] sm:$0xf]
      %v807 = vld [vmem:[%s1 + $0x120] sm:$0xf]
      %v808 = vld [vmem:[%s1 + $0x124] sm:$0xf]
      %v809 = vld [vmem:[%s1 + $0x128] sm:$0xf]
      %v810 = vld [vmem:[%s1 + $0x12c] sm:$0xf]
      %v811 = vld [vmem:[%s1 + $0x130] sm:$0xf]
      %v812 = vld [vmem:[%s1 + $0x134] sm:$0xf]
      %v813 = vld [vmem:[%s1 + $0x138] sm:$0xf]
      %v814 = vld [vmem:[%s1 + $0x13c] sm:$0xf]
      %v815 = vld [vmem:[%s1 + $0x140] sm:$0xf]
      %v816 = vld [vmem:[%s1 + $0x144] sm:$0xf]
      %v817 = vld [vmem:[%s1 + $0x148] sm:$0xf]
      %v818 = vld [vmem:[%s1 + $0x14c] sm:$0xf]
      %v819 = vld [vmem:[%s1 + $0x150] sm:$0xf]
      %v820 = vld [vmem:[%s1 + $0x154] sm:$0xf]
      %v821 = vld [vmem:[%s1 + $0x158] sm:$0xf]
      %v822 = vld [vmem:[%s1 + $0x15c] sm:$0xf]
      %v823 = vld [vmem:[%s1 + $0x160] sm:$0xf]
      %v824 = vld [vmem:[%s1 + $0x164] sm:$0xf]
      %v825 = vld [vmem:[%s1 + $0x168] sm:$0xf]
      %v826 = vld [vmem:[%s1 + $0x16c] sm:$0xf]
      %v827 = vld [vmem:[%s1 + $0x170] sm:$0xf]
      %v828 = vld [vmem:[%s1 + $0x174] sm:$0xf]
      %v829 = vld [vmem:[%s1 + $0x178] sm:$0xf]
      %v830 = vld [vmem:[%s1 + $0x17c] sm:$0xf]
      %v831 = vld [vmem:[%s1 + $0x180] sm:$0xf]
      %v832 = vld [vmem:[%s1 + $0x184] sm:$0xf]
      %v833 = vld [vmem:[%s1 + $0x188] sm:$0xf]
      %v834 = vld [vmem:[%s1 + $0x18c] sm:$0xf]
      %v835 = vld [vmem:[%s1 + $0x190] sm:$0xf]
      %v836 = vld [vmem:[%s1 + $0x194] sm:$0xf]
      %v837 = vld [vmem:[%s1 + $0x198] sm:$0xf]
      %v838 = vld [vmem:[%s1 + $0x19c] sm:$0xf]
      %v839 = vld [vmem:[%s1 + $0x1a0] sm:$0xf]
      %v840 = vld [vmem:[%s1 + $0x1a4] sm:$0xf]
      %v841 = vld [vmem:[%s1 + $0x1a8] sm:$0xf]
      %v842 = vld [vmem:[%s1 + $0x1ac] sm:$0xf]
      %v843 = vld [vmem:[%s1 + $0x1b0] sm:$0xf]
      %v844 = vld [vmem:[%s1 + $0x1b4] sm:$0xf]
      %v845 = vld [vmem:[%s1 + $0x1b8] sm:$0xf]
      %v846 = vld [vmem:[%s1 + $0x1bc] sm:$0xf]
      %v847 = vld [vmem:[%s1 + $0x1c0] sm:$0xf]
      %v848 = vld [vmem:[%s1 + $0x1c4] sm:$0xf]
      %v849 = vld [vmem:[%s1 + $0x1c8] sm:$0xf]
      %v850 = vld [vmem:[%s1 + $0x1cc] sm:$0xf]
      %v851 = vld [vmem:[%s1 + $0x1d0] sm:$0xf]
      %v852 = vld [vmem:[%s1 + $0x1d4] sm:$0xf]
      %v853 = vld [vmem:[%s1 + $0x1d8] sm:$0xf]
      %v854 = vld [vmem:[%s1 + $0x1dc] sm:$0xf]
      %v855 = vld [vmem:[%s1 + $0x1e0] sm:$0xf]
      %v856 = vld [vmem:[%s1 + $0x1e4] sm:$0xf]
      %v857 = vld [vmem:[%s1 + $0x1e8] sm:$0xf]
      %v858 = vld [vmem:[%s1 + $0x1ec] sm:$0xf]
      %v859 = vld [vmem:[%s1 + $0x1f0] sm:$0xf]
      %v860 = vld [vmem:[%s1 + $0x1f4] sm:$0xf]
      %v861 = vld [vmem:[%s1 + $0x1f8] sm:$0xf]
      %v862 = vld [vmem:[%s1 + $0x1fc] sm:$0xf]
      %v863 = vld [vmem:[%s1 + $0x200] sm:$0xf]
      %v864 = vld [vmem:[%s1 + $0x204] sm:$0xf]
      %v865 = vld [vmem:[%s1 + $0x208] sm:$0xf]
      %v866 = vld [vmem:[%s1 + $0x20c] sm:$0xf]
      %v867 = vld [vmem:[%s1 + $0x210] sm:$0xf]
      %v868 = vld [vmem:[%s1 + $0x214] sm:$0xf]
      %v869 = vld [vmem:[%s1 + $0x218] sm:$0xf]
      %v870 = vld [vmem:[%s1 + $0x21c] sm:$0xf]
      %v871 = vld [vmem:[%s1 + $0x220] sm:$0xf]
      %v872 = vld [vmem:[%s1 + $0x224] sm:$0xf]
      %v873 = vld [vmem:[%s1 + $0x228] sm:$0xf]
      %v874 = vld [vmem:[%s1 + $0x22c] sm:$0xf]
      %v875 = vld [vmem:[%s1 + $0x230] sm:$0xf]
      %v876 = vld [vmem:[%s1 + $0x234] sm:$0xf]
      %v877 = vld [vmem:[%s1 + $0x238] sm:$0xf]
      %v878 = vld [vmem:[%s1 + $0x23c] sm:$0xf]
      %v879 = vld [vmem:[%s2] sm:$0x1]
      %v881 = vlaneseq
      %v882 = vshrl.u32 %v881, 7
      %v883 = vsub.s32 0, %v882
      %v884 = vrot.slane %v879, %v883
      %v1030 = vunpack.c.l.b16 %v735
      %v1031 = vunpack.c.l.b16 %v736
      %v1032 = vunpack.c.l.b16 %v737
      %v1033 = vunpack.c.l.b16 %v738
      %v1034 = vunpack.c.l.b16 %v739
      %v1035 = vunpack.c.l.b16 %v740
      %v1036 = vunpack.c.l.b16 %v741
      %v1037 = vunpack.c.l.b16 %v742
      %v1038 = vunpack.c.l.b16 %v743
      %v1039 = vunpack.c.l.b16 %v744
      %v1040 = vunpack.c.l.b16 %v745
      %v1041 = vunpack.c.l.b16 %v746
      %v1042 = vunpack.c.l.b16 %v747
      %v1043 = vunpack.c.l.b16 %v748
      %v1044 = vunpack.c.l.b16 %v749
      %v1045 = vunpack.c.l.b16 %v750
      %v1046 = vunpack.c.l.b16 %v751
      %v1047 = vunpack.c.l.b16 %v752
      %v1048 = vunpack.c.l.b16 %v753
      %v1049 = vunpack.c.l.b16 %v754
      %v1050 = vunpack.c.l.b16 %v755
      %v1051 = vunpack.c.l.b16 %v756
      %v1052 = vunpack.c.l.b16 %v757
      %v1053 = vunpack.c.l.b16 %v758
      %v1054 = vunpack.c.l.b16 %v759
      %v1055 = vunpack.c.l.b16 %v760
      %v1056 = vunpack.c.l.b16 %v761
      %v1057 = vunpack.c.l.b16 %v762
      %v1058 = vunpack.c.l.b16 %v763
      %v1059 = vunpack.c.l.b16 %v764
      %v1060 = vunpack.c.l.b16 %v765
      %v1061 = vunpack.c.l.b16 %v766
      %v1062 = vunpack.c.l.b16 %v767
      %v1063 = vunpack.c.l.b16 %v768
      %v1064 = vunpack.c.l.b16 %v769
      %v1065 = vunpack.c.l.b16 %v770
      %v1066 = vunpack.c.l.b16 %v771
      %v1067 = vunpack.c.l.b16 %v772
      %v1068 = vunpack.c.l.b16 %v773
      %v1069 = vunpack.c.l.b16 %v774
      %v1070 = vunpack.c.l.b16 %v775
      %v1071 = vunpack.c.l.b16 %v776
      %v1072 = vunpack.c.l.b16 %v777
      %v1073 = vunpack.c.l.b16 %v778
      %v1074 = vunpack.c.l.b16 %v779
      %v1075 = vunpack.c.l.b16 %v780
      %v1076 = vunpack.c.l.b16 %v781
      %v1077 = vunpack.c.l.b16 %v782
      %v1078 = vunpack.c.l.b16 %v783
      %v1079 = vunpack.c.l.b16 %v784
      %v1080 = vunpack.c.l.b16 %v785
      %v1081 = vunpack.c.l.b16 %v786
      %v1082 = vunpack.c.l.b16 %v787
      %v1083 = vunpack.c.l.b16 %v788
      %v1084 = vunpack.c.l.b16 %v789
      %v1085 = vunpack.c.l.b16 %v790
      %v1086 = vunpack.c.l.b16 %v791
      %v1087 = vunpack.c.l.b16 %v792
      %v1088 = vunpack.c.l.b16 %v793
      %v1089 = vunpack.c.l.b16 %v794
      %v1090 = vunpack.c.l.b16 %v795
      %v1091 = vunpack.c.l.b16 %v796
      %v1092 = vunpack.c.l.b16 %v797
      %v1093 = vunpack.c.l.b16 %v798
      %v1094 = vunpack.c.l.b16 %v799
      %v1095 = vunpack.c.l.b16 %v800
      %v1096 = vunpack.c.l.b16 %v801
      %v1097 = vunpack.c.l.b16 %v802
      %v1098 = vunpack.c.l.b16 %v803
      %v1099 = vunpack.c.l.b16 %v804
      %v1100 = vunpack.c.l.b16 %v805
      %v1101 = vunpack.c.l.b16 %v806
      %v1102 = vunpack.c.l.b16 %v807
      %v1103 = vunpack.c.l.b16 %v808
      %v1104 = vunpack.c.l.b16 %v809
      %v1105 = vunpack.c.l.b16 %v810
      %v1106 = vunpack.c.l.b16 %v811
      %v1107 = vunpack.c.l.b16 %v812
      %v1108 = vunpack.c.l.b16 %v813
      %v1109 = vunpack.c.l.b16 %v814
      %v1110 = vunpack.c.l.b16 %v815
      %v1111 = vunpack.c.l.b16 %v816
      %v1112 = vunpack.c.l.b16 %v817
      %v1113 = vunpack.c.l.b16 %v818
      %v1114 = vunpack.c.l.b16 %v819
      %v1115 = vunpack.c.l.b16 %v820
      %v1116 = vunpack.c.l.b16 %v821
      %v1117 = vunpack.c.l.b16 %v822
      %v1118 = vunpack.c.l.b16 %v823
      %v1119 = vunpack.c.l.b16 %v824
      %v1120 = vunpack.c.l.b16 %v825
      %v1121 = vunpack.c.l.b16 %v826
      %v1122 = vunpack.c.l.b16 %v827
      %v1123 = vunpack.c.l.b16 %v828
      %v1124 = vunpack.c.l.b16 %v829
      %v1125 = vunpack.c.l.b16 %v830
      %v1126 = vunpack.c.l.b16 %v831
      %v1127 = vunpack.c.l.b16 %v832
      %v1128 = vunpack.c.l.b16 %v833
      %v1129 = vunpack.c.l.b16 %v834
      %v1130 = vunpack.c.l.b16 %v835
      %v1131 = vunpack.c.l.b16 %v836
      %v1132 = vunpack.c.l.b16 %v837
      %v1133 = vunpack.c.l.b16 %v838
      %v1134 = vunpack.c.l.b16 %v839
      %v1135 = vunpack.c.l.b16 %v840
      %v1136 = vunpack.c.l.b16 %v841
      %v1137 = vunpack.c.l.b16 %v842
      %v1138 = vunpack.c.l.b16 %v843
      %v1139 = vunpack.c.l.b16 %v844
      %v1140 = vunpack.c.l.b16 %v845
      %v1141 = vunpack.c.l.b16 %v846
      %v1142 = vunpack.c.l.b16 %v847
      %v1143 = vunpack.c.l.b16 %v848
      %v1144 = vunpack.c.l.b16 %v849
      %v1145 = vunpack.c.l.b16 %v850
      %v1146 = vunpack.c.l.b16 %v851
      %v1147 = vunpack.c.l.b16 %v852
      %v1148 = vunpack.c.l.b16 %v853
      %v1149 = vunpack.c.l.b16 %v854
      %v1150 = vunpack.c.l.b16 %v855
      %v1151 = vunpack.c.l.b16 %v856
      %v1152 = vunpack.c.l.b16 %v857
      %v1153 = vunpack.c.l.b16 %v858
      %v1154 = vunpack.c.l.b16 %v859
      %v1155 = vunpack.c.l.b16 %v860
      %v1156 = vunpack.c.l.b16 %v861
      %v1157 = vunpack.c.l.b16 %v862
      %v1158 = vunpack.c.l.b16 %v863
      %v1159 = vunpack.c.l.b16 %v864
      %v1160 = vunpack.c.l.b16 %v865
      %v1161 = vunpack.c.l.b16 %v866
      %v1162 = vunpack.c.l.b16 %v867
      %v1163 = vunpack.c.l.b16 %v868
      %v1164 = vunpack.c.l.b16 %v869
      %v1165 = vunpack.c.l.b16 %v870
      %v1166 = vunpack.c.l.b16 %v871
      %v1167 = vunpack.c.l.b16 %v872
      %v1168 = vunpack.c.l.b16 %v873
      %v1169 = vunpack.c.l.b16 %v874
      %v1170 = vunpack.c.l.b16 %v875
      %v1171 = vunpack.c.l.b16 %v876
      %v1172 = vunpack.c.l.b16 %v877
      %v1173 = vunpack.c.l.b16 %v878
      %v1174 = vpack.c.b16 %v1031, %v1030
      %v1175 = vpack.c.b16 %v1033, %v1032
      %v1176 = vpack.c.b16 %v1035, %v1034
      %v1177 = vpack.c.b16 %v1037, %v1036
      %v1178 = vpack.c.b16 %v1039, %v1038
      %v1179 = vpack.c.b16 %v1041, %v1040
      %v1180 = vpack.c.b16 %v1043, %v1042
      %v1181 = vpack.c.b16 %v1045, %v1044
      %v1182 = vpack.c.b16 %v1047, %v1046
      %v1183 = vpack.c.b16 %v1049, %v1048
      %v1184 = vpack.c.b16 %v1051, %v1050
      %v1185 = vpack.c.b16 %v1053, %v1052
      %v1186 = vpack.c.b16 %v1055, %v1054
      %v1187 = vpack.c.b16 %v1057, %v1056
      %v1188 = vpack.c.b16 %v1059, %v1058
      %v1189 = vpack.c.b16 %v1061, %v1060
      %v1190 = vpack.c.b16 %v1063, %v1062
      %v1191 = vpack.c.b16 %v1065, %v1064
      %v1192 = vpack.c.b16 %v1067, %v1066
      %v1193 = vpack.c.b16 %v1069, %v1068
      %v1194 = vpack.c.b16 %v1071, %v1070
      %v1195 = vpack.c.b16 %v1073, %v1072
      %v1196 = vpack.c.b16 %v1075, %v1074
      %v1197 = vpack.c.b16 %v1077, %v1076
      %v1198 = vpack.c.b16 %v1079, %v1078
      %v1199 = vpack.c.b16 %v1081, %v1080
      %v1200 = vpack.c.b16 %v1083, %v1082
      %v1201 = vpack.c.b16 %v1085, %v1084
      %v1202 = vpack.c.b16 %v1087, %v1086
      %v1203 = vpack.c.b16 %v1089, %v1088
      %v1204 = vpack.c.b16 %v1091, %v1090
      %v1205 = vpack.c.b16 %v1093, %v1092
      %v1206 = vpack.c.b16 %v1095, %v1094
      %v1207 = vpack.c.b16 %v1097, %v1096
      %v1208 = vpack.c.b16 %v1099, %v1098
      %v1209 = vpack.c.b16 %v1101, %v1100
      %v1210 = vpack.c.b16 %v1103, %v1102
      %v1211 = vpack.c.b16 %v1105, %v1104
      %v1212 = vpack.c.b16 %v1107, %v1106
      %v1213 = vpack.c.b16 %v1109, %v1108
      %v1214 = vpack.c.b16 %v1111, %v1110
      %v1215 = vpack.c.b16 %v1113, %v1112
      %v1216 = vpack.c.b16 %v1115, %v1114
      %v1217 = vpack.c.b16 %v1117, %v1116
      %v1218 = vpack.c.b16 %v1119, %v1118
      %v1219 = vpack.c.b16 %v1121, %v1120
      %v1220 = vpack.c.b16 %v1123, %v1122
      %v1221 = vpack.c.b16 %v1125, %v1124
      %v1222 = vpack.c.b16 %v1127, %v1126
      %v1223 = vpack.c.b16 %v1129, %v1128
      %v1224 = vpack.c.b16 %v1131, %v1130
      %v1225 = vpack.c.b16 %v1133, %v1132
      %v1226 = vpack.c.b16 %v1135, %v1134
      %v1227 = vpack.c.b16 %v1137, %v1136
      %v1228 = vpack.c.b16 %v1139, %v1138
      %v1229 = vpack.c.b16 %v1141, %v1140
      %v1230 = vpack.c.b16 %v1143, %v1142
      %v1231 = vpack.c.b16 %v1145, %v1144
      %v1232 = vpack.c.b16 %v1147, %v1146
      %v1233 = vpack.c.b16 %v1149, %v1148
      %v1234 = vpack.c.b16 %v1151, %v1150
      %v1235 = vpack.c.b16 %v1153, %v1152
      %v1236 = vpack.c.b16 %v1155, %v1154
      %v1237 = vpack.c.b16 %v1157, %v1156
      %v1238 = vpack.c.b16 %v1159, %v1158
      %v1239 = vpack.c.b16 %v1161, %v1160
      %v1240 = vpack.c.b16 %v1163, %v1162
      %v1241 = vpack.c.b16 %v1165, %v1164
      %v1242 = vpack.c.b16 %v1167, %v1166
      %v1243 = vpack.c.b16 %v1169, %v1168
      %v1244 = vpack.c.b16 %v1171, %v1170
      %v1245 = vpack.c.b16 %v1173, %v1172
      %1318 = vmatprep.subr.bf16.mxu0 0
      %1319 = vmatpush1.bf16.msra.mxu0 %v1181
      %1320 = vmatprep.subr.bf16.mxu0 0
      %1321 = vmatpush1.bf16.msra.mxu0 %v1180
      %1322 = vmatprep.subr.bf16.mxu0 0
      %1323 = vmatpush1.bf16.msra.mxu0 %v1179
      %1324 = vmatprep.subr.bf16.mxu0 0
      %1325 = vmatpush1.bf16.msra.mxu0 %v1178
      %1326 = vmatprep.subr.bf16.mxu0 0
      %1327 = vmatpush1.bf16.msra.mxu0 %v1177
      %1328 = vmatprep.subr.bf16.mxu0 0
      %1329 = vmatpush1.bf16.msra.mxu0 %v1176
      %1330 = vmatprep.subr.bf16.mxu0 0
      %1331 = vmatpush1.bf16.msra.mxu0 %v1175
      %1332 = vmatprep.subr.bf16.mxu0 0
      %1333 = vmatpush1.bf16.msra.mxu0 %v1174
      %1334 = vmatprep.subr.bf16.mxu0 0
      %1335 = vmatpush2.bf16.msra.mxu0 %v1189
      %1336 = vmatprep.subr.bf16.mxu0 0
      %1337 = vmatpush2.bf16.msra.mxu0 %v1188
      %1338 = vmatprep.subr.bf16.mxu0 0
      %1339 = vmatpush2.bf16.msra.mxu0 %v1187
      %1340 = vmatprep.subr.bf16.mxu0 0
      %1341 = vmatpush2.bf16.msra.mxu0 %v1186
      %1342 = vmatprep.subr.bf16.mxu0 0
      %1343 = vmatpush2.bf16.msra.mxu0 %v1185
      %1344 = vmatprep.subr.bf16.mxu0 0
      %1345 = vmatpush2.bf16.msra.mxu0 %v1184
      %1346 = vmatprep.subr.bf16.mxu0 0
      %1347 = vmatpush2.bf16.msra.mxu0 %v1183
      %1348 = vmatprep.subr.bf16.mxu0 0
      %1349 = vmatpush2.bf16.msra.mxu0 %v1182
      %1350 = vmatprep.mubr.bf16.mxu0 %v422
      %1351 = vmatmul.mubr.bf16.gmra.mxu0 %v376
      %v1352 = vpop.f32.mrf.mxu0
      %v1353 = vadd.f32 %v884, %v1352
      %v1354 = vpop.f32.mrf.mxu0
      %v1355 = vpop.f32.mrf.mxu0
      %v1356 = vadd.f32 %v884, %v1355
      %v1357 = vpop.f32.mrf.mxu0
      %1358 = vmatprep.mubr.bf16.mxu0 %v434
      %1359 = vmatmul.mubr.bf16.gmra.mxu0 %v377
      %v1360 = vpop.f32.mrf.mxu0
      %v1361 = vadd.f32 %v884, %v1360
      %v1362 = vpop.f32.mrf.mxu0
      %v1363 = vpop.f32.mrf.mxu0
      %v1364 = vadd.f32 %v884, %v1363
      %v1365 = vpop.f32.mrf.mxu0
      %1366 = vmatprep.mubr.bf16.mxu0 %v446
      %1367 = vmatmul.mubr.bf16.gmra.mxu0 %v378
      %v1368 = vpop.f32.mrf.mxu0
      %v1369 = vadd.f32 %v884, %v1368
      %v1370 = vpop.f32.mrf.mxu0
      %v1371 = vpop.f32.mrf.mxu0
      %v1372 = vadd.f32 %v884, %v1371
      %v1373 = vpop.f32.mrf.mxu0
      %1374 = vmatprep.mubr.bf16.mxu0 %v458
      %1375 = vmatmul.mubr.bf16.gmra.mxu0 %v379
      %v1376 = vpop.f32.mrf.mxu0
      %v1377 = vadd.f32 %v884, %v1376
      %v1378 = vpop.f32.mrf.mxu0
      %v1379 = vpop.f32.mrf.mxu0
      %v1380 = vadd.f32 %v884, %v1379
      %v1381 = vpop.f32.mrf.mxu0
      %1382 = vmatprep.mubr.bf16.mxu0 %v470
      %1383 = vmatmul.mubr.bf16.gmra.mxu0 %v380
      %v1384 = vpop.f32.mrf.mxu0
      %v1385 = vadd.f32 %v884, %v1384
      %v1386 = vpop.f32.mrf.mxu0
      %v1387 = vpop.f32.mrf.mxu0
      %v1388 = vadd.f32 %v884, %v1387
      %v1389 = vpop.f32.mrf.mxu0
      %1390 = vmatprep.mubr.bf16.mxu0 %v482
      %1391 = vmatmul.mubr.bf16.gmra.mxu0 %v381
      %v1392 = vpop.f32.mrf.mxu0
      %v1393 = vadd.f32 %v884, %v1392
      %v1394 = vpop.f32.mrf.mxu0
      %v1395 = vpop.f32.mrf.mxu0
      %v1396 = vadd.f32 %v884, %v1395
      %v1397 = vpop.f32.mrf.mxu0
      %1398 = vmatprep.mubr.bf16.mxu0 %v494
      %1399 = vmatmul.mubr.bf16.gmra.mxu0 %v382
      %v1400 = vpop.f32.mrf.mxu0
      %v1401 = vadd.f32 %v884, %v1400
      %v1402 = vpop.f32.mrf.mxu0
      %v1403 = vpop.f32.mrf.mxu0
      %v1404 = vadd.f32 %v884, %v1403
      %v1405 = vpop.f32.mrf.mxu0
      %1406 = vmatprep.mubr.bf16.mxu0 %v506
      %1407 = vmatmul.mubr.bf16.gmra.mxu0 %v383
      %v1408 = vpop.f32.mrf.mxu0
      %v1409 = vadd.f32 %v884, %v1408
      %v1410 = vpop.f32.mrf.mxu0
      %v1411 = vpop.f32.mrf.mxu0
      %v1412 = vadd.f32 %v884, %v1411
      %v1413 = vpop.f32.mrf.mxu0
      %1414 = vmatprep.mubr.bf16.mxu0 %v518
      %1415 = vmatmul.mubr.bf16.gmra.mxu0 %v384
      %v1416 = vpop.f32.mrf.mxu0
      %v1417 = vadd.f32 %v884, %v1416
      %v1418 = vpop.f32.mrf.mxu0
      %v1419 = vpop.f32.mrf.mxu0
      %v1420 = vadd.f32 %v884, %v1419
      %v1421 = vpop.f32.mrf.mxu0
      %1422 = vmatprep.mubr.bf16.mxu0 %v530
      %1423 = vmatmul.mubr.bf16.gmra.mxu0 %v385
      %v1424 = vpop.f32.mrf.mxu0
      %v1425 = vadd.f32 %v884, %v1424
      %v1426 = vpop.f32.mrf.mxu0
      %v1427 = vpop.f32.mrf.mxu0
      %v1428 = vadd.f32 %v884, %v1427
      %v1429 = vpop.f32.mrf.mxu0
      %1430 = vmatprep.mubr.bf16.mxu0 %v542
      %1431 = vmatmul.mubr.bf16.gmra.mxu0 %v386
      %v1432 = vpop.f32.mrf.mxu0
      %v1433 = vadd.f32 %v884, %v1432
      %v1434 = vpop.f32.mrf.mxu0
      %v1435 = vpop.f32.mrf.mxu0
      %v1436 = vadd.f32 %v884, %v1435
      %v1437 = vpop.f32.mrf.mxu0
      %1438 = vmatprep.mubr.bf16.mxu0 %v554
      %1439 = vmatmul.mubr.bf16.gmra.mxu0 %v387
      %v1440 = vpop.f32.mrf.mxu0
      %v1441 = vadd.f32 %v884, %v1440
      %v1442 = vpop.f32.mrf.mxu0
      %v1443 = vpop.f32.mrf.mxu0
      %v1444 = vadd.f32 %v884, %v1443
      %v1445 = vpop.f32.mrf.mxu0
      %1446 = vmatprep.mubr.bf16.mxu0 %v566
      %1447 = vmatmul.mubr.bf16.gmra.mxu0 %v388
      %v1448 = vpop.f32.mrf.mxu0
      %v1449 = vadd.f32 %v884, %v1448
      %v1450 = vpop.f32.mrf.mxu0
      %v1451 = vpop.f32.mrf.mxu0
      %v1452 = vadd.f32 %v884, %v1451
      %v1453 = vpop.f32.mrf.mxu0
      %1454 = vmatprep.mubr.bf16.mxu0 %v578
      %1455 = vmatmul.mubr.bf16.gmra.mxu0 %v389
      %v1456 = vpop.f32.mrf.mxu0
      %v1457 = vadd.f32 %v884, %v1456
      %v1458 = vpop.f32.mrf.mxu0
      %v1459 = vpop.f32.mrf.mxu0
      %v1460 = vadd.f32 %v884, %v1459
      %v1461 = vpop.f32.mrf.mxu0
      %1462 = vmatprep.mubr.bf16.mxu0 %v590
      %1463 = vmatmul.mubr.bf16.gmra.mxu0 %v390
      %v1464 = vpop.f32.mrf.mxu0
      %v1465 = vadd.f32 %v884, %v1464
      %v1466 = vpop.f32.mrf.mxu0
      %v1467 = vpop.f32.mrf.mxu0
      %v1468 = vadd.f32 %v884, %v1467
      %v1469 = vpop.f32.mrf.mxu0
      %1470 = vmatprep.mubr.bf16.mxu0 %v602
      %1471 = vmatmul.mubr.bf16.gmra.mxu0 %v391
      %v1472 = vpop.f32.mrf.mxu0
      %v1473 = vadd.f32 %v884, %v1472
      %v1474 = vpop.f32.mrf.mxu0
      %v1475 = vpop.f32.mrf.mxu0
      %v1476 = vadd.f32 %v884, %v1475
      %v1477 = vpop.f32.mrf.mxu0
      %1478 = vdwg.mxu0
      %1479 = vmatprep.subr.bf16.mxu0 0
      %1480 = vmatpush1.bf16.msra.mxu0 %v1197
      %1481 = vmatprep.subr.bf16.mxu0 0
      %1482 = vmatpush1.bf16.msra.mxu0 %v1196
      %1483 = vmatprep.subr.bf16.mxu0 0
      %1484 = vmatpush1.bf16.msra.mxu0 %v1195
      %1485 = vmatprep.subr.bf16.mxu0 0
      %1486 = vmatpush1.bf16.msra.mxu0 %v1194
      %1487 = vmatprep.subr.bf16.mxu0 0
      %1488 = vmatpush1.bf16.msra.mxu0 %v1193
      %1489 = vmatprep.subr.bf16.mxu0 0
      %1490 = vmatpush1.bf16.msra.mxu0 %v1192
      %1491 = vmatprep.subr.bf16.mxu0 0
      %1492 = vmatpush1.bf16.msra.mxu0 %v1191
      %1493 = vmatprep.subr.bf16.mxu0 0
      %1494 = vmatpush1.bf16.msra.mxu0 %v1190
      %1495 = vmatprep.subr.bf16.mxu0 0
      %1496 = vmatpush2.bf16.msra.mxu0 %v1205
      %1497 = vmatprep.subr.bf16.mxu0 0
      %1498 = vmatpush2.bf16.msra.mxu0 %v1204
      %1499 = vmatprep.subr.bf16.mxu0 0
      %1500 = vmatpush2.bf16.msra.mxu0 %v1203
      %1501 = vmatprep.subr.bf16.mxu0 0
      %1502 = vmatpush2.bf16.msra.mxu0 %v1202
      %1503 = vmatprep.subr.bf16.mxu0 0
      %1504 = vmatpush2.bf16.msra.mxu0 %v1201
      %1505 = vmatprep.subr.bf16.mxu0 0
      %1506 = vmatpush2.bf16.msra.mxu0 %v1200
      %1507 = vmatprep.subr.bf16.mxu0 0
      %1508 = vmatpush2.bf16.msra.mxu0 %v1199
      %1509 = vmatprep.subr.bf16.mxu0 0
      %1510 = vmatpush2.bf16.msra.mxu0 %v1198
      %1511 = vmatprep.mubr.bf16.mxu0 %v377
      %1512 = vmatmul.mubr.bf16.gmra.mxu0 %v654
      %v1513 = vpop.f32.mrf.mxu0
      %v1514 = vadd.f32 %v1353, %v1513
      %v1515 = vpop.f32.mrf.mxu0
      %v1516 = vpop.f32.mrf.mxu0
      %v1517 = vadd.f32 %v1356, %v1516
      %v1518 = vpop.f32.mrf.mxu0
      %1519 = vmatprep.mubr.bf16.mxu0 %v378
      %1520 = vmatmul.mubr.bf16.gmra.mxu0 %v657
      %v1521 = vpop.f32.mrf.mxu0
      %v1522 = vadd.f32 %v1361, %v1521
      %v1523 = vpop.f32.mrf.mxu0
      %v1524 = vpop.f32.mrf.mxu0
      %v1525 = vadd.f32 %v1364, %v1524
      %v1526 = vpop.f32.mrf.mxu0
      %1527 = vmatprep.mubr.bf16.mxu0 %v379
      %1528 = vmatmul.mubr.bf16.gmra.mxu0 %v660
      %v1529 = vpop.f32.mrf.mxu0
      %v1530 = vadd.f32 %v1369, %v1529
      %v1531 = vpop.f32.mrf.mxu0
      %v1532 = vpop.f32.mrf.mxu0
      %v1533 = vadd.f32 %v1372, %v1532
      %v1534 = vpop.f32.mrf.mxu0
      %1535 = vmatprep.mubr.bf16.mxu0 %v380
      %1536 = vmatmul.mubr.bf16.gmra.mxu0 %v663
      %v1537 = vpop.f32.mrf.mxu0
      %v1538 = vadd.f32 %v1377, %v1537
      %v1539 = vpop.f32.mrf.mxu0
      %v1540 = vpop.f32.mrf.mxu0
      %v1541 = vadd.f32 %v1380, %v1540
      %v1542 = vpop.f32.mrf.mxu0
      %1543 = vmatprep.mubr.bf16.mxu0 %v381
      %1544 = vmatmul.mubr.bf16.gmra.mxu0 %v666
      %v1545 = vpop.f32.mrf.mxu0
      %v1546 = vadd.f32 %v1385, %v1545
      %v1547 = vpop.f32.mrf.mxu0
      %v1548 = vpop.f32.mrf.mxu0
      %v1549 = vadd.f32 %v1388, %v1548
      %v1550 = vpop.f32.mrf.mxu0
      %1551 = vmatprep.mubr.bf16.mxu0 %v382
      %1552 = vmatmul.mubr.bf16.gmra.mxu0 %v669
      %v1553 = vpop.f32.mrf.mxu0
      %v1554 = vadd.f32 %v1393, %v1553
      %v1555 = vpop.f32.mrf.mxu0
      %v1556 = vpop.f32.mrf.mxu0
      %v1557 = vadd.f32 %v1396, %v1556
      %v1558 = vpop.f32.mrf.mxu0
      %1559 = vmatprep.mubr.bf16.mxu0 %v383
      %1560 = vmatmul.mubr.bf16.gmra.mxu0 %v672
      %v1561 = vpop.f32.mrf.mxu0
      %v1562 = vadd.f32 %v1401, %v1561
      %v1563 = vpop.f32.mrf.mxu0
      %v1564 = vpop.f32.mrf.mxu0
      %v1565 = vadd.f32 %v1404, %v1564
      %v1566 = vpop.f32.mrf.mxu0
      %1567 = vmatprep.mubr.bf16.mxu0 %v384
      %1568 = vmatmul.mubr.bf16.gmra.mxu0 %v675
      %v1569 = vpop.f32.mrf.mxu0
      %v1570 = vadd.f32 %v1409, %v1569
      %v1571 = vpop.f32.mrf.mxu0
      %v1572 = vpop.f32.mrf.mxu0
      %v1573 = vadd.f32 %v1412, %v1572
      %v1574 = vpop.f32.mrf.mxu0
      %1575 = vmatprep.mubr.bf16.mxu0 %v385
      %1576 = vmatmul.mubr.bf16.gmra.mxu0 %v678
      %v1577 = vpop.f32.mrf.mxu0
      %v1578 = vadd.f32 %v1417, %v1577
      %v1579 = vpop.f32.mrf.mxu0
      %v1580 = vpop.f32.mrf.mxu0
      %v1581 = vadd.f32 %v1420, %v1580
      %v1582 = vpop.f32.mrf.mxu0
      %1583 = vmatprep.mubr.bf16.mxu0 %v386
      %1584 = vmatmul.mubr.bf16.gmra.mxu0 %v681
      %v1585 = vpop.f32.mrf.mxu0
      %v1586 = vadd.f32 %v1425, %v1585
      %v1587 = vpop.f32.mrf.mxu0
      %v1588 = vpop.f32.mrf.mxu0
      %v1589 = vadd.f32 %v1428, %v1588
      %v1590 = vpop.f32.mrf.mxu0
      %1591 = vmatprep.mubr.bf16.mxu0 %v387
      %1592 = vmatmul.mubr.bf16.gmra.mxu0 %v684
      %v1593 = vpop.f32.mrf.mxu0
      %v1594 = vadd.f32 %v1433, %v1593
      %v1595 = vpop.f32.mrf.mxu0
      %v1596 = vpop.f32.mrf.mxu0
      %v1597 = vadd.f32 %v1436, %v1596
      %v1598 = vpop.f32.mrf.mxu0
      %1599 = vmatprep.mubr.bf16.mxu0 %v388
      %1600 = vmatmul.mubr.bf16.gmra.mxu0 %v687
      %v1601 = vpop.f32.mrf.mxu0
      %v1602 = vadd.f32 %v1441, %v1601
      %v1603 = vpop.f32.mrf.mxu0
      %v1604 = vpop.f32.mrf.mxu0
      %v1605 = vadd.f32 %v1444, %v1604
      %v1606 = vpop.f32.mrf.mxu0
      %1607 = vmatprep.mubr.bf16.mxu0 %v389
      %1608 = vmatmul.mubr.bf16.gmra.mxu0 %v690
      %v1609 = vpop.f32.mrf.mxu0
      %v1610 = vadd.f32 %v1449, %v1609
      %v1611 = vpop.f32.mrf.mxu0
      %v1612 = vpop.f32.mrf.mxu0
      %v1613 = vadd.f32 %v1452, %v1612
      %v1614 = vpop.f32.mrf.mxu0
      %1615 = vmatprep.mubr.bf16.mxu0 %v390
      %1616 = vmatmul.mubr.bf16.gmra.mxu0 %v693
      %v1617 = vpop.f32.mrf.mxu0
      %v1618 = vadd.f32 %v1457, %v1617
      %v1619 = vpop.f32.mrf.mxu0
      %v1620 = vpop.f32.mrf.mxu0
      %v1621 = vadd.f32 %v1460, %v1620
      %v1622 = vpop.f32.mrf.mxu0
      %1623 = vmatprep.mubr.bf16.mxu0 %v391
      %1624 = vmatmul.mubr.bf16.gmra.mxu0 %v696
      %v1625 = vpop.f32.mrf.mxu0
      %v1626 = vadd.f32 %v1465, %v1625
      %v1627 = vpop.f32.mrf.mxu0
      %v1628 = vpop.f32.mrf.mxu0
      %v1629 = vadd.f32 %v1468, %v1628
      %v1630 = vpop.f32.mrf.mxu0
      %1631 = vmatprep.mubr.bf16.mxu0 %v392
      %1632 = vmatmul.mubr.bf16.gmra.mxu0 %v699
      %v1633 = vpop.f32.mrf.mxu0
      %v1634 = vadd.f32 %v1473, %v1633
      %v1635 = vpop.f32.mrf.mxu0
      %v1636 = vpop.f32.mrf.mxu0
      %v1637 = vadd.f32 %v1476, %v1636
      %v1638 = vpop.f32.mrf.mxu0
      %1639 = vdwg.mxu0
      %1640 = vmatprep.subr.bf16.mxu0 0
      %1641 = vmatpush1.bf16.msra.mxu0 %v1213
      %1642 = vmatprep.subr.bf16.mxu0 0
      %1643 = vmatpush1.bf16.msra.mxu0 %v1212
      %1644 = vmatprep.subr.bf16.mxu0 0
      %1645 = vmatpush1.bf16.msra.mxu0 %v1211
      %1646 = vmatprep.subr.bf16.mxu0 0
      %1647 = vmatpush1.bf16.msra.mxu0 %v1210
      %1648 = vmatprep.subr.bf16.mxu0 0
      %1649 = vmatpush1.bf16.msra.mxu0 %v1209
      %1650 = vmatprep.subr.bf16.mxu0 0
      %1651 = vmatpush1.bf16.msra.mxu0 %v1208
      %1652 = vmatprep.subr.bf16.mxu0 0
      %1653 = vmatpush1.bf16.msra.mxu0 %v1207
      %1654 = vmatprep.subr.bf16.mxu0 0
      %1655 = vmatpush1.bf16.msra.mxu0 %v1206
      %1656 = vmatprep.subr.bf16.mxu0 0
      %1657 = vmatpush2.bf16.msra.mxu0 %v1221
      %1658 = vmatprep.subr.bf16.mxu0 0
      %1659 = vmatpush2.bf16.msra.mxu0 %v1220
      %1660 = vmatprep.subr.bf16.mxu0 0
      %1661 = vmatpush2.bf16.msra.mxu0 %v1219
      %1662 = vmatprep.subr.bf16.mxu0 0
      %1663 = vmatpush2.bf16.msra.mxu0 %v1218
      %1664 = vmatprep.subr.bf16.mxu0 0
      %1665 = vmatpush2.bf16.msra.mxu0 %v1217
      %1666 = vmatprep.subr.bf16.mxu0 0
      %1667 = vmatpush2.bf16.msra.mxu0 %v1216
      %1668 = vmatprep.subr.bf16.mxu0 0
      %1669 = vmatpush2.bf16.msra.mxu0 %v1215
      %1670 = vmatprep.subr.bf16.mxu0 0
      %1671 = vmatpush2.bf16.msra.mxu0 %v1214
      %1672 = vmatprep.mubr.bf16.mxu0 %v657
      %1673 = vmatmul.mubr.bf16.gmra.mxu0 %v434
      %v1674 = vpop.f32.mrf.mxu0
      %v1675 = vadd.f32 %v1514, %v1674
      %v1676 = vpop.f32.mrf.mxu0
      %v1677 = vpop.f32.mrf.mxu0
      %v1678 = vadd.f32 %v1517, %v1677
      %v1679 = vpop.f32.mrf.mxu0
      %1680 = vmatprep.mubr.bf16.mxu0 %v660
      %1681 = vmatmul.mubr.bf16.gmra.mxu0 %v446
      %v1682 = vpop.f32.mrf.mxu0
      %v1683 = vadd.f32 %v1522, %v1682
      %v1684 = vpop.f32.mrf.mxu0
      %v1685 = vpop.f32.mrf.mxu0
      %v1686 = vadd.f32 %v1525, %v1685
      %v1687 = vpop.f32.mrf.mxu0
      %1688 = vmatprep.mubr.bf16.mxu0 %v663
      %1689 = vmatmul.mubr.bf16.gmra.mxu0 %v458
      %v1690 = vpop.f32.mrf.mxu0
      %v1691 = vadd.f32 %v1530, %v1690
      %v1692 = vpop.f32.mrf.mxu0
      %v1693 = vpop.f32.mrf.mxu0
      %v1694 = vadd.f32 %v1533, %v1693
      %v1695 = vpop.f32.mrf.mxu0
      %1696 = vmatprep.mubr.bf16.mxu0 %v666
      %1697 = vmatmul.mubr.bf16.gmra.mxu0 %v470
      %v1698 = vpop.f32.mrf.mxu0
      %v1699 = vadd.f32 %v1538, %v1698
      %v1700 = vpop.f32.mrf.mxu0
      %v1701 = vpop.f32.mrf.mxu0
      %v1702 = vadd.f32 %v1541, %v1701
      %v1703 = vpop.f32.mrf.mxu0
      %1704 = vmatprep.mubr.bf16.mxu0 %v669
      %1705 = vmatmul.mubr.bf16.gmra.mxu0 %v482
      %v1706 = vpop.f32.mrf.mxu0
      %v1707 = vadd.f32 %v1546, %v1706
      %v1708 = vpop.f32.mrf.mxu0
      %v1709 = vpop.f32.mrf.mxu0
      %v1710 = vadd.f32 %v1549, %v1709
      %v1711 = vpop.f32.mrf.mxu0
      %1712 = vmatprep.mubr.bf16.mxu0 %v672
      %1713 = vmatmul.mubr.bf16.gmra.mxu0 %v494
      %v1714 = vpop.f32.mrf.mxu0
      %v1715 = vadd.f32 %v1554, %v1714
      %v1716 = vpop.f32.mrf.mxu0
      %v1717 = vpop.f32.mrf.mxu0
      %v1718 = vadd.f32 %v1557, %v1717
      %v1719 = vpop.f32.mrf.mxu0
      %1720 = vmatprep.mubr.bf16.mxu0 %v675
      %1721 = vmatmul.mubr.bf16.gmra.mxu0 %v506
      %v1722 = vpop.f32.mrf.mxu0
      %v1723 = vadd.f32 %v1562, %v1722
      %v1724 = vpop.f32.mrf.mxu0
      %v1725 = vpop.f32.mrf.mxu0
      %v1726 = vadd.f32 %v1565, %v1725
      %v1727 = vpop.f32.mrf.mxu0
      %1728 = vmatprep.mubr.bf16.mxu0 %v678
      %1729 = vmatmul.mubr.bf16.gmra.mxu0 %v518
      %v1730 = vpop.f32.mrf.mxu0
      %v1731 = vadd.f32 %v1570, %v1730
      %v1732 = vpop.f32.mrf.mxu0
      %v1733 = vpop.f32.mrf.mxu0
      %v1734 = vadd.f32 %v1573, %v1733
      %v1735 = vpop.f32.mrf.mxu0
      %1736 = vmatprep.mubr.bf16.mxu0 %v681
      %1737 = vmatmul.mubr.bf16.gmra.mxu0 %v530
      %v1738 = vpop.f32.mrf.mxu0
      %v1739 = vadd.f32 %v1578, %v1738
      %v1740 = vpop.f32.mrf.mxu0
      %v1741 = vpop.f32.mrf.mxu0
      %v1742 = vadd.f32 %v1581, %v1741
      %v1743 = vpop.f32.mrf.mxu0
      %1744 = vmatprep.mubr.bf16.mxu0 %v684
      %1745 = vmatmul.mubr.bf16.gmra.mxu0 %v542
      %v1746 = vpop.f32.mrf.mxu0
      %v1747 = vadd.f32 %v1586, %v1746
      %v1748 = vpop.f32.mrf.mxu0
      %v1749 = vpop.f32.mrf.mxu0
      %v1750 = vadd.f32 %v1589, %v1749
      %v1751 = vpop.f32.mrf.mxu0
      %1752 = vmatprep.mubr.bf16.mxu0 %v687
      %1753 = vmatmul.mubr.bf16.gmra.mxu0 %v554
      %v1754 = vpop.f32.mrf.mxu0
      %v1755 = vadd.f32 %v1594, %v1754
      %v1756 = vpop.f32.mrf.mxu0
      %v1757 = vpop.f32.mrf.mxu0
      %v1758 = vadd.f32 %v1597, %v1757
      %v1759 = vpop.f32.mrf.mxu0
      %1760 = vmatprep.mubr.bf16.mxu0 %v690
      %1761 = vmatmul.mubr.bf16.gmra.mxu0 %v566
      %v1762 = vpop.f32.mrf.mxu0
      %v1763 = vadd.f32 %v1602, %v1762
      %v1764 = vpop.f32.mrf.mxu0
      %v1765 = vpop.f32.mrf.mxu0
      %v1766 = vadd.f32 %v1605, %v1765
      %v1767 = vpop.f32.mrf.mxu0
      %1768 = vmatprep.mubr.bf16.mxu0 %v693
      %1769 = vmatmul.mubr.bf16.gmra.mxu0 %v578
      %v1770 = vpop.f32.mrf.mxu0
      %v1771 = vadd.f32 %v1610, %v1770
      %v1772 = vpop.f32.mrf.mxu0
      %v1773 = vpop.f32.mrf.mxu0
      %v1774 = vadd.f32 %v1613, %v1773
      %v1775 = vpop.f32.mrf.mxu0
      %1776 = vmatprep.mubr.bf16.mxu0 %v696
      %1777 = vmatmul.mubr.bf16.gmra.mxu0 %v590
      %v1778 = vpop.f32.mrf.mxu0
      %v1779 = vadd.f32 %v1618, %v1778
      %v1780 = vpop.f32.mrf.mxu0
      %v1781 = vpop.f32.mrf.mxu0
      %v1782 = vadd.f32 %v1621, %v1781
      %v1783 = vpop.f32.mrf.mxu0
      %1784 = vmatprep.mubr.bf16.mxu0 %v699
      %1785 = vmatmul.mubr.bf16.gmra.mxu0 %v602
      %v1786 = vpop.f32.mrf.mxu0
      %v1787 = vadd.f32 %v1626, %v1786
      %v1788 = vpop.f32.mrf.mxu0
      %v1789 = vpop.f32.mrf.mxu0
      %v1790 = vadd.f32 %v1629, %v1789
      %v1791 = vpop.f32.mrf.mxu0
      %1792 = vmatprep.mubr.bf16.mxu0 %v733
      %1793 = vmatmul.mubr.bf16.gmra.mxu0 %v727
      %v1794 = vpop.f32.mrf.mxu0
      %v1795 = vadd.f32 %v1634, %v1794
      %v1796 = vpop.f32.mrf.mxu0
      %v1797 = vpop.f32.mrf.mxu0
      %v1798 = vadd.f32 %v1637, %v1797
      %v1799 = vpop.f32.mrf.mxu0
      %1800 = vdwg.mxu0
      %1801 = vmatprep.subr.bf16.mxu0 0
      %1802 = vmatpush1.bf16.msra.mxu0 %v1229
      %1803 = vmatprep.subr.bf16.mxu0 0
      %1804 = vmatpush1.bf16.msra.mxu0 %v1228
      %1805 = vmatprep.subr.bf16.mxu0 0
      %1806 = vmatpush1.bf16.msra.mxu0 %v1227
      %1807 = vmatprep.subr.bf16.mxu0 0
      %1808 = vmatpush1.bf16.msra.mxu0 %v1226
      %1809 = vmatprep.subr.bf16.mxu0 0
      %1810 = vmatpush1.bf16.msra.mxu0 %v1225
      %1811 = vmatprep.subr.bf16.mxu0 0
      %1812 = vmatpush1.bf16.msra.mxu0 %v1224
      %1813 = vmatprep.subr.bf16.mxu0 0
      %1814 = vmatpush1.bf16.msra.mxu0 %v1223
      %1815 = vmatprep.subr.bf16.mxu0 0
      %1816 = vmatpush1.bf16.msra.mxu0 %v1222
      %1817 = vmatprep.subr.bf16.mxu0 0
      %1818 = vmatpush2.bf16.msra.mxu0 %v1237
      %1819 = vmatprep.subr.bf16.mxu0 0
      %1820 = vmatpush2.bf16.msra.mxu0 %v1236
      %1821 = vmatprep.subr.bf16.mxu0 0
      %1822 = vmatpush2.bf16.msra.mxu0 %v1235
      %1823 = vmatprep.subr.bf16.mxu0 0
      %1824 = vmatpush2.bf16.msra.mxu0 %v1234
      %1825 = vmatprep.subr.bf16.mxu0 0
      %1826 = vmatpush2.bf16.msra.mxu0 %v1233
      %1827 = vmatprep.subr.bf16.mxu0 0
      %1828 = vmatpush2.bf16.msra.mxu0 %v1232
      %1829 = vmatprep.subr.bf16.mxu0 0
      %1830 = vmatpush2.bf16.msra.mxu0 %v1231
      %1831 = vmatprep.subr.bf16.mxu0 0
      %1832 = vmatpush2.bf16.msra.mxu0 %v1230
      %1833 = vmatprep.mubr.bf16.mxu0 %v446
      %1834 = vmatmul.mubr.bf16.gmra.mxu0 %v378
      %v1835 = vpop.f32.mrf.mxu0
      %v1836 = vadd.f32 %v1675, %v1835
      %v1837 = vpop.f32.mrf.mxu0
      %v1838 = vpop.f32.mrf.mxu0
      %v1839 = vadd.f32 %v1678, %v1838
      %v1840 = vpop.f32.mrf.mxu0
      %1841 = vmatprep.mubr.bf16.mxu0 %v458
      %1842 = vmatmul.mubr.bf16.gmra.mxu0 %v379
      %v1843 = vpop.f32.mrf.mxu0
      %v1844 = vadd.f32 %v1683, %v1843
      %v1845 = vpop.f32.mrf.mxu0
      %v1846 = vpop.f32.mrf.mxu0
      %v1847 = vadd.f32 %v1686, %v1846
      %v1848 = vpop.f32.mrf.mxu0
      %1849 = vmatprep.mubr.bf16.mxu0 %v470
      %1850 = vmatmul.mubr.bf16.gmra.mxu0 %v380
      %v1851 = vpop.f32.mrf.mxu0
      %v1852 = vadd.f32 %v1691, %v1851
      %v1853 = vpop.f32.mrf.mxu0
      %v1854 = vpop.f32.mrf.mxu0
      %v1855 = vadd.f32 %v1694, %v1854
      %v1856 = vpop.f32.mrf.mxu0
      %1857 = vmatprep.mubr.bf16.mxu0 %v482
      %1858 = vmatmul.mubr.bf16.gmra.mxu0 %v381
      %v1859 = vpop.f32.mrf.mxu0
      %v1860 = vadd.f32 %v1699, %v1859
      %v1861 = vpop.f32.mrf.mxu0
      %v1862 = vpop.f32.mrf.mxu0
      %v1863 = vadd.f32 %v1702, %v1862
      %v1864 = vpop.f32.mrf.mxu0
      %1865 = vmatprep.mubr.bf16.mxu0 %v494
      %1866 = vmatmul.mubr.bf16.gmra.mxu0 %v382
      %v1867 = vpop.f32.mrf.mxu0
      %v1868 = vadd.f32 %v1707, %v1867
      %v1869 = vpop.f32.mrf.mxu0
      %v1870 = vpop.f32.mrf.mxu0
      %v1871 = vadd.f32 %v1710, %v1870
      %v1872 = vpop.f32.mrf.mxu0
      %1873 = vmatprep.mubr.bf16.mxu0 %v506
      %1874 = vmatmul.mubr.bf16.gmra.mxu0 %v383
      %v1875 = vpop.f32.mrf.mxu0
      %v1876 = vadd.f32 %v1715, %v1875
      %v1877 = vpop.f32.mrf.mxu0
      %v1878 = vpop.f32.mrf.mxu0
      %v1879 = vadd.f32 %v1718, %v1878
      %v1880 = vpop.f32.mrf.mxu0
      %1881 = vmatprep.mubr.bf16.mxu0 %v518
      %1882 = vmatmul.mubr.bf16.gmra.mxu0 %v384
      %v1883 = vpop.f32.mrf.mxu0
      %v1884 = vadd.f32 %v1723, %v1883
      %v1885 = vpop.f32.mrf.mxu0
      %v1886 = vpop.f32.mrf.mxu0
      %v1887 = vadd.f32 %v1726, %v1886
      %v1888 = vpop.f32.mrf.mxu0
      %1889 = vmatprep.mubr.bf16.mxu0 %v530
      %1890 = vmatmul.mubr.bf16.gmra.mxu0 %v385
      %v1891 = vpop.f32.mrf.mxu0
      %v1892 = vadd.f32 %v1731, %v1891
      %v1893 = vpop.f32.mrf.mxu0
      %v1894 = vpop.f32.mrf.mxu0
      %v1895 = vadd.f32 %v1734, %v1894
      %v1896 = vpop.f32.mrf.mxu0
      %1897 = vmatprep.mubr.bf16.mxu0 %v542
      %1898 = vmatmul.mubr.bf16.gmra.mxu0 %v386
      %v1899 = vpop.f32.mrf.mxu0
      %v1900 = vadd.f32 %v1739, %v1899
      %v1901 = vpop.f32.mrf.mxu0
      %v1902 = vpop.f32.mrf.mxu0
      %v1903 = vadd.f32 %v1742, %v1902
      %v1904 = vpop.f32.mrf.mxu0
      %1905 = vmatprep.mubr.bf16.mxu0 %v554
      %1906 = vmatmul.mubr.bf16.gmra.mxu0 %v387
      %v1907 = vpop.f32.mrf.mxu0
      %v1908 = vadd.f32 %v1747, %v1907
      %v1909 = vpop.f32.mrf.mxu0
      %v1910 = vpop.f32.mrf.mxu0
      %v1911 = vadd.f32 %v1750, %v1910
      %v1912 = vpop.f32.mrf.mxu0
      %1913 = vmatprep.mubr.bf16.mxu0 %v566
      %1914 = vmatmul.mubr.bf16.gmra.mxu0 %v388
      %v1915 = vpop.f32.mrf.mxu0
      %v1916 = vadd.f32 %v1755, %v1915
      %v1917 = vpop.f32.mrf.mxu0
      %v1918 = vpop.f32.mrf.mxu0
      %v1919 = vadd.f32 %v1758, %v1918
      %v1920 = vpop.f32.mrf.mxu0
      %1921 = vmatprep.mubr.bf16.mxu0 %v578
      %1922 = vmatmul.mubr.bf16.gmra.mxu0 %v389
      %v1923 = vpop.f32.mrf.mxu0
      %v1924 = vadd.f32 %v1763, %v1923
      %v1925 = vpop.f32.mrf.mxu0
      %v1926 = vpop.f32.mrf.mxu0
      %v1927 = vadd.f32 %v1766, %v1926
      %v1928 = vpop.f32.mrf.mxu0
      %1929 = vmatprep.mubr.bf16.mxu0 %v590
      %1930 = vmatmul.mubr.bf16.gmra.mxu0 %v390
      %v1931 = vpop.f32.mrf.mxu0
      %v1932 = vadd.f32 %v1771, %v1931
      %v1933 = vpop.f32.mrf.mxu0
      %v1934 = vpop.f32.mrf.mxu0
      %v1935 = vadd.f32 %v1774, %v1934
      %v1936 = vpop.f32.mrf.mxu0
      %1937 = vmatprep.mubr.bf16.mxu0 %v602
      %1938 = vmatmul.mubr.bf16.gmra.mxu0 %v391
      %v1939 = vpop.f32.mrf.mxu0
      %v1940 = vadd.f32 %v1779, %v1939
      %v1941 = vpop.f32.mrf.mxu0
      %v1942 = vpop.f32.mrf.mxu0
      %v1943 = vadd.f32 %v1782, %v1942
      %v1944 = vpop.f32.mrf.mxu0
      %1945 = vmatprep.mubr.bf16.mxu0 %v727
      %1946 = vmatmul.mubr.bf16.gmra.mxu0 %v392
      %v1947 = vpop.f32.mrf.mxu0
      %v1948 = vadd.f32 %v1787, %v1947
      %v1949 = vpop.f32.mrf.mxu0
      %v1950 = vpop.f32.mrf.mxu0
      %v1951 = vadd.f32 %v1790, %v1950
      %v1952 = vpop.f32.mrf.mxu0
      %1953 = vmatprep.mubr.bf16.mxu0 %v422
      %1954 = vmatmul.mubr.bf16.gmra.mxu0 %v376
      %v1955 = vpop.f32.mrf.mxu0
      %v1956 = vadd.f32 %v1795, %v1955
      %v1957 = vpop.f32.mrf.mxu0
      %v1958 = vpop.f32.mrf.mxu0
      %v1959 = vadd.f32 %v1798, %v1958
      %v1960 = vpop.f32.mrf.mxu0
      %1961 = vdwg.mxu0
      %1962 = vmatprep.subr.bf16.mxu0 0
      %1963 = vmatpush1.bf16.msra.mxu0 %v1245
      %1964 = vmatprep.subr.bf16.mxu0 0
      %1965 = vmatpush1.bf16.msra.mxu0 %v1244
      %1966 = vmatprep.subr.bf16.mxu0 0
      %1967 = vmatpush1.bf16.msra.mxu0 %v1243
      %1968 = vmatprep.subr.bf16.mxu0 0
      %1969 = vmatpush1.bf16.msra.mxu0 %v1242
      %1970 = vmatprep.subr.bf16.mxu0 0
      %1971 = vmatpush1.bf16.msra.mxu0 %v1241
      %1972 = vmatprep.subr.bf16.mxu0 0
      %1973 = vmatpush1.bf16.msra.mxu0 %v1240
      %1974 = vmatprep.subr.bf16.mxu0 0
      %1975 = vmatpush1.bf16.msra.mxu0 %v1239
      %1976 = vmatprep.subr.bf16.mxu0 0
      %1977 = vmatpush1.bf16.msra.mxu0 %v1238
      %1978 = vmatprep.subr.bf16.mxu0 0
      %1979 = vmatpush2.bf16.msra.mxu0 0
      %1980 = vmatprep.subr.bf16.mxu0 0
      %1981 = vmatpush2.bf16.msra.mxu0 0
      %1982 = vmatprep.subr.bf16.mxu0 0
      %1983 = vmatpush2.bf16.msra.mxu0 0
      %1984 = vmatprep.subr.bf16.mxu0 0
      %1985 = vmatpush2.bf16.msra.mxu0 0
      %1986 = vmatprep.subr.bf16.mxu0 0
      %1987 = vmatpush2.bf16.msra.mxu0 0
      %1988 = vmatprep.subr.bf16.mxu0 0
      %1989 = vmatpush2.bf16.msra.mxu0 0
      %1990 = vmatprep.subr.bf16.mxu0 0
      %1991 = vmatpush2.bf16.msra.mxu0 0
      %1992 = vmatprep.subr.bf16.mxu0 0
      %1993 = vmatpush2.bf16.msra.mxu0 0
      %1994 = vmatprep.mubr.bf16.mxu0 0
      %1995 = vmatmul.mubr.bf16.gmra.mxu0 %v660
      %v1996 = vpop.f32.mrf.mxu0
      %v1997 = vadd.f32 %v1836, %v1996
      %v1998 = vpop.f32.mrf.mxu0
      %v1999 = vpop.f32.mrf.mxu0
      %v2000 = vadd.f32 %v1839, %v1999
      %v2001 = vpop.f32.mrf.mxu0
      %2002 = vmatprep.mubr.bf16.mxu0 0
      %2003 = vmatmul.mubr.bf16.gmra.mxu0 %v663
      %v2004 = vpop.f32.mrf.mxu0
      %v2005 = vadd.f32 %v1844, %v2004
      %v2006 = vpop.f32.mrf.mxu0
      %v2007 = vpop.f32.mrf.mxu0
      %v2008 = vadd.f32 %v1847, %v2007
      %v2009 = vpop.f32.mrf.mxu0
      %2010 = vmatprep.mubr.bf16.mxu0 0
      %2011 = vmatmul.mubr.bf16.gmra.mxu0 %v666
      %v2012 = vpop.f32.mrf.mxu0
      %v2013 = vadd.f32 %v1852, %v2012
      %v2014 = vpop.f32.mrf.mxu0
      %v2015 = vpop.f32.mrf.mxu0
      %v2016 = vadd.f32 %v1855, %v2015
      %v2017 = vpop.f32.mrf.mxu0
      %2018 = vmatprep.mubr.bf16.mxu0 0
      %2019 = vmatmul.mubr.bf16.gmra.mxu0 %v669
      %v2020 = vpop.f32.mrf.mxu0
      %v2021 = vadd.f32 %v1860, %v2020
      %v2022 = vpop.f32.mrf.mxu0
      %v2023 = vpop.f32.mrf.mxu0
      %v2024 = vadd.f32 %v1863, %v2023
      %v2025 = vpop.f32.mrf.mxu0
      %2026 = vmatprep.mubr.bf16.mxu0 0
      %2027 = vmatmul.mubr.bf16.gmra.mxu0 %v672
      %v2028 = vpop.f32.mrf.mxu0
      %v2029 = vadd.f32 %v1868, %v2028
      %v2030 = vpop.f32.mrf.mxu0
      %v2031 = vpop.f32.mrf.mxu0
      %v2032 = vadd.f32 %v1871, %v2031
      %v2033 = vpop.f32.mrf.mxu0
      %2034 = vmatprep.mubr.bf16.mxu0 0
      %2035 = vmatmul.mubr.bf16.gmra.mxu0 %v675
      %v2036 = vpop.f32.mrf.mxu0
      %v2037 = vadd.f32 %v1876, %v2036
      %v2038 = vpop.f32.mrf.mxu0
      %v2039 = vpop.f32.mrf.mxu0
      %v2040 = vadd.f32 %v1879, %v2039
      %v2041 = vpop.f32.mrf.mxu0
      %2042 = vmatprep.mubr.bf16.mxu0 0
      %2043 = vmatmul.mubr.bf16.gmra.mxu0 %v678
      %v2044 = vpop.f32.mrf.mxu0
      %v2045 = vadd.f32 %v1884, %v2044
      %v2046 = vpop.f32.mrf.mxu0
      %v2047 = vpop.f32.mrf.mxu0
      %v2048 = vadd.f32 %v1887, %v2047
      %v2049 = vpop.f32.mrf.mxu0
      %2050 = vmatprep.mubr.bf16.mxu0 0
      %2051 = vmatmul.mubr.bf16.gmra.mxu0 %v681
      %v2052 = vpop.f32.mrf.mxu0
      %v2053 = vadd.f32 %v1892, %v2052
      %v2054 = vpop.f32.mrf.mxu0
      %v2055 = vpop.f32.mrf.mxu0
      %v2056 = vadd.f32 %v1895, %v2055
      %v2057 = vpop.f32.mrf.mxu0
      %2058 = vmatprep.mubr.bf16.mxu0 0
      %2059 = vmatmul.mubr.bf16.gmra.mxu0 %v684
      %v2060 = vpop.f32.mrf.mxu0
      %v2061 = vadd.f32 %v1900, %v2060
      %v2062 = vpop.f32.mrf.mxu0
      %v2063 = vpop.f32.mrf.mxu0
      %v2064 = vadd.f32 %v1903, %v2063
      %v2065 = vpop.f32.mrf.mxu0
      %2066 = vmatprep.mubr.bf16.mxu0 0
      %2067 = vmatmul.mubr.bf16.gmra.mxu0 %v687
      %v2068 = vpop.f32.mrf.mxu0
      %v2069 = vadd.f32 %v1908, %v2068
      %v2070 = vpop.f32.mrf.mxu0
      %v2071 = vpop.f32.mrf.mxu0
      %v2072 = vadd.f32 %v1911, %v2071
      %v2073 = vpop.f32.mrf.mxu0
      %2074 = vmatprep.mubr.bf16.mxu0 0
      %2075 = vmatmul.mubr.bf16.gmra.mxu0 %v690
      %v2076 = vpop.f32.mrf.mxu0
      %v2077 = vadd.f32 %v1916, %v2076
      %v2078 = vpop.f32.mrf.mxu0
      %v2079 = vpop.f32.mrf.mxu0
      %v2080 = vadd.f32 %v1919, %v2079
      %v2081 = vpop.f32.mrf.mxu0
      %2082 = vmatprep.mubr.bf16.mxu0 0
      %2083 = vmatmul.mubr.bf16.gmra.mxu0 %v693
      %v2084 = vpop.f32.mrf.mxu0
      %v2085 = vadd.f32 %v1924, %v2084
      %v2086 = vpop.f32.mrf.mxu0
      %v2087 = vpop.f32.mrf.mxu0
      %v2088 = vadd.f32 %v1927, %v2087
      %v2089 = vpop.f32.mrf.mxu0
      %2090 = vmatprep.mubr.bf16.mxu0 0
      %2091 = vmatmul.mubr.bf16.gmra.mxu0 %v696
      %v2092 = vpop.f32.mrf.mxu0
      %v2093 = vadd.f32 %v1932, %v2092
      %v2094 = vpop.f32.mrf.mxu0
      %v2095 = vpop.f32.mrf.mxu0
      %v2096 = vadd.f32 %v1935, %v2095
      %v2097 = vpop.f32.mrf.mxu0
      %2098 = vmatprep.mubr.bf16.mxu0 0
      %2099 = vmatmul.mubr.bf16.gmra.mxu0 %v699
      %v2100 = vpop.f32.mrf.mxu0
      %v2101 = vadd.f32 %v1940, %v2100
      %v2102 = vpop.f32.mrf.mxu0
      %v2103 = vpop.f32.mrf.mxu0
      %v2104 = vadd.f32 %v1943, %v2103
      %v2105 = vpop.f32.mrf.mxu0
      %2106 = vmatprep.mubr.bf16.mxu0 0
      %2107 = vmatmul.mubr.bf16.gmra.mxu0 %v733
      %v2108 = vpop.f32.mrf.mxu0
      %v2109 = vadd.f32 %v1948, %v2108
      %v2110 = vpop.f32.mrf.mxu0
      %v2111 = vpop.f32.mrf.mxu0
      %v2112 = vadd.f32 %v1951, %v2111
      %v2113 = vpop.f32.mrf.mxu0
      %2114 = vmatprep.mubr.bf16.mxu0 0
      %2115 = vmatmul.mubr.bf16.gmra.mxu0 %v654
      %v2116 = vpop.f32.mrf.mxu0
      %v2117 = vadd.f32 %v1956, %v2116
      %v2118 = vpop.f32.mrf.mxu0
      %v2119 = vpop.f32.mrf.mxu0
      %v2120 = vadd.f32 %v1959, %v2119
      %v2121 = vpop.f32.mrf.mxu0
      %2122 = vdwg.mxu0
      %2123 = vst [vmem:[%s170] sm:$0xff] %v1997
      %2124 = vst [vmem:[%s170 + $0x8] sm:$0xff] %v2000
      %2125 = vst [vmem:[%s170 + $0x10] sm:$0xff] %v2005
      %2126 = vst [vmem:[%s170 + $0x18] sm:$0xff] %v2008
      %2127 = vst [vmem:[%s170 + $0x20] sm:$0xff] %v2013
      %2128 = vst [vmem:[%s170 + $0x28] sm:$0xff] %v2016
      %2129 = vst [vmem:[%s170 + $0x30] sm:$0xff] %v2021
      %2130 = vst [vmem:[%s170 + $0x38] sm:$0xff] %v2024
      %2131 = vst [vmem:[%s170 + $0x40] sm:$0xff] %v2029
      %2132 = vst [vmem:[%s170 + $0x48] sm:$0xff] %v2032
      %2133 = vst [vmem:[%s170 + $0x50] sm:$0xff] %v2037
      %2134 = vst [vmem:[%s170 + $0x58] sm:$0xff] %v2040
      %2135 = vst [vmem:[%s170 + $0x60] sm:$0xff] %v2045
      %2136 = vst [vmem:[%s170 + $0x68] sm:$0xff] %v2048
      %2137 = vst [vmem:[%s170 + $0x70] sm:$0xff] %v2053
      %2138 = vst [vmem:[%s170 + $0x78] sm:$0xff] %v2056
      %2139 = vst [vmem:[%s170 + $0x80] sm:$0xff] %v2061
      %2140 = vst [vmem:[%s170 + $0x88] sm:$0xff] %v2064
      %2141 = vst [vmem:[%s170 + $0x90] sm:$0xff] %v2069
      %2142 = vst [vmem:[%s170 + $0x98] sm:$0xff] %v2072
      %2143 = vst [vmem:[%s170 + $0xa0] sm:$0xff] %v2077
      %2144 = vst [vmem:[%s170 + $0xa8] sm:$0xff] %v2080
      %2145 = vst [vmem:[%s170 + $0xb0] sm:$0xff] %v2085
      %2146 = vst [vmem:[%s170 + $0xb8] sm:$0xff] %v2088
      %2147 = vst [vmem:[%s170 + $0xc0] sm:$0xff] %v2093
      %2148 = vst [vmem:[%s170 + $0xc8] sm:$0xff] %v2096
      %2149 = vst [vmem:[%s170 + $0xd0] sm:$0xff] %v2101
      %2150 = vst [vmem:[%s170 + $0xd8] sm:$0xff] %v2104
      %2151 = vst [vmem:[%s170 + $0xe0] sm:$0xff] %v2109
      %2152 = vst [vmem:[%s170 + $0xe8] sm:$0xff] %v2112
      %2153 = vst [vmem:[%s170 + $0xf0] sm:$0xff] %v2117
      %2154 = vst [vmem:[%s170 + $0xf8] sm:$0xff] %v2120
      %p2155 = scmp.lt.s32.totalorder %s14, 1
      %s2156 = scalar_select %p2155, %s14, 1
      %s2157 = smul.addr %s2156, 32
      %s2158 = smul.addr %s2157, 8
      %s2159 = scalar_lea.vmem %s3, %s2158
      // Predicated region
      $region33: #{rcan_forward.19} parent=31 // pred_check
        %p2160 = pneg %p100
      $region34: #{rcan_forward.19} parent=31 // pred_check_branch
        %2162 = sbr.rel (%p2160) target = $region36
      $region35: #{rcan_forward.19} parent=31 // pred_region
        _
      $region36: #{rcan_forward.19} parent=31 // pred_fallthru
        _
    $region32: #{rcan_forward.19} parent=5 // pred_fallthru
      _
    %p2163 = scmp.le.s32.totalorder 2, %s9
    // Predicated region
    $region37: #{rcan_forward.19} parent=5 // pred_check
      %p2164 = pneg %p2163
    $region38: #{rcan_forward.19} parent=5 // pred_check_branch
      %2166 = sbr.rel (%p2164) target = $region40
    $region39: #{rcan_forward.19} parent=5 // pred_region
      %s2167 = ssub.s32 %s9, 2
      // Predicated region
      $region41: #{rcan_forward.19} parent=39 // pred_check
        %p2168 = pneg %p106
      $region42: #{rcan_forward.19} parent=39 // pred_check_branch
        %2170 = sbr.rel (%p2168) target = $region44
      $region43: #{rcan_forward.19} parent=39 // pred_region
        %p2171 = scmp.lt.s32.totalorder %s15, 1
        %s2172 = scalar_select %p2171, %s15, 1
        %s2173 = smul.addr %s2172, 32
        %s2174 = smul.addr %s2173, 8
        %s2175 = scalar_lea.vmem %s3, %s2174
      $region44: #{rcan_forward.19} parent=39 // pred_fallthru
        _
    $region40: #{rcan_forward.19} parent=5 // pred_fallthru
      _
  $region6: #{rcan_forward.19} parent=0 // loop_footer
    %s13 = sadd.s32 1, %s9
  $region7: #{rcan_forward.19} parent=0 // loop_footer_branch
    %8 = sbr.rel target = $region3
  $region8: #{rcan_forward.19} parent=0 // loop_exit
    _

</llo_original>
